<compile_context>
chip_gen: v5e
topology: v5e:2x2
jax: 0.10.0
libtpu: 0.0.40
codegen_flags: <defaults>
</compile_context>

<pallas_src>
import functools
import math

import jax
import jax.numpy as jnp
import numpy as np
from jax.experimental import pallas as pl
from jax.experimental.pallas import tpu as pltpu

C_REF = 2      # ref_image channels (slices 0 and 2 of the input image)
C_REF_PAD = 8  # zero-padded so per-tap sublane chunks stay 8-aligned
C1 = 16        # encoder stage-1 / decoder skip-0 channels
C2 = 32        # encoder stage-2 / decoder skip-1 channels


# -----------------------------------------------------------------------------
# Host-side constant 0/1 operators.  Features inside kernels are (channels, HW)
# (channels on sublanes, flattened spatial on lanes):
#   3x3 conv (pad 1, stride s):  out = W_flat @ stack_t(x @ S_t)
#   nearest 2x upsample fused into the following conv via  M_t = U @ S_t
# -----------------------------------------------------------------------------
def _shift_mats(H, W, stride):
    Ho = (H + 2 - 3) // stride + 1
    Wo = (W + 2 - 3) // stride + 1
    S = np.zeros((9, H * W, Ho * Wo), np.float32)
    t = 0
    for di in range(3):
        for dj in range(3):
            for oi in range(Ho):
                ii = oi * stride + di - 1
                if 0 <= ii < H:
                    for oj in range(Wo):
                        jj = oj * stride + dj - 1
                        if 0 <= jj < W:
                            S[t, ii * W + jj, oi * Wo + oj] = 1.0
            t += 1
    return S


def _upsample_mat(H, W):
    U = np.zeros((H * W, 4 * H * W), np.float32)
    for i in range(2 * H):
        for j in range(2 * W):
            U[(i // 2) * W + (j // 2), i * (2 * W) + j] = 1.0
    return U


def _block_diag_taps(S, K):
    """(9, a, b) -> (9, K*a, K*b): per-tap block-diagonal over K lane blocks."""
    T, a, b = S.shape
    out = np.zeros((T, K * a, K * b), S.dtype)
    for k in range(K):
        out[:, k * a:(k + 1) * a, k * b:(k + 1) * b] = S
    return out


def _lane_tile_taps(S, K):
    """(9, a, b) -> (9, a, K*b): same operator replicated into K lane blocks."""
    return np.concatenate([S] * K, axis=2)


# -----------------------------------------------------------------------------
# Parameter / constant-operator init (deterministic, synthetic E / G).
# -----------------------------------------------------------------------------
def init_params(key, *, nz, n_class, H, W, num_negative):
    assert H % 4 == 0 and W % 4 == 0
    K = num_negative + 2
    H2, W2, H4, W4 = H // 2, W // 2, H // 4, W // 4
    bf16 = jnp.bfloat16
    ks = jax.random.split(key, 10)

    def conv_w(k, cout, cin, fan_in):
        return (jax.random.normal(k, (9, cout, cin), jnp.float32)
                / math.sqrt(float(fan_in)))

    def flat_taps(w):  # (9, Cout, Cin) -> (Cout, 9*Cin), tap-major columns
        return jnp.transpose(w, (1, 0, 2)).reshape(w.shape[1], -1)

    def bias(c):
        return jnp.zeros((c, 1), jnp.float32)

    # per-tap raw weights
    e_w1 = conv_w(ks[0], C1, C_REF, 9 * C_REF)
    e_w2 = conv_w(ks[1], C2, C1, 9 * C1)
    g_w1h = conv_w(ks[4], C2, C2, 9 * (C2 + C2))
    g_w1d = conv_w(ks[5], C2, C2, 9 * (C2 + C2))
    g_w2u = conv_w(ks[6], C1, C2, 9 * (C2 + C1))
    g_w2s = conv_w(ks[7], C1, C1, 9 * (C2 + C1))
    g_w3 = conv_w(ks[8], 1, C1, 9 * C1)

    # 0/1 operators (exact in bf16)
    s_e1 = _shift_mats(H, W, 2)        # (9, HW,   HW/4)  encoder conv1, stride 2
    s_e2 = _shift_mats(H2, W2, 2)      # (9, HW/4, HW/16) encoder conv2, stride 2
    s_q = _shift_mats(H4, W4, 1)       # (9, 16, 16)      generator conv1
    s_h = _shift_mats(H2, W2, 1)       # (9, 64, 64)      generator conv2 skip
    s_f = _shift_mats(H, W, 1)         # (9, 256, 256)
    u1 = _upsample_mat(H4, W4)         # (16, 64)
    u2 = _upsample_mat(H2, W2)         # (64, 256)
    m2 = np.einsum("pq,tqr->tpr", u1, s_h)   # upsample folded into conv2
    m3 = np.einsum("pq,tqr->tpr", u2, s_f)   # upsample folded into conv3

    # pad encoder conv1 input channels 2 -> 8 (zero weight columns)
    e_w1p = jnp.pad(e_w1, ((0, 0), (0, 0), (0, C_REF_PAD - C_REF)))

    fc_in = 2 * nz + n_class
    return {
        # ---- encoder (tap-fused flat weights) ----
        "e_w1f": flat_taps(e_w1p).astype(bf16),        # (C1, 9*8)
        "e_b1": bias(C1),
        "e_w2f": flat_taps(e_w2).astype(bf16),         # (C2, 9*C1)
        "e_b2": bias(C2),
        "e_wz": (jax.random.normal(ks[2], (nz, C2), jnp.float32)
                 / math.sqrt(float(C2))).astype(bf16),
        "e_bz": jnp.zeros((nz, 1), jnp.float32),
        "s_e1": jnp.asarray(s_e1, bf16),
        "s_e2": jnp.asarray(s_e2, bf16),
        # ---- generator latent FC (stays in XLA wrapper) ----
        "g_wfc": jax.random.normal(ks[3], (fc_in, C2, H4 * W4), jnp.float32)
                 / math.sqrt(float(fc_in)),
        "g_bfc": jnp.zeros((C2, H4 * W4), jnp.float32),
        # ---- generator convs: taps + branches fused into one weight matrix ----
        "g_w1f": jnp.concatenate(
            [flat_taps(g_w1h), flat_taps(g_w1d)], axis=1).astype(bf16),  # (C2,576)
        "g_b1": bias(C2),
        "g_w2f": jnp.concatenate(
            [flat_taps(g_w2u), flat_taps(g_w2s)], axis=1).astype(bf16),  # (C1,432)
        "g_b2": bias(C1),
        "g_w3": g_w3.astype(bf16),                     # (9, 1, C1) per-tap
        "g_b3": jnp.zeros((1, 1), jnp.float32),
        # ---- replica-batched constant spatial operators ----
        "s_q_bd": jnp.asarray(_block_diag_taps(s_q, K), bf16),  # (9, K*16, K*16)
        "s_q_rep": jnp.asarray(_lane_tile_taps(s_q, K), bf16),  # (9, 16,   K*16)
        "m2_bd": jnp.asarray(_block_diag_taps(m2, K), bf16),    # (9, K*16, K*64)
        "s_h_rep": jnp.asarray(_lane_tile_taps(s_h, K), bf16),  # (9, 64,   K*64)
        "m3": jnp.asarray(m3, bf16),                            # (9, 64,   HW)
    }


# -----------------------------------------------------------------------------
# In-kernel fused 3x3 conv: stack per-tap (x @ S_t) along sublanes for every
# input branch, then one wide weight matmul (Cout, sum_b 9*Cin_b) @ stack.
# -----------------------------------------------------------------------------
def _conv_fused(branches, w_ref):
    xs = jnp.concatenate(
        [jnp.dot(x, op_ref[t], preferred_element_type=jnp.float32)
         for (x, op_ref) in branches for t in range(9)],
        axis=0)
    return jnp.dot(w_ref[...], xs.astype(jnp.bfloat16),
                   preferred_element_type=jnp.float32)


# -----------------------------------------------------------------------------
# Fused encoder kernel: one grid step per batch element.
# -----------------------------------------------------------------------------
def _encoder_kernel(x_ref, w1_ref, b1_ref, w2_ref, b2_ref, wz_ref, bz_ref,
                    s1_ref, s2_ref, d0_ref, d1_ref, zr_ref):
    x = x_ref[...]                                                    # (8, HW) bf16
    d0 = jnp.maximum(_conv_fused([(x, s1_ref)], w1_ref) + b1_ref[...], 0.0)
    d0b = d0.astype(jnp.bfloat16)                                     # (C1, HW/4)
    d1 = jnp.maximum(_conv_fused([(d0b, s2_ref)], w2_ref) + b2_ref[...], 0.0)
    d1b = d1.astype(jnp.bfloat16)                                     # (C2, HW/16)
    pooled = jnp.mean(d1, axis=1, keepdims=True)                      # (C2, 1)
    zr = jnp.dot(wz_ref[...], pooled.astype(jnp.bfloat16),
                 preferred_element_type=jnp.float32) + bz_ref[...]    # (nz, 1)
    d0_ref[...] = d0b
    d1_ref[...] = d1b
    zr_ref[...] = zr


def encoder_forward(p, ref_pad):
    B, _, HW = ref_pad.shape
    HW4, HW16 = HW // 4, HW // 16
    nz = p["e_wz"].shape[0]
    full3 = lambda i: (0, 0, 0)
    full2 = lambda i: (0, 0)
    blk = lambda i: (i, 0, 0)
    return pl.pallas_call(
        _encoder_kernel,
        out_shape=(
            jax.ShapeDtypeStruct((B, C1, HW4), jnp.bfloat16),
            jax.ShapeDtypeStruct((B, C2, HW16), jnp.bfloat16),
            jax.ShapeDtypeStruct((B, nz, 1), jnp.float32),
        ),
        grid=(B,),
        in_specs=[
            pl.BlockSpec((None, C_REF_PAD, HW), blk),
            pl.BlockSpec(p["e_w1f"].shape, full2),
            pl.BlockSpec(p["e_b1"].shape, full2),
            pl.BlockSpec(p["e_w2f"].shape, full2),
            pl.BlockSpec(p["e_b2"].shape, full2),
            pl.BlockSpec(p["e_wz"].shape, full2),
            pl.BlockSpec(p["e_bz"].shape, full2),
            pl.BlockSpec(p["s_e1"].shape, full3),
            pl.BlockSpec(p["s_e2"].shape, full3),
        ],
        out_specs=(
            pl.BlockSpec((None, C1, HW4), blk),
            pl.BlockSpec((None, C2, HW16), blk),
            pl.BlockSpec((None, nz, 1), blk),
        ),
        compiler_params=pltpu.CompilerParams(dimension_semantics=("parallel",)),
    )(ref_pad, p["e_w1f"], p["e_b1"], p["e_w2f"], p["e_b2"],
      p["e_wz"], p["e_bz"], p["s_e1"], p["s_e2"])


# -----------------------------------------------------------------------------
# Fused generator kernel: one grid step per batch element; all K replicas are
# lane-batched (conv1 / conv2) and sublane-stacked for conv3.
# -----------------------------------------------------------------------------
def _generator_kernel(h0_ref, d0_ref, d1_ref,
                      w1_ref, b1_ref, w2_ref, b2_ref, w3_ref, b3_ref,
                      sqbd_ref, sqrep_ref, m2bd_ref, shrep_ref, m3_ref,
                      out_ref, *, K, HWm):
    h0 = h0_ref[...]                      # (C2, K*H4W4) bf16 post-relu FC seed
    d0 = d0_ref[...]                      # (C1, HWm)    bf16 encoder skip-0
    d1 = d1_ref[...]                      # (C2, H4W4)   bf16 encoder skip-1

    # conv1 on concat([h0, d1]); replica-block-diag / lane-tiled operators.
    c1 = _conv_fused([(h0, sqbd_ref), (d1, sqrep_ref)], w1_ref) + b1_ref[...]
    c1 = jnp.maximum(c1, 0.0).astype(jnp.bfloat16)            # (C2, K*H4W4)

    # conv2 on concat([up2(c1), d0]); upsample folded into m2_bd.
    c2 = _conv_fused([(c1, m2bd_ref), (d0, shrep_ref)], w2_ref) + b2_ref[...]
    c2 = jnp.maximum(c2, 0.0).astype(jnp.bfloat16)            # (C1, K*HWm)

    # restack replicas from lanes to sublanes: (C1, K*HWm) -> (K*C1, HWm)
    c2s = jnp.concatenate(
        [c2[:, r * HWm:(r + 1) * HWm] for r in range(K)], axis=0)

    # conv3 on up2(c2) (upsample folded into m3); block-diag weight over
    # replicas -> a sublane/lane-dense (K, HW) output slab; tanh.
    c3 = _conv_fused([(c2s, m3_ref)], w3_ref) + b3_ref[...]   # (K, HW)
    out_ref[...] = jnp.tanh(c3)


def generator_forward(p, h0, d0, d1, w3bd, *, K, HW):
    B = h0.shape[0]
    HWm = d0.shape[2]
    full3 = lambda b: (0, 0, 0)
    full2 = lambda b: (0, 0)
    blk = lambda b: (b, 0, 0)
    kernel = functools.partial(_generator_kernel, K=K, HWm=HWm)
    return pl.pallas_call(
        kernel,
        out_shape=jax.ShapeDtypeStruct((B, K, HW), jnp.float32),
        grid=(B,),
        in_specs=[
            pl.BlockSpec((None,) + h0.shape[1:], blk),
            pl.BlockSpec((None,) + d0.shape[1:], blk),
            pl.BlockSpec((None,) + d1.shape[1:], blk),
            pl.BlockSpec(p["g_w1f"].shape, full2),
            pl.BlockSpec(p["g_b1"].shape, full2),
            pl.BlockSpec(p["g_w2f"].shape, full2),
            pl.BlockSpec(p["g_b2"].shape, full2),
            pl.BlockSpec(w3bd.shape, full2),
            pl.BlockSpec(p["g_b3"].shape, full2),
            pl.BlockSpec(p["s_q_bd"].shape, full3),
            pl.BlockSpec(p["s_q_rep"].shape, full3),
            pl.BlockSpec(p["m2_bd"].shape, full3),
            pl.BlockSpec(p["s_h_rep"].shape, full3),
            pl.BlockSpec(p["m3"].shape, full3),
        ],
        out_specs=pl.BlockSpec((None, K, HW), blk),
        compiler_params=pltpu.CompilerParams(dimension_semantics=("parallel",)),
    )(h0, d0, d1,
      p["g_w1f"], p["g_b1"], p["g_w2f"], p["g_b2"], w3bd, p["g_b3"],
      p["s_q_bd"], p["s_q_rep"], p["m2_bd"], p["s_h_rep"], p["m3"])


# -----------------------------------------------------------------------------
# DivCo_PLGAN.forward() semantics.
# -----------------------------------------------------------------------------
def divco_plgan_forward(params, image, label, key, *, nz, num_negative, radius):
    B, H, W, _ = image.shape
    HW, H4W4 = H * W, (H // 4) * (W // 4)
    K = num_negative + 2

    # torch: ref_image = image[:,:,:,(0,2)].permute(0,3,1,2)
    ref_cs = jnp.transpose(image[:, :, :, (0, 2)], (0, 3, 1, 2)).reshape(B, C_REF, HW)
    ref_pad = jnp.pad(ref_cs.astype(jnp.bfloat16),
                      ((0, 0), (0, C_REF_PAD - C_REF), (0, 0)))

    # latent sampling: query / pos / negatives
    kq, kp, kn = jax.random.split(key, 3)
    query = jax.random.normal(kq, (B, nz), jnp.float32)
    pos = query + jax.random.uniform(kp, (B, nz), jnp.float32,
                                     minval=-radius, maxval=radius)
    # TODO(synk): torch rejection-resampling loop (`while |neg-query|.min()<radius`)
    # is data-dependent host control flow; a single Gaussian draw is used instead.
    negs = [jax.random.normal(jax.random.fold_in(kn, i), (B, nz), jnp.float32)
            for i in range(num_negative)]
    z_all = jnp.stack([query, pos] + negs, axis=1)                    # (B, K, nz)

    # E(ref_image): one fused Pallas kernel (grid over B)
    d0, d1, zr_col = encoder_forward(params, ref_pad)
    z_r = zr_col[:, :, 0]                                             # (B, nz)

    # G's latent FC (tiny, kept in XLA); emits h0 directly in the lane-batched
    # (B, C2, K*H4W4) bf16 layout the generator kernel consumes.
    zfull = jnp.concatenate(
        [z_all,
         jnp.broadcast_to(z_r[:, None, :], (B, K, nz)),
         jnp.broadcast_to(label[:, None, :], (B, K, label.shape[-1]))], axis=2)
    h0 = jax.nn.relu(jnp.einsum("bki,icp->bckp", zfull, params["g_wfc"])
                     + params["g_bfc"][None, :, None, :])
    h0 = h0.reshape(B, C2, K * H4W4).astype(jnp.bfloat16)

    # block-diagonal conv3 weight over replicas (depends on learned g_w3)
    w3_2d = params["g_w3"][:, 0, :].astype(jnp.float32)               # (9, C1)
    w3bd = jnp.einsum("tc,rs->rtsc", w3_2d,
                      jnp.eye(K, dtype=jnp.float32)
                      ).reshape(K, 9 * K * C1).astype(jnp.bfloat16)

    # G(down_outputs, z, z_r, label): one fused Pallas kernel (grid over B)
    fake_bk = generator_forward(params, h0, d0, d1, w3bd, K=K, HW=HW)  # (B, K, HW)
    fake_image = jnp.transpose(fake_bk, (1, 0, 2)).reshape(K * B, H, W, 1)
    fake_image1 = fake_image[:B]
    return fake_image, fake_image1


if __name__ == "__main__":
    B, H, W = 2, 16, 16
    NZ, N_CLASS = 8, 4
    NUM_NEGATIVE, RADIUS = 2, 0.01

    root = jax.random.PRNGKey(0)
    k_param, k_img, k_lbl, k_z = jax.random.split(root, 4)

    params = init_params(k_param, nz=NZ, n_class=N_CLASS, H=H, W=W,
                         num_negative=NUM_NEGATIVE)
    image = jax.random.normal(k_img, (B, H, W, 3), jnp.float32)
    label = jax.nn.one_hot(
        jax.random.randint(k_lbl, (B,), 0, N_CLASS), N_CLASS, dtype=jnp.float32)

    fwd = jax.jit(functools.partial(
        divco_plgan_forward, nz=NZ, num_negative=NUM_NEGATIVE, radius=RADIUS))
    fake_image, fake_image1 = fwd(params, image, label, k_z)
    jax.block_until_ready((fake_image, fake_image1))

    assert fake_image.shape == ((NUM_NEGATIVE + 2) * B, H, W, 1)
    assert fake_image1.shape == (B, H, W, 1)
    assert bool(jnp.all(jnp.isfinite(fake_image)))
    print("KERNEL_OK")
</pallas_src>

<mosaic_0001>
module attributes {stable_mosaic.version = 11 : i64} {
  func.func @_encoder_kernel(%arg0: i32, %arg1: memref<1x8x256xbf16, #tpu.memory_space<vmem>>, %arg2: memref<16x72xbf16, #tpu.memory_space<vmem>>, %arg3: memref<16x1xf32, #tpu.memory_space<vmem>>, %arg4: memref<32x144xbf16, #tpu.memory_space<vmem>>, %arg5: memref<32x1xf32, #tpu.memory_space<vmem>>, %arg6: memref<8x32xbf16, #tpu.memory_space<vmem>>, %arg7: memref<8x1xf32, #tpu.memory_space<vmem>>, %arg8: memref<9x256x64xbf16, #tpu.memory_space<vmem>>, %arg9: memref<9x64x16xbf16, #tpu.memory_space<vmem>>, %arg10: memref<1x16x64xbf16, #tpu.memory_space<vmem>>, %arg11: memref<1x32x16xbf16, #tpu.memory_space<vmem>>, %arg12: memref<1x8x1xf32, #tpu.memory_space<vmem>>) attributes {dimension_semantics = [#tpu.dimension_semantics<parallel>], iteration_bounds = array<i64: 2>, scalar_prefetch = 0 : i64, scratch_operands = 0 : i64, tpu.core_type = #tpu.core_type<tc>, window_params = [{transform_indices = @transform_0, window_bounds = array<i64: 1, 8, 256>}, {pipeline_mode = #tpu.pipeline_mode<synchronous>, transform_indices = @transform_1, window_bounds = array<i64: 16, 72>}, {pipeline_mode = #tpu.pipeline_mode<synchronous>, transform_indices = @transform_2, window_bounds = array<i64: 16, 1>}, {pipeline_mode = #tpu.pipeline_mode<synchronous>, transform_indices = @transform_3, window_bounds = array<i64: 32, 144>}, {pipeline_mode = #tpu.pipeline_mode<synchronous>, transform_indices = @transform_4, window_bounds = array<i64: 32, 1>}, {pipeline_mode = #tpu.pipeline_mode<synchronous>, transform_indices = @transform_5, window_bounds = array<i64: 8, 32>}, {pipeline_mode = #tpu.pipeline_mode<synchronous>, transform_indices = @transform_6, window_bounds = array<i64: 8, 1>}, {pipeline_mode = #tpu.pipeline_mode<synchronous>, transform_indices = @transform_7, window_bounds = array<i64: 9, 256, 64>}, {pipeline_mode = #tpu.pipeline_mode<synchronous>, transform_indices = @transform_8, window_bounds = array<i64: 9, 64, 16>}, {transform_indices = @transform_9, window_bounds = array<i64: 1, 16, 64>}, {transform_indices = @transform_10, window_bounds = array<i64: 1, 32, 16>}, {transform_indices = @transform_11, window_bounds = array<i64: 1, 8, 1>}]} {
    %c0 = arith.constant 0 : index
    %c0_0 = arith.constant 0 : index
    %c0_1 = arith.constant 0 : index
    %0 = vector.load %arg1[%c0, %c0_0, %c0_1] : memref<1x8x256xbf16, #tpu.memory_space<vmem>>, vector<1x8x256xbf16>
    %1 = vector.shape_cast %0 : vector<1x8x256xbf16> to vector<8x256xbf16>
    %c0_2 = arith.constant 0 : index
    %c0_3 = arith.constant 0 : index
    %c0_4 = arith.constant 0 : index
    %2 = vector.load %arg8[%c0_2, %c0_3, %c0_4] : memref<9x256x64xbf16, #tpu.memory_space<vmem>>, vector<1x256x64xbf16>
    %3 = vector.shape_cast %2 : vector<1x256x64xbf16> to vector<256x64xbf16>
    %cst = arith.constant dense<0.000000e+00> : vector<8x64xf32>
    %4 = tpu.matmul %1, %3, %cst {dimension_numbers = #tpu.dot_dimension_numbers<[1], [0], [0], [1], [0, 0, 1, 1], [], []>} : vector<8x256xbf16>, vector<256x64xbf16>, vector<8x64xf32> -> vector<8x64xf32>
    %c1 = arith.constant 1 : index
    %c0_5 = arith.constant 0 : index
    %c0_6 = arith.constant 0 : index
    %5 = vector.load %arg8[%c1, %c0_5, %c0_6] : memref<9x256x64xbf16, #tpu.memory_space<vmem>>, vector<1x256x64xbf16>
    %6 = vector.shape_cast %5 : vector<1x256x64xbf16> to vector<256x64xbf16>
    %cst_7 = arith.constant dense<0.000000e+00> : vector<8x64xf32>
    %7 = tpu.matmul %1, %6, %cst_7 {dimension_numbers = #tpu.dot_dimension_numbers<[1], [0], [0], [1], [0, 0, 1, 1], [], []>} : vector<8x256xbf16>, vector<256x64xbf16>, vector<8x64xf32> -> vector<8x64xf32>
    %c2 = arith.constant 2 : index
    %c0_8 = arith.constant 0 : index
    %c0_9 = arith.constant 0 : index
    %8 = vector.load %arg8[%c2, %c0_8, %c0_9] : memref<9x256x64xbf16, #tpu.memory_space<vmem>>, vector<1x256x64xbf16>
    %9 = vector.shape_cast %8 : vector<1x256x64xbf16> to vector<256x64xbf16>
    %cst_10 = arith.constant dense<0.000000e+00> : vector<8x64xf32>
    %10 = tpu.matmul %1, %9, %cst_10 {dimension_numbers = #tpu.dot_dimension_numbers<[1], [0], [0], [1], [0, 0, 1, 1], [], []>} : vector<8x256xbf16>, vector<256x64xbf16>, vector<8x64xf32> -> vector<8x64xf32>
    %c3 = arith.constant 3 : index
    %c0_11 = arith.constant 0 : index
    %c0_12 = arith.constant 0 : index
    %11 = vector.load %arg8[%c3, %c0_11, %c0_12] : memref<9x256x64xbf16, #tpu.memory_space<vmem>>, vector<1x256x64xbf16>
    %12 = vector.shape_cast %11 : vector<1x256x64xbf16> to vector<256x64xbf16>
    %cst_13 = arith.constant dense<0.000000e+00> : vector<8x64xf32>
    %13 = tpu.matmul %1, %12, %cst_13 {dimension_numbers = #tpu.dot_dimension_numbers<[1], [0], [0], [1], [0, 0, 1, 1], [], []>} : vector<8x256xbf16>, vector<256x64xbf16>, vector<8x64xf32> -> vector<8x64xf32>
    %c4 = arith.constant 4 : index
    %c0_14 = arith.constant 0 : index
    %c0_15 = arith.constant 0 : index
    %14 = vector.load %arg8[%c4, %c0_14, %c0_15] : memref<9x256x64xbf16, #tpu.memory_space<vmem>>, vector<1x256x64xbf16>
    %15 = vector.shape_cast %14 : vector<1x256x64xbf16> to vector<256x64xbf16>
    %cst_16 = arith.constant dense<0.000000e+00> : vector<8x64xf32>
    %16 = tpu.matmul %1, %15, %cst_16 {dimension_numbers = #tpu.dot_dimension_numbers<[1], [0], [0], [1], [0, 0, 1, 1], [], []>} : vector<8x256xbf16>, vector<256x64xbf16>, vector<8x64xf32> -> vector<8x64xf32>
    %c5 = arith.constant 5 : index
    %c0_17 = arith.constant 0 : index
    %c0_18 = arith.constant 0 : index
    %17 = vector.load %arg8[%c5, %c0_17, %c0_18] : memref<9x256x64xbf16, #tpu.memory_space<vmem>>, vector<1x256x64xbf16>
    %18 = vector.shape_cast %17 : vector<1x256x64xbf16> to vector<256x64xbf16>
    %cst_19 = arith.constant dense<0.000000e+00> : vector<8x64xf32>
    %19 = tpu.matmul %1, %18, %cst_19 {dimension_numbers = #tpu.dot_dimension_numbers<[1], [0], [0], [1], [0, 0, 1, 1], [], []>} : vector<8x256xbf16>, vector<256x64xbf16>, vector<8x64xf32> -> vector<8x64xf32>
    %c6 = arith.constant 6 : index
    %c0_20 = arith.constant 0 : index
    %c0_21 = arith.constant 0 : index
    %20 = vector.load %arg8[%c6, %c0_20, %c0_21] : memref<9x256x64xbf16, #tpu.memory_space<vmem>>, vector<1x256x64xbf16>
    %21 = vector.shape_cast %20 : vector<1x256x64xbf16> to vector<256x64xbf16>
    %cst_22 = arith.constant dense<0.000000e+00> : vector<8x64xf32>
    %22 = tpu.matmul %1, %21, %cst_22 {dimension_numbers = #tpu.dot_dimension_numbers<[1], [0], [0], [1], [0, 0, 1, 1], [], []>} : vector<8x256xbf16>, vector<256x64xbf16>, vector<8x64xf32> -> vector<8x64xf32>
    %c7 = arith.constant 7 : index
    %c0_23 = arith.constant 0 : index
    %c0_24 = arith.constant 0 : index
    %23 = vector.load %arg8[%c7, %c0_23, %c0_24] : memref<9x256x64xbf16, #tpu.memory_space<vmem>>, vector<1x256x64xbf16>
    %24 = vector.shape_cast %23 : vector<1x256x64xbf16> to vector<256x64xbf16>
    %cst_25 = arith.constant dense<0.000000e+00> : vector<8x64xf32>
    %25 = tpu.matmul %1, %24, %cst_25 {dimension_numbers = #tpu.dot_dimension_numbers<[1], [0], [0], [1], [0, 0, 1, 1], [], []>} : vector<8x256xbf16>, vector<256x64xbf16>, vector<8x64xf32> -> vector<8x64xf32>
    %c8 = arith.constant 8 : index
    %c0_26 = arith.constant 0 : index
    %c0_27 = arith.constant 0 : index
    %26 = vector.load %arg8[%c8, %c0_26, %c0_27] : memref<9x256x64xbf16, #tpu.memory_space<vmem>>, vector<1x256x64xbf16>
    %27 = vector.shape_cast %26 : vector<1x256x64xbf16> to vector<256x64xbf16>
    %cst_28 = arith.constant dense<0.000000e+00> : vector<8x64xf32>
    %28 = tpu.matmul %1, %27, %cst_28 {dimension_numbers = #tpu.dot_dimension_numbers<[1], [0], [0], [1], [0, 0, 1, 1], [], []>} : vector<8x256xbf16>, vector<256x64xbf16>, vector<8x64xf32> -> vector<8x64xf32>
    %29 = tpu.concatenate %4, %7, %10, %13, %16, %19, %22, %25, %28 in 0 : vector<8x64xf32>, vector<8x64xf32>, vector<8x64xf32>, vector<8x64xf32>, vector<8x64xf32>, vector<8x64xf32>, vector<8x64xf32>, vector<8x64xf32>, vector<8x64xf32> -> vector<72x64xf32>
    %c0_29 = arith.constant 0 : index
    %c0_30 = arith.constant 0 : index
    %30 = vector.load %arg2[%c0_29, %c0_30] : memref<16x72xbf16, #tpu.memory_space<vmem>>, vector<16x72xbf16>
    %31 = arith.truncf %29 : vector<72x64xf32> to vector<72x64xbf16>
    %cst_31 = arith.constant dense<0.000000e+00> : vector<16x64xf32>
    %32 = tpu.matmul %30, %31, %cst_31 {dimension_numbers = #tpu.dot_dimension_numbers<[1], [0], [0], [1], [0, 0, 1, 1], [], []>} : vector<16x72xbf16>, vector<72x64xbf16>, vector<16x64xf32> -> vector<16x64xf32>
    %c0_32 = arith.constant 0 : index
    %c0_33 = arith.constant 0 : index
    %33 = vector.load %arg3[%c0_32, %c0_33] : memref<16x1xf32, #tpu.memory_space<vmem>>, vector<16x1xf32>
    %34 = vector.broadcast %33 : vector<16x1xf32> to vector<16x64xf32>
    %35 = arith.addf %32, %34 : vector<16x64xf32>
    %cst_34 = arith.constant 0.000000e+00 : f32
    %36 = vector.broadcast %cst_34 : f32 to vector<16x64xf32>
    %37 = arith.maximumf %35, %36 : vector<16x64xf32>
    %38 = arith.truncf %37 : vector<16x64xf32> to vector<16x64xbf16>
    %c0_35 = arith.constant 0 : index
    %c0_36 = arith.constant 0 : index
    %c0_37 = arith.constant 0 : index
    %39 = vector.load %arg9[%c0_35, %c0_36, %c0_37] : memref<9x64x16xbf16, #tpu.memory_space<vmem>>, vector<1x64x16xbf16>
    %40 = vector.shape_cast %39 : vector<1x64x16xbf16> to vector<64x16xbf16>
    %cst_38 = arith.constant dense<0.000000e+00> : vector<16x16xf32>
    %41 = tpu.matmul %38, %40, %cst_38 {dimension_numbers = #tpu.dot_dimension_numbers<[1], [0], [0], [1], [0, 0, 1, 1], [], []>} : vector<16x64xbf16>, vector<64x16xbf16>, vector<16x16xf32> -> vector<16x16xf32>
    %c1_39 = arith.constant 1 : index
    %c0_40 = arith.constant 0 : index
    %c0_41 = arith.constant 0 : index
    %42 = vector.load %arg9[%c1_39, %c0_40, %c0_41] : memref<9x64x16xbf16, #tpu.memory_space<vmem>>, vector<1x64x16xbf16>
    %43 = vector.shape_cast %42 : vector<1x64x16xbf16> to vector<64x16xbf16>
    %cst_42 = arith.constant dense<0.000000e+00> : vector<16x16xf32>
    %44 = tpu.matmul %38, %43, %cst_42 {dimension_numbers = #tpu.dot_dimension_numbers<[1], [0], [0], [1], [0, 0, 1, 1], [], []>} : vector<16x64xbf16>, vector<64x16xbf16>, vector<16x16xf32> -> vector<16x16xf32>
    %c2_43 = arith.constant 2 : index
    %c0_44 = arith.constant 0 : index
    %c0_45 = arith.constant 0 : index
    %45 = vector.load %arg9[%c2_43, %c0_44, %c0_45] : memref<9x64x16xbf16, #tpu.memory_space<vmem>>, vector<1x64x16xbf16>
    %46 = vector.shape_cast %45 : vector<1x64x16xbf16> to vector<64x16xbf16>
    %cst_46 = arith.constant dense<0.000000e+00> : vector<16x16xf32>
    %47 = tpu.matmul %38, %46, %cst_46 {dimension_numbers = #tpu.dot_dimension_numbers<[1], [0], [0], [1], [0, 0, 1, 1], [], []>} : vector<16x64xbf16>, vector<64x16xbf16>, vector<16x16xf32> -> vector<16x16xf32>
    %c3_47 = arith.constant 3 : index
    %c0_48 = arith.constant 0 : index
    %c0_49 = arith.constant 0 : index
    %48 = vector.load %arg9[%c3_47, %c0_48, %c0_49] : memref<9x64x16xbf16, #tpu.memory_space<vmem>>, vector<1x64x16xbf16>
    %49 = vector.shape_cast %48 : vector<1x64x16xbf16> to vector<64x16xbf16>
    %cst_50 = arith.constant dense<0.000000e+00> : vector<16x16xf32>
    %50 = tpu.matmul %38, %49, %cst_50 {dimension_numbers = #tpu.dot_dimension_numbers<[1], [0], [0], [1], [0, 0, 1, 1], [], []>} : vector<16x64xbf16>, vector<64x16xbf16>, vector<16x16xf32> -> vector<16x16xf32>
    %c4_51 = arith.constant 4 : index
    %c0_52 = arith.constant 0 : index
    %c0_53 = arith.constant 0 : index
    %51 = vector.load %arg9[%c4_51, %c0_52, %c0_53] : memref<9x64x16xbf16, #tpu.memory_space<vmem>>, vector<1x64x16xbf16>
    %52 = vector.shape_cast %51 : vector<1x64x16xbf16> to vector<64x16xbf16>
    %cst_54 = arith.constant dense<0.000000e+00> : vector<16x16xf32>
    %53 = tpu.matmul %38, %52, %cst_54 {dimension_numbers = #tpu.dot_dimension_numbers<[1], [0], [0], [1], [0, 0, 1, 1], [], []>} : vector<16x64xbf16>, vector<64x16xbf16>, vector<16x16xf32> -> vector<16x16xf32>
    %c5_55 = arith.constant 5 : index
    %c0_56 = arith.constant 0 : index
    %c0_57 = arith.constant 0 : index
    %54 = vector.load %arg9[%c5_55, %c0_56, %c0_57] : memref<9x64x16xbf16, #tpu.memory_space<vmem>>, vector<1x64x16xbf16>
    %55 = vector.shape_cast %54 : vector<1x64x16xbf16> to vector<64x16xbf16>
    %cst_58 = arith.constant dense<0.000000e+00> : vector<16x16xf32>
    %56 = tpu.matmul %38, %55, %cst_58 {dimension_numbers = #tpu.dot_dimension_numbers<[1], [0], [0], [1], [0, 0, 1, 1], [], []>} : vector<16x64xbf16>, vector<64x16xbf16>, vector<16x16xf32> -> vector<16x16xf32>
    %c6_59 = arith.constant 6 : index
    %c0_60 = arith.constant 0 : index
    %c0_61 = arith.constant 0 : index
    %57 = vector.load %arg9[%c6_59, %c0_60, %c0_61] : memref<9x64x16xbf16, #tpu.memory_space<vmem>>, vector<1x64x16xbf16>
    %58 = vector.shape_cast %57 : vector<1x64x16xbf16> to vector<64x16xbf16>
    %cst_62 = arith.constant dense<0.000000e+00> : vector<16x16xf32>
    %59 = tpu.matmul %38, %58, %cst_62 {dimension_numbers = #tpu.dot_dimension_numbers<[1], [0], [0], [1], [0, 0, 1, 1], [], []>} : vector<16x64xbf16>, vector<64x16xbf16>, vector<16x16xf32> -> vector<16x16xf32>
    %c7_63 = arith.constant 7 : index
    %c0_64 = arith.constant 0 : index
    %c0_65 = arith.constant 0 : index
    %60 = vector.load %arg9[%c7_63, %c0_64, %c0_65] : memref<9x64x16xbf16, #tpu.memory_space<vmem>>, vector<1x64x16xbf16>
    %61 = vector.shape_cast %60 : vector<1x64x16xbf16> to vector<64x16xbf16>
    %cst_66 = arith.constant dense<0.000000e+00> : vector<16x16xf32>
    %62 = tpu.matmul %38, %61, %cst_66 {dimension_numbers = #tpu.dot_dimension_numbers<[1], [0], [0], [1], [0, 0, 1, 1], [], []>} : vector<16x64xbf16>, vector<64x16xbf16>, vector<16x16xf32> -> vector<16x16xf32>
    %c8_67 = arith.constant 8 : index
    %c0_68 = arith.constant 0 : index
    %c0_69 = arith.constant 0 : index
    %63 = vector.load %arg9[%c8_67, %c0_68, %c0_69] : memref<9x64x16xbf16, #tpu.memory_space<vmem>>, vector<1x64x16xbf16>
    %64 = vector.shape_cast %63 : vector<1x64x16xbf16> to vector<64x16xbf16>
    %cst_70 = arith.constant dense<0.000000e+00> : vector<16x16xf32>
    %65 = tpu.matmul %38, %64, %cst_70 {dimension_numbers = #tpu.dot_dimension_numbers<[1], [0], [0], [1], [0, 0, 1, 1], [], []>} : vector<16x64xbf16>, vector<64x16xbf16>, vector<16x16xf32> -> vector<16x16xf32>
    %66 = tpu.concatenate %41, %44, %47, %50, %53, %56, %59, %62, %65 in 0 : vector<16x16xf32>, vector<16x16xf32>, vector<16x16xf32>, vector<16x16xf32>, vector<16x16xf32>, vector<16x16xf32>, vector<16x16xf32>, vector<16x16xf32>, vector<16x16xf32> -> vector<144x16xf32>
    %c0_71 = arith.constant 0 : index
    %c0_72 = arith.constant 0 : index
    %67 = vector.load %arg4[%c0_71, %c0_72] : memref<32x144xbf16, #tpu.memory_space<vmem>>, vector<32x144xbf16>
    %68 = arith.truncf %66 : vector<144x16xf32> to vector<144x16xbf16>
    %cst_73 = arith.constant dense<0.000000e+00> : vector<32x16xf32>
    %69 = tpu.matmul %67, %68, %cst_73 {dimension_numbers = #tpu.dot_dimension_numbers<[1], [0], [0], [1], [0, 0, 1, 1], [], []>} : vector<32x144xbf16>, vector<144x16xbf16>, vector<32x16xf32> -> vector<32x16xf32>
    %c0_74 = arith.constant 0 : index
    %c0_75 = arith.constant 0 : index
    %70 = vector.load %arg5[%c0_74, %c0_75] : memref<32x1xf32, #tpu.memory_space<vmem>>, vector<32x1xf32>
    %71 = vector.broadcast %70 : vector<32x1xf32> to vector<32x16xf32>
    %72 = arith.addf %69, %71 : vector<32x16xf32>
    %cst_76 = arith.constant 0.000000e+00 : f32
    %73 = vector.broadcast %cst_76 : f32 to vector<32x16xf32>
    %74 = arith.maximumf %72, %73 : vector<32x16xf32>
    %75 = arith.truncf %74 : vector<32x16xf32> to vector<32x16xbf16>
    %cst_77 = arith.constant dense<0.000000e+00> : vector<32xf32>
    %76 = vector.multi_reduction <add>, %74, %cst_77 [1] : vector<32x16xf32> to vector<32xf32>
    %77 = vector.shape_cast %76 : vector<32xf32> to vector<32x1xf32>
    %cst_78 = arith.constant 1.600000e+01 : f32
    %78 = vector.broadcast %cst_78 : f32 to vector<32x1xf32>
    %79 = arith.divf %77, %78 : vector<32x1xf32>
    %c0_79 = arith.constant 0 : index
    %c0_80 = arith.constant 0 : index
    %80 = vector.load %arg6[%c0_79, %c0_80] : memref<8x32xbf16, #tpu.memory_space<vmem>>, vector<8x32xbf16>
    %81 = arith.truncf %79 : vector<32x1xf32> to vector<32x1xbf16>
    %cst_81 = arith.constant dense<0.000000e+00> : vector<8x1xf32>
    %82 = tpu.matmul %80, %81, %cst_81 {dimension_numbers = #tpu.dot_dimension_numbers<[1], [0], [0], [1], [0, 0, 1, 1], [], []>} : vector<8x32xbf16>, vector<32x1xbf16>, vector<8x1xf32> -> vector<8x1xf32>
    %c0_82 = arith.constant 0 : index
    %c0_83 = arith.constant 0 : index
    %83 = vector.load %arg7[%c0_82, %c0_83] : memref<8x1xf32, #tpu.memory_space<vmem>>, vector<8x1xf32>
    %84 = arith.addf %82, %83 : vector<8x1xf32>
    %c0_84 = arith.constant 0 : index
    %c0_85 = arith.constant 0 : index
    %c0_86 = arith.constant 0 : index
    %85 = vector.load %arg10[%c0_84, %c0_85, %c0_86] : memref<1x16x64xbf16, #tpu.memory_space<vmem>>, vector<1x16x64xbf16>
    %86 = vector.shape_cast %85 : vector<1x16x64xbf16> to vector<16x64xbf16>
    %87 = vector.shape_cast %38 : vector<16x64xbf16> to vector<1x16x64xbf16>
    tpu.vector_store %arg10[%c0_84, %c0_85, %c0_86], %87 {strides = array<i32>} : memref<1x16x64xbf16, #tpu.memory_space<vmem>>, vector<1x16x64xbf16>,
    %c0_87 = arith.constant 0 : index
    %c0_88 = arith.constant 0 : index
    %c0_89 = arith.constant 0 : index
    %88 = vector.load %arg11[%c0_87, %c0_88, %c0_89] : memref<1x32x16xbf16, #tpu.memory_space<vmem>>, vector<1x32x16xbf16>
    %89 = vector.shape_cast %88 : vector<1x32x16xbf16> to vector<32x16xbf16>
    %90 = vector.shape_cast %75 : vector<32x16xbf16> to vector<1x32x16xbf16>
    tpu.vector_store %arg11[%c0_87, %c0_88, %c0_89], %90 {strides = array<i32>} : memref<1x32x16xbf16, #tpu.memory_space<vmem>>, vector<1x32x16xbf16>,
    %c0_90 = arith.constant 0 : index
    %c0_91 = arith.constant 0 : index
    %c0_92 = arith.constant 0 : index
    %91 = vector.load %arg12[%c0_90, %c0_91, %c0_92] : memref<1x8x1xf32, #tpu.memory_space<vmem>>, vector<1x8x1xf32>
    %92 = vector.shape_cast %91 : vector<1x8x1xf32> to vector<8x1xf32>
    %93 = vector.shape_cast %84 : vector<8x1xf32> to vector<1x8x1xf32>
    tpu.vector_store %arg12[%c0_90, %c0_91, %c0_92], %93 {strides = array<i32>} : memref<1x8x1xf32, #tpu.memory_space<vmem>>, vector<1x8x1xf32>,
    return
  }
  func.func @transform_0(%arg0: i32) -> (i32, i32, i32) {
    %c0_i32 = arith.constant 0 : i32
    %c0_i32_0 = arith.constant 0 : i32
    %c0_i32_1 = arith.constant 0 : i32
    return %arg0, %c0_i32, %c0_i32_0 : i32, i32, i32
  }
  func.func @transform_1(%arg0: i32) -> (i32, i32) {
    %c0_i32 = arith.constant 0 : i32
    %c0_i32_0 = arith.constant 0 : i32
    %c0_i32_1 = arith.constant 0 : i32
    return %c0_i32, %c0_i32_0 : i32, i32
  }
  func.func @transform_2(%arg0: i32) -> (i32, i32) {
    %c0_i32 = arith.constant 0 : i32
    %c0_i32_0 = arith.constant 0 : i32
    %c0_i32_1 = arith.constant 0 : i32
    return %c0_i32, %c0_i32_0 : i32, i32
  }
  func.func @transform_3(%arg0: i32) -> (i32, i32) {
    %c0_i32 = arith.constant 0 : i32
    %c0_i32_0 = arith.constant 0 : i32
    %c0_i32_1 = arith.constant 0 : i32
    return %c0_i32, %c0_i32_0 : i32, i32
  }
  func.func @transform_4(%arg0: i32) -> (i32, i32) {
    %c0_i32 = arith.constant 0 : i32
    %c0_i32_0 = arith.constant 0 : i32
    %c0_i32_1 = arith.constant 0 : i32
    return %c0_i32, %c0_i32_0 : i32, i32
  }
  func.func @transform_5(%arg0: i32) -> (i32, i32) {
    %c0_i32 = arith.constant 0 : i32
    %c0_i32_0 = arith.constant 0 : i32
    %c0_i32_1 = arith.constant 0 : i32
    return %c0_i32, %c0_i32_0 : i32, i32
  }
  func.func @transform_6(%arg0: i32) -> (i32, i32) {
    %c0_i32 = arith.constant 0 : i32
    %c0_i32_0 = arith.constant 0 : i32
    %c0_i32_1 = arith.constant 0 : i32
    return %c0_i32, %c0_i32_0 : i32, i32
  }
  func.func @transform_7(%arg0: i32) -> (i32, i32, i32) {
    %c0_i32 = arith.constant 0 : i32
    %c0_i32_0 = arith.constant 0 : i32
    %c0_i32_1 = arith.constant 0 : i32
    %c0_i32_2 = arith.constant 0 : i32
    return %c0_i32, %c0_i32_0, %c0_i32_1 : i32, i32, i32
  }
  func.func @transform_8(%arg0: i32) -> (i32, i32, i32) {
    %c0_i32 = arith.constant 0 : i32
    %c0_i32_0 = arith.constant 0 : i32
    %c0_i32_1 = arith.constant 0 : i32
    %c0_i32_2 = arith.constant 0 : i32
    return %c0_i32, %c0_i32_0, %c0_i32_1 : i32, i32, i32
  }
  func.func @transform_9(%arg0: i32) -> (i32, i32, i32) {
    %c0_i32 = arith.constant 0 : i32
    %c0_i32_0 = arith.constant 0 : i32
    %c0_i32_1 = arith.constant 0 : i32
    return %arg0, %c0_i32, %c0_i32_0 : i32, i32, i32
  }
  func.func @transform_10(%arg0: i32) -> (i32, i32, i32) {
    %c0_i32 = arith.constant 0 : i32
    %c0_i32_0 = arith.constant 0 : i32
    %c0_i32_1 = arith.constant 0 : i32
    return %arg0, %c0_i32, %c0_i32_0 : i32, i32, i32
  }
  func.func @transform_11(%arg0: i32) -> (i32, i32, i32) {
    %c0_i32 = arith.constant 0 : i32
    %c0_i32_0 = arith.constant 0 : i32
    %c0_i32_1 = arith.constant 0 : i32
    return %arg0, %c0_i32, %c0_i32_0 : i32, i32, i32
  }
}

module attributes {stable_mosaic.version = 11 : i64} {
  func.func @_generator_kernel(%arg0: i32, %arg1: memref<1x32x64xbf16, #tpu.memory_space<vmem>>, %arg2: memref<1x16x64xbf16, #tpu.memory_space<vmem>>, %arg3: memref<1x32x16xbf16, #tpu.memory_space<vmem>>, %arg4: memref<32x576xbf16, #tpu.memory_space<vmem>>, %arg5: memref<32x1xf32, #tpu.memory_space<vmem>>, %arg6: memref<16x432xbf16, #tpu.memory_space<vmem>>, %arg7: memref<16x1xf32, #tpu.memory_space<vmem>>, %arg8: memref<4x576xbf16, #tpu.memory_space<vmem>>, %arg9: memref<1x1xf32, #tpu.memory_space<vmem>>, %arg10: memref<9x64x64xbf16, #tpu.memory_space<vmem>>, %arg11: memref<9x16x64xbf16, #tpu.memory_space<vmem>>, %arg12: memref<9x64x256xbf16, #tpu.memory_space<vmem>>, %arg13: memref<9x64x256xbf16, #tpu.memory_space<vmem>>, %arg14: memref<9x64x256xbf16, #tpu.memory_space<vmem>>, %arg15: memref<1x4x256xf32, #tpu.memory_space<vmem>>) attributes {dimension_semantics = [#tpu.dimension_semantics<parallel>], iteration_bounds = array<i64: 2>, scalar_prefetch = 0 : i64, scratch_operands = 0 : i64, tpu.core_type = #tpu.core_type<tc>, window_params = [{transform_indices = @transform_0, window_bounds = array<i64: 1, 32, 64>}, {transform_indices = @transform_1, window_bounds = array<i64: 1, 16, 64>}, {transform_indices = @transform_2, window_bounds = array<i64: 1, 32, 16>}, {pipeline_mode = #tpu.pipeline_mode<synchronous>, transform_indices = @transform_3, window_bounds = array<i64: 32, 576>}, {pipeline_mode = #tpu.pipeline_mode<synchronous>, transform_indices = @transform_4, window_bounds = array<i64: 32, 1>}, {pipeline_mode = #tpu.pipeline_mode<synchronous>, transform_indices = @transform_5, window_bounds = array<i64: 16, 432>}, {pipeline_mode = #tpu.pipeline_mode<synchronous>, transform_indices = @transform_6, window_bounds = array<i64: 16, 1>}, {pipeline_mode = #tpu.pipeline_mode<synchronous>, transform_indices = @transform_7, window_bounds = array<i64: 4, 576>}, {pipeline_mode = #tpu.pipeline_mode<synchronous>, transform_indices = @transform_8, window_bounds = array<i64: 1, 1>}, {pipeline_mode = #tpu.pipeline_mode<synchronous>, transform_indices = @transform_9, window_bounds = array<i64: 9, 64, 64>}, {pipeline_mode = #tpu.pipeline_mode<synchronous>, transform_indices = @transform_10, window_bounds = array<i64: 9, 16, 64>}, {pipeline_mode = #tpu.pipeline_mode<synchronous>, transform_indices = @transform_11, window_bounds = array<i64: 9, 64, 256>}, {pipeline_mode = #tpu.pipeline_mode<synchronous>, transform_indices = @transform_12, window_bounds = array<i64: 9, 64, 256>}, {pipeline_mode = #tpu.pipeline_mode<synchronous>, transform_indices = @transform_13, window_bounds = array<i64: 9, 64, 256>}, {transform_indices = @transform_14, window_bounds = array<i64: 1, 4, 256>}]} {
    %c0 = arith.constant 0 : index
    %c0_0 = arith.constant 0 : index
    %c0_1 = arith.constant 0 : index
    %0 = vector.load %arg1[%c0, %c0_0, %c0_1] : memref<1x32x64xbf16, #tpu.memory_space<vmem>>, vector<1x32x64xbf16>
    %1 = vector.shape_cast %0 : vector<1x32x64xbf16> to vector<32x64xbf16>
    %c0_2 = arith.constant 0 : index
    %c0_3 = arith.constant 0 : index
    %c0_4 = arith.constant 0 : index
    %2 = vector.load %arg2[%c0_2, %c0_3, %c0_4] : memref<1x16x64xbf16, #tpu.memory_space<vmem>>, vector<1x16x64xbf16>
    %3 = vector.shape_cast %2 : vector<1x16x64xbf16> to vector<16x64xbf16>
    %c0_5 = arith.constant 0 : index
    %c0_6 = arith.constant 0 : index
    %c0_7 = arith.constant 0 : index
    %4 = vector.load %arg3[%c0_5, %c0_6, %c0_7] : memref<1x32x16xbf16, #tpu.memory_space<vmem>>, vector<1x32x16xbf16>
    %5 = vector.shape_cast %4 : vector<1x32x16xbf16> to vector<32x16xbf16>
    %c0_8 = arith.constant 0 : index
    %c0_9 = arith.constant 0 : index
    %c0_10 = arith.constant 0 : index
    %6 = vector.load %arg10[%c0_8, %c0_9, %c0_10] : memref<9x64x64xbf16, #tpu.memory_space<vmem>>, vector<1x64x64xbf16>
    %7 = vector.shape_cast %6 : vector<1x64x64xbf16> to vector<64x64xbf16>
    %cst = arith.constant dense<0.000000e+00> : vector<32x64xf32>
    %8 = tpu.matmul %1, %7, %cst {dimension_numbers = #tpu.dot_dimension_numbers<[1], [0], [0], [1], [0, 0, 1, 1], [], []>} : vector<32x64xbf16>, vector<64x64xbf16>, vector<32x64xf32> -> vector<32x64xf32>
    %c1 = arith.constant 1 : index
    %c0_11 = arith.constant 0 : index
    %c0_12 = arith.constant 0 : index
    %9 = vector.load %arg10[%c1, %c0_11, %c0_12] : memref<9x64x64xbf16, #tpu.memory_space<vmem>>, vector<1x64x64xbf16>
    %10 = vector.shape_cast %9 : vector<1x64x64xbf16> to vector<64x64xbf16>
    %cst_13 = arith.constant dense<0.000000e+00> : vector<32x64xf32>
    %11 = tpu.matmul %1, %10, %cst_13 {dimension_numbers = #tpu.dot_dimension_numbers<[1], [0], [0], [1], [0, 0, 1, 1], [], []>} : vector<32x64xbf16>, vector<64x64xbf16>, vector<32x64xf32> -> vector<32x64xf32>
    %c2 = arith.constant 2 : index
    %c0_14 = arith.constant 0 : index
    %c0_15 = arith.constant 0 : index
    %12 = vector.load %arg10[%c2, %c0_14, %c0_15] : memref<9x64x64xbf16, #tpu.memory_space<vmem>>, vector<1x64x64xbf16>
    %13 = vector.shape_cast %12 : vector<1x64x64xbf16> to vector<64x64xbf16>
    %cst_16 = arith.constant dense<0.000000e+00> : vector<32x64xf32>
    %14 = tpu.matmul %1, %13, %cst_16 {dimension_numbers = #tpu.dot_dimension_numbers<[1], [0], [0], [1], [0, 0, 1, 1], [], []>} : vector<32x64xbf16>, vector<64x64xbf16>, vector<32x64xf32> -> vector<32x64xf32>
    %c3 = arith.constant 3 : index
    %c0_17 = arith.constant 0 : index
    %c0_18 = arith.constant 0 : index
    %15 = vector.load %arg10[%c3, %c0_17, %c0_18] : memref<9x64x64xbf16, #tpu.memory_space<vmem>>, vector<1x64x64xbf16>
    %16 = vector.shape_cast %15 : vector<1x64x64xbf16> to vector<64x64xbf16>
    %cst_19 = arith.constant dense<0.000000e+00> : vector<32x64xf32>
    %17 = tpu.matmul %1, %16, %cst_19 {dimension_numbers = #tpu.dot_dimension_numbers<[1], [0], [0], [1], [0, 0, 1, 1], [], []>} : vector<32x64xbf16>, vector<64x64xbf16>, vector<32x64xf32> -> vector<32x64xf32>
    %c4 = arith.constant 4 : index
    %c0_20 = arith.constant 0 : index
    %c0_21 = arith.constant 0 : index
    %18 = vector.load %arg10[%c4, %c0_20, %c0_21] : memref<9x64x64xbf16, #tpu.memory_space<vmem>>, vector<1x64x64xbf16>
    %19 = vector.shape_cast %18 : vector<1x64x64xbf16> to vector<64x64xbf16>
    %cst_22 = arith.constant dense<0.000000e+00> : vector<32x64xf32>
    %20 = tpu.matmul %1, %19, %cst_22 {dimension_numbers = #tpu.dot_dimension_numbers<[1], [0], [0], [1], [0, 0, 1, 1], [], []>} : vector<32x64xbf16>, vector<64x64xbf16>, vector<32x64xf32> -> vector<32x64xf32>
    %c5 = arith.constant 5 : index
    %c0_23 = arith.constant 0 : index
    %c0_24 = arith.constant 0 : index
    %21 = vector.load %arg10[%c5, %c0_23, %c0_24] : memref<9x64x64xbf16, #tpu.memory_space<vmem>>, vector<1x64x64xbf16>
    %22 = vector.shape_cast %21 : vector<1x64x64xbf16> to vector<64x64xbf16>
    %cst_25 = arith.constant dense<0.000000e+00> : vector<32x64xf32>
    %23 = tpu.matmul %1, %22, %cst_25 {dimension_numbers = #tpu.dot_dimension_numbers<[1], [0], [0], [1], [0, 0, 1, 1], [], []>} : vector<32x64xbf16>, vector<64x64xbf16>, vector<32x64xf32> -> vector<32x64xf32>
    %c6 = arith.constant 6 : index
    %c0_26 = arith.constant 0 : index
    %c0_27 = arith.constant 0 : index
    %24 = vector.load %arg10[%c6, %c0_26, %c0_27] : memref<9x64x64xbf16, #tpu.memory_space<vmem>>, vector<1x64x64xbf16>
    %25 = vector.shape_cast %24 : vector<1x64x64xbf16> to vector<64x64xbf16>
    %cst_28 = arith.constant dense<0.000000e+00> : vector<32x64xf32>
    %26 = tpu.matmul %1, %25, %cst_28 {dimension_numbers = #tpu.dot_dimension_numbers<[1], [0], [0], [1], [0, 0, 1, 1], [], []>} : vector<32x64xbf16>, vector<64x64xbf16>, vector<32x64xf32> -> vector<32x64xf32>
    %c7 = arith.constant 7 : index
    %c0_29 = arith.constant 0 : index
    %c0_30 = arith.constant 0 : index
    %27 = vector.load %arg10[%c7, %c0_29, %c0_30] : memref<9x64x64xbf16, #tpu.memory_space<vmem>>, vector<1x64x64xbf16>
    %28 = vector.shape_cast %27 : vector<1x64x64xbf16> to vector<64x64xbf16>
    %cst_31 = arith.constant dense<0.000000e+00> : vector<32x64xf32>
    %29 = tpu.matmul %1, %28, %cst_31 {dimension_numbers = #tpu.dot_dimension_numbers<[1], [0], [0], [1], [0, 0, 1, 1], [], []>} : vector<32x64xbf16>, vector<64x64xbf16>, vector<32x64xf32> -> vector<32x64xf32>
    %c8 = arith.constant 8 : index
    %c0_32 = arith.constant 0 : index
    %c0_33 = arith.constant 0 : index
    %30 = vector.load %arg10[%c8, %c0_32, %c0_33] : memref<9x64x64xbf16, #tpu.memory_space<vmem>>, vector<1x64x64xbf16>
    %31 = vector.shape_cast %30 : vector<1x64x64xbf16> to vector<64x64xbf16>
    %cst_34 = arith.constant dense<0.000000e+00> : vector<32x64xf32>
    %32 = tpu.matmul %1, %31, %cst_34 {dimension_numbers = #tpu.dot_dimension_numbers<[1], [0], [0], [1], [0, 0, 1, 1], [], []>} : vector<32x64xbf16>, vector<64x64xbf16>, vector<32x64xf32> -> vector<32x64xf32>
    %c0_35 = arith.constant 0 : index
    %c0_36 = arith.constant 0 : index
    %c0_37 = arith.constant 0 : index
    %33 = vector.load %arg11[%c0_35, %c0_36, %c0_37] : memref<9x16x64xbf16, #tpu.memory_space<vmem>>, vector<1x16x64xbf16>
    %34 = vector.shape_cast %33 : vector<1x16x64xbf16> to vector<16x64xbf16>
    %cst_38 = arith.constant dense<0.000000e+00> : vector<32x64xf32>
    %35 = tpu.matmul %5, %34, %cst_38 {dimension_numbers = #tpu.dot_dimension_numbers<[1], [0], [0], [1], [0, 0, 1, 1], [], []>} : vector<32x16xbf16>, vector<16x64xbf16>, vector<32x64xf32> -> vector<32x64xf32>
    %c1_39 = arith.constant 1 : index
    %c0_40 = arith.constant 0 : index
    %c0_41 = arith.constant 0 : index
    %36 = vector.load %arg11[%c1_39, %c0_40, %c0_41] : memref<9x16x64xbf16, #tpu.memory_space<vmem>>, vector<1x16x64xbf16>
    %37 = vector.shape_cast %36 : vector<1x16x64xbf16> to vector<16x64xbf16>
    %cst_42 = arith.constant dense<0.000000e+00> : vector<32x64xf32>
    %38 = tpu.matmul %5, %37, %cst_42 {dimension_numbers = #tpu.dot_dimension_numbers<[1], [0], [0], [1], [0, 0, 1, 1], [], []>} : vector<32x16xbf16>, vector<16x64xbf16>, vector<32x64xf32> -> vector<32x64xf32>
    %c2_43 = arith.constant 2 : index
    %c0_44 = arith.constant 0 : index
    %c0_45 = arith.constant 0 : index
    %39 = vector.load %arg11[%c2_43, %c0_44, %c0_45] : memref<9x16x64xbf16, #tpu.memory_space<vmem>>, vector<1x16x64xbf16>
    %40 = vector.shape_cast %39 : vector<1x16x64xbf16> to vector<16x64xbf16>
    %cst_46 = arith.constant dense<0.000000e+00> : vector<32x64xf32>
    %41 = tpu.matmul %5, %40, %cst_46 {dimension_numbers = #tpu.dot_dimension_numbers<[1], [0], [0], [1], [0, 0, 1, 1], [], []>} : vector<32x16xbf16>, vector<16x64xbf16>, vector<32x64xf32> -> vector<32x64xf32>
    %c3_47 = arith.constant 3 : index
    %c0_48 = arith.constant 0 : index
    %c0_49 = arith.constant 0 : index
    %42 = vector.load %arg11[%c3_47, %c0_48, %c0_49] : memref<9x16x64xbf16, #tpu.memory_space<vmem>>, vector<1x16x64xbf16>
    %43 = vector.shape_cast %42 : vector<1x16x64xbf16> to vector<16x64xbf16>
    %cst_50 = arith.constant dense<0.000000e+00> : vector<32x64xf32>
    %44 = tpu.matmul %5, %43, %cst_50 {dimension_numbers = #tpu.dot_dimension_numbers<[1], [0], [0], [1], [0, 0, 1, 1], [], []>} : vector<32x16xbf16>, vector<16x64xbf16>, vector<32x64xf32> -> vector<32x64xf32>
    %c4_51 = arith.constant 4 : index
    %c0_52 = arith.constant 0 : index
    %c0_53 = arith.constant 0 : index
    %45 = vector.load %arg11[%c4_51, %c0_52, %c0_53] : memref<9x16x64xbf16, #tpu.memory_space<vmem>>, vector<1x16x64xbf16>
    %46 = vector.shape_cast %45 : vector<1x16x64xbf16> to vector<16x64xbf16>
    %cst_54 = arith.constant dense<0.000000e+00> : vector<32x64xf32>
    %47 = tpu.matmul %5, %46, %cst_54 {dimension_numbers = #tpu.dot_dimension_numbers<[1], [0], [0], [1], [0, 0, 1, 1], [], []>} : vector<32x16xbf16>, vector<16x64xbf16>, vector<32x64xf32> -> vector<32x64xf32>
    %c5_55 = arith.constant 5 : index
    %c0_56 = arith.constant 0 : index
    %c0_57 = arith.constant 0 : index
    %48 = vector.load %arg11[%c5_55, %c0_56, %c0_57] : memref<9x16x64xbf16, #tpu.memory_space<vmem>>, vector<1x16x64xbf16>
    %49 = vector.shape_cast %48 : vector<1x16x64xbf16> to vector<16x64xbf16>
    %cst_58 = arith.constant dense<0.000000e+00> : vector<32x64xf32>
    %50 = tpu.matmul %5, %49, %cst_58 {dimension_numbers = #tpu.dot_dimension_numbers<[1], [0], [0], [1], [0, 0, 1, 1], [], []>} : vector<32x16xbf16>, vector<16x64xbf16>, vector<32x64xf32> -> vector<32x64xf32>
    %c6_59 = arith.constant 6 : index
    %c0_60 = arith.constant 0 : index
    %c0_61 = arith.constant 0 : index
    %51 = vector.load %arg11[%c6_59, %c0_60, %c0_61] : memref<9x16x64xbf16, #tpu.memory_space<vmem>>, vector<1x16x64xbf16>
    %52 = vector.shape_cast %51 : vector<1x16x64xbf16> to vector<16x64xbf16>
    %cst_62 = arith.constant dense<0.000000e+00> : vector<32x64xf32>
    %53 = tpu.matmul %5, %52, %cst_62 {dimension_numbers = #tpu.dot_dimension_numbers<[1], [0], [0], [1], [0, 0, 1, 1], [], []>} : vector<32x16xbf16>, vector<16x64xbf16>, vector<32x64xf32> -> vector<32x64xf32>
    %c7_63 = arith.constant 7 : index
    %c0_64 = arith.constant 0 : index
    %c0_65 = arith.constant 0 : index
    %54 = vector.load %arg11[%c7_63, %c0_64, %c0_65] : memref<9x16x64xbf16, #tpu.memory_space<vmem>>, vector<1x16x64xbf16>
    %55 = vector.shape_cast %54 : vector<1x16x64xbf16> to vector<16x64xbf16>
    %cst_66 = arith.constant dense<0.000000e+00> : vector<32x64xf32>
    %56 = tpu.matmul %5, %55, %cst_66 {dimension_numbers = #tpu.dot_dimension_numbers<[1], [0], [0], [1], [0, 0, 1, 1], [], []>} : vector<32x16xbf16>, vector<16x64xbf16>, vector<32x64xf32> -> vector<32x64xf32>
    %c8_67 = arith.constant 8 : index
    %c0_68 = arith.constant 0 : index
    %c0_69 = arith.constant 0 : index
    %57 = vector.load %arg11[%c8_67, %c0_68, %c0_69] : memref<9x16x64xbf16, #tpu.memory_space<vmem>>, vector<1x16x64xbf16>
    %58 = vector.shape_cast %57 : vector<1x16x64xbf16> to vector<16x64xbf16>
    %cst_70 = arith.constant dense<0.000000e+00> : vector<32x64xf32>
    %59 = tpu.matmul %5, %58, %cst_70 {dimension_numbers = #tpu.dot_dimension_numbers<[1], [0], [0], [1], [0, 0, 1, 1], [], []>} : vector<32x16xbf16>, vector<16x64xbf16>, vector<32x64xf32> -> vector<32x64xf32>
    %60 = tpu.concatenate %8, %11, %14, %17, %20, %23, %26, %29, %32, %35, %38, %41, %44, %47, %50, %53 in 0 : vector<32x64xf32>, vector<32x64xf32>, vector<32x64xf32>, vector<32x64xf32>, vector<32x64xf32>, vector<32x64xf32>, vector<32x64xf32>, vector<32x64xf32>, vector<32x64xf32>, vector<32x64xf32>, vector<32x64xf32>, vector<32x64xf32>, vector<32x64xf32>, vector<32x64xf32>, vector<32x64xf32>, vector<32x64xf32> -> vector<512x64xf32>
    %61 = tpu.concatenate %56, %59 in 0 : vector<32x64xf32>, vector<32x64xf32> -> vector<64x64xf32>
    %62 = tpu.concatenate %60, %61 in 0 : vector<512x64xf32>, vector<64x64xf32> -> vector<576x64xf32>
    %c0_71 = arith.constant 0 : index
    %c0_72 = arith.constant 0 : index
    %63 = vector.load %arg4[%c0_71, %c0_72] : memref<32x576xbf16, #tpu.memory_space<vmem>>, vector<32x576xbf16>
    %64 = arith.truncf %62 : vector<576x64xf32> to vector<576x64xbf16>
    %cst_73 = arith.constant dense<0.000000e+00> : vector<32x64xf32>
    %65 = tpu.matmul %63, %64, %cst_73 {dimension_numbers = #tpu.dot_dimension_numbers<[1], [0], [0], [1], [0, 0, 1, 1], [], []>} : vector<32x576xbf16>, vector<576x64xbf16>, vector<32x64xf32> -> vector<32x64xf32>
    %c0_74 = arith.constant 0 : index
    %c0_75 = arith.constant 0 : index
    %66 = vector.load %arg5[%c0_74, %c0_75] : memref<32x1xf32, #tpu.memory_space<vmem>>, vector<32x1xf32>
    %67 = vector.broadcast %66 : vector<32x1xf32> to vector<32x64xf32>
    %68 = arith.addf %65, %67 : vector<32x64xf32>
    %cst_76 = arith.constant 0.000000e+00 : f32
    %69 = vector.broadcast %cst_76 : f32 to vector<32x64xf32>
    %70 = arith.maximumf %68, %69 : vector<32x64xf32>
    %71 = arith.truncf %70 : vector<32x64xf32> to vector<32x64xbf16>
    %c0_77 = arith.constant 0 : index
    %c0_78 = arith.constant 0 : index
    %c0_79 = arith.constant 0 : index
    %72 = vector.load %arg12[%c0_77, %c0_78, %c0_79] : memref<9x64x256xbf16, #tpu.memory_space<vmem>>, vector<1x64x256xbf16>
    %73 = vector.shape_cast %72 : vector<1x64x256xbf16> to vector<64x256xbf16>
    %cst_80 = arith.constant dense<0.000000e+00> : vector<32x256xf32>
    %74 = tpu.matmul %71, %73, %cst_80 {dimension_numbers = #tpu.dot_dimension_numbers<[1], [0], [0], [1], [0, 0, 1, 1], [], []>} : vector<32x64xbf16>, vector<64x256xbf16>, vector<32x256xf32> -> vector<32x256xf32>
    %c1_81 = arith.constant 1 : index
    %c0_82 = arith.constant 0 : index
    %c0_83 = arith.constant 0 : index
    %75 = vector.load %arg12[%c1_81, %c0_82, %c0_83] : memref<9x64x256xbf16, #tpu.memory_space<vmem>>, vector<1x64x256xbf16>
    %76 = vector.shape_cast %75 : vector<1x64x256xbf16> to vector<64x256xbf16>
    %cst_84 = arith.constant dense<0.000000e+00> : vector<32x256xf32>
    %77 = tpu.matmul %71, %76, %cst_84 {dimension_numbers = #tpu.dot_dimension_numbers<[1], [0], [0], [1], [0, 0, 1, 1], [], []>} : vector<32x64xbf16>, vector<64x256xbf16>, vector<32x256xf32> -> vector<32x256xf32>
    %c2_85 = arith.constant 2 : index
    %c0_86 = arith.constant 0 : index
    %c0_87 = arith.constant 0 : index
    %78 = vector.load %arg12[%c2_85, %c0_86, %c0_87] : memref<9x64x256xbf16, #tpu.memory_space<vmem>>, vector<1x64x256xbf16>
    %79 = vector.shape_cast %78 : vector<1x64x256xbf16> to vector<64x256xbf16>
    %cst_88 = arith.constant dense<0.000000e+00> : vector<32x256xf32>
    %80 = tpu.matmul %71, %79, %cst_88 {dimension_numbers = #tpu.dot_dimension_numbers<[1], [0], [0], [1], [0, 0, 1, 1], [], []>} : vector<32x64xbf16>, vector<64x256xbf16>, vector<32x256xf32> -> vector<32x256xf32>
    %c3_89 = arith.constant 3 : index
    %c0_90 = arith.constant 0 : index
    %c0_91 = arith.constant 0 : index
    %81 = vector.load %arg12[%c3_89, %c0_90, %c0_91] : memref<9x64x256xbf16, #tpu.memory_space<vmem>>, vector<1x64x256xbf16>
    %82 = vector.shape_cast %81 : vector<1x64x256xbf16> to vector<64x256xbf16>
    %cst_92 = arith.constant dense<0.000000e+00> : vector<32x256xf32>
    %83 = tpu.matmul %71, %82, %cst_92 {dimension_numbers = #tpu.dot_dimension_numbers<[1], [0], [0], [1], [0, 0, 1, 1], [], []>} : vector<32x64xbf16>, vector<64x256xbf16>, vector<32x256xf32> -> vector<32x256xf32>
    %c4_93 = arith.constant 4 : index
    %c0_94 = arith.constant 0 : index
    %c0_95 = arith.constant 0 : index
    %84 = vector.load %arg12[%c4_93, %c0_94, %c0_95] : memref<9x64x256xbf16, #tpu.memory_space<vmem>>, vector<1x64x256xbf16>
    %85 = vector.shape_cast %84 : vector<1x64x256xbf16> to vector<64x256xbf16>
    %cst_96 = arith.constant dense<0.000000e+00> : vector<32x256xf32>
    %86 = tpu.matmul %71, %85, %cst_96 {dimension_numbers = #tpu.dot_dimension_numbers<[1], [0], [0], [1], [0, 0, 1, 1], [], []>} : vector<32x64xbf16>, vector<64x256xbf16>, vector<32x256xf32> -> vector<32x256xf32>
    %c5_97 = arith.constant 5 : index
    %c0_98 = arith.constant 0 : index
    %c0_99 = arith.constant 0 : index
    %87 = vector.load %arg12[%c5_97, %c0_98, %c0_99] : memref<9x64x256xbf16, #tpu.memory_space<vmem>>, vector<1x64x256xbf16>
    %88 = vector.shape_cast %87 : vector<1x64x256xbf16> to vector<64x256xbf16>
    %cst_100 = arith.constant dense<0.000000e+00> : vector<32x256xf32>
    %89 = tpu.matmul %71, %88, %cst_100 {dimension_numbers = #tpu.dot_dimension_numbers<[1], [0], [0], [1], [0, 0, 1, 1], [], []>} : vector<32x64xbf16>, vector<64x256xbf16>, vector<32x256xf32> -> vector<32x256xf32>
    %c6_101 = arith.constant 6 : index
    %c0_102 = arith.constant 0 : index
    %c0_103 = arith.constant 0 : index
    %90 = vector.load %arg12[%c6_101, %c0_102, %c0_103] : memref<9x64x256xbf16, #tpu.memory_space<vmem>>, vector<1x64x256xbf16>
    %91 = vector.shape_cast %90 : vector<1x64x256xbf16> to vector<64x256xbf16>
    %cst_104 = arith.constant dense<0.000000e+00> : vector<32x256xf32>
    %92 = tpu.matmul %71, %91, %cst_104 {dimension_numbers = #tpu.dot_dimension_numbers<[1], [0], [0], [1], [0, 0, 1, 1], [], []>} : vector<32x64xbf16>, vector<64x256xbf16>, vector<32x256xf32> -> vector<32x256xf32>
    %c7_105 = arith.constant 7 : index
    %c0_106 = arith.constant 0 : index
    %c0_107 = arith.constant 0 : index
    %93 = vector.load %arg12[%c7_105, %c0_106, %c0_107] : memref<9x64x256xbf16, #tpu.memory_space<vmem>>, vector<1x64x256xbf16>
    %94 = vector.shape_cast %93 : vector<1x64x256xbf16> to vector<64x256xbf16>
    %cst_108 = arith.constant dense<0.000000e+00> : vector<32x256xf32>
    %95 = tpu.matmul %71, %94, %cst_108 {dimension_numbers = #tpu.dot_dimension_numbers<[1], [0], [0], [1], [0, 0, 1, 1], [], []>} : vector<32x64xbf16>, vector<64x256xbf16>, vector<32x256xf32> -> vector<32x256xf32>
    %c8_109 = arith.constant 8 : index
    %c0_110 = arith.constant 0 : index
    %c0_111 = arith.constant 0 : index
    %96 = vector.load %arg12[%c8_109, %c0_110, %c0_111] : memref<9x64x256xbf16, #tpu.memory_space<vmem>>, vector<1x64x256xbf16>
    %97 = vector.shape_cast %96 : vector<1x64x256xbf16> to vector<64x256xbf16>
    %cst_112 = arith.constant dense<0.000000e+00> : vector<32x256xf32>
    %98 = tpu.matmul %71, %97, %cst_112 {dimension_numbers = #tpu.dot_dimension_numbers<[1], [0], [0], [1], [0, 0, 1, 1], [], []>} : vector<32x64xbf16>, vector<64x256xbf16>, vector<32x256xf32> -> vector<32x256xf32>
    %c0_113 = arith.constant 0 : index
    %c0_114 = arith.constant 0 : index
    %c0_115 = arith.constant 0 : index
    %99 = vector.load %arg13[%c0_113, %c0_114, %c0_115] : memref<9x64x256xbf16, #tpu.memory_space<vmem>>, vector<1x64x256xbf16>
    %100 = vector.shape_cast %99 : vector<1x64x256xbf16> to vector<64x256xbf16>
    %cst_116 = arith.constant dense<0.000000e+00> : vector<16x256xf32>
    %101 = tpu.matmul %3, %100, %cst_116 {dimension_numbers = #tpu.dot_dimension_numbers<[1], [0], [0], [1], [0, 0, 1, 1], [], []>} : vector<16x64xbf16>, vector<64x256xbf16>, vector<16x256xf32> -> vector<16x256xf32>
    %c1_117 = arith.constant 1 : index
    %c0_118 = arith.constant 0 : index
    %c0_119 = arith.constant 0 : index
    %102 = vector.load %arg13[%c1_117, %c0_118, %c0_119] : memref<9x64x256xbf16, #tpu.memory_space<vmem>>, vector<1x64x256xbf16>
    %103 = vector.shape_cast %102 : vector<1x64x256xbf16> to vector<64x256xbf16>
    %cst_120 = arith.constant dense<0.000000e+00> : vector<16x256xf32>
    %104 = tpu.matmul %3, %103, %cst_120 {dimension_numbers = #tpu.dot_dimension_numbers<[1], [0], [0], [1], [0, 0, 1, 1], [], []>} : vector<16x64xbf16>, vector<64x256xbf16>, vector<16x256xf32> -> vector<16x256xf32>
    %c2_121 = arith.constant 2 : index
    %c0_122 = arith.constant 0 : index
    %c0_123 = arith.constant 0 : index
    %105 = vector.load %arg13[%c2_121, %c0_122, %c0_123] : memref<9x64x256xbf16, #tpu.memory_space<vmem>>, vector<1x64x256xbf16>
    %106 = vector.shape_cast %105 : vector<1x64x256xbf16> to vector<64x256xbf16>
    %cst_124 = arith.constant dense<0.000000e+00> : vector<16x256xf32>
    %107 = tpu.matmul %3, %106, %cst_124 {dimension_numbers = #tpu.dot_dimension_numbers<[1], [0], [0], [1], [0, 0, 1, 1], [], []>} : vector<16x64xbf16>, vector<64x256xbf16>, vector<16x256xf32> -> vector<16x256xf32>
    %c3_125 = arith.constant 3 : index
    %c0_126 = arith.constant 0 : index
    %c0_127 = arith.constant 0 : index
    %108 = vector.load %arg13[%c3_125, %c0_126, %c0_127] : memref<9x64x256xbf16, #tpu.memory_space<vmem>>, vector<1x64x256xbf16>
    %109 = vector.shape_cast %108 : vector<1x64x256xbf16> to vector<64x256xbf16>
    %cst_128 = arith.constant dense<0.000000e+00> : vector<16x256xf32>
    %110 = tpu.matmul %3, %109, %cst_128 {dimension_numbers = #tpu.dot_dimension_numbers<[1], [0], [0], [1], [0, 0, 1, 1], [], []>} : vector<16x64xbf16>, vector<64x256xbf16>, vector<16x256xf32> -> vector<16x256xf32>
    %c4_129 = arith.constant 4 : index
    %c0_130 = arith.constant 0 : index
    %c0_131 = arith.constant 0 : index
    %111 = vector.load %arg13[%c4_129, %c0_130, %c0_131] : memref<9x64x256xbf16, #tpu.memory_space<vmem>>, vector<1x64x256xbf16>
    %112 = vector.shape_cast %111 : vector<1x64x256xbf16> to vector<64x256xbf16>
    %cst_132 = arith.constant dense<0.000000e+00> : vector<16x256xf32>
    %113 = tpu.matmul %3, %112, %cst_132 {dimension_numbers = #tpu.dot_dimension_numbers<[1], [0], [0], [1], [0, 0, 1, 1], [], []>} : vector<16x64xbf16>, vector<64x256xbf16>, vector<16x256xf32> -> vector<16x256xf32>
    %c5_133 = arith.constant 5 : index
    %c0_134 = arith.constant 0 : index
    %c0_135 = arith.constant 0 : index
    %114 = vector.load %arg13[%c5_133, %c0_134, %c0_135] : memref<9x64x256xbf16, #tpu.memory_space<vmem>>, vector<1x64x256xbf16>
    %115 = vector.shape_cast %114 : vector<1x64x256xbf16> to vector<64x256xbf16>
    %cst_136 = arith.constant dense<0.000000e+00> : vector<16x256xf32>
    %116 = tpu.matmul %3, %115, %cst_136 {dimension_numbers = #tpu.dot_dimension_numbers<[1], [0], [0], [1], [0, 0, 1, 1], [], []>} : vector<16x64xbf16>, vector<64x256xbf16>, vector<16x256xf32> -> vector<16x256xf32>
    %c6_137 = arith.constant 6 : index
    %c0_138 = arith.constant 0 : index
    %c0_139 = arith.constant 0 : index
    %117 = vector.load %arg13[%c6_137, %c0_138, %c0_139] : memref<9x64x256xbf16, #tpu.memory_space<vmem>>, vector<1x64x256xbf16>
    %118 = vector.shape_cast %117 : vector<1x64x256xbf16> to vector<64x256xbf16>
    %cst_140 = arith.constant dense<0.000000e+00> : vector<16x256xf32>
    %119 = tpu.matmul %3, %118, %cst_140 {dimension_numbers = #tpu.dot_dimension_numbers<[1], [0], [0], [1], [0, 0, 1, 1], [], []>} : vector<16x64xbf16>, vector<64x256xbf16>, vector<16x256xf32> -> vector<16x256xf32>
    %c7_141 = arith.constant 7 : index
    %c0_142 = arith.constant 0 : index
    %c0_143 = arith.constant 0 : index
    %120 = vector.load %arg13[%c7_141, %c0_142, %c0_143] : memref<9x64x256xbf16, #tpu.memory_space<vmem>>, vector<1x64x256xbf16>
    %121 = vector.shape_cast %120 : vector<1x64x256xbf16> to vector<64x256xbf16>
    %cst_144 = arith.constant dense<0.000000e+00> : vector<16x256xf32>
    %122 = tpu.matmul %3, %121, %cst_144 {dimension_numbers = #tpu.dot_dimension_numbers<[1], [0], [0], [1], [0, 0, 1, 1], [], []>} : vector<16x64xbf16>, vector<64x256xbf16>, vector<16x256xf32> -> vector<16x256xf32>
    %c8_145 = arith.constant 8 : index
    %c0_146 = arith.constant 0 : index
    %c0_147 = arith.constant 0 : index
    %123 = vector.load %arg13[%c8_145, %c0_146, %c0_147] : memref<9x64x256xbf16, #tpu.memory_space<vmem>>, vector<1x64x256xbf16>
    %124 = vector.shape_cast %123 : vector<1x64x256xbf16> to vector<64x256xbf16>
    %cst_148 = arith.constant dense<0.000000e+00> : vector<16x256xf32>
    %125 = tpu.matmul %3, %124, %cst_148 {dimension_numbers = #tpu.dot_dimension_numbers<[1], [0], [0], [1], [0, 0, 1, 1], [], []>} : vector<16x64xbf16>, vector<64x256xbf16>, vector<16x256xf32> -> vector<16x256xf32>
    %126 = tpu.concatenate %74, %77, %80, %83, %86, %89, %92, %95, %98, %101, %104, %107, %110, %113, %116, %119 in 0 : vector<32x256xf32>, vector<32x256xf32>, vector<32x256xf32>, vector<32x256xf32>, vector<32x256xf32>, vector<32x256xf32>, vector<32x256xf32>, vector<32x256xf32>, vector<32x256xf32>, vector<16x256xf32>, vector<16x256xf32>, vector<16x256xf32>, vector<16x256xf32>, vector<16x256xf32>, vector<16x256xf32>, vector<16x256xf32> -> vector<400x256xf32>
    %127 = tpu.concatenate %122, %125 in 0 : vector<16x256xf32>, vector<16x256xf32> -> vector<32x256xf32>
    %128 = tpu.concatenate %126, %127 in 0 : vector<400x256xf32>, vector<32x256xf32> -> vector<432x256xf32>
    %c0_149 = arith.constant 0 : index
    %c0_150 = arith.constant 0 : index
    %129 = vector.load %arg6[%c0_149, %c0_150] : memref<16x432xbf16, #tpu.memory_space<vmem>>, vector<16x432xbf16>
    %130 = arith.truncf %128 : vector<432x256xf32> to vector<432x256xbf16>
    %cst_151 = arith.constant dense<0.000000e+00> : vector<16x256xf32>
    %131 = tpu.matmul %129, %130, %cst_151 {dimension_numbers = #tpu.dot_dimension_numbers<[1], [0], [0], [1], [0, 0, 1, 1], [], []>} : vector<16x432xbf16>, vector<432x256xbf16>, vector<16x256xf32> -> vector<16x256xf32>
    %c0_152 = arith.constant 0 : index
    %c0_153 = arith.constant 0 : index
    %132 = vector.load %arg7[%c0_152, %c0_153] : memref<16x1xf32, #tpu.memory_space<vmem>>, vector<16x1xf32>
    %133 = vector.broadcast %132 : vector<16x1xf32> to vector<16x256xf32>
    %134 = arith.addf %131, %133 : vector<16x256xf32>
    %cst_154 = arith.constant 0.000000e+00 : f32
    %135 = vector.broadcast %cst_154 : f32 to vector<16x256xf32>
    %136 = arith.maximumf %134, %135 : vector<16x256xf32>
    %137 = arith.truncf %136 : vector<16x256xf32> to vector<16x256xbf16>
    %138 = vector.extract_strided_slice %137 {offsets = [0, 0], sizes = [16, 64], strides = [1, 1]} : vector<16x256xbf16> to vector<16x64xbf16>
    %139 = vector.extract_strided_slice %137 {offsets = [0, 64], sizes = [16, 64], strides = [1, 1]} : vector<16x256xbf16> to vector<16x64xbf16>
    %140 = vector.extract_strided_slice %137 {offsets = [0, 128], sizes = [16, 64], strides = [1, 1]} : vector<16x256xbf16> to vector<16x64xbf16>
    %141 = vector.extract_strided_slice %137 {offsets = [0, 192], sizes = [16, 64], strides = [1, 1]} : vector<16x256xbf16> to vector<16x64xbf16>
    %142 = tpu.concatenate %138, %139, %140, %141 in 0 : vector<16x64xbf16>, vector<16x64xbf16>, vector<16x64xbf16>, vector<16x64xbf16> -> vector<64x64xbf16>
    %c0_155 = arith.constant 0 : index
    %c0_156 = arith.constant 0 : index
    %c0_157 = arith.constant 0 : index
    %143 = vector.load %arg14[%c0_155, %c0_156, %c0_157] : memref<9x64x256xbf16, #tpu.memory_space<vmem>>, vector<1x64x256xbf16>
    %144 = vector.shape_cast %143 : vector<1x64x256xbf16> to vector<64x256xbf16>
    %cst_158 = arith.constant dense<0.000000e+00> : vector<64x256xf32>
    %145 = tpu.matmul %142, %144, %cst_158 {dimension_numbers = #tpu.dot_dimension_numbers<[1], [0], [0], [1], [0, 0, 1, 1], [], []>} : vector<64x64xbf16>, vector<64x256xbf16>, vector<64x256xf32> -> vector<64x256xf32>
    %c1_159 = arith.constant 1 : index
    %c0_160 = arith.constant 0 : index
    %c0_161 = arith.constant 0 : index
    %146 = vector.load %arg14[%c1_159, %c0_160, %c0_161] : memref<9x64x256xbf16, #tpu.memory_space<vmem>>, vector<1x64x256xbf16>
    %147 = vector.shape_cast %146 : vector<1x64x256xbf16> to vector<64x256xbf16>
    %cst_162 = arith.constant dense<0.000000e+00> : vector<64x256xf32>
    %148 = tpu.matmul %142, %147, %cst_162 {dimension_numbers = #tpu.dot_dimension_numbers<[1], [0], [0], [1], [0, 0, 1, 1], [], []>} : vector<64x64xbf16>, vector<64x256xbf16>, vector<64x256xf32> -> vector<64x256xf32>
    %c2_163 = arith.constant 2 : index
    %c0_164 = arith.constant 0 : index
    %c0_165 = arith.constant 0 : index
    %149 = vector.load %arg14[%c2_163, %c0_164, %c0_165] : memref<9x64x256xbf16, #tpu.memory_space<vmem>>, vector<1x64x256xbf16>
    %150 = vector.shape_cast %149 : vector<1x64x256xbf16> to vector<64x256xbf16>
    %cst_166 = arith.constant dense<0.000000e+00> : vector<64x256xf32>
    %151 = tpu.matmul %142, %150, %cst_166 {dimension_numbers = #tpu.dot_dimension_numbers<[1], [0], [0], [1], [0, 0, 1, 1], [], []>} : vector<64x64xbf16>, vector<64x256xbf16>, vector<64x256xf32> -> vector<64x256xf32>
    %c3_167 = arith.constant 3 : index
    %c0_168 = arith.constant 0 : index
    %c0_169 = arith.constant 0 : index
    %152 = vector.load %arg14[%c3_167, %c0_168, %c0_169] : memref<9x64x256xbf16, #tpu.memory_space<vmem>>, vector<1x64x256xbf16>
    %153 = vector.shape_cast %152 : vector<1x64x256xbf16> to vector<64x256xbf16>
    %cst_170 = arith.constant dense<0.000000e+00> : vector<64x256xf32>
    %154 = tpu.matmul %142, %153, %cst_170 {dimension_numbers = #tpu.dot_dimension_numbers<[1], [0], [0], [1], [0, 0, 1, 1], [], []>} : vector<64x64xbf16>, vector<64x256xbf16>, vector<64x256xf32> -> vector<64x256xf32>
    %c4_171 = arith.constant 4 : index
    %c0_172 = arith.constant 0 : index
    %c0_173 = arith.constant 0 : index
    %155 = vector.load %arg14[%c4_171, %c0_172, %c0_173] : memref<9x64x256xbf16, #tpu.memory_space<vmem>>, vector<1x64x256xbf16>
    %156 = vector.shape_cast %155 : vector<1x64x256xbf16> to vector<64x256xbf16>
    %cst_174 = arith.constant dense<0.000000e+00> : vector<64x256xf32>
    %157 = tpu.matmul %142, %156, %cst_174 {dimension_numbers = #tpu.dot_dimension_numbers<[1], [0], [0], [1], [0, 0, 1, 1], [], []>} : vector<64x64xbf16>, vector<64x256xbf16>, vector<64x256xf32> -> vector<64x256xf32>
    %c5_175 = arith.constant 5 : index
    %c0_176 = arith.constant 0 : index
    %c0_177 = arith.constant 0 : index
    %158 = vector.load %arg14[%c5_175, %c0_176, %c0_177] : memref<9x64x256xbf16, #tpu.memory_space<vmem>>, vector<1x64x256xbf16>
    %159 = vector.shape_cast %158 : vector<1x64x256xbf16> to vector<64x256xbf16>
    %cst_178 = arith.constant dense<0.000000e+00> : vector<64x256xf32>
    %160 = tpu.matmul %142, %159, %cst_178 {dimension_numbers = #tpu.dot_dimension_numbers<[1], [0], [0], [1], [0, 0, 1, 1], [], []>} : vector<64x64xbf16>, vector<64x256xbf16>, vector<64x256xf32> -> vector<64x256xf32>
    %c6_179 = arith.constant 6 : index
    %c0_180 = arith.constant 0 : index
    %c0_181 = arith.constant 0 : index
    %161 = vector.load %arg14[%c6_179, %c0_180, %c0_181] : memref<9x64x256xbf16, #tpu.memory_space<vmem>>, vector<1x64x256xbf16>
    %162 = vector.shape_cast %161 : vector<1x64x256xbf16> to vector<64x256xbf16>
    %cst_182 = arith.constant dense<0.000000e+00> : vector<64x256xf32>
    %163 = tpu.matmul %142, %162, %cst_182 {dimension_numbers = #tpu.dot_dimension_numbers<[1], [0], [0], [1], [0, 0, 1, 1], [], []>} : vector<64x64xbf16>, vector<64x256xbf16>, vector<64x256xf32> -> vector<64x256xf32>
    %c7_183 = arith.constant 7 : index
    %c0_184 = arith.constant 0 : index
    %c0_185 = arith.constant 0 : index
    %164 = vector.load %arg14[%c7_183, %c0_184, %c0_185] : memref<9x64x256xbf16, #tpu.memory_space<vmem>>, vector<1x64x256xbf16>
    %165 = vector.shape_cast %164 : vector<1x64x256xbf16> to vector<64x256xbf16>
    %cst_186 = arith.constant dense<0.000000e+00> : vector<64x256xf32>
    %166 = tpu.matmul %142, %165, %cst_186 {dimension_numbers = #tpu.dot_dimension_numbers<[1], [0], [0], [1], [0, 0, 1, 1], [], []>} : vector<64x64xbf16>, vector<64x256xbf16>, vector<64x256xf32> -> vector<64x256xf32>
    %c8_187 = arith.constant 8 : index
    %c0_188 = arith.constant 0 : index
    %c0_189 = arith.constant 0 : index
    %167 = vector.load %arg14[%c8_187, %c0_188, %c0_189] : memref<9x64x256xbf16, #tpu.memory_space<vmem>>, vector<1x64x256xbf16>
    %168 = vector.shape_cast %167 : vector<1x64x256xbf16> to vector<64x256xbf16>
    %cst_190 = arith.constant dense<0.000000e+00> : vector<64x256xf32>
    %169 = tpu.matmul %142, %168, %cst_190 {dimension_numbers = #tpu.dot_dimension_numbers<[1], [0], [0], [1], [0, 0, 1, 1], [], []>} : vector<64x64xbf16>, vector<64x256xbf16>, vector<64x256xf32> -> vector<64x256xf32>
    %170 = tpu.concatenate %145, %148, %151, %154, %157, %160, %163, %166, %169 in 0 : vector<64x256xf32>, vector<64x256xf32>, vector<64x256xf32>, vector<64x256xf32>, vector<64x256xf32>, vector<64x256xf32>, vector<64x256xf32>, vector<64x256xf32>, vector<64x256xf32> -> vector<576x256xf32>
    %c0_191 = arith.constant 0 : index
    %c0_192 = arith.constant 0 : index
    %171 = vector.load %arg8[%c0_191, %c0_192] : memref<4x576xbf16, #tpu.memory_space<vmem>>, vector<4x576xbf16>
    %172 = arith.truncf %170 : vector<576x256xf32> to vector<576x256xbf16>
    %cst_193 = arith.constant dense<0.000000e+00> : vector<4x256xf32>
    %173 = tpu.matmul %171, %172, %cst_193 {dimension_numbers = #tpu.dot_dimension_numbers<[1], [0], [0], [1], [0, 0, 1, 1], [], []>} : vector<4x576xbf16>, vector<576x256xbf16>, vector<4x256xf32> -> vector<4x256xf32>
    %c0_194 = arith.constant 0 : index
    %c0_195 = arith.constant 0 : index
    %174 = vector.load %arg9[%c0_194, %c0_195] : memref<1x1xf32, #tpu.memory_space<vmem>>, vector<1x1xf32>
    %175 = vector.broadcast %174 : vector<1x1xf32> to vector<4x256xf32>
    %176 = arith.addf %173, %175 : vector<4x256xf32>
    %177 = math.tanh %176 : vector<4x256xf32>
    %c0_196 = arith.constant 0 : index
    %c0_197 = arith.constant 0 : index
    %c0_198 = arith.constant 0 : index
    %178 = vector.load %arg15[%c0_196, %c0_197, %c0_198] : memref<1x4x256xf32, #tpu.memory_space<vmem>>, vector<1x4x256xf32>
    %179 = vector.shape_cast %178 : vector<1x4x256xf32> to vector<4x256xf32>
    %180 = vector.shape_cast %177 : vector<4x256xf32> to vector<1x4x256xf32>
    tpu.vector_store %arg15[%c0_196, %c0_197, %c0_198], %180 {strides = array<i32>} : memref<1x4x256xf32, #tpu.memory_space<vmem>>, vector<1x4x256xf32>,
    return
  }
  func.func @transform_0(%arg0: i32) -> (i32, i32, i32) {
    %c0_i32 = arith.constant 0 : i32
    %c0_i32_0 = arith.constant 0 : i32
    %c0_i32_1 = arith.constant 0 : i32
    return %arg0, %c0_i32, %c0_i32_0 : i32, i32, i32
  }
  func.func @transform_1(%arg0: i32) -> (i32, i32, i32) {
    %c0_i32 = arith.constant 0 : i32
    %c0_i32_0 = arith.constant 0 : i32
    %c0_i32_1 = arith.constant 0 : i32
    return %arg0, %c0_i32, %c0_i32_0 : i32, i32, i32
  }
  func.func @transform_2(%arg0: i32) -> (i32, i32, i32) {
    %c0_i32 = arith.constant 0 : i32
    %c0_i32_0 = arith.constant 0 : i32
    %c0_i32_1 = arith.constant 0 : i32
    return %arg0, %c0_i32, %c0_i32_0 : i32, i32, i32
  }
  func.func @transform_3(%arg0: i32) -> (i32, i32) {
    %c0_i32 = arith.constant 0 : i32
    %c0_i32_0 = arith.constant 0 : i32
    %c0_i32_1 = arith.constant 0 : i32
    return %c0_i32, %c0_i32_0 : i32, i32
  }
  func.func @transform_4(%arg0: i32) -> (i32, i32) {
    %c0_i32 = arith.constant 0 : i32
    %c0_i32_0 = arith.constant 0 : i32
    %c0_i32_1 = arith.constant 0 : i32
    return %c0_i32, %c0_i32_0 : i32, i32
  }
  func.func @transform_5(%arg0: i32) -> (i32, i32) {
    %c0_i32 = arith.constant 0 : i32
    %c0_i32_0 = arith.constant 0 : i32
    %c0_i32_1 = arith.constant 0 : i32
    return %c0_i32, %c0_i32_0 : i32, i32
  }
  func.func @transform_6(%arg0: i32) -> (i32, i32) {
    %c0_i32 = arith.constant 0 : i32
    %c0_i32_0 = arith.constant 0 : i32
    %c0_i32_1 = arith.constant 0 : i32
    return %c0_i32, %c0_i32_0 : i32, i32
  }
  func.func @transform_7(%arg0: i32) -> (i32, i32) {
    %c0_i32 = arith.constant 0 : i32
    %c0_i32_0 = arith.constant 0 : i32
    %c0_i32_1 = arith.constant 0 : i32
    return %c0_i32, %c0_i32_0 : i32, i32
  }
  func.func @transform_8(%arg0: i32) -> (i32, i32) {
    %c0_i32 = arith.constant 0 : i32
    %c0_i32_0 = arith.constant 0 : i32
    %c0_i32_1 = arith.constant 0 : i32
    return %c0_i32, %c0_i32_0 : i32, i32
  }
  func.func @transform_9(%arg0: i32) -> (i32, i32, i32) {
    %c0_i32 = arith.constant 0 : i32
    %c0_i32_0 = arith.constant 0 : i32
    %c0_i32_1 = arith.constant 0 : i32
    %c0_i32_2 = arith.constant 0 : i32
    return %c0_i32, %c0_i32_0, %c0_i32_1 : i32, i32, i32
  }
  func.func @transform_10(%arg0: i32) -> (i32, i32, i32) {
    %c0_i32 = arith.constant 0 : i32
    %c0_i32_0 = arith.constant 0 : i32
    %c0_i32_1 = arith.constant 0 : i32
    %c0_i32_2 = arith.constant 0 : i32
    return %c0_i32, %c0_i32_0, %c0_i32_1 : i32, i32, i32
  }
  func.func @transform_11(%arg0: i32) -> (i32, i32, i32) {
    %c0_i32 = arith.constant 0 : i32
    %c0_i32_0 = arith.constant 0 : i32
    %c0_i32_1 = arith.constant 0 : i32
    %c0_i32_2 = arith.constant 0 : i32
    return %c0_i32, %c0_i32_0, %c0_i32_1 : i32, i32, i32
  }
  func.func @transform_12(%arg0: i32) -> (i32, i32, i32) {
    %c0_i32 = arith.constant 0 : i32
    %c0_i32_0 = arith.constant 0 : i32
    %c0_i32_1 = arith.constant 0 : i32
    %c0_i32_2 = arith.constant 0 : i32
    return %c0_i32, %c0_i32_0, %c0_i32_1 : i32, i32, i32
  }
  func.func @transform_13(%arg0: i32) -> (i32, i32, i32) {
    %c0_i32 = arith.constant 0 : i32
    %c0_i32_0 = arith.constant 0 : i32
    %c0_i32_1 = arith.constant 0 : i32
    %c0_i32_2 = arith.constant 0 : i32
    return %c0_i32, %c0_i32_0, %c0_i32_1 : i32, i32, i32
  }
  func.func @transform_14(%arg0: i32) -> (i32, i32, i32) {
    %c0_i32 = arith.constant 0 : i32
    %c0_i32_0 = arith.constant 0 : i32
    %c0_i32_1 = arith.constant 0 : i32
    return %arg0, %c0_i32, %c0_i32_0 : i32, i32, i32
  }
}

</mosaic_0001>

<llo_original>
// kernel: divco_plgan_forward.4
$region0: #{divco_plgan_forward.4}
  #allocation0 [shape = 'u32[]', space=smem, size = 0x4, offset = 0x4, fixed_abs, tag = 'smem constant byte address 0x4 - core index']
  #allocation1 [shape = 'u32[72,128]{1,0:T(1,128)}', space=vmem, size = 0x9000, scoped, tag = 'internal scratch']
  %s0 = inlined_call_operand.vmem [shape: bf16[2,8,256], index: 0, kind: input, shape index: {}]
  %s1 = inlined_call_operand.vmem [shape: bf16[16,72], index: 1, kind: input, shape index: {}]
  %s2 = inlined_call_operand.vmem [shape: f32[16,1], index: 2, kind: input, shape index: {}]
  %s3 = inlined_call_operand.vmem [shape: bf16[32,144], index: 3, kind: input, shape index: {}]
  %s4 = inlined_call_operand.vmem [shape: f32[32,1], index: 4, kind: input, shape index: {}]
  %s5 = inlined_call_operand.vmem [shape: bf16[8,32], index: 5, kind: input, shape index: {}]
  %s6 = inlined_call_operand.vmem [shape: f32[8,1], index: 6, kind: input, shape index: {}]
  %s7 = inlined_call_operand.vmem [shape: bf16[9,256,64], index: 7, kind: input, shape index: {}]
  %s8 = inlined_call_operand.vmem [shape: bf16[9,64,16], index: 8, kind: input, shape index: {}]
  %s9 = inlined_call_operand.vmem [shape: bf16[2,16,64], index: 9, kind: output, shape index: {0}]
  %s10 = inlined_call_operand.vmem [shape: bf16[2,32,16], index: 10, kind: output, shape index: {1}]
  %s11 = inlined_call_operand.vmem [shape: f32[2,8,1], index: 11, kind: output, shape index: {2}]
  %12 = xla_tuple %s9, %s10, %s11
  %s13 = sld [smem:[#allocation0]]
  $region85: #{divco_plgan_forward.4} parent=0
    _
  %s15 = ssub.s32 1, %s13
  %s16 = scalar_select 0, %s15, %s13
  loop: start=0, step=1, limit=4
  $region2: #{divco_plgan_forward.4} parent=0 // loop_pre_header
    _
  $region3: #{divco_plgan_forward.4} parent=0 // loop_header
    %s18 = sphi 0, %s22
    %p19 = scmp.ge.s32.totalorder %s18, 4
    %s28 = sphi 0, %s30
    %s31 = sphi 0, %s28
    %s32 = sphi 0, %s31
    %s48 = sphi 0, %s32
    %s52 = sphi 0, %s52
    %s54 = sphi 0, %s52
    %s55 = sphi 0, %s54
    %s69 = sphi 0, %s55
    %s73 = sphi 0, %s73
    %s75 = sphi 0, %s73
    %s76 = sphi 0, %s75
    %s90 = sphi 0, %s76
    %s94 = sphi 0, %s94
    %s96 = sphi 0, %s94
    %s97 = sphi 0, %s96
    %s111 = sphi 0, %s97
    %s115 = sphi 0, %s115
    %s117 = sphi 0, %s115
    %s118 = sphi 0, %s117
    %s132 = sphi 0, %s118
    %s136 = sphi 0, %s136
    %s138 = sphi 0, %s136
    %s139 = sphi 0, %s138
    %s153 = sphi 0, %s139
    %s157 = sphi 0, %s157
    %s159 = sphi 0, %s157
    %s160 = sphi 0, %s159
    %s174 = sphi 0, %s160
    %s178 = sphi 0, %s178
    %s180 = sphi 0, %s178
    %s181 = sphi 0, %s180
    %s195 = sphi 0, %s181
    %s199 = sphi 0, %s199
    %s201 = sphi 0, %s199
    %s202 = sphi 0, %s201
    %s216 = sphi 0, %s202
    %s222 = sphi 0, %s224
    %s225 = sphi 0, %s222
    %s226 = sphi 0, %s225
    %s242 = sphi 0, %s226
    %s248 = sphi 0, %s250
    %s251 = sphi 0, %s248
    %s252 = sphi 0, %s251
    %s268 = sphi 0, %s252
    %s274 = sphi 0, %s276
    %s277 = sphi 0, %s274
    %s278 = sphi 0, %s277
    %s294 = sphi 0, %s278
  $region4: #{divco_plgan_forward.4} parent=0 // loop_header_branch
    %21 = sbr.rel (%p19) target = $region8
  $region5: #{divco_plgan_forward.4} parent=0 // loop_body
    %s23 = ssub.s32 %s18, 1
    %s24 = ssub.s32 %s18, 2
    %s25 = sadd.s32 %s18, 1
    %s26 = ssub.s32 %s18, %s25
    %p27 = scmp.eq.s32.totalorder %s26, 0
    %s29 = sadd.s32 %s28, 1
    %s30 = scalar_select %p27, %s28, %s29
    %p33 = pneg %p27
    %p34 = scmp.eq.s32.totalorder %s18, 1
    %p35 = por %p33, %p34
    %p36 = scmp.ne.s32.totalorder %s28, %s31
    %p37 = scmp.eq.s32.totalorder %s18, 0
    %p38 = por %p36, %p37
    %p39 = scmp.ne.s32.totalorder %s28, %s31
    %p40 = scmp.eq.s32.totalorder %s23, 1
    %p41 = por %p39, %p40
    %p42 = scmp.ne.s32.totalorder %s31, %s32
    %p43 = scmp.eq.s32.totalorder %s23, 0
    %p44 = por %p42, %p43
    %p45 = scmp.ne.s32.totalorder %s31, %s32
    %p46 = scmp.eq.s32.totalorder %s24, 1
    %p47 = por %p45, %p46
    %p49 = scmp.ne.s32.totalorder %s32, %s48
    %p50 = scmp.eq.s32.totalorder %s24, 0
    %p51 = por %p49, %p50
    %s53 = sadd.s32 %s52, 1
    %p56 = scmp.eq.s32.totalorder %s18, 1
    %p57 = scmp.ne.s32.totalorder %s52, %s54
    %p58 = scmp.eq.s32.totalorder %s18, 0
    %p59 = por %p57, %p58
    %p60 = scmp.ne.s32.totalorder %s52, %s54
    %p61 = scmp.eq.s32.totalorder %s23, 1
    %p62 = por %p60, %p61
    %p63 = scmp.ne.s32.totalorder %s54, %s55
    %p64 = scmp.eq.s32.totalorder %s23, 0
    %p65 = por %p63, %p64
    %p66 = scmp.ne.s32.totalorder %s54, %s55
    %p67 = scmp.eq.s32.totalorder %s24, 1
    %p68 = por %p66, %p67
    %p70 = scmp.ne.s32.totalorder %s55, %s69
    %p71 = scmp.eq.s32.totalorder %s24, 0
    %p72 = por %p70, %p71
    %s74 = sadd.s32 %s73, 1
    %p77 = scmp.eq.s32.totalorder %s18, 1
    %p78 = scmp.ne.s32.totalorder %s73, %s75
    %p79 = scmp.eq.s32.totalorder %s18, 0
    %p80 = por %p78, %p79
    %p81 = scmp.ne.s32.totalorder %s73, %s75
    %p82 = scmp.eq.s32.totalorder %s23, 1
    %p83 = por %p81, %p82
    %p84 = scmp.ne.s32.totalorder %s75, %s76
    %p85 = scmp.eq.s32.totalorder %s23, 0
    %p86 = por %p84, %p85
    %p87 = scmp.ne.s32.totalorder %s75, %s76
    %p88 = scmp.eq.s32.totalorder %s24, 1
    %p89 = por %p87, %p88
    %p91 = scmp.ne.s32.totalorder %s76, %s90
    %p92 = scmp.eq.s32.totalorder %s24, 0
    %p93 = por %p91, %p92
    %s95 = sadd.s32 %s94, 1
    %p98 = scmp.eq.s32.totalorder %s18, 1
    %p99 = scmp.ne.s32.totalorder %s94, %s96
    %p100 = scmp.eq.s32.totalorder %s18, 0
    %p101 = por %p99, %p100
    %p102 = scmp.ne.s32.totalorder %s94, %s96
    %p103 = scmp.eq.s32.totalorder %s23, 1
    %p104 = por %p102, %p103
    %p105 = scmp.ne.s32.totalorder %s96, %s97
    %p106 = scmp.eq.s32.totalorder %s23, 0
    %p107 = por %p105, %p106
    %p108 = scmp.ne.s32.totalorder %s96, %s97
    %p109 = scmp.eq.s32.totalorder %s24, 1
    %p110 = por %p108, %p109
    %p112 = scmp.ne.s32.totalorder %s97, %s111
    %p113 = scmp.eq.s32.totalorder %s24, 0
    %p114 = por %p112, %p113
    %s116 = sadd.s32 %s115, 1
    %p119 = scmp.eq.s32.totalorder %s18, 1
    %p120 = scmp.ne.s32.totalorder %s115, %s117
    %p121 = scmp.eq.s32.totalorder %s18, 0
    %p122 = por %p120, %p121
    %p123 = scmp.ne.s32.totalorder %s115, %s117
    %p124 = scmp.eq.s32.totalorder %s23, 1
    %p125 = por %p123, %p124
    %p126 = scmp.ne.s32.totalorder %s117, %s118
    %p127 = scmp.eq.s32.totalorder %s23, 0
    %p128 = por %p126, %p127
    %p129 = scmp.ne.s32.totalorder %s117, %s118
    %p130 = scmp.eq.s32.totalorder %s24, 1
    %p131 = por %p129, %p130
    %p133 = scmp.ne.s32.totalorder %s118, %s132
    %p134 = scmp.eq.s32.totalorder %s24, 0
    %p135 = por %p133, %p134
    %s137 = sadd.s32 %s136, 1
    %p140 = scmp.eq.s32.totalorder %s18, 1
    %p141 = scmp.ne.s32.totalorder %s136, %s138
    %p142 = scmp.eq.s32.totalorder %s18, 0
    %p143 = por %p141, %p142
    %p144 = scmp.ne.s32.totalorder %s136, %s138
    %p145 = scmp.eq.s32.totalorder %s23, 1
    %p146 = por %p144, %p145
    %p147 = scmp.ne.s32.totalorder %s138, %s139
    %p148 = scmp.eq.s32.totalorder %s23, 0
    %p149 = por %p147, %p148
    %p150 = scmp.ne.s32.totalorder %s138, %s139
    %p151 = scmp.eq.s32.totalorder %s24, 1
    %p152 = por %p150, %p151
    %p154 = scmp.ne.s32.totalorder %s139, %s153
    %p155 = scmp.eq.s32.totalorder %s24, 0
    %p156 = por %p154, %p155
    %s158 = sadd.s32 %s157, 1
    %p161 = scmp.eq.s32.totalorder %s18, 1
    %p162 = scmp.ne.s32.totalorder %s157, %s159
    %p163 = scmp.eq.s32.totalorder %s18, 0
    %p164 = por %p162, %p163
    %p165 = scmp.ne.s32.totalorder %s157, %s159
    %p166 = scmp.eq.s32.totalorder %s23, 1
    %p167 = por %p165, %p166
    %p168 = scmp.ne.s32.totalorder %s159, %s160
    %p169 = scmp.eq.s32.totalorder %s23, 0
    %p170 = por %p168, %p169
    %p171 = scmp.ne.s32.totalorder %s159, %s160
    %p172 = scmp.eq.s32.totalorder %s24, 1
    %p173 = por %p171, %p172
    %p175 = scmp.ne.s32.totalorder %s160, %s174
    %p176 = scmp.eq.s32.totalorder %s24, 0
    %p177 = por %p175, %p176
    %s179 = sadd.s32 %s178, 1
    %p182 = scmp.eq.s32.totalorder %s18, 1
    %p183 = scmp.ne.s32.totalorder %s178, %s180
    %p184 = scmp.eq.s32.totalorder %s18, 0
    %p185 = por %p183, %p184
    %p186 = scmp.ne.s32.totalorder %s178, %s180
    %p187 = scmp.eq.s32.totalorder %s23, 1
    %p188 = por %p186, %p187
    %p189 = scmp.ne.s32.totalorder %s180, %s181
    %p190 = scmp.eq.s32.totalorder %s23, 0
    %p191 = por %p189, %p190
    %p192 = scmp.ne.s32.totalorder %s180, %s181
    %p193 = scmp.eq.s32.totalorder %s24, 1
    %p194 = por %p192, %p193
    %p196 = scmp.ne.s32.totalorder %s181, %s195
    %p197 = scmp.eq.s32.totalorder %s24, 0
    %p198 = por %p196, %p197
    %s200 = sadd.s32 %s199, 1
    %p203 = scmp.eq.s32.totalorder %s18, 1
    %p204 = scmp.ne.s32.totalorder %s199, %s201
    %p205 = scmp.eq.s32.totalorder %s18, 0
    %p206 = por %p204, %p205
    %p207 = scmp.ne.s32.totalorder %s199, %s201
    %p208 = scmp.eq.s32.totalorder %s23, 1
    %p209 = por %p207, %p208
    %p210 = scmp.ne.s32.totalorder %s201, %s202
    %p211 = scmp.eq.s32.totalorder %s23, 0
    %p212 = por %p210, %p211
    %p213 = scmp.ne.s32.totalorder %s201, %s202
    %p214 = scmp.eq.s32.totalorder %s24, 1
    %p215 = por %p213, %p214
    %p217 = scmp.ne.s32.totalorder %s202, %s216
    %p218 = scmp.eq.s32.totalorder %s24, 0
    %p219 = por %p217, %p218
    %s220 = ssub.s32 %s18, %s25
    %p221 = scmp.eq.s32.totalorder %s220, 0
    %s223 = sadd.s32 %s222, 1
    %s224 = scalar_select %p221, %s222, %s223
    %p227 = pneg %p221
    %p228 = scmp.eq.s32.totalorder %s18, 1
    %p229 = por %p227, %p228
    %p230 = scmp.ne.s32.totalorder %s222, %s225
    %p231 = scmp.eq.s32.totalorder %s18, 0
    %p232 = por %p230, %p231
    %p233 = scmp.ne.s32.totalorder %s222, %s225
    %p234 = scmp.eq.s32.totalorder %s23, 1
    %p235 = por %p233, %p234
    %p236 = scmp.ne.s32.totalorder %s225, %s226
    %p237 = scmp.eq.s32.totalorder %s23, 0
    %p238 = por %p236, %p237
    %p239 = scmp.ne.s32.totalorder %s225, %s226
    %p240 = scmp.eq.s32.totalorder %s24, 1
    %p241 = por %p239, %p240
    %p243 = scmp.ne.s32.totalorder %s226, %s242
    %p244 = scmp.eq.s32.totalorder %s24, 0
    %p245 = por %p243, %p244
    %s246 = ssub.s32 %s18, %s25
    %p247 = scmp.eq.s32.totalorder %s246, 0
    %s249 = sadd.s32 %s248, 1
    %s250 = scalar_select %p247, %s248, %s249
    %p253 = pneg %p247
    %p254 = scmp.eq.s32.totalorder %s18, 1
    %p255 = por %p253, %p254
    %p256 = scmp.ne.s32.totalorder %s248, %s251
    %p257 = scmp.eq.s32.totalorder %s18, 0
    %p258 = por %p256, %p257
    %p259 = scmp.ne.s32.totalorder %s248, %s251
    %p260 = scmp.eq.s32.totalorder %s23, 1
    %p261 = por %p259, %p260
    %p262 = scmp.ne.s32.totalorder %s251, %s252
    %p263 = scmp.eq.s32.totalorder %s23, 0
    %p264 = por %p262, %p263
    %p265 = scmp.ne.s32.totalorder %s251, %s252
    %p266 = scmp.eq.s32.totalorder %s24, 1
    %p267 = por %p265, %p266
    %p269 = scmp.ne.s32.totalorder %s252, %s268
    %p270 = scmp.eq.s32.totalorder %s24, 0
    %p271 = por %p269, %p270
    %s272 = ssub.s32 %s18, %s25
    %p273 = scmp.eq.s32.totalorder %s272, 0
    %s275 = sadd.s32 %s274, 1
    %s276 = scalar_select %p273, %s274, %s275
    %p279 = pneg %p273
    %p280 = scmp.eq.s32.totalorder %s18, 1
    %p281 = por %p279, %p280
    %p282 = scmp.ne.s32.totalorder %s274, %s277
    %p283 = scmp.eq.s32.totalorder %s18, 0
    %p284 = por %p282, %p283
    %p285 = scmp.ne.s32.totalorder %s274, %s277
    %p286 = scmp.eq.s32.totalorder %s23, 1
    %p287 = por %p285, %p286
    %p288 = scmp.ne.s32.totalorder %s277, %s278
    %p289 = scmp.eq.s32.totalorder %s23, 0
    %p290 = por %p288, %p289
    %p291 = scmp.ne.s32.totalorder %s277, %s278
    %p292 = scmp.eq.s32.totalorder %s24, 1
    %p293 = por %p291, %p292
    %p295 = scmp.ne.s32.totalorder %s278, %s294
    %p296 = scmp.eq.s32.totalorder %s24, 0
    %p297 = por %p295, %p296
    %p298 = scmp.le.s32.totalorder 1, %s18
    %p299 = scmp.lt.s32.totalorder %s18, 3
    %p300 = pnand %p298, %p299
    %p301 = pneg %p300
    // Predicated region
    $region9: #{divco_plgan_forward.4} parent=5 // pred_check
      _
    $region10: #{divco_plgan_forward.4} parent=5 // pred_check_branch
      %303 = sbr.rel (%p300) target = $region12
    $region11: #{divco_plgan_forward.4} parent=5 // pred_region
      %s304 = ssub.s32 %s18, 1
      // Predicated region
      $region13: #{divco_plgan_forward.4} parent=11 // pred_check
        %p305 = pneg %p65
      $region14: #{divco_plgan_forward.4} parent=11 // pred_check_branch
        %307 = sbr.rel (%p305) target = $region16
      $region15: #{divco_plgan_forward.4} parent=11 // pred_region
        _
      $region16: #{divco_plgan_forward.4} parent=11 // pred_fallthru
        _
      // Predicated region
      $region17: #{divco_plgan_forward.4} parent=11 // pred_check
        %p308 = pneg %p86
      $region18: #{divco_plgan_forward.4} parent=11 // pred_check_branch
        %310 = sbr.rel (%p308) target = $region20
      $region19: #{divco_plgan_forward.4} parent=11 // pred_region
        _
      $region20: #{divco_plgan_forward.4} parent=11 // pred_fallthru
        _
      // Predicated region
      $region21: #{divco_plgan_forward.4} parent=11 // pred_check
        %p311 = pneg %p107
      $region22: #{divco_plgan_forward.4} parent=11 // pred_check_branch
        %313 = sbr.rel (%p311) target = $region24
      $region23: #{divco_plgan_forward.4} parent=11 // pred_region
        _
      $region24: #{divco_plgan_forward.4} parent=11 // pred_fallthru
        _
      // Predicated region
      $region25: #{divco_plgan_forward.4} parent=11 // pred_check
        %p314 = pneg %p128
      $region26: #{divco_plgan_forward.4} parent=11 // pred_check_branch
        %316 = sbr.rel (%p314) target = $region28
      $region27: #{divco_plgan_forward.4} parent=11 // pred_region
        _
      $region28: #{divco_plgan_forward.4} parent=11 // pred_fallthru
        _
      // Predicated region
      $region29: #{divco_plgan_forward.4} parent=11 // pred_check
        %p317 = pneg %p149
      $region30: #{divco_plgan_forward.4} parent=11 // pred_check_branch
        %319 = sbr.rel (%p317) target = $region32
      $region31: #{divco_plgan_forward.4} parent=11 // pred_region
        _
      $region32: #{divco_plgan_forward.4} parent=11 // pred_fallthru
        _
      // Predicated region
      $region33: #{divco_plgan_forward.4} parent=11 // pred_check
        %p320 = pneg %p170
      $region34: #{divco_plgan_forward.4} parent=11 // pred_check_branch
        %322 = sbr.rel (%p320) target = $region36
      $region35: #{divco_plgan_forward.4} parent=11 // pred_region
        _
      $region36: #{divco_plgan_forward.4} parent=11 // pred_fallthru
        _
      // Predicated region
      $region37: #{divco_plgan_forward.4} parent=11 // pred_check
        %p323 = pneg %p191
      $region38: #{divco_plgan_forward.4} parent=11 // pred_check_branch
        %325 = sbr.rel (%p323) target = $region40
      $region39: #{divco_plgan_forward.4} parent=11 // pred_region
        _
      $region40: #{divco_plgan_forward.4} parent=11 // pred_fallthru
        _
      // Predicated region
      $region41: #{divco_plgan_forward.4} parent=11 // pred_check
        %p326 = pneg %p212
      $region42: #{divco_plgan_forward.4} parent=11 // pred_check_branch
        %328 = sbr.rel (%p326) target = $region44
      $region43: #{divco_plgan_forward.4} parent=11 // pred_region
        _
      $region44: #{divco_plgan_forward.4} parent=11 // pred_fallthru
        _
    $region12: #{divco_plgan_forward.4} parent=5 // pred_fallthru
      _
    %p329 = scmp.lt.s32.totalorder %s18, 2
    // Predicated region
    $region45: #{divco_plgan_forward.4} parent=5 // pred_check
      %p330 = pneg %p329
    $region46: #{divco_plgan_forward.4} parent=5 // pred_check_branch
      %332 = sbr.rel (%p330) target = $region48
    $region47: #{divco_plgan_forward.4} parent=5 // pred_region
      // Predicated region
      $region49: #{divco_plgan_forward.4} parent=47 // pred_check
        %p333 = pneg %p38
      $region50: #{divco_plgan_forward.4} parent=47 // pred_check_branch
        %335 = sbr.rel (%p333) target = $region52
      $region51: #{divco_plgan_forward.4} parent=47 // pred_region
        %p336 = scmp.lt.s32.totalorder %s18, 1
        %s337 = scalar_select %p336, %s18, 1
        %s338 = smul.addr %s337, 2
        %s339 = smul.addr %s338, 4
        %s340 = scalar_lea.vmem %s0, %s339
      $region52: #{divco_plgan_forward.4} parent=47 // pred_fallthru
        _
    $region48: #{divco_plgan_forward.4} parent=5 // pred_fallthru
      _
    %p341 = scmp.le.s32.totalorder 1, %s18
    %p342 = scmp.lt.s32.totalorder %s18, 3
    %p343 = pnand %p341, %p342
    %p344 = pneg %p343
    // Predicated region
    $region53: #{divco_plgan_forward.4} parent=5 // pred_check
      _
    $region54: #{divco_plgan_forward.4} parent=5 // pred_check_branch
      %346 = sbr.rel (%p343) target = $region56
    $region55: #{divco_plgan_forward.4} parent=5 // pred_region
      %s347 = ssub.s32 %s18, 1
      %p348 = scmp.lt.s32.totalorder %s23, 1
      %s349 = scalar_select %p348, %s23, 1
      %s350 = smul.addr %s349, 2
      %s351 = smul.addr %s350, 4
      %s352 = scalar_lea.vmem %s0, %s351
      %p353 = pneg %p44
      %p354 = pneg %p41
      %p355 = pneg %p65
      %p356 = pneg %p62
      %p357 = pneg %p86
      %p358 = pneg %p83
      %p359 = pneg %p107
      %p360 = pneg %p104
      %p361 = pneg %p128
      %p362 = pneg %p125
      %p363 = pneg %p149
      %p364 = pneg %p146
      %p365 = pneg %p170
      %p366 = pneg %p167
      %p367 = pneg %p191
      %p368 = pneg %p188
      %p369 = pneg %p212
      %p370 = pneg %p209
      %p371 = pneg %p238
      %p372 = pneg %p235
      %p373 = scmp.lt.s32.totalorder %s23, 1
      %s374 = scalar_select %p373, %s23, 1
      %s375 = smul.addr %s374, 2
      %s376 = smul.addr %s375, 4
      %s377 = scalar_lea.vmem %s9, %s376
      %p378 = pneg %p264
      %p379 = pneg %p261
      %p380 = scmp.lt.s32.totalorder %s23, 1
      %s381 = scalar_select %p380, %s23, 1
      %s382 = smul.addr %s381, 4
      %s383 = smul.addr %s382, 4
      %s384 = scalar_lea.vmem %s10, %s383
      %p385 = pneg %p290
      %p386 = pneg %p287
      %p387 = scmp.lt.s32.totalorder %s23, 1
      %s388 = scalar_select %p387, %s23, 1
      %s389 = smul.addr %s388, 8
      %s390 = scalar_lea.vmem %s11, %s389
      %p391 = scmp.lt.s32.totalorder %s23, 1
      %s392 = scalar_select %p391, %s23, 1
      %s393 = smul.addr %s392, 2
      %s394 = smul.addr %s393, 4
      %s395 = scalar_lea.vmem %s0, %s394
      %p396 = scmp.lt.s32.totalorder %s23, 1
      %s397 = scalar_select %p396, %s23, 1
      %s398 = smul.addr %s397, 2
      %s399 = smul.addr %s398, 4
      %s400 = scalar_lea.vmem %s9, %s399
      %p401 = scmp.lt.s32.totalorder %s23, 1
      %s402 = scalar_select %p401, %s23, 1
      %s403 = smul.addr %s402, 4
      %s404 = smul.addr %s403, 4
      %s405 = scalar_lea.vmem %s10, %s404
      %p406 = scmp.lt.s32.totalorder %s23, 1
      %s407 = scalar_select %p406, %s23, 1
      %s408 = smul.addr %s407, 8
      %s409 = scalar_lea.vmem %s11, %s408
      %v411 = vld [vmem:[%s395] sm:$0xff]
      %v412 = vld [vmem:[%s7] sm:$0xf]
      %v413 = vld [vmem:[%s7 + $0x4] sm:$0xf]
      %v414 = vld [vmem:[%s7 + $0x8] sm:$0xf]
      %v415 = vld [vmem:[%s7 + $0xc] sm:$0xf]
      %v416 = vld [vmem:[%s7 + $0x10] sm:$0xf]
      %v417 = vld [vmem:[%s7 + $0x14] sm:$0xf]
      %v418 = vld [vmem:[%s7 + $0x18] sm:$0xf]
      %v419 = vld [vmem:[%s7 + $0x1c] sm:$0xf]
      %v420 = vld [vmem:[%s7 + $0x20] sm:$0xf]
      %v421 = vld [vmem:[%s7 + $0x24] sm:$0xf]
      %v422 = vld [vmem:[%s7 + $0x28] sm:$0xf]
      %v423 = vld [vmem:[%s7 + $0x2c] sm:$0xf]
      %v424 = vld [vmem:[%s7 + $0x30] sm:$0xf]
      %v425 = vld [vmem:[%s7 + $0x34] sm:$0xf]
      %v426 = vld [vmem:[%s7 + $0x38] sm:$0xf]
      %v427 = vld [vmem:[%s7 + $0x3c] sm:$0xf]
      %v428 = vld [vmem:[%s7 + $0x40] sm:$0xf]
      %v429 = vld [vmem:[%s7 + $0x44] sm:$0xf]
      %v430 = vld [vmem:[%s7 + $0x48] sm:$0xf]
      %v431 = vld [vmem:[%s7 + $0x4c] sm:$0xf]
      %v432 = vld [vmem:[%s7 + $0x50] sm:$0xf]
      %v433 = vld [vmem:[%s7 + $0x54] sm:$0xf]
      %v434 = vld [vmem:[%s7 + $0x58] sm:$0xf]
      %v435 = vld [vmem:[%s7 + $0x5c] sm:$0xf]
      %v436 = vld [vmem:[%s7 + $0x60] sm:$0xf]
      %v437 = vld [vmem:[%s7 + $0x64] sm:$0xf]
      %v438 = vld [vmem:[%s7 + $0x68] sm:$0xf]
      %v439 = vld [vmem:[%s7 + $0x6c] sm:$0xf]
      %v440 = vld [vmem:[%s7 + $0x70] sm:$0xf]
      %v441 = vld [vmem:[%s7 + $0x74] sm:$0xf]
      %v442 = vld [vmem:[%s7 + $0x78] sm:$0xf]
      %v443 = vld [vmem:[%s7 + $0x7c] sm:$0xf]
      %v445 = vunpack.c.l.b16 %v411
      %v446 = vunpack.c.h.b16 %v411
      %v447 = vpack.c.b16 %v445, %v445
      %v448 = vpack.c.b16 %v446, %v446
      %v483 = vunpack.c.l.b16 %v412
      %v484 = vunpack.c.l.b16 %v413
      %v485 = vunpack.c.l.b16 %v414
      %v486 = vunpack.c.l.b16 %v415
      %v487 = vunpack.c.l.b16 %v416
      %v488 = vunpack.c.l.b16 %v417
      %v489 = vunpack.c.l.b16 %v418
      %v490 = vunpack.c.l.b16 %v419
      %v491 = vunpack.c.l.b16 %v420
      %v492 = vunpack.c.l.b16 %v421
      %v493 = vunpack.c.l.b16 %v422
      %v494 = vunpack.c.l.b16 %v423
      %v495 = vunpack.c.l.b16 %v424
      %v496 = vunpack.c.l.b16 %v425
      %v497 = vunpack.c.l.b16 %v426
      %v498 = vunpack.c.l.b16 %v427
      %v499 = vunpack.c.l.b16 %v428
      %v500 = vunpack.c.l.b16 %v429
      %v501 = vunpack.c.l.b16 %v430
      %v502 = vunpack.c.l.b16 %v431
      %v503 = vunpack.c.l.b16 %v432
      %v504 = vunpack.c.l.b16 %v433
      %v505 = vunpack.c.l.b16 %v434
      %v506 = vunpack.c.l.b16 %v435
      %v507 = vunpack.c.l.b16 %v436
      %v508 = vunpack.c.l.b16 %v437
      %v509 = vunpack.c.l.b16 %v438
      %v510 = vunpack.c.l.b16 %v439
      %v511 = vunpack.c.l.b16 %v440
      %v512 = vunpack.c.l.b16 %v441
      %v513 = vunpack.c.l.b16 %v442
      %v514 = vunpack.c.l.b16 %v443
      %v515 = vpack.c.b16 %v484, %v483
      %v516 = vpack.c.b16 %v486, %v485
      %v517 = vpack.c.b16 %v488, %v487
      %v518 = vpack.c.b16 %v490, %v489
      %v519 = vpack.c.b16 %v492, %v491
      %v520 = vpack.c.b16 %v494, %v493
      %v521 = vpack.c.b16 %v496, %v495
      %v522 = vpack.c.b16 %v498, %v497
      %v523 = vpack.c.b16 %v500, %v499
      %v524 = vpack.c.b16 %v502, %v501
      %v525 = vpack.c.b16 %v504, %v503
      %v526 = vpack.c.b16 %v506, %v505
      %v527 = vpack.c.b16 %v508, %v507
      %v528 = vpack.c.b16 %v510, %v509
      %v529 = vpack.c.b16 %v512, %v511
      %v530 = vpack.c.b16 %v514, %v513
      %547 = vmatpush.bf16.msra.mxu0 %v522
      %548 = vmatpush.bf16.msra.mxu0 %v521
      %549 = vmatpush.bf16.msra.mxu0 %v520
      %550 = vmatpush.bf16.msra.mxu0 %v519
      %551 = vmatpush.bf16.msra.mxu0 %v518
      %552 = vmatpush.bf16.msra.mxu0 %v517
      %553 = vmatpush.bf16.msra.mxu0 %v516
      %554 = vmatpush.bf16.msra.mxu0 %v515
      %555 = vmatmul.bf16.gmra.mxu0 %v447
      %v556 = vpop.f32.mrf.mxu0
      %v557 = vadd.f32 0.0, %v556
      %v558 = vpop.f32.mrf.mxu0
      %559 = vdwg.mxu0
      %560 = vmatpush.bf16.msra.mxu0 %v530
      %561 = vmatpush.bf16.msra.mxu0 %v529
      %562 = vmatpush.bf16.msra.mxu0 %v528
      %563 = vmatpush.bf16.msra.mxu0 %v527
      %564 = vmatpush.bf16.msra.mxu0 %v526
      %565 = vmatpush.bf16.msra.mxu0 %v525
      %566 = vmatpush.bf16.msra.mxu0 %v524
      %567 = vmatpush.bf16.msra.mxu0 %v523
      %568 = vmatmul.bf16.gmra.mxu0 %v448
      %v569 = vpop.f32.mrf.mxu0
      %v570 = vadd.f32 %v557, %v569
      %v571 = vpop.f32.mrf.mxu0
      %572 = vdwg.mxu0
      %s573 = scalar_lea.vmem %s7, 128
      %v574 = vld [vmem:[%s573] sm:$0xf]
      %v575 = vld [vmem:[%s573 + $0x4] sm:$0xf]
      %v576 = vld [vmem:[%s573 + $0x8] sm:$0xf]
      %v577 = vld [vmem:[%s573 + $0xc] sm:$0xf]
      %v578 = vld [vmem:[%s573 + $0x10] sm:$0xf]
      %v579 = vld [vmem:[%s573 + $0x14] sm:$0xf]
      %v580 = vld [vmem:[%s573 + $0x18] sm:$0xf]
      %v581 = vld [vmem:[%s573 + $0x1c] sm:$0xf]
      %v582 = vld [vmem:[%s573 + $0x20] sm:$0xf]
      %v583 = vld [vmem:[%s573 + $0x24] sm:$0xf]
      %v584 = vld [vmem:[%s573 + $0x28] sm:$0xf]
      %v585 = vld [vmem:[%s573 + $0x2c] sm:$0xf]
      %v586 = vld [vmem:[%s573 + $0x30] sm:$0xf]
      %v587 = vld [vmem:[%s573 + $0x34] sm:$0xf]
      %v588 = vld [vmem:[%s573 + $0x38] sm:$0xf]
      %v589 = vld [vmem:[%s573 + $0x3c] sm:$0xf]
      %v590 = vld [vmem:[%s573 + $0x40] sm:$0xf]
      %v591 = vld [vmem:[%s573 + $0x44] sm:$0xf]
      %v592 = vld [vmem:[%s573 + $0x48] sm:$0xf]
      %v593 = vld [vmem:[%s573 + $0x4c] sm:$0xf]
      %v594 = vld [vmem:[%s573 + $0x50] sm:$0xf]
      %v595 = vld [vmem:[%s573 + $0x54] sm:$0xf]
      %v596 = vld [vmem:[%s573 + $0x58] sm:$0xf]
      %v597 = vld [vmem:[%s573 + $0x5c] sm:$0xf]
      %v598 = vld [vmem:[%s573 + $0x60] sm:$0xf]
      %v599 = vld [vmem:[%s573 + $0x64] sm:$0xf]
      %v600 = vld [vmem:[%s573 + $0x68] sm:$0xf]
      %v601 = vld [vmem:[%s573 + $0x6c] sm:$0xf]
      %v602 = vld [vmem:[%s573 + $0x70] sm:$0xf]
      %v603 = vld [vmem:[%s573 + $0x74] sm:$0xf]
      %v604 = vld [vmem:[%s573 + $0x78] sm:$0xf]
      %v605 = vld [vmem:[%s573 + $0x7c] sm:$0xf]
      %v638 = vunpack.c.l.b16 %v574
      %v639 = vunpack.c.l.b16 %v575
      %v640 = vunpack.c.l.b16 %v576
      %v641 = vunpack.c.l.b16 %v577
      %v642 = vunpack.c.l.b16 %v578
      %v643 = vunpack.c.l.b16 %v579
      %v644 = vunpack.c.l.b16 %v580
      %v645 = vunpack.c.l.b16 %v581
      %v646 = vunpack.c.l.b16 %v582
      %v647 = vunpack.c.l.b16 %v583
      %v648 = vunpack.c.l.b16 %v584
      %v649 = vunpack.c.l.b16 %v585
      %v650 = vunpack.c.l.b16 %v586
      %v651 = vunpack.c.l.b16 %v587
      %v652 = vunpack.c.l.b16 %v588
      %v653 = vunpack.c.l.b16 %v589
      %v654 = vunpack.c.l.b16 %v590
      %v655 = vunpack.c.l.b16 %v591
      %v656 = vunpack.c.l.b16 %v592
      %v657 = vunpack.c.l.b16 %v593
      %v658 = vunpack.c.l.b16 %v594
      %v659 = vunpack.c.l.b16 %v595
      %v660 = vunpack.c.l.b16 %v596
      %v661 = vunpack.c.l.b16 %v597
      %v662 = vunpack.c.l.b16 %v598
      %v663 = vunpack.c.l.b16 %v599
      %v664 = vunpack.c.l.b16 %v600
      %v665 = vunpack.c.l.b16 %v601
      %v666 = vunpack.c.l.b16 %v602
      %v667 = vunpack.c.l.b16 %v603
      %v668 = vunpack.c.l.b16 %v604
      %v669 = vunpack.c.l.b16 %v605
      %v670 = vpack.c.b16 %v639, %v638
      %v671 = vpack.c.b16 %v641, %v640
      %v672 = vpack.c.b16 %v643, %v642
      %v673 = vpack.c.b16 %v645, %v644
      %v674 = vpack.c.b16 %v647, %v646
      %v675 = vpack.c.b16 %v649, %v648
      %v676 = vpack.c.b16 %v651, %v650
      %v677 = vpack.c.b16 %v653, %v652
      %v678 = vpack.c.b16 %v655, %v654
      %v679 = vpack.c.b16 %v657, %v656
      %v680 = vpack.c.b16 %v659, %v658
      %v681 = vpack.c.b16 %v661, %v660
      %v682 = vpack.c.b16 %v663, %v662
      %v683 = vpack.c.b16 %v665, %v664
      %v684 = vpack.c.b16 %v667, %v666
      %v685 = vpack.c.b16 %v669, %v668
      %702 = vmatpush.bf16.msra.mxu0 %v677
      %703 = vmatpush.bf16.msra.mxu0 %v676
      %704 = vmatpush.bf16.msra.mxu0 %v675
      %705 = vmatpush.bf16.msra.mxu0 %v674
      %706 = vmatpush.bf16.msra.mxu0 %v673
      %707 = vmatpush.bf16.msra.mxu0 %v672
      %708 = vmatpush.bf16.msra.mxu0 %v671
      %709 = vmatpush.bf16.msra.mxu0 %v670
      %710 = vmatmul.bf16.gmra.mxu0 %v447
      %v711 = vpop.f32.mrf.mxu0
      %v712 = vadd.f32 0.0, %v711
      %v713 = vpop.f32.mrf.mxu0
      %714 = vdwg.mxu0
      %715 = vmatpush.bf16.msra.mxu0 %v685
      %716 = vmatpush.bf16.msra.mxu0 %v684
      %717 = vmatpush.bf16.msra.mxu0 %v683
      %718 = vmatpush.bf16.msra.mxu0 %v682
      %719 = vmatpush.bf16.msra.mxu0 %v681
      %720 = vmatpush.bf16.msra.mxu0 %v680
      %721 = vmatpush.bf16.msra.mxu0 %v679
      %722 = vmatpush.bf16.msra.mxu0 %v678
      %723 = vmatmul.bf16.gmra.mxu0 %v448
      %v724 = vpop.f32.mrf.mxu0
      %v725 = vadd.f32 %v712, %v724
      %v726 = vpop.f32.mrf.mxu0
      %727 = vdwg.mxu0
      %s728 = scalar_lea.vmem %s7, 256
      %v729 = vld [vmem:[%s728] sm:$0xf]
      %v730 = vld [vmem:[%s728 + $0x4] sm:$0xf]
      %v731 = vld [vmem:[%s728 + $0x8] sm:$0xf]
      %v732 = vld [vmem:[%s728 + $0xc] sm:$0xf]
      %v733 = vld [vmem:[%s728 + $0x10] sm:$0xf]
      %v734 = vld [vmem:[%s728 + $0x14] sm:$0xf]
      %v735 = vld [vmem:[%s728 + $0x18] sm:$0xf]
      %v736 = vld [vmem:[%s728 + $0x1c] sm:$0xf]
      %v737 = vld [vmem:[%s728 + $0x20] sm:$0xf]
      %v738 = vld [vmem:[%s728 + $0x24] sm:$0xf]
      %v739 = vld [vmem:[%s728 + $0x28] sm:$0xf]
      %v740 = vld [vmem:[%s728 + $0x2c] sm:$0xf]
      %v741 = vld [vmem:[%s728 + $0x30] sm:$0xf]
      %v742 = vld [vmem:[%s728 + $0x34] sm:$0xf]
      %v743 = vld [vmem:[%s728 + $0x38] sm:$0xf]
      %v744 = vld [vmem:[%s728 + $0x3c] sm:$0xf]
      %v745 = vld [vmem:[%s728 + $0x40] sm:$0xf]
      %v746 = vld [vmem:[%s728 + $0x44] sm:$0xf]
      %v747 = vld [vmem:[%s728 + $0x48] sm:$0xf]
      %v748 = vld [vmem:[%s728 + $0x4c] sm:$0xf]
      %v749 = vld [vmem:[%s728 + $0x50] sm:$0xf]
      %v750 = vld [vmem:[%s728 + $0x54] sm:$0xf]
      %v751 = vld [vmem:[%s728 + $0x58] sm:$0xf]
      %v752 = vld [vmem:[%s728 + $0x5c] sm:$0xf]
      %v753 = vld [vmem:[%s728 + $0x60] sm:$0xf]
      %v754 = vld [vmem:[%s728 + $0x64] sm:$0xf]
      %v755 = vld [vmem:[%s728 + $0x68] sm:$0xf]
      %v756 = vld [vmem:[%s728 + $0x6c] sm:$0xf]
      %v757 = vld [vmem:[%s728 + $0x70] sm:$0xf]
      %v758 = vld [vmem:[%s728 + $0x74] sm:$0xf]
      %v759 = vld [vmem:[%s728 + $0x78] sm:$0xf]
      %v760 = vld [vmem:[%s728 + $0x7c] sm:$0xf]
      %v793 = vunpack.c.l.b16 %v729
      %v794 = vunpack.c.l.b16 %v730
      %v795 = vunpack.c.l.b16 %v731
      %v796 = vunpack.c.l.b16 %v732
      %v797 = vunpack.c.l.b16 %v733
      %v798 = vunpack.c.l.b16 %v734
      %v799 = vunpack.c.l.b16 %v735
      %v800 = vunpack.c.l.b16 %v736
      %v801 = vunpack.c.l.b16 %v737
      %v802 = vunpack.c.l.b16 %v738
      %v803 = vunpack.c.l.b16 %v739
      %v804 = vunpack.c.l.b16 %v740
      %v805 = vunpack.c.l.b16 %v741
      %v806 = vunpack.c.l.b16 %v742
      %v807 = vunpack.c.l.b16 %v743
      %v808 = vunpack.c.l.b16 %v744
      %v809 = vunpack.c.l.b16 %v745
      %v810 = vunpack.c.l.b16 %v746
      %v811 = vunpack.c.l.b16 %v747
      %v812 = vunpack.c.l.b16 %v748
      %v813 = vunpack.c.l.b16 %v749
      %v814 = vunpack.c.l.b16 %v750
      %v815 = vunpack.c.l.b16 %v751
      %v816 = vunpack.c.l.b16 %v752
      %v817 = vunpack.c.l.b16 %v753
      %v818 = vunpack.c.l.b16 %v754
      %v819 = vunpack.c.l.b16 %v755
      %v820 = vunpack.c.l.b16 %v756
      %v821 = vunpack.c.l.b16 %v757
      %v822 = vunpack.c.l.b16 %v758
      %v823 = vunpack.c.l.b16 %v759
      %v824 = vunpack.c.l.b16 %v760
      %v825 = vpack.c.b16 %v794, %v793
      %v826 = vpack.c.b16 %v796, %v795
      %v827 = vpack.c.b16 %v798, %v797
      %v828 = vpack.c.b16 %v800, %v799
      %v829 = vpack.c.b16 %v802, %v801
      %v830 = vpack.c.b16 %v804, %v803
      %v831 = vpack.c.b16 %v806, %v805
      %v832 = vpack.c.b16 %v808, %v807
      %v833 = vpack.c.b16 %v810, %v809
      %v834 = vpack.c.b16 %v812, %v811
      %v835 = vpack.c.b16 %v814, %v813
      %v836 = vpack.c.b16 %v816, %v815
      %v837 = vpack.c.b16 %v818, %v817
      %v838 = vpack.c.b16 %v820, %v819
      %v839 = vpack.c.b16 %v822, %v821
      %v840 = vpack.c.b16 %v824, %v823
      %857 = vmatpush.bf16.msra.mxu0 %v832
      %858 = vmatpush.bf16.msra.mxu0 %v831
      %859 = vmatpush.bf16.msra.mxu0 %v830
      %860 = vmatpush.bf16.msra.mxu0 %v829
      %861 = vmatpush.bf16.msra.mxu0 %v828
      %862 = vmatpush.bf16.msra.mxu0 %v827
      %863 = vmatpush.bf16.msra.mxu0 %v826
      %864 = vmatpush.bf16.msra.mxu0 %v825
      %865 = vmatmul.bf16.gmra.mxu0 %v447
      %v866 = vpop.f32.mrf.mxu0
      %v867 = vadd.f32 0.0, %v866
      %v868 = vpop.f32.mrf.mxu0
      %869 = vdwg.mxu0
      %870 = vmatpush.bf16.msra.mxu0 %v840
      %871 = vmatpush.bf16.msra.mxu0 %v839
      %872 = vmatpush.bf16.msra.mxu0 %v838
      %873 = vmatpush.bf16.msra.mxu0 %v837
      %874 = vmatpush.bf16.msra.mxu0 %v836
      %875 = vmatpush.bf16.msra.mxu0 %v835
      %876 = vmatpush.bf16.msra.mxu0 %v834
      %877 = vmatpush.bf16.msra.mxu0 %v833
      %878 = vmatmul.bf16.gmra.mxu0 %v448
      %v879 = vpop.f32.mrf.mxu0
      %v880 = vadd.f32 %v867, %v879
      %v881 = vpop.f32.mrf.mxu0
      %882 = vdwg.mxu0
      %s883 = scalar_lea.vmem %s7, 384
      %v884 = vld [vmem:[%s883] sm:$0xf]
      %v885 = vld [vmem:[%s883 + $0x4] sm:$0xf]
      %v886 = vld [vmem:[%s883 + $0x8] sm:$0xf]
      %v887 = vld [vmem:[%s883 + $0xc] sm:$0xf]
      %v888 = vld [vmem:[%s883 + $0x10] sm:$0xf]
      %v889 = vld [vmem:[%s883 + $0x14] sm:$0xf]
      %v890 = vld [vmem:[%s883 + $0x18] sm:$0xf]
      %v891 = vld [vmem:[%s883 + $0x1c] sm:$0xf]
      %v892 = vld [vmem:[%s883 + $0x20] sm:$0xf]
      %v893 = vld [vmem:[%s883 + $0x24] sm:$0xf]
      %v894 = vld [vmem:[%s883 + $0x28] sm:$0xf]
      %v895 = vld [vmem:[%s883 + $0x2c] sm:$0xf]
      %v896 = vld [vmem:[%s883 + $0x30] sm:$0xf]
      %v897 = vld [vmem:[%s883 + $0x34] sm:$0xf]
      %v898 = vld [vmem:[%s883 + $0x38] sm:$0xf]
      %v899 = vld [vmem:[%s883 + $0x3c] sm:$0xf]
      %v900 = vld [vmem:[%s883 + $0x40] sm:$0xf]
      %v901 = vld [vmem:[%s883 + $0x44] sm:$0xf]
      %v902 = vld [vmem:[%s883 + $0x48] sm:$0xf]
      %v903 = vld [vmem:[%s883 + $0x4c] sm:$0xf]
      %v904 = vld [vmem:[%s883 + $0x50] sm:$0xf]
      %v905 = vld [vmem:[%s883 + $0x54] sm:$0xf]
      %v906 = vld [vmem:[%s883 + $0x58] sm:$0xf]
      %v907 = vld [vmem:[%s883 + $0x5c] sm:$0xf]
      %v908 = vld [vmem:[%s883 + $0x60] sm:$0xf]
      %v909 = vld [vmem:[%s883 + $0x64] sm:$0xf]
      %v910 = vld [vmem:[%s883 + $0x68] sm:$0xf]
      %v911 = vld [vmem:[%s883 + $0x6c] sm:$0xf]
      %v912 = vld [vmem:[%s883 + $0x70] sm:$0xf]
      %v913 = vld [vmem:[%s883 + $0x74] sm:$0xf]
      %v914 = vld [vmem:[%s883 + $0x78] sm:$0xf]
      %v915 = vld [vmem:[%s883 + $0x7c] sm:$0xf]
      %v948 = vunpack.c.l.b16 %v884
      %v949 = vunpack.c.l.b16 %v885
      %v950 = vunpack.c.l.b16 %v886
      %v951 = vunpack.c.l.b16 %v887
      %v952 = vunpack.c.l.b16 %v888
      %v953 = vunpack.c.l.b16 %v889
      %v954 = vunpack.c.l.b16 %v890
      %v955 = vunpack.c.l.b16 %v891
      %v956 = vunpack.c.l.b16 %v892
      %v957 = vunpack.c.l.b16 %v893
      %v958 = vunpack.c.l.b16 %v894
      %v959 = vunpack.c.l.b16 %v895
      %v960 = vunpack.c.l.b16 %v896
      %v961 = vunpack.c.l.b16 %v897
      %v962 = vunpack.c.l.b16 %v898
      %v963 = vunpack.c.l.b16 %v899
      %v964 = vunpack.c.l.b16 %v900
      %v965 = vunpack.c.l.b16 %v901
      %v966 = vunpack.c.l.b16 %v902
      %v967 = vunpack.c.l.b16 %v903
      %v968 = vunpack.c.l.b16 %v904
      %v969 = vunpack.c.l.b16 %v905
      %v970 = vunpack.c.l.b16 %v906
      %v971 = vunpack.c.l.b16 %v907
      %v972 = vunpack.c.l.b16 %v908
      %v973 = vunpack.c.l.b16 %v909
      %v974 = vunpack.c.l.b16 %v910
      %v975 = vunpack.c.l.b16 %v911
      %v976 = vunpack.c.l.b16 %v912
      %v977 = vunpack.c.l.b16 %v913
      %v978 = vunpack.c.l.b16 %v914
      %v979 = vunpack.c.l.b16 %v915
      %v980 = vpack.c.b16 %v949, %v948
      %v981 = vpack.c.b16 %v951, %v950
      %v982 = vpack.c.b16 %v953, %v952
      %v983 = vpack.c.b16 %v955, %v954
      %v984 = vpack.c.b16 %v957, %v956
      %v985 = vpack.c.b16 %v959, %v958
      %v986 = vpack.c.b16 %v961, %v960
      %v987 = vpack.c.b16 %v963, %v962
      %v988 = vpack.c.b16 %v965, %v964
      %v989 = vpack.c.b16 %v967, %v966
      %v990 = vpack.c.b16 %v969, %v968
      %v991 = vpack.c.b16 %v971, %v970
      %v992 = vpack.c.b16 %v973, %v972
      %v993 = vpack.c.b16 %v975, %v974
      %v994 = vpack.c.b16 %v977, %v976
      %v995 = vpack.c.b16 %v979, %v978
      %1012 = vmatpush.bf16.msra.mxu0 %v987
      %1013 = vmatpush.bf16.msra.mxu0 %v986
      %1014 = vmatpush.bf16.msra.mxu0 %v985
      %1015 = vmatpush.bf16.msra.mxu0 %v984
      %1016 = vmatpush.bf16.msra.mxu0 %v983
      %1017 = vmatpush.bf16.msra.mxu0 %v982
      %1018 = vmatpush.bf16.msra.mxu0 %v981
      %1019 = vmatpush.bf16.msra.mxu0 %v980
      %1020 = vmatmul.bf16.gmra.mxu0 %v447
      %v1021 = vpop.f32.mrf.mxu0
      %v1022 = vadd.f32 0.0, %v1021
      %v1023 = vpop.f32.mrf.mxu0
      %1024 = vdwg.mxu0
      %1025 = vmatpush.bf16.msra.mxu0 %v995
      %1026 = vmatpush.bf16.msra.mxu0 %v994
      %1027 = vmatpush.bf16.msra.mxu0 %v993
      %1028 = vmatpush.bf16.msra.mxu0 %v992
      %1029 = vmatpush.bf16.msra.mxu0 %v991
      %1030 = vmatpush.bf16.msra.mxu0 %v990
      %1031 = vmatpush.bf16.msra.mxu0 %v989
      %1032 = vmatpush.bf16.msra.mxu0 %v988
      %1033 = vmatmul.bf16.gmra.mxu0 %v448
      %v1034 = vpop.f32.mrf.mxu0
      %v1035 = vadd.f32 %v1022, %v1034
      %v1036 = vpop.f32.mrf.mxu0
      %1037 = vdwg.mxu0
      %s1038 = scalar_lea.vmem %s7, 512
      %v1039 = vld [vmem:[%s1038] sm:$0xf]
      %v1040 = vld [vmem:[%s1038 + $0x4] sm:$0xf]
      %v1041 = vld [vmem:[%s1038 + $0x8] sm:$0xf]
      %v1042 = vld [vmem:[%s1038 + $0xc] sm:$0xf]
      %v1043 = vld [vmem:[%s1038 + $0x10] sm:$0xf]
      %v1044 = vld [vmem:[%s1038 + $0x14] sm:$0xf]
      %v1045 = vld [vmem:[%s1038 + $0x18] sm:$0xf]
      %v1046 = vld [vmem:[%s1038 + $0x1c] sm:$0xf]
      %v1047 = vld [vmem:[%s1038 + $0x20] sm:$0xf]
      %v1048 = vld [vmem:[%s1038 + $0x24] sm:$0xf]
      %v1049 = vld [vmem:[%s1038 + $0x28] sm:$0xf]
      %v1050 = vld [vmem:[%s1038 + $0x2c] sm:$0xf]
      %v1051 = vld [vmem:[%s1038 + $0x30] sm:$0xf]
      %v1052 = vld [vmem:[%s1038 + $0x34] sm:$0xf]
      %v1053 = vld [vmem:[%s1038 + $0x38] sm:$0xf]
      %v1054 = vld [vmem:[%s1038 + $0x3c] sm:$0xf]
      %v1055 = vld [vmem:[%s1038 + $0x40] sm:$0xf]
      %v1056 = vld [vmem:[%s1038 + $0x44] sm:$0xf]
      %v1057 = vld [vmem:[%s1038 + $0x48] sm:$0xf]
      %v1058 = vld [vmem:[%s1038 + $0x4c] sm:$0xf]
      %v1059 = vld [vmem:[%s1038 + $0x50] sm:$0xf]
      %v1060 = vld [vmem:[%s1038 + $0x54] sm:$0xf]
      %v1061 = vld [vmem:[%s1038 + $0x58] sm:$0xf]
      %v1062 = vld [vmem:[%s1038 + $0x5c] sm:$0xf]
      %v1063 = vld [vmem:[%s1038 + $0x60] sm:$0xf]
      %v1064 = vld [vmem:[%s1038 + $0x64] sm:$0xf]
      %v1065 = vld [vmem:[%s1038 + $0x68] sm:$0xf]
      %v1066 = vld [vmem:[%s1038 + $0x6c] sm:$0xf]
      %v1067 = vld [vmem:[%s1038 + $0x70] sm:$0xf]
      %v1068 = vld [vmem:[%s1038 + $0x74] sm:$0xf]
      %v1069 = vld [vmem:[%s1038 + $0x78] sm:$0xf]
      %v1070 = vld [vmem:[%s1038 + $0x7c] sm:$0xf]
      %v1103 = vunpack.c.l.b16 %v1039
      %v1104 = vunpack.c.l.b16 %v1040
      %v1105 = vunpack.c.l.b16 %v1041
      %v1106 = vunpack.c.l.b16 %v1042
      %v1107 = vunpack.c.l.b16 %v1043
      %v1108 = vunpack.c.l.b16 %v1044
      %v1109 = vunpack.c.l.b16 %v1045
      %v1110 = vunpack.c.l.b16 %v1046
      %v1111 = vunpack.c.l.b16 %v1047
      %v1112 = vunpack.c.l.b16 %v1048
      %v1113 = vunpack.c.l.b16 %v1049
      %v1114 = vunpack.c.l.b16 %v1050
      %v1115 = vunpack.c.l.b16 %v1051
      %v1116 = vunpack.c.l.b16 %v1052
      %v1117 = vunpack.c.l.b16 %v1053
      %v1118 = vunpack.c.l.b16 %v1054
      %v1119 = vunpack.c.l.b16 %v1055
      %v1120 = vunpack.c.l.b16 %v1056
      %v1121 = vunpack.c.l.b16 %v1057
      %v1122 = vunpack.c.l.b16 %v1058
      %v1123 = vunpack.c.l.b16 %v1059
      %v1124 = vunpack.c.l.b16 %v1060
      %v1125 = vunpack.c.l.b16 %v1061
      %v1126 = vunpack.c.l.b16 %v1062
      %v1127 = vunpack.c.l.b16 %v1063
      %v1128 = vunpack.c.l.b16 %v1064
      %v1129 = vunpack.c.l.b16 %v1065
      %v1130 = vunpack.c.l.b16 %v1066
      %v1131 = vunpack.c.l.b16 %v1067
      %v1132 = vunpack.c.l.b16 %v1068
      %v1133 = vunpack.c.l.b16 %v1069
      %v1134 = vunpack.c.l.b16 %v1070
      %v1135 = vpack.c.b16 %v1104, %v1103
      %v1136 = vpack.c.b16 %v1106, %v1105
      %v1137 = vpack.c.b16 %v1108, %v1107
      %v1138 = vpack.c.b16 %v1110, %v1109
      %v1139 = vpack.c.b16 %v1112, %v1111
      %v1140 = vpack.c.b16 %v1114, %v1113
      %v1141 = vpack.c.b16 %v1116, %v1115
      %v1142 = vpack.c.b16 %v1118, %v1117
      %v1143 = vpack.c.b16 %v1120, %v1119
      %v1144 = vpack.c.b16 %v1122, %v1121
      %v1145 = vpack.c.b16 %v1124, %v1123
      %v1146 = vpack.c.b16 %v1126, %v1125
      %v1147 = vpack.c.b16 %v1128, %v1127
      %v1148 = vpack.c.b16 %v1130, %v1129
      %v1149 = vpack.c.b16 %v1132, %v1131
      %v1150 = vpack.c.b16 %v1134, %v1133
      %1167 = vmatpush.bf16.msra.mxu0 %v1142
      %1168 = vmatpush.bf16.msra.mxu0 %v1141
      %1169 = vmatpush.bf16.msra.mxu0 %v1140
      %1170 = vmatpush.bf16.msra.mxu0 %v1139
      %1171 = vmatpush.bf16.msra.mxu0 %v1138
      %1172 = vmatpush.bf16.msra.mxu0 %v1137
      %1173 = vmatpush.bf16.msra.mxu0 %v1136
      %1174 = vmatpush.bf16.msra.mxu0 %v1135
      %1175 = vmatmul.bf16.gmra.mxu0 %v447
      %v1176 = vpop.f32.mrf.mxu0
      %v1177 = vadd.f32 0.0, %v1176
      %v1178 = vpop.f32.mrf.mxu0
      %1179 = vdwg.mxu0
      %1180 = vmatpush.bf16.msra.mxu0 %v1150
      %1181 = vmatpush.bf16.msra.mxu0 %v1149
      %1182 = vmatpush.bf16.msra.mxu0 %v1148
      %1183 = vmatpush.bf16.msra.mxu0 %v1147
      %1184 = vmatpush.bf16.msra.mxu0 %v1146
      %1185 = vmatpush.bf16.msra.mxu0 %v1145
      %1186 = vmatpush.bf16.msra.mxu0 %v1144
      %1187 = vmatpush.bf16.msra.mxu0 %v1143
      %1188 = vmatmul.bf16.gmra.mxu0 %v448
      %v1189 = vpop.f32.mrf.mxu0
      %v1190 = vadd.f32 %v1177, %v1189
      %v1191 = vpop.f32.mrf.mxu0
      %1192 = vdwg.mxu0
      %s1193 = scalar_lea.vmem %s7, 640
      %v1194 = vld [vmem:[%s1193] sm:$0xf]
      %v1195 = vld [vmem:[%s1193 + $0x4] sm:$0xf]
      %v1196 = vld [vmem:[%s1193 + $0x8] sm:$0xf]
      %v1197 = vld [vmem:[%s1193 + $0xc] sm:$0xf]
      %v1198 = vld [vmem:[%s1193 + $0x10] sm:$0xf]
      %v1199 = vld [vmem:[%s1193 + $0x14] sm:$0xf]
      %v1200 = vld [vmem:[%s1193 + $0x18] sm:$0xf]
      %v1201 = vld [vmem:[%s1193 + $0x1c] sm:$0xf]
      %v1202 = vld [vmem:[%s1193 + $0x20] sm:$0xf]
      %v1203 = vld [vmem:[%s1193 + $0x24] sm:$0xf]
      %v1204 = vld [vmem:[%s1193 + $0x28] sm:$0xf]
      %v1205 = vld [vmem:[%s1193 + $0x2c] sm:$0xf]
      %v1206 = vld [vmem:[%s1193 + $0x30] sm:$0xf]
      %v1207 = vld [vmem:[%s1193 + $0x34] sm:$0xf]
      %v1208 = vld [vmem:[%s1193 + $0x38] sm:$0xf]
      %v1209 = vld [vmem:[%s1193 + $0x3c] sm:$0xf]
      %v1210 = vld [vmem:[%s1193 + $0x40] sm:$0xf]
      %v1211 = vld [vmem:[%s1193 + $0x44] sm:$0xf]
      %v1212 = vld [vmem:[%s1193 + $0x48] sm:$0xf]
      %v1213 = vld [vmem:[%s1193 + $0x4c] sm:$0xf]
      %v1214 = vld [vmem:[%s1193 + $0x50] sm:$0xf]
      %v1215 = vld [vmem:[%s1193 + $0x54] sm:$0xf]
      %v1216 = vld [vmem:[%s1193 + $0x58] sm:$0xf]
      %v1217 = vld [vmem:[%s1193 + $0x5c] sm:$0xf]
      %v1218 = vld [vmem:[%s1193 + $0x60] sm:$0xf]
      %v1219 = vld [vmem:[%s1193 + $0x64] sm:$0xf]
      %v1220 = vld [vmem:[%s1193 + $0x68] sm:$0xf]
      %v1221 = vld [vmem:[%s1193 + $0x6c] sm:$0xf]
      %v1222 = vld [vmem:[%s1193 + $0x70] sm:$0xf]
      %v1223 = vld [vmem:[%s1193 + $0x74] sm:$0xf]
      %v1224 = vld [vmem:[%s1193 + $0x78] sm:$0xf]
      %v1225 = vld [vmem:[%s1193 + $0x7c] sm:$0xf]
      %v1258 = vunpack.c.l.b16 %v1194
      %v1259 = vunpack.c.l.b16 %v1195
      %v1260 = vunpack.c.l.b16 %v1196
      %v1261 = vunpack.c.l.b16 %v1197
      %v1262 = vunpack.c.l.b16 %v1198
      %v1263 = vunpack.c.l.b16 %v1199
      %v1264 = vunpack.c.l.b16 %v1200
      %v1265 = vunpack.c.l.b16 %v1201
      %v1266 = vunpack.c.l.b16 %v1202
      %v1267 = vunpack.c.l.b16 %v1203
      %v1268 = vunpack.c.l.b16 %v1204
      %v1269 = vunpack.c.l.b16 %v1205
      %v1270 = vunpack.c.l.b16 %v1206
      %v1271 = vunpack.c.l.b16 %v1207
      %v1272 = vunpack.c.l.b16 %v1208
      %v1273 = vunpack.c.l.b16 %v1209
      %v1274 = vunpack.c.l.b16 %v1210
      %v1275 = vunpack.c.l.b16 %v1211
      %v1276 = vunpack.c.l.b16 %v1212
      %v1277 = vunpack.c.l.b16 %v1213
      %v1278 = vunpack.c.l.b16 %v1214
      %v1279 = vunpack.c.l.b16 %v1215
      %v1280 = vunpack.c.l.b16 %v1216
      %v1281 = vunpack.c.l.b16 %v1217
      %v1282 = vunpack.c.l.b16 %v1218
      %v1283 = vunpack.c.l.b16 %v1219
      %v1284 = vunpack.c.l.b16 %v1220
      %v1285 = vunpack.c.l.b16 %v1221
      %v1286 = vunpack.c.l.b16 %v1222
      %v1287 = vunpack.c.l.b16 %v1223
      %v1288 = vunpack.c.l.b16 %v1224
      %v1289 = vunpack.c.l.b16 %v1225
      %v1290 = vpack.c.b16 %v1259, %v1258
      %v1291 = vpack.c.b16 %v1261, %v1260
      %v1292 = vpack.c.b16 %v1263, %v1262
      %v1293 = vpack.c.b16 %v1265, %v1264
      %v1294 = vpack.c.b16 %v1267, %v1266
      %v1295 = vpack.c.b16 %v1269, %v1268
      %v1296 = vpack.c.b16 %v1271, %v1270
      %v1297 = vpack.c.b16 %v1273, %v1272
      %v1298 = vpack.c.b16 %v1275, %v1274
      %v1299 = vpack.c.b16 %v1277, %v1276
      %v1300 = vpack.c.b16 %v1279, %v1278
      %v1301 = vpack.c.b16 %v1281, %v1280
      %v1302 = vpack.c.b16 %v1283, %v1282
      %v1303 = vpack.c.b16 %v1285, %v1284
      %v1304 = vpack.c.b16 %v1287, %v1286
      %v1305 = vpack.c.b16 %v1289, %v1288
      %1322 = vmatpush.bf16.msra.mxu0 %v1297
      %1323 = vmatpush.bf16.msra.mxu0 %v1296
      %1324 = vmatpush.bf16.msra.mxu0 %v1295
      %1325 = vmatpush.bf16.msra.mxu0 %v1294
      %1326 = vmatpush.bf16.msra.mxu0 %v1293
      %1327 = vmatpush.bf16.msra.mxu0 %v1292
      %1328 = vmatpush.bf16.msra.mxu0 %v1291
      %1329 = vmatpush.bf16.msra.mxu0 %v1290
      %1330 = vmatmul.bf16.gmra.mxu0 %v447
      %v1331 = vpop.f32.mrf.mxu0
      %v1332 = vadd.f32 0.0, %v1331
      %v1333 = vpop.f32.mrf.mxu0
      %1334 = vdwg.mxu0
      %1335 = vmatpush.bf16.msra.mxu0 %v1305
      %1336 = vmatpush.bf16.msra.mxu0 %v1304
      %1337 = vmatpush.bf16.msra.mxu0 %v1303
      %1338 = vmatpush.bf16.msra.mxu0 %v1302
      %1339 = vmatpush.bf16.msra.mxu0 %v1301
      %1340 = vmatpush.bf16.msra.mxu0 %v1300
      %1341 = vmatpush.bf16.msra.mxu0 %v1299
      %1342 = vmatpush.bf16.msra.mxu0 %v1298
      %1343 = vmatmul.bf16.gmra.mxu0 %v448
      %v1344 = vpop.f32.mrf.mxu0
      %v1345 = vadd.f32 %v1332, %v1344
      %v1346 = vpop.f32.mrf.mxu0
      %1347 = vdwg.mxu0
      %s1348 = scalar_lea.vmem %s7, 768
      %v1349 = vld [vmem:[%s1348] sm:$0xf]
      %v1350 = vld [vmem:[%s1348 + $0x4] sm:$0xf]
      %v1351 = vld [vmem:[%s1348 + $0x8] sm:$0xf]
      %v1352 = vld [vmem:[%s1348 + $0xc] sm:$0xf]
      %v1353 = vld [vmem:[%s1348 + $0x10] sm:$0xf]
      %v1354 = vld [vmem:[%s1348 + $0x14] sm:$0xf]
      %v1355 = vld [vmem:[%s1348 + $0x18] sm:$0xf]
      %v1356 = vld [vmem:[%s1348 + $0x1c] sm:$0xf]
      %v1357 = vld [vmem:[%s1348 + $0x20] sm:$0xf]
      %v1358 = vld [vmem:[%s1348 + $0x24] sm:$0xf]
      %v1359 = vld [vmem:[%s1348 + $0x28] sm:$0xf]
      %v1360 = vld [vmem:[%s1348 + $0x2c] sm:$0xf]
      %v1361 = vld [vmem:[%s1348 + $0x30] sm:$0xf]
      %v1362 = vld [vmem:[%s1348 + $0x34] sm:$0xf]
      %v1363 = vld [vmem:[%s1348 + $0x38] sm:$0xf]
      %v1364 = vld [vmem:[%s1348 + $0x3c] sm:$0xf]
      %v1365 = vld [vmem:[%s1348 + $0x40] sm:$0xf]
      %v1366 = vld [vmem:[%s1348 + $0x44] sm:$0xf]
      %v1367 = vld [vmem:[%s1348 + $0x48] sm:$0xf]
      %v1368 = vld [vmem:[%s1348 + $0x4c] sm:$0xf]
      %v1369 = vld [vmem:[%s1348 + $0x50] sm:$0xf]
      %v1370 = vld [vmem:[%s1348 + $0x54] sm:$0xf]
      %v1371 = vld [vmem:[%s1348 + $0x58] sm:$0xf]
      %v1372 = vld [vmem:[%s1348 + $0x5c] sm:$0xf]
      %v1373 = vld [vmem:[%s1348 + $0x60] sm:$0xf]
      %v1374 = vld [vmem:[%s1348 + $0x64] sm:$0xf]
      %v1375 = vld [vmem:[%s1348 + $0x68] sm:$0xf]
      %v1376 = vld [vmem:[%s1348 + $0x6c] sm:$0xf]
      %v1377 = vld [vmem:[%s1348 + $0x70] sm:$0xf]
      %v1378 = vld [vmem:[%s1348 + $0x74] sm:$0xf]
      %v1379 = vld [vmem:[%s1348 + $0x78] sm:$0xf]
      %v1380 = vld [vmem:[%s1348 + $0x7c] sm:$0xf]
      %v1413 = vunpack.c.l.b16 %v1349
      %v1414 = vunpack.c.l.b16 %v1350
      %v1415 = vunpack.c.l.b16 %v1351
      %v1416 = vunpack.c.l.b16 %v1352
      %v1417 = vunpack.c.l.b16 %v1353
      %v1418 = vunpack.c.l.b16 %v1354
      %v1419 = vunpack.c.l.b16 %v1355
      %v1420 = vunpack.c.l.b16 %v1356
      %v1421 = vunpack.c.l.b16 %v1357
      %v1422 = vunpack.c.l.b16 %v1358
      %v1423 = vunpack.c.l.b16 %v1359
      %v1424 = vunpack.c.l.b16 %v1360
      %v1425 = vunpack.c.l.b16 %v1361
      %v1426 = vunpack.c.l.b16 %v1362
      %v1427 = vunpack.c.l.b16 %v1363
      %v1428 = vunpack.c.l.b16 %v1364
      %v1429 = vunpack.c.l.b16 %v1365
      %v1430 = vunpack.c.l.b16 %v1366
      %v1431 = vunpack.c.l.b16 %v1367
      %v1432 = vunpack.c.l.b16 %v1368
      %v1433 = vunpack.c.l.b16 %v1369
      %v1434 = vunpack.c.l.b16 %v1370
      %v1435 = vunpack.c.l.b16 %v1371
      %v1436 = vunpack.c.l.b16 %v1372
      %v1437 = vunpack.c.l.b16 %v1373
      %v1438 = vunpack.c.l.b16 %v1374
      %v1439 = vunpack.c.l.b16 %v1375
      %v1440 = vunpack.c.l.b16 %v1376
      %v1441 = vunpack.c.l.b16 %v1377
      %v1442 = vunpack.c.l.b16 %v1378
      %v1443 = vunpack.c.l.b16 %v1379
      %v1444 = vunpack.c.l.b16 %v1380
      %v1445 = vpack.c.b16 %v1414, %v1413
      %v1446 = vpack.c.b16 %v1416, %v1415
      %v1447 = vpack.c.b16 %v1418, %v1417
      %v1448 = vpack.c.b16 %v1420, %v1419
      %v1449 = vpack.c.b16 %v1422, %v1421
      %v1450 = vpack.c.b16 %v1424, %v1423
      %v1451 = vpack.c.b16 %v1426, %v1425
      %v1452 = vpack.c.b16 %v1428, %v1427
      %v1453 = vpack.c.b16 %v1430, %v1429
      %v1454 = vpack.c.b16 %v1432, %v1431
      %v1455 = vpack.c.b16 %v1434, %v1433
      %v1456 = vpack.c.b16 %v1436, %v1435
      %v1457 = vpack.c.b16 %v1438, %v1437
      %v1458 = vpack.c.b16 %v1440, %v1439
      %v1459 = vpack.c.b16 %v1442, %v1441
      %v1460 = vpack.c.b16 %v1444, %v1443
      %1477 = vmatpush.bf16.msra.mxu0 %v1452
      %1478 = vmatpush.bf16.msra.mxu0 %v1451
      %1479 = vmatpush.bf16.msra.mxu0 %v1450
      %1480 = vmatpush.bf16.msra.mxu0 %v1449
      %1481 = vmatpush.bf16.msra.mxu0 %v1448
      %1482 = vmatpush.bf16.msra.mxu0 %v1447
      %1483 = vmatpush.bf16.msra.mxu0 %v1446
      %1484 = vmatpush.bf16.msra.mxu0 %v1445
      %1485 = vmatmul.bf16.gmra.mxu0 %v447
      %v1486 = vpop.f32.mrf.mxu0
      %v1487 = vadd.f32 0.0, %v1486
      %v1488 = vpop.f32.mrf.mxu0
      %1489 = vdwg.mxu0
      %1490 = vmatpush.bf16.msra.mxu0 %v1460
      %1491 = vmatpush.bf16.msra.mxu0 %v1459
      %1492 = vmatpush.bf16.msra.mxu0 %v1458
      %1493 = vmatpush.bf16.msra.mxu0 %v1457
      %1494 = vmatpush.bf16.msra.mxu0 %v1456
      %1495 = vmatpush.bf16.msra.mxu0 %v1455
      %1496 = vmatpush.bf16.msra.mxu0 %v1454
      %1497 = vmatpush.bf16.msra.mxu0 %v1453
      %1498 = vmatmul.bf16.gmra.mxu0 %v448
      %v1499 = vpop.f32.mrf.mxu0
      %v1500 = vadd.f32 %v1487, %v1499
      %v1501 = vpop.f32.mrf.mxu0
      %1502 = vdwg.mxu0
      %s1503 = scalar_lea.vmem %s7, 896
      %v1504 = vld [vmem:[%s1503] sm:$0xf]
      %v1505 = vld [vmem:[%s1503 + $0x4] sm:$0xf]
      %v1506 = vld [vmem:[%s1503 + $0x8] sm:$0xf]
      %v1507 = vld [vmem:[%s1503 + $0xc] sm:$0xf]
      %v1508 = vld [vmem:[%s1503 + $0x10] sm:$0xf]
      %v1509 = vld [vmem:[%s1503 + $0x14] sm:$0xf]
      %v1510 = vld [vmem:[%s1503 + $0x18] sm:$0xf]
      %v1511 = vld [vmem:[%s1503 + $0x1c] sm:$0xf]
      %v1512 = vld [vmem:[%s1503 + $0x20] sm:$0xf]
      %v1513 = vld [vmem:[%s1503 + $0x24] sm:$0xf]
      %v1514 = vld [vmem:[%s1503 + $0x28] sm:$0xf]
      %v1515 = vld [vmem:[%s1503 + $0x2c] sm:$0xf]
      %v1516 = vld [vmem:[%s1503 + $0x30] sm:$0xf]
      %v1517 = vld [vmem:[%s1503 + $0x34] sm:$0xf]
      %v1518 = vld [vmem:[%s1503 + $0x38] sm:$0xf]
      %v1519 = vld [vmem:[%s1503 + $0x3c] sm:$0xf]
      %v1520 = vld [vmem:[%s1503 + $0x40] sm:$0xf]
      %v1521 = vld [vmem:[%s1503 + $0x44] sm:$0xf]
      %v1522 = vld [vmem:[%s1503 + $0x48] sm:$0xf]
      %v1523 = vld [vmem:[%s1503 + $0x4c] sm:$0xf]
      %v1524 = vld [vmem:[%s1503 + $0x50] sm:$0xf]
      %v1525 = vld [vmem:[%s1503 + $0x54] sm:$0xf]
      %v1526 = vld [vmem:[%s1503 + $0x58] sm:$0xf]
      %v1527 = vld [vmem:[%s1503 + $0x5c] sm:$0xf]
      %v1528 = vld [vmem:[%s1503 + $0x60] sm:$0xf]
      %v1529 = vld [vmem:[%s1503 + $0x64] sm:$0xf]
      %v1530 = vld [vmem:[%s1503 + $0x68] sm:$0xf]
      %v1531 = vld [vmem:[%s1503 + $0x6c] sm:$0xf]
      %v1532 = vld [vmem:[%s1503 + $0x70] sm:$0xf]
      %v1533 = vld [vmem:[%s1503 + $0x74] sm:$0xf]
      %v1534 = vld [vmem:[%s1503 + $0x78] sm:$0xf]
      %v1535 = vld [vmem:[%s1503 + $0x7c] sm:$0xf]
      %v1568 = vunpack.c.l.b16 %v1504
      %v1569 = vunpack.c.l.b16 %v1505
      %v1570 = vunpack.c.l.b16 %v1506
      %v1571 = vunpack.c.l.b16 %v1507
      %v1572 = vunpack.c.l.b16 %v1508
      %v1573 = vunpack.c.l.b16 %v1509
      %v1574 = vunpack.c.l.b16 %v1510
      %v1575 = vunpack.c.l.b16 %v1511
      %v1576 = vunpack.c.l.b16 %v1512
      %v1577 = vunpack.c.l.b16 %v1513
      %v1578 = vunpack.c.l.b16 %v1514
      %v1579 = vunpack.c.l.b16 %v1515
      %v1580 = vunpack.c.l.b16 %v1516
      %v1581 = vunpack.c.l.b16 %v1517
      %v1582 = vunpack.c.l.b16 %v1518
      %v1583 = vunpack.c.l.b16 %v1519
      %v1584 = vunpack.c.l.b16 %v1520
      %v1585 = vunpack.c.l.b16 %v1521
      %v1586 = vunpack.c.l.b16 %v1522
      %v1587 = vunpack.c.l.b16 %v1523
      %v1588 = vunpack.c.l.b16 %v1524
      %v1589 = vunpack.c.l.b16 %v1525
      %v1590 = vunpack.c.l.b16 %v1526
      %v1591 = vunpack.c.l.b16 %v1527
      %v1592 = vunpack.c.l.b16 %v1528
      %v1593 = vunpack.c.l.b16 %v1529
      %v1594 = vunpack.c.l.b16 %v1530
      %v1595 = vunpack.c.l.b16 %v1531
      %v1596 = vunpack.c.l.b16 %v1532
      %v1597 = vunpack.c.l.b16 %v1533
      %v1598 = vunpack.c.l.b16 %v1534
      %v1599 = vunpack.c.l.b16 %v1535
      %v1600 = vpack.c.b16 %v1569, %v1568
      %v1601 = vpack.c.b16 %v1571, %v1570
      %v1602 = vpack.c.b16 %v1573, %v1572
      %v1603 = vpack.c.b16 %v1575, %v1574
      %v1604 = vpack.c.b16 %v1577, %v1576
      %v1605 = vpack.c.b16 %v1579, %v1578
      %v1606 = vpack.c.b16 %v1581, %v1580
      %v1607 = vpack.c.b16 %v1583, %v1582
      %v1608 = vpack.c.b16 %v1585, %v1584
      %v1609 = vpack.c.b16 %v1587, %v1586
      %v1610 = vpack.c.b16 %v1589, %v1588
      %v1611 = vpack.c.b16 %v1591, %v1590
      %v1612 = vpack.c.b16 %v1593, %v1592
      %v1613 = vpack.c.b16 %v1595, %v1594
      %v1614 = vpack.c.b16 %v1597, %v1596
      %v1615 = vpack.c.b16 %v1599, %v1598
      %1632 = vmatpush.bf16.msra.mxu0 %v1607
      %1633 = vmatpush.bf16.msra.mxu0 %v1606
      %1634 = vmatpush.bf16.msra.mxu0 %v1605
      %1635 = vmatpush.bf16.msra.mxu0 %v1604
      %1636 = vmatpush.bf16.msra.mxu0 %v1603
      %1637 = vmatpush.bf16.msra.mxu0 %v1602
      %1638 = vmatpush.bf16.msra.mxu0 %v1601
      %1639 = vmatpush.bf16.msra.mxu0 %v1600
      %1640 = vmatmul.bf16.gmra.mxu0 %v447
      %v1641 = vpop.f32.mrf.mxu0
      %v1642 = vadd.f32 0.0, %v1641
      %v1643 = vpop.f32.mrf.mxu0
      %1644 = vdwg.mxu0
      %1645 = vmatpush.bf16.msra.mxu0 %v1615
      %1646 = vmatpush.bf16.msra.mxu0 %v1614
      %1647 = vmatpush.bf16.msra.mxu0 %v1613
      %1648 = vmatpush.bf16.msra.mxu0 %v1612
      %1649 = vmatpush.bf16.msra.mxu0 %v1611
      %1650 = vmatpush.bf16.msra.mxu0 %v1610
      %1651 = vmatpush.bf16.msra.mxu0 %v1609
      %1652 = vmatpush.bf16.msra.mxu0 %v1608
      %1653 = vmatmul.bf16.gmra.mxu0 %v448
      %v1654 = vpop.f32.mrf.mxu0
      %v1655 = vadd.f32 %v1642, %v1654
      %v1656 = vpop.f32.mrf.mxu0
      %1657 = vdwg.mxu0
      %s1658 = scalar_lea.vmem %s7, 1024
      %v1659 = vld [vmem:[%s1658] sm:$0xf]
      %v1660 = vld [vmem:[%s1658 + $0x4] sm:$0xf]
      %v1661 = vld [vmem:[%s1658 + $0x8] sm:$0xf]
      %v1662 = vld [vmem:[%s1658 + $0xc] sm:$0xf]
      %v1663 = vld [vmem:[%s1658 + $0x10] sm:$0xf]
      %v1664 = vld [vmem:[%s1658 + $0x14] sm:$0xf]
      %v1665 = vld [vmem:[%s1658 + $0x18] sm:$0xf]
      %v1666 = vld [vmem:[%s1658 + $0x1c] sm:$0xf]
      %v1667 = vld [vmem:[%s1658 + $0x20] sm:$0xf]
      %v1668 = vld [vmem:[%s1658 + $0x24] sm:$0xf]
      %v1669 = vld [vmem:[%s1658 + $0x28] sm:$0xf]
      %v1670 = vld [vmem:[%s1658 + $0x2c] sm:$0xf]
      %v1671 = vld [vmem:[%s1658 + $0x30] sm:$0xf]
      %v1672 = vld [vmem:[%s1658 + $0x34] sm:$0xf]
      %v1673 = vld [vmem:[%s1658 + $0x38] sm:$0xf]
      %v1674 = vld [vmem:[%s1658 + $0x3c] sm:$0xf]
      %v1675 = vld [vmem:[%s1658 + $0x40] sm:$0xf]
      %v1676 = vld [vmem:[%s1658 + $0x44] sm:$0xf]
      %v1677 = vld [vmem:[%s1658 + $0x48] sm:$0xf]
      %v1678 = vld [vmem:[%s1658 + $0x4c] sm:$0xf]
      %v1679 = vld [vmem:[%s1658 + $0x50] sm:$0xf]
      %v1680 = vld [vmem:[%s1658 + $0x54] sm:$0xf]
      %v1681 = vld [vmem:[%s1658 + $0x58] sm:$0xf]
      %v1682 = vld [vmem:[%s1658 + $0x5c] sm:$0xf]
      %v1683 = vld [vmem:[%s1658 + $0x60] sm:$0xf]
      %v1684 = vld [vmem:[%s1658 + $0x64] sm:$0xf]
      %v1685 = vld [vmem:[%s1658 + $0x68] sm:$0xf]
      %v1686 = vld [vmem:[%s1658 + $0x6c] sm:$0xf]
      %v1687 = vld [vmem:[%s1658 + $0x70] sm:$0xf]
      %v1688 = vld [vmem:[%s1658 + $0x74] sm:$0xf]
      %v1689 = vld [vmem:[%s1658 + $0x78] sm:$0xf]
      %v1690 = vld [vmem:[%s1658 + $0x7c] sm:$0xf]
      %v1723 = vunpack.c.l.b16 %v1659
      %v1724 = vunpack.c.l.b16 %v1660
      %v1725 = vunpack.c.l.b16 %v1661
      %v1726 = vunpack.c.l.b16 %v1662
      %v1727 = vunpack.c.l.b16 %v1663
      %v1728 = vunpack.c.l.b16 %v1664
      %v1729 = vunpack.c.l.b16 %v1665
      %v1730 = vunpack.c.l.b16 %v1666
      %v1731 = vunpack.c.l.b16 %v1667
      %v1732 = vunpack.c.l.b16 %v1668
      %v1733 = vunpack.c.l.b16 %v1669
      %v1734 = vunpack.c.l.b16 %v1670
      %v1735 = vunpack.c.l.b16 %v1671
      %v1736 = vunpack.c.l.b16 %v1672
      %v1737 = vunpack.c.l.b16 %v1673
      %v1738 = vunpack.c.l.b16 %v1674
      %v1739 = vunpack.c.l.b16 %v1675
      %v1740 = vunpack.c.l.b16 %v1676
      %v1741 = vunpack.c.l.b16 %v1677
      %v1742 = vunpack.c.l.b16 %v1678
      %v1743 = vunpack.c.l.b16 %v1679
      %v1744 = vunpack.c.l.b16 %v1680
      %v1745 = vunpack.c.l.b16 %v1681
      %v1746 = vunpack.c.l.b16 %v1682
      %v1747 = vunpack.c.l.b16 %v1683
      %v1748 = vunpack.c.l.b16 %v1684
      %v1749 = vunpack.c.l.b16 %v1685
      %v1750 = vunpack.c.l.b16 %v1686
      %v1751 = vunpack.c.l.b16 %v1687
      %v1752 = vunpack.c.l.b16 %v1688
      %v1753 = vunpack.c.l.b16 %v1689
      %v1754 = vunpack.c.l.b16 %v1690
      %v1755 = vpack.c.b16 %v1724, %v1723
      %v1756 = vpack.c.b16 %v1726, %v1725
      %v1757 = vpack.c.b16 %v1728, %v1727
      %v1758 = vpack.c.b16 %v1730, %v1729
      %v1759 = vpack.c.b16 %v1732, %v1731
      %v1760 = vpack.c.b16 %v1734, %v1733
      %v1761 = vpack.c.b16 %v1736, %v1735
      %v1762 = vpack.c.b16 %v1738, %v1737
      %v1763 = vpack.c.b16 %v1740, %v1739
      %v1764 = vpack.c.b16 %v1742, %v1741
      %v1765 = vpack.c.b16 %v1744, %v1743
      %v1766 = vpack.c.b16 %v1746, %v1745
      %v1767 = vpack.c.b16 %v1748, %v1747
      %v1768 = vpack.c.b16 %v1750, %v1749
      %v1769 = vpack.c.b16 %v1752, %v1751
      %v1770 = vpack.c.b16 %v1754, %v1753
      %1787 = vmatpush.bf16.msra.mxu0 %v1762
      %1788 = vmatpush.bf16.msra.mxu0 %v1761
      %1789 = vmatpush.bf16.msra.mxu0 %v1760
      %1790 = vmatpush.bf16.msra.mxu0 %v1759
      %1791 = vmatpush.bf16.msra.mxu0 %v1758
      %1792 = vmatpush.bf16.msra.mxu0 %v1757
      %1793 = vmatpush.bf16.msra.mxu0 %v1756
      %1794 = vmatpush.bf16.msra.mxu0 %v1755
      %1795 = vmatmul.bf16.gmra.mxu0 %v447
      %v1796 = vpop.f32.mrf.mxu0
      %v1797 = vadd.f32 0.0, %v1796
      %v1798 = vpop.f32.mrf.mxu0
      %1799 = vdwg.mxu0
      %1800 = vmatpush.bf16.msra.mxu0 %v1770
      %1801 = vmatpush.bf16.msra.mxu0 %v1769
      %1802 = vmatpush.bf16.msra.mxu0 %v1768
      %1803 = vmatpush.bf16.msra.mxu0 %v1767
      %1804 = vmatpush.bf16.msra.mxu0 %v1766
      %1805 = vmatpush.bf16.msra.mxu0 %v1765
      %1806 = vmatpush.bf16.msra.mxu0 %v1764
      %1807 = vmatpush.bf16.msra.mxu0 %v1763
      %1808 = vmatmul.bf16.gmra.mxu0 %v448
      %v1809 = vpop.f32.mrf.mxu0
      %v1810 = vadd.f32 %v1797, %v1809
      %v1811 = vpop.f32.mrf.mxu0
      %1812 = vdwg.mxu0
      %v1813 = vld [vmem:[%s1] sm:$0xf]
      %v1814 = vld [vmem:[%s1 + $0x4] sm:$0xf]
      %v1815 = vpack.c.bf16 %v725, %v570
      %v1816 = vpack.c.bf16 %v1035, %v880
      %v1817 = vpack.c.bf16 %v1345, %v1190
      %v1818 = vpack.c.bf16 %v1655, %v1500
      %v1819 = vpack.c.bf16 %v1810, %v1810
      %v1820 = vld [vmem:[%s2] sm:$0xff]
      %v1821 = vld [vmem:[%s2 + $0x8] sm:$0xff]
      %1823 = vset.pattern.permute.xlu0 0
      %1824 = vperm.xlu0 %1823, %v1820
      %v1825 = vpop.permute.xlu0 %1824
      %1828 = vset.pattern.permute.xlu0 0
      %1829 = vperm.xlu0 %1828, %v1821
      %v1830 = vpop.permute.xlu0 %1829
      %v1834 = vunpack.c.l.b16 %v1813
      %v1835 = vunpack.c.l.b16 %v1814
      %v1836 = vpack.c.b16 %v1835, %v1834
      %vm1837 = vcmask 588800
      %v1839 = vsel %vm1837, %v1836, 0
      %vm1841 = vcmask 1043456
      %v1843 = vsel %vm1841, %v1819, 0
      %1845 = vmatpush.bf16.msra.mxu0 0
      %1846 = vmatpush.bf16.msra.mxu0 0
      %1847 = vmatpush.bf16.msra.mxu0 0
      %1848 = vmatpush.bf16.msra.mxu0 %v1843
      %1849 = vmatpush.bf16.msra.mxu0 %v1818
      %1850 = vmatpush.bf16.msra.mxu0 %v1817
      %1851 = vmatpush.bf16.msra.mxu0 %v1816
      %1852 = vmatpush.bf16.msra.mxu0 %v1815
      %1853 = vmatmul.bf16.gmra.mxu0 %v1839
      %v1854 = vpop.f32.mrf.mxu0
      %v1855 = vadd.f32 %v1825, %v1854
      %v1856 = vpop.f32.mrf.mxu0
      %v1857 = vadd.f32 %v1830, %v1856
      %1858 = vdwg.mxu0
      %v1859 = vmax.f32 %v1855, 0.0
      %v1860 = vmax.f32 %v1857, 0.0
      %v1861 = vpack.c.bf16 %v1859, %v1859
      %v1862 = vpack.c.bf16 %v1860, %v1860
      %v1863 = vld [vmem:[%s8] sm:$0xf]
      %v1864 = vld [vmem:[%s8 + $0x4] sm:$0xf]
      %v1865 = vld [vmem:[%s8 + $0x8] sm:$0xf]
      %v1866 = vld [vmem:[%s8 + $0xc] sm:$0xf]
      %v1867 = vld [vmem:[%s8 + $0x10] sm:$0xf]
      %v1868 = vld [vmem:[%s8 + $0x14] sm:$0xf]
      %v1869 = vld [vmem:[%s8 + $0x18] sm:$0xf]
      %v1870 = vld [vmem:[%s8 + $0x1c] sm:$0xf]
      %v1873 = vunpack.c.l.b16 %v1861
      %v1874 = vunpack.c.l.b16 %v1862
      %v1875 = vpack.c.b16 %v1874, %v1873
      %v1884 = vunpack.c.l.b16 %v1863
      %v1885 = vunpack.c.l.b16 %v1864
      %v1886 = vunpack.c.l.b16 %v1865
      %v1887 = vunpack.c.l.b16 %v1866
      %v1888 = vunpack.c.l.b16 %v1867
      %v1889 = vunpack.c.l.b16 %v1868
      %v1890 = vunpack.c.l.b16 %v1869
      %v1891 = vunpack.c.l.b16 %v1870
      %v1892 = vpack.c.b16 %v1885, %v1884
      %v1893 = vpack.c.b16 %v1887, %v1886
      %v1894 = vpack.c.b16 %v1889, %v1888
      %v1895 = vpack.c.b16 %v1891, %v1890
      %vm1900 = vcmask 523264
      %v1902 = vsel %vm1900, %v1875, 0
      %1904 = vmatpush.bf16.msra.mxu0 0
      %1905 = vmatpush.bf16.msra.mxu0 0
      %1906 = vmatpush.bf16.msra.mxu0 0
      %1907 = vmatpush.bf16.msra.mxu0 0
      %1908 = vmatpush.bf16.msra.mxu0 %v1895
      %1909 = vmatpush.bf16.msra.mxu0 %v1894
      %1910 = vmatpush.bf16.msra.mxu0 %v1893
      %1911 = vmatpush.bf16.msra.mxu0 %v1892
      %1912 = vmatmul.bf16.gmra.mxu0 %v1902
      %v1913 = vpop.f32.mrf.mxu0
      %v1914 = vadd.f32 0.0, %v1913
      %v1915 = vpop.f32.mrf.mxu0
      %v1916 = vadd.f32 0.0, %v1915
      %1917 = vdwg.mxu0
      %s1918 = scalar_lea.vmem %s8, 32
      %v1919 = vld [vmem:[%s1918] sm:$0xf]
      %v1920 = vld [vmem:[%s1918 + $0x4] sm:$0xf]
      %v1921 = vld [vmem:[%s1918 + $0x8] sm:$0xf]
      %v1922 = vld [vmem:[%s1918 + $0xc] sm:$0xf]
      %v1923 = vld [vmem:[%s1918 + $0x10] sm:$0xf]
      %v1924 = vld [vmem:[%s1918 + $0x14] sm:$0xf]
      %v1925 = vld [vmem:[%s1918 + $0x18] sm:$0xf]
      %v1926 = vld [vmem:[%s1918 + $0x1c] sm:$0xf]
      %v1935 = vunpack.c.l.b16 %v1919
      %v1936 = vunpack.c.l.b16 %v1920
      %v1937 = vunpack.c.l.b16 %v1921
      %v1938 = vunpack.c.l.b16 %v1922
      %v1939 = vunpack.c.l.b16 %v1923
      %v1940 = vunpack.c.l.b16 %v1924
      %v1941 = vunpack.c.l.b16 %v1925
      %v1942 = vunpack.c.l.b16 %v1926
      %v1943 = vpack.c.b16 %v1936, %v1935
      %v1944 = vpack.c.b16 %v1938, %v1937
      %v1945 = vpack.c.b16 %v1940, %v1939
      %v1946 = vpack.c.b16 %v1942, %v1941
      %1951 = vmatpush.bf16.msra.mxu0 0
      %1952 = vmatpush.bf16.msra.mxu0 0
      %1953 = vmatpush.bf16.msra.mxu0 0
      %1954 = vmatpush.bf16.msra.mxu0 0
      %1955 = vmatpush.bf16.msra.mxu0 %v1946
      %1956 = vmatpush.bf16.msra.mxu0 %v1945
      %1957 = vmatpush.bf16.msra.mxu0 %v1944
      %1958 = vmatpush.bf16.msra.mxu0 %v1943
      %1959 = vmatmul.bf16.gmra.mxu0 %v1902
      %v1960 = vpop.f32.mrf.mxu0
      %v1961 = vadd.f32 0.0, %v1960
      %v1962 = vpop.f32.mrf.mxu0
      %v1963 = vadd.f32 0.0, %v1962
      %1964 = vdwg.mxu0
      %s1965 = scalar_lea.vmem %s8, 64
      %v1966 = vld [vmem:[%s1965] sm:$0xf]
      %v1967 = vld [vmem:[%s1965 + $0x4] sm:$0xf]
      %v1968 = vld [vmem:[%s1965 + $0x8] sm:$0xf]
      %v1969 = vld [vmem:[%s1965 + $0xc] sm:$0xf]
      %v1970 = vld [vmem:[%s1965 + $0x10] sm:$0xf]
      %v1971 = vld [vmem:[%s1965 + $0x14] sm:$0xf]
      %v1972 = vld [vmem:[%s1965 + $0x18] sm:$0xf]
      %v1973 = vld [vmem:[%s1965 + $0x1c] sm:$0xf]
      %v1982 = vunpack.c.l.b16 %v1966
      %v1983 = vunpack.c.l.b16 %v1967
      %v1984 = vunpack.c.l.b16 %v1968
      %v1985 = vunpack.c.l.b16 %v1969
      %v1986 = vunpack.c.l.b16 %v1970
      %v1987 = vunpack.c.l.b16 %v1971
      %v1988 = vunpack.c.l.b16 %v1972
      %v1989 = vunpack.c.l.b16 %v1973
      %v1990 = vpack.c.b16 %v1983, %v1982
      %v1991 = vpack.c.b16 %v1985, %v1984
      %v1992 = vpack.c.b16 %v1987, %v1986
      %v1993 = vpack.c.b16 %v1989, %v1988
      %1998 = vmatpush.bf16.msra.mxu0 0
      %1999 = vmatpush.bf16.msra.mxu0 0
      %2000 = vmatpush.bf16.msra.mxu0 0
      %2001 = vmatpush.bf16.msra.mxu0 0
      %2002 = vmatpush.bf16.msra.mxu0 %v1993
      %2003 = vmatpush.bf16.msra.mxu0 %v1992
      %2004 = vmatpush.bf16.msra.mxu0 %v1991
      %2005 = vmatpush.bf16.msra.mxu0 %v1990
      %2006 = vmatmul.bf16.gmra.mxu0 %v1902
      %v2007 = vpop.f32.mrf.mxu0
      %v2008 = vadd.f32 0.0, %v2007
      %v2009 = vpop.f32.mrf.mxu0
      %v2010 = vadd.f32 0.0, %v2009
      %2011 = vdwg.mxu0
      %s2012 = scalar_lea.vmem %s8, 96
      %v2013 = vld [vmem:[%s2012] sm:$0xf]
      %v2014 = vld [vmem:[%s2012 + $0x4] sm:$0xf]
      %v2015 = vld [vmem:[%s2012 + $0x8] sm:$0xf]
      %v2016 = vld [vmem:[%s2012 + $0xc] sm:$0xf]
      %v2017 = vld [vmem:[%s2012 + $0x10] sm:$0xf]
      %v2018 = vld [vmem:[%s2012 + $0x14] sm:$0xf]
      %v2019 = vld [vmem:[%s2012 + $0x18] sm:$0xf]
      %v2020 = vld [vmem:[%s2012 + $0x1c] sm:$0xf]
      %v2029 = vunpack.c.l.b16 %v2013
      %v2030 = vunpack.c.l.b16 %v2014
      %v2031 = vunpack.c.l.b16 %v2015
      %v2032 = vunpack.c.l.b16 %v2016
      %v2033 = vunpack.c.l.b16 %v2017
      %v2034 = vunpack.c.l.b16 %v2018
      %v2035 = vunpack.c.l.b16 %v2019
      %v2036 = vunpack.c.l.b16 %v2020
      %v2037 = vpack.c.b16 %v2030, %v2029
      %v2038 = vpack.c.b16 %v2032, %v2031
      %v2039 = vpack.c.b16 %v2034, %v2033
      %v2040 = vpack.c.b16 %v2036, %v2035
      %2045 = vmatpush.bf16.msra.mxu0 0
      %2046 = vmatpush.bf16.msra.mxu0 0
      %2047 = vmatpush.bf16.msra.mxu0 0
      %2048 = vmatpush.bf16.msra.mxu0 0
      %2049 = vmatpush.bf16.msra.mxu0 %v2040
      %2050 = vmatpush.bf16.msra.mxu0 %v2039
      %2051 = vmatpush.bf16.msra.mxu0 %v2038
      %2052 = vmatpush.bf16.msra.mxu0 %v2037
      %2053 = vmatmul.bf16.gmra.mxu0 %v1902
      %v2054 = vpop.f32.mrf.mxu0
      %v2055 = vadd.f32 0.0, %v2054
      %v2056 = vpop.f32.mrf.mxu0
      %v2057 = vadd.f32 0.0, %v2056
      %2058 = vdwg.mxu0
      %s2059 = scalar_lea.vmem %s8, 128
      %v2060 = vld [vmem:[%s2059] sm:$0xf]
      %v2061 = vld [vmem:[%s2059 + $0x4] sm:$0xf]
      %v2062 = vld [vmem:[%s2059 + $0x8] sm:$0xf]
      %v2063 = vld [vmem:[%s2059 + $0xc] sm:$0xf]
      %v2064 = vld [vmem:[%s2059 + $0x10] sm:$0xf]
      %v2065 = vld [vmem:[%s2059 + $0x14] sm:$0xf]
      %v2066 = vld [vmem:[%s2059 + $0x18] sm:$0xf]
      %v2067 = vld [vmem:[%s2059 + $0x1c] sm:$0xf]
      %v2076 = vunpack.c.l.b16 %v2060
      %v2077 = vunpack.c.l.b16 %v2061
      %v2078 = vunpack.c.l.b16 %v2062
      %v2079 = vunpack.c.l.b16 %v2063
      %v2080 = vunpack.c.l.b16 %v2064
      %v2081 = vunpack.c.l.b16 %v2065
      %v2082 = vunpack.c.l.b16 %v2066
      %v2083 = vunpack.c.l.b16 %v2067
      %v2084 = vpack.c.b16 %v2077, %v2076
      %v2085 = vpack.c.b16 %v2079, %v2078
      %v2086 = vpack.c.b16 %v2081, %v2080
      %v2087 = vpack.c.b16 %v2083, %v2082
      %2092 = vmatpush.bf16.msra.mxu0 0
      %2093 = vmatpush.bf16.msra.mxu0 0
      %2094 = vmatpush.bf16.msra.mxu0 0
      %2095 = vmatpush.bf16.msra.mxu0 0
      %2096 = vmatpush.bf16.msra.mxu0 %v2087
      %2097 = vmatpush.bf16.msra.mxu0 %v2086
      %2098 = vmatpush.bf16.msra.mxu0 %v2085
      %2099 = vmatpush.bf16.msra.mxu0 %v2084
      %2100 = vmatmul.bf16.gmra.mxu0 %v1902
      %v2101 = vpop.f32.mrf.mxu0
      %v2102 = vadd.f32 0.0, %v2101
      %v2103 = vpop.f32.mrf.mxu0
      %v2104 = vadd.f32 0.0, %v2103
      %2105 = vdwg.mxu0
      %s2106 = scalar_lea.vmem %s8, 160
      %v2107 = vld [vmem:[%s2106] sm:$0xf]
      %v2108 = vld [vmem:[%s2106 + $0x4] sm:$0xf]
      %v2109 = vld [vmem:[%s2106 + $0x8] sm:$0xf]
      %v2110 = vld [vmem:[%s2106 + $0xc] sm:$0xf]
      %v2111 = vld [vmem:[%s2106 + $0x10] sm:$0xf]
      %v2112 = vld [vmem:[%s2106 + $0x14] sm:$0xf]
      %v2113 = vld [vmem:[%s2106 + $0x18] sm:$0xf]
      %v2114 = vld [vmem:[%s2106 + $0x1c] sm:$0xf]
      %v2123 = vunpack.c.l.b16 %v2107
      %v2124 = vunpack.c.l.b16 %v2108
      %v2125 = vunpack.c.l.b16 %v2109
      %v2126 = vunpack.c.l.b16 %v2110
      %v2127 = vunpack.c.l.b16 %v2111
      %v2128 = vunpack.c.l.b16 %v2112
      %v2129 = vunpack.c.l.b16 %v2113
      %v2130 = vunpack.c.l.b16 %v2114
      %v2131 = vpack.c.b16 %v2124, %v2123
      %v2132 = vpack.c.b16 %v2126, %v2125
      %v2133 = vpack.c.b16 %v2128, %v2127
      %v2134 = vpack.c.b16 %v2130, %v2129
      %2139 = vmatpush.bf16.msra.mxu0 0
      %2140 = vmatpush.bf16.msra.mxu0 0
      %2141 = vmatpush.bf16.msra.mxu0 0
      %2142 = vmatpush.bf16.msra.mxu0 0
      %2143 = vmatpush.bf16.msra.mxu0 %v2134
      %2144 = vmatpush.bf16.msra.mxu0 %v2133
      %2145 = vmatpush.bf16.msra.mxu0 %v2132
      %2146 = vmatpush.bf16.msra.mxu0 %v2131
      %2147 = vmatmul.bf16.gmra.mxu0 %v1902
      %v2148 = vpop.f32.mrf.mxu0
      %v2149 = vadd.f32 0.0, %v2148
      %v2150 = vpop.f32.mrf.mxu0
      %v2151 = vadd.f32 0.0, %v2150
      %2152 = vdwg.mxu0
      %s2153 = scalar_lea.vmem %s8, 192
      %v2154 = vld [vmem:[%s2153] sm:$0xf]
      %v2155 = vld [vmem:[%s2153 + $0x4] sm:$0xf]
      %v2156 = vld [vmem:[%s2153 + $0x8] sm:$0xf]
      %v2157 = vld [vmem:[%s2153 + $0xc] sm:$0xf]
      %v2158 = vld [vmem:[%s2153 + $0x10] sm:$0xf]
      %v2159 = vld [vmem:[%s2153 + $0x14] sm:$0xf]
      %v2160 = vld [vmem:[%s2153 + $0x18] sm:$0xf]
      %v2161 = vld [vmem:[%s2153 + $0x1c] sm:$0xf]
      %v2170 = vunpack.c.l.b16 %v2154
      %v2171 = vunpack.c.l.b16 %v2155
      %v2172 = vunpack.c.l.b16 %v2156
      %v2173 = vunpack.c.l.b16 %v2157
      %v2174 = vunpack.c.l.b16 %v2158
      %v2175 = vunpack.c.l.b16 %v2159
      %v2176 = vunpack.c.l.b16 %v2160
      %v2177 = vunpack.c.l.b16 %v2161
      %v2178 = vpack.c.b16 %v2171, %v2170
      %v2179 = vpack.c.b16 %v2173, %v2172
      %v2180 = vpack.c.b16 %v2175, %v2174
      %v2181 = vpack.c.b16 %v2177, %v2176
      %2186 = vmatpush.bf16.msra.mxu0 0
      %2187 = vmatpush.bf16.msra.mxu0 0
      %2188 = vmatpush.bf16.msra.mxu0 0
      %2189 = vmatpush.bf16.msra.mxu0 0
      %2190 = vmatpush.bf16.msra.mxu0 %v2181
      %2191 = vmatpush.bf16.msra.mxu0 %v2180
      %2192 = vmatpush.bf16.msra.mxu0 %v2179
      %2193 = vmatpush.bf16.msra.mxu0 %v2178
      %2194 = vmatmul.bf16.gmra.mxu0 %v1902
      %v2195 = vpop.f32.mrf.mxu0
      %v2196 = vadd.f32 0.0, %v2195
      %v2197 = vpop.f32.mrf.mxu0
      %v2198 = vadd.f32 0.0, %v2197
      %2199 = vdwg.mxu0
      %s2200 = scalar_lea.vmem %s8, 224
      %v2201 = vld [vmem:[%s2200] sm:$0xf]
      %v2202 = vld [vmem:[%s2200 + $0x4] sm:$0xf]
      %v2203 = vld [vmem:[%s2200 + $0x8] sm:$0xf]
      %v2204 = vld [vmem:[%s2200 + $0xc] sm:$0xf]
      %v2205 = vld [vmem:[%s2200 + $0x10] sm:$0xf]
      %v2206 = vld [vmem:[%s2200 + $0x14] sm:$0xf]
      %v2207 = vld [vmem:[%s2200 + $0x18] sm:$0xf]
      %v2208 = vld [vmem:[%s2200 + $0x1c] sm:$0xf]
      %v2217 = vunpack.c.l.b16 %v2201
      %v2218 = vunpack.c.l.b16 %v2202
      %v2219 = vunpack.c.l.b16 %v2203
      %v2220 = vunpack.c.l.b16 %v2204
      %v2221 = vunpack.c.l.b16 %v2205
      %v2222 = vunpack.c.l.b16 %v2206
      %v2223 = vunpack.c.l.b16 %v2207
      %v2224 = vunpack.c.l.b16 %v2208
      %v2225 = vpack.c.b16 %v2218, %v2217
      %v2226 = vpack.c.b16 %v2220, %v2219
      %v2227 = vpack.c.b16 %v2222, %v2221
      %v2228 = vpack.c.b16 %v2224, %v2223
      %2233 = vmatpush.bf16.msra.mxu0 0
      %2234 = vmatpush.bf16.msra.mxu0 0
      %2235 = vmatpush.bf16.msra.mxu0 0
      %2236 = vmatpush.bf16.msra.mxu0 0
      %2237 = vmatpush.bf16.msra.mxu0 %v2228
      %2238 = vmatpush.bf16.msra.mxu0 %v2227
      %2239 = vmatpush.bf16.msra.mxu0 %v2226
      %2240 = vmatpush.bf16.msra.mxu0 %v2225
      %2241 = vmatmul.bf16.gmra.mxu0 %v1902
      %v2242 = vpop.f32.mrf.mxu0
      %v2243 = vadd.f32 0.0, %v2242
      %v2244 = vpop.f32.mrf.mxu0
      %v2245 = vadd.f32 0.0, %v2244
      %2246 = vdwg.mxu0
      %s2247 = scalar_lea.vmem %s8, 256
      %v2248 = vld [vmem:[%s2247] sm:$0xf]
      %v2249 = vld [vmem:[%s2247 + $0x4] sm:$0xf]
      %v2250 = vld [vmem:[%s2247 + $0x8] sm:$0xf]
      %v2251 = vld [vmem:[%s2247 + $0xc] sm:$0xf]
      %v2252 = vld [vmem:[%s2247 + $0x10] sm:$0xf]
      %v2253 = vld [vmem:[%s2247 + $0x14] sm:$0xf]
      %v2254 = vld [vmem:[%s2247 + $0x18] sm:$0xf]
      %v2255 = vld [vmem:[%s2247 + $0x1c] sm:$0xf]
      %v2264 = vunpack.c.l.b16 %v2248
      %v2265 = vunpack.c.l.b16 %v2249
      %v2266 = vunpack.c.l.b16 %v2250
      %v2267 = vunpack.c.l.b16 %v2251
      %v2268 = vunpack.c.l.b16 %v2252
      %v2269 = vunpack.c.l.b16 %v2253
      %v2270 = vunpack.c.l.b16 %v2254
      %v2271 = vunpack.c.l.b16 %v2255
      %v2272 = vpack.c.b16 %v2265, %v2264
      %v2273 = vpack.c.b16 %v2267, %v2266
      %v2274 = vpack.c.b16 %v2269, %v2268
      %v2275 = vpack.c.b16 %v2271, %v2270
      %2280 = vmatpush.bf16.msra.mxu0 0
      %2281 = vmatpush.bf16.msra.mxu0 0
      %2282 = vmatpush.bf16.msra.mxu0 0
      %2283 = vmatpush.bf16.msra.mxu0 0
      %2284 = vmatpush.bf16.msra.mxu0 %v2275
      %2285 = vmatpush.bf16.msra.mxu0 %v2274
      %2286 = vmatpush.bf16.msra.mxu0 %v2273
      %2287 = vmatpush.bf16.msra.mxu0 %v2272
      %2288 = vmatmul.bf16.gmra.mxu0 %v1902
      %v2289 = vpop.f32.mrf.mxu0
      %v2290 = vadd.f32 0.0, %v2289
      %v2291 = vpop.f32.mrf.mxu0
      %v2292 = vadd.f32 0.0, %v2291
      %2293 = vdwg.mxu0
      %v2294 = vld [vmem:[%s3] sm:$0xff]
      %v2295 = vld [vmem:[%s3 + $0x8] sm:$0xff]
      %v2296 = vld [vmem:[%s3 + $0x10] sm:$0xff]
      %v2297 = vld [vmem:[%s3 + $0x18] sm:$0xff]
      %v2298 = vpack.c.bf16 %v1916, %v1914
      %v2299 = vpack.c.bf16 %v1963, %v1961
      %v2300 = vpack.c.bf16 %v2010, %v2008
      %v2301 = vpack.c.bf16 %v2057, %v2055
      %v2302 = vpack.c.bf16 %v2104, %v2102
      %v2303 = vpack.c.bf16 %v2151, %v2149
      %v2304 = vpack.c.bf16 %v2198, %v2196
      %v2305 = vpack.c.bf16 %v2245, %v2243
      %v2306 = vpack.c.bf16 %v2292, %v2290
      %v2307 = vld [vmem:[%s4] sm:$0xff]
      %v2308 = vld [vmem:[%s4 + $0x8] sm:$0xff]
      %v2309 = vld [vmem:[%s4 + $0x10] sm:$0xff]
      %v2310 = vld [vmem:[%s4 + $0x18] sm:$0xff]
      %2312 = vset.pattern.permute.xlu0 0
      %2313 = vperm.xlu0 %2312, %v2307
      %v2314 = vpop.permute.xlu0 %2313
      %2317 = vset.pattern.permute.xlu0 0
      %2318 = vperm.xlu0 %2317, %v2308
      %v2319 = vpop.permute.xlu0 %2318
      %2322 = vset.pattern.permute.xlu0 0
      %2323 = vperm.xlu0 %2322, %v2309
      %v2324 = vpop.permute.xlu0 %2323
      %2327 = vset.pattern.permute.xlu0 0
      %2328 = vperm.xlu0 %2327, %v2310
      %v2329 = vpop.permute.xlu0 %2328
      %v2335 = vunpack.c.l.b16 %v2294
      %v2336 = vunpack.c.h.b16 %v2294
      %v2337 = vunpack.c.l.b16 %v2295
      %v2338 = vunpack.c.h.b16 %v2295
      %v2339 = vunpack.c.l.b16 %v2296
      %v2340 = vunpack.c.h.b16 %v2296
      %v2341 = vunpack.c.l.b16 %v2297
      %v2342 = vunpack.c.h.b16 %v2297
      %v2343 = vpack.c.b16 %v2337, %v2335
      %v2344 = vpack.c.b16 %v2338, %v2336
      %v2345 = vpack.c.b16 %v2341, %v2339
      %v2346 = vpack.c.b16 %v2342, %v2340
      %vm2349 = vcmask 130048
      %v2351 = vsel %vm2349, %v2344, 0
      %v2354 = vsel %vm2349, %v2346, 0
      %2356 = vmatpush.bf16.msra.mxu0 %v2305
      %2357 = vmatpush.bf16.msra.mxu0 %v2304
      %2358 = vmatpush.bf16.msra.mxu0 %v2303
      %2359 = vmatpush.bf16.msra.mxu0 %v2302
      %2360 = vmatpush.bf16.msra.mxu0 %v2301
      %2361 = vmatpush.bf16.msra.mxu0 %v2300
      %2362 = vmatpush.bf16.msra.mxu0 %v2299
      %2363 = vmatpush.bf16.msra.mxu0 %v2298
      %2364 = vmatmul.bf16.gmra.mxu0 %v2343
      %v2365 = vpop.f32.mrf.mxu0
      %v2366 = vadd.f32 %v2314, %v2365
      %v2367 = vpop.f32.mrf.mxu0
      %v2368 = vadd.f32 %v2319, %v2367
      %2369 = vmatmul.bf16.gmra.mxu0 %v2345
      %v2370 = vpop.f32.mrf.mxu0
      %v2371 = vadd.f32 %v2324, %v2370
      %v2372 = vpop.f32.mrf.mxu0
      %v2373 = vadd.f32 %v2329, %v2372
      %2374 = vdwg.mxu0
      %2375 = vmatpush.bf16.msra.mxu0 0
      %2376 = vmatpush.bf16.msra.mxu0 0
      %2377 = vmatpush.bf16.msra.mxu0 0
      %2378 = vmatpush.bf16.msra.mxu0 0
      %2379 = vmatpush.bf16.msra.mxu0 0
      %2380 = vmatpush.bf16.msra.mxu0 0
      %2381 = vmatpush.bf16.msra.mxu0 0
      %2382 = vmatpush.bf16.msra.mxu0 %v2306
      %2383 = vmatmul.bf16.gmra.mxu0 %v2351
      %v2384 = vpop.f32.mrf.mxu0
      %v2385 = vadd.f32 %v2366, %v2384
      %v2386 = vpop.f32.mrf.mxu0
      %v2387 = vadd.f32 %v2368, %v2386
      %2388 = vmatmul.bf16.gmra.mxu0 %v2354
      %v2389 = vpop.f32.mrf.mxu0
      %v2390 = vadd.f32 %v2371, %v2389
      %v2391 = vpop.f32.mrf.mxu0
      %v2392 = vadd.f32 %v2373, %v2391
      %2393 = vdwg.mxu0
      %v2394 = vmax.f32 %v2385, 0.0
      %v2395 = vmax.f32 %v2387, 0.0
      %v2396 = vmax.f32 %v2390, 0.0
      %v2397 = vmax.f32 %v2392, 0.0
      %v2398 = vpack.c.bf16 %v2394, %v2394
      %v2399 = vpack.c.bf16 %v2395, %v2395
      %v2400 = vpack.c.bf16 %v2396, %v2396
      %v2401 = vpack.c.bf16 %v2397, %v2397
      %v2402 = vsel %vm2349, %v2394, 0.0
      %2403 = vadd.xlane.f32.xlu0 %v2402
      %v2404 = vpop.xlane.xlu0 %2403
      %v2405 = vsel %vm2349, %v2395, 0.0
      %2406 = vadd.xlane.f32.xlu0 %v2405
      %v2407 = vpop.xlane.xlu0 %2406
      %v2408 = vsel %vm2349, %v2396, 0.0
      %2409 = vadd.xlane.f32.xlu0 %v2408
      %v2410 = vpop.xlane.xlu0 %2409
      %v2411 = vsel %vm2349, %v2397, 0.0
      %2412 = vadd.xlane.f32.xlu0 %v2411
      %v2413 = vpop.xlane.xlu0 %2412
      %v2414 = vrcp.pop 16.0
      %v2415 = vmul.f32 16.0, %v2414
      %v2416 = vsub.f32 1.0, %v2415
      %v2417 = vmul.f32 %v2414, %v2416
      %v2418 = vadd.f32 %v2414, %v2417
      %vm2419 = vweird.f32 %v2414
      %v2420 = vsel %vm2419, %v2414, %v2418
      %v2421 = vmul.f32 %v2404, %v2420
      %v2422 = vmul.f32 %v2407, %v2420
      %v2423 = vmul.f32 %v2410, %v2420
      %v2424 = vmul.f32 %v2413, %v2420
      %v2425 = vld [vmem:[%s5] sm:$0xf]
      %v2426 = vpack.c.bf16 %v2422, %v2421
      %v2427 = vpack.c.bf16 %v2424, %v2423
      %v2428 = vld [vmem:[%s6] sm:$0xff]
      %vm2429 = vcmask 261120
      %v2431 = vsel %vm2429, %v2425, 0
      %2433 = vmatpush.bf16.msra.mxu0 0
      %2434 = vmatpush.bf16.msra.mxu0 0
      %2435 = vmatpush.bf16.msra.mxu0 0
      %2436 = vmatpush.bf16.msra.mxu0 0
      %2437 = vmatpush.bf16.msra.mxu0 0
      %2438 = vmatpush.bf16.msra.mxu0 0
      %2439 = vmatpush.bf16.msra.mxu0 %v2427
      %2440 = vmatpush.bf16.msra.mxu0 %v2426
      %2441 = vmatmul.bf16.gmra.mxu0 %v2431
      %v2442 = vpop.f32.mrf.mxu0
      %v2443 = vadd.f32 %v2428, %v2442
      %v2444 = vpop.f32.mrf.mxu0
      %2445 = vdwg.mxu0
      %vm2446 = vcmask 519168
      %2447 = vst.msk [vmem:[%s400] sm:$0xf] %vm2446, %v1861
      %2448 = vst.msk [vmem:[%s400 + $0x4] sm:$0xf] %vm2446, %v1862
      %vm2449 = vcmask 125952
      %2450 = vst.msk [vmem:[%s405] sm:$0xf] %vm2449, %v2398
      %2451 = vst.msk [vmem:[%s405 + $0x4] sm:$0xf] %vm2449, %v2399
      %2452 = vst.msk [vmem:[%s405 + $0x8] sm:$0xf] %vm2449, %v2400
      %2453 = vst.msk [vmem:[%s405 + $0xc] sm:$0xf] %vm2449, %v2401
      %vm2454 = vcmask 7168
      %2455 = vst.msk [vmem:[%s409] sm:$0xff] %vm2454, %v2443
      %p2456 = scmp.lt.s32.totalorder %s23, 1
      %s2457 = scalar_select %p2456, %s23, 1
      %s2458 = smul.addr %s2457, 2
      %s2459 = smul.addr %s2458, 4
      %s2460 = scalar_lea.vmem %s9, %s2459
      %p2461 = scmp.lt.s32.totalorder %s23, 1
      %s2462 = scalar_select %p2461, %s23, 1
      %s2463 = smul.addr %s2462, 4
      %s2464 = smul.addr %s2463, 4
      %s2465 = scalar_lea.vmem %s10, %s2464
      %p2466 = scmp.lt.s32.totalorder %s23, 1
      %s2467 = scalar_select %p2466, %s23, 1
      %s2468 = smul.addr %s2467, 8
      %s2469 = scalar_lea.vmem %s11, %s2468
      // Predicated region
      $region57: #{divco_plgan_forward.4} parent=55 // pred_check
        %p2470 = pneg %p235
      $region58: #{divco_plgan_forward.4} parent=55 // pred_check_branch
        %2472 = sbr.rel (%p2470) target = $region60
      $region59: #{divco_plgan_forward.4} parent=55 // pred_region
        _
      $region60: #{divco_plgan_forward.4} parent=55 // pred_fallthru
        _
      // Predicated region
      $region61: #{divco_plgan_forward.4} parent=55 // pred_check
        %p2473 = pneg %p261
      $region62: #{divco_plgan_forward.4} parent=55 // pred_check_branch
        %2475 = sbr.rel (%p2473) target = $region64
      $region63: #{divco_plgan_forward.4} parent=55 // pred_region
        _
      $region64: #{divco_plgan_forward.4} parent=55 // pred_fallthru
        _
      // Predicated region
      $region65: #{divco_plgan_forward.4} parent=55 // pred_check
        %p2476 = pneg %p287
      $region66: #{divco_plgan_forward.4} parent=55 // pred_check_branch
        %2478 = sbr.rel (%p2476) target = $region68
      $region67: #{divco_plgan_forward.4} parent=55 // pred_region
        _
      $region68: #{divco_plgan_forward.4} parent=55 // pred_fallthru
        _
    $region56: #{divco_plgan_forward.4} parent=5 // pred_fallthru
      _
    %p2479 = scmp.le.s32.totalorder 2, %s18
    // Predicated region
    $region69: #{divco_plgan_forward.4} parent=5 // pred_check
      %p2480 = pneg %p2479
    $region70: #{divco_plgan_forward.4} parent=5 // pred_check_branch
      %2482 = sbr.rel (%p2480) target = $region72
    $region71: #{divco_plgan_forward.4} parent=5 // pred_region
      %s2483 = ssub.s32 %s18, 2
      // Predicated region
      $region73: #{divco_plgan_forward.4} parent=71 // pred_check
        %p2484 = pneg %p241
      $region74: #{divco_plgan_forward.4} parent=71 // pred_check_branch
        %2486 = sbr.rel (%p2484) target = $region76
      $region75: #{divco_plgan_forward.4} parent=71 // pred_region
        %p2487 = scmp.lt.s32.totalorder %s24, 1
        %s2488 = scalar_select %p2487, %s24, 1
        %s2489 = smul.addr %s2488, 2
        %s2490 = smul.addr %s2489, 4
        %s2491 = scalar_lea.vmem %s9, %s2490
      $region76: #{divco_plgan_forward.4} parent=71 // pred_fallthru
        _
      // Predicated region
      $region77: #{divco_plgan_forward.4} parent=71 // pred_check
        %p2492 = pneg %p267
      $region78: #{divco_plgan_forward.4} parent=71 // pred_check_branch
        %2494 = sbr.rel (%p2492) target = $region80
      $region79: #{divco_plgan_forward.4} parent=71 // pred_region
        %p2495 = scmp.lt.s32.totalorder %s24, 1
        %s2496 = scalar_select %p2495, %s24, 1
        %s2497 = smul.addr %s2496, 4
        %s2498 = smul.addr %s2497, 4
        %s2499 = scalar_lea.vmem %s10, %s2498
      $region80: #{divco_plgan_forward.4} parent=71 // pred_fallthru
        _
      // Predicated region
      $region81: #{divco_plgan_forward.4} parent=71 // pred_check
        %p2500 = pneg %p293
      $region82: #{divco_plgan_forward.4} parent=71 // pred_check_branch
        %2502 = sbr.rel (%p2500) target = $region84
      $region83: #{divco_plgan_forward.4} parent=71 // pred_region
        %p2503 = scmp.lt.s32.totalorder %s24, 1
        %s2504 = scalar_select %p2503, %s24, 1
        %s2505 = smul.addr %s2504, 8
        %s2506 = scalar_lea.vmem %s11, %s2505
      $region84: #{divco_plgan_forward.4} parent=71 // pred_fallthru
        _
    $region72: #{divco_plgan_forward.4} parent=5 // pred_fallthru
      _
  $region6: #{divco_plgan_forward.4} parent=0 // loop_footer
    %s22 = sadd.s32 1, %s18
  $region7: #{divco_plgan_forward.4} parent=0 // loop_footer_branch
    %17 = sbr.rel target = $region3
  $region8: #{divco_plgan_forward.4} parent=0 // loop_exit
    _

// kernel: divco_plgan_forward.5
$region0: #{divco_plgan_forward.5}
  #allocation0 [shape = 'u32[]', space=smem, size = 0x4, offset = 0x4, fixed_abs, tag = 'smem constant byte address 0x4 - core index']
  #allocation1 [shape = 'u32[72,128]{1,0:T(1,128)}', space=vmem, size = 0x9000, scoped, tag = 'internal scratch']
  #allocation2 [shape = 'f32[1,1]{1,0:T(1,128)S(1)}', space=vmem, size = 0x200, scoped, tag = 'scoped memory for divco_plgan_forward.5']
  %s0 = inlined_call_operand.vmem [shape: bf16[2,32,64], index: 0, kind: input, shape index: {}]
  %s1 = inlined_call_operand.vmem [shape: bf16[2,16,64], index: 1, kind: input, shape index: {}]
  %s2 = inlined_call_operand.vmem [shape: bf16[2,32,16], index: 2, kind: input, shape index: {}]
  %s3 = inlined_call_operand.vmem [shape: bf16[32,576], index: 3, kind: input, shape index: {}]
  %s4 = inlined_call_operand.vmem [shape: f32[32,1], index: 4, kind: input, shape index: {}]
  %s5 = inlined_call_operand.vmem [shape: bf16[16,432], index: 5, kind: input, shape index: {}]
  %s6 = inlined_call_operand.vmem [shape: f32[16,1], index: 6, kind: input, shape index: {}]
  %s7 = inlined_call_operand.vmem [shape: bf16[4,576], index: 7, kind: input, shape index: {}]
  %s8 = inlined_call_operand.<no memory space> [shape: f32[1,1], index: 8, kind: input, shape index: {}]
  %s9 = inlined_call_operand.vmem [shape: bf16[9,64,64], index: 9, kind: input, shape index: {}]
  %s10 = inlined_call_operand.vmem [shape: bf16[9,16,64], index: 10, kind: input, shape index: {}]
  %s11 = inlined_call_operand.vmem [shape: bf16[9,64,256], index: 11, kind: input, shape index: {}]
  %s12 = inlined_call_operand.vmem [shape: bf16[9,64,256], index: 12, kind: input, shape index: {}]
  %s13 = inlined_call_operand.vmem [shape: bf16[9,64,256], index: 13, kind: input, shape index: {}]
  %s14 = inlined_call_operand.vmem [shape: f32[2,4,256], index: 14, kind: output, shape index: {}]
  %s15 = sld [smem:[#allocation0]]
  $region89: #{divco_plgan_forward.5} parent=0
    _
  %s17 = ssub.s32 1, %s15
  %s18 = scalar_select 0, %s17, %s15
  %v19 = vstv %s8
  %20 = vst [vmem:[#allocation2] sm:$0x1] %v19
  loop: start=0, step=1, limit=4
  $region2: #{divco_plgan_forward.5} parent=0 // loop_pre_header
    _
  $region3: #{divco_plgan_forward.5} parent=0 // loop_header
    %s22 = sphi 0, %s26
    %p23 = scmp.ge.s32.totalorder %s22, 4
    %s32 = sphi 0, %s34
    %s35 = sphi 0, %s32
    %s36 = sphi 0, %s35
    %s52 = sphi 0, %s36
    %s58 = sphi 0, %s60
    %s61 = sphi 0, %s58
    %s62 = sphi 0, %s61
    %s78 = sphi 0, %s62
    %s84 = sphi 0, %s86
    %s87 = sphi 0, %s84
    %s88 = sphi 0, %s87
    %s104 = sphi 0, %s88
    %s108 = sphi 0, %s108
    %s110 = sphi 0, %s108
    %s111 = sphi 0, %s110
    %s125 = sphi 0, %s111
    %s129 = sphi 0, %s129
    %s131 = sphi 0, %s129
    %s132 = sphi 0, %s131
    %s146 = sphi 0, %s132
    %s150 = sphi 0, %s150
    %s152 = sphi 0, %s150
    %s153 = sphi 0, %s152
    %s167 = sphi 0, %s153
    %s171 = sphi 0, %s171
    %s173 = sphi 0, %s171
    %s174 = sphi 0, %s173
    %s188 = sphi 0, %s174
    %s192 = sphi 0, %s192
    %s194 = sphi 0, %s192
    %s195 = sphi 0, %s194
    %s209 = sphi 0, %s195
    %s213 = sphi 0, %s213
    %s215 = sphi 0, %s213
    %s216 = sphi 0, %s215
    %s230 = sphi 0, %s216
    %s234 = sphi 0, %s234
    %s236 = sphi 0, %s234
    %s237 = sphi 0, %s236
    %s251 = sphi 0, %s237
    %s255 = sphi 0, %s255
    %s257 = sphi 0, %s255
    %s258 = sphi 0, %s257
    %s272 = sphi 0, %s258
    %s276 = sphi 0, %s276
    %s278 = sphi 0, %s276
    %s279 = sphi 0, %s278
    %s293 = sphi 0, %s279
    %s297 = sphi 0, %s297
    %s299 = sphi 0, %s297
    %s300 = sphi 0, %s299
    %s314 = sphi 0, %s300
    %s318 = sphi 0, %s318
    %s320 = sphi 0, %s318
    %s321 = sphi 0, %s320
    %s335 = sphi 0, %s321
    %s341 = sphi 0, %s343
    %s344 = sphi 0, %s341
    %s345 = sphi 0, %s344
    %s361 = sphi 0, %s345
  $region4: #{divco_plgan_forward.5} parent=0 // loop_header_branch
    %25 = sbr.rel (%p23) target = $region8
  $region5: #{divco_plgan_forward.5} parent=0 // loop_body
    %s27 = ssub.s32 %s22, 1
    %s28 = ssub.s32 %s22, 2
    %s29 = sadd.s32 %s22, 1
    %s30 = ssub.s32 %s22, %s29
    %p31 = scmp.eq.s32.totalorder %s30, 0
    %s33 = sadd.s32 %s32, 1
    %s34 = scalar_select %p31, %s32, %s33
    %p37 = pneg %p31
    %p38 = scmp.eq.s32.totalorder %s22, 1
    %p39 = por %p37, %p38
    %p40 = scmp.ne.s32.totalorder %s32, %s35
    %p41 = scmp.eq.s32.totalorder %s22, 0
    %p42 = por %p40, %p41
    %p43 = scmp.ne.s32.totalorder %s32, %s35
    %p44 = scmp.eq.s32.totalorder %s27, 1
    %p45 = por %p43, %p44
    %p46 = scmp.ne.s32.totalorder %s35, %s36
    %p47 = scmp.eq.s32.totalorder %s27, 0
    %p48 = por %p46, %p47
    %p49 = scmp.ne.s32.totalorder %s35, %s36
    %p50 = scmp.eq.s32.totalorder %s28, 1
    %p51 = por %p49, %p50
    %p53 = scmp.ne.s32.totalorder %s36, %s52
    %p54 = scmp.eq.s32.totalorder %s28, 0
    %p55 = por %p53, %p54
    %s56 = ssub.s32 %s22, %s29
    %p57 = scmp.eq.s32.totalorder %s56, 0
    %s59 = sadd.s32 %s58, 1
    %s60 = scalar_select %p57, %s58, %s59
    %p63 = pneg %p57
    %p64 = scmp.eq.s32.totalorder %s22, 1
    %p65 = por %p63, %p64
    %p66 = scmp.ne.s32.totalorder %s58, %s61
    %p67 = scmp.eq.s32.totalorder %s22, 0
    %p68 = por %p66, %p67
    %p69 = scmp.ne.s32.totalorder %s58, %s61
    %p70 = scmp.eq.s32.totalorder %s27, 1
    %p71 = por %p69, %p70
    %p72 = scmp.ne.s32.totalorder %s61, %s62
    %p73 = scmp.eq.s32.totalorder %s27, 0
    %p74 = por %p72, %p73
    %p75 = scmp.ne.s32.totalorder %s61, %s62
    %p76 = scmp.eq.s32.totalorder %s28, 1
    %p77 = por %p75, %p76
    %p79 = scmp.ne.s32.totalorder %s62, %s78
    %p80 = scmp.eq.s32.totalorder %s28, 0
    %p81 = por %p79, %p80
    %s82 = ssub.s32 %s22, %s29
    %p83 = scmp.eq.s32.totalorder %s82, 0
    %s85 = sadd.s32 %s84, 1
    %s86 = scalar_select %p83, %s84, %s85
    %p89 = pneg %p83
    %p90 = scmp.eq.s32.totalorder %s22, 1
    %p91 = por %p89, %p90
    %p92 = scmp.ne.s32.totalorder %s84, %s87
    %p93 = scmp.eq.s32.totalorder %s22, 0
    %p94 = por %p92, %p93
    %p95 = scmp.ne.s32.totalorder %s84, %s87
    %p96 = scmp.eq.s32.totalorder %s27, 1
    %p97 = por %p95, %p96
    %p98 = scmp.ne.s32.totalorder %s87, %s88
    %p99 = scmp.eq.s32.totalorder %s27, 0
    %p100 = por %p98, %p99
    %p101 = scmp.ne.s32.totalorder %s87, %s88
    %p102 = scmp.eq.s32.totalorder %s28, 1
    %p103 = por %p101, %p102
    %p105 = scmp.ne.s32.totalorder %s88, %s104
    %p106 = scmp.eq.s32.totalorder %s28, 0
    %p107 = por %p105, %p106
    %s109 = sadd.s32 %s108, 1
    %p112 = scmp.eq.s32.totalorder %s22, 1
    %p113 = scmp.ne.s32.totalorder %s108, %s110
    %p114 = scmp.eq.s32.totalorder %s22, 0
    %p115 = por %p113, %p114
    %p116 = scmp.ne.s32.totalorder %s108, %s110
    %p117 = scmp.eq.s32.totalorder %s27, 1
    %p118 = por %p116, %p117
    %p119 = scmp.ne.s32.totalorder %s110, %s111
    %p120 = scmp.eq.s32.totalorder %s27, 0
    %p121 = por %p119, %p120
    %p122 = scmp.ne.s32.totalorder %s110, %s111
    %p123 = scmp.eq.s32.totalorder %s28, 1
    %p124 = por %p122, %p123
    %p126 = scmp.ne.s32.totalorder %s111, %s125
    %p127 = scmp.eq.s32.totalorder %s28, 0
    %p128 = por %p126, %p127
    %s130 = sadd.s32 %s129, 1
    %p133 = scmp.eq.s32.totalorder %s22, 1
    %p134 = scmp.ne.s32.totalorder %s129, %s131
    %p135 = scmp.eq.s32.totalorder %s22, 0
    %p136 = por %p134, %p135
    %p137 = scmp.ne.s32.totalorder %s129, %s131
    %p138 = scmp.eq.s32.totalorder %s27, 1
    %p139 = por %p137, %p138
    %p140 = scmp.ne.s32.totalorder %s131, %s132
    %p141 = scmp.eq.s32.totalorder %s27, 0
    %p142 = por %p140, %p141
    %p143 = scmp.ne.s32.totalorder %s131, %s132
    %p144 = scmp.eq.s32.totalorder %s28, 1
    %p145 = por %p143, %p144
    %p147 = scmp.ne.s32.totalorder %s132, %s146
    %p148 = scmp.eq.s32.totalorder %s28, 0
    %p149 = por %p147, %p148
    %s151 = sadd.s32 %s150, 1
    %p154 = scmp.eq.s32.totalorder %s22, 1
    %p155 = scmp.ne.s32.totalorder %s150, %s152
    %p156 = scmp.eq.s32.totalorder %s22, 0
    %p157 = por %p155, %p156
    %p158 = scmp.ne.s32.totalorder %s150, %s152
    %p159 = scmp.eq.s32.totalorder %s27, 1
    %p160 = por %p158, %p159
    %p161 = scmp.ne.s32.totalorder %s152, %s153
    %p162 = scmp.eq.s32.totalorder %s27, 0
    %p163 = por %p161, %p162
    %p164 = scmp.ne.s32.totalorder %s152, %s153
    %p165 = scmp.eq.s32.totalorder %s28, 1
    %p166 = por %p164, %p165
    %p168 = scmp.ne.s32.totalorder %s153, %s167
    %p169 = scmp.eq.s32.totalorder %s28, 0
    %p170 = por %p168, %p169
    %s172 = sadd.s32 %s171, 1
    %p175 = scmp.eq.s32.totalorder %s22, 1
    %p176 = scmp.ne.s32.totalorder %s171, %s173
    %p177 = scmp.eq.s32.totalorder %s22, 0
    %p178 = por %p176, %p177
    %p179 = scmp.ne.s32.totalorder %s171, %s173
    %p180 = scmp.eq.s32.totalorder %s27, 1
    %p181 = por %p179, %p180
    %p182 = scmp.ne.s32.totalorder %s173, %s174
    %p183 = scmp.eq.s32.totalorder %s27, 0
    %p184 = por %p182, %p183
    %p185 = scmp.ne.s32.totalorder %s173, %s174
    %p186 = scmp.eq.s32.totalorder %s28, 1
    %p187 = por %p185, %p186
    %p189 = scmp.ne.s32.totalorder %s174, %s188
    %p190 = scmp.eq.s32.totalorder %s28, 0
    %p191 = por %p189, %p190
    %s193 = sadd.s32 %s192, 1
    %p196 = scmp.eq.s32.totalorder %s22, 1
    %p197 = scmp.ne.s32.totalorder %s192, %s194
    %p198 = scmp.eq.s32.totalorder %s22, 0
    %p199 = por %p197, %p198
    %p200 = scmp.ne.s32.totalorder %s192, %s194
    %p201 = scmp.eq.s32.totalorder %s27, 1
    %p202 = por %p200, %p201
    %p203 = scmp.ne.s32.totalorder %s194, %s195
    %p204 = scmp.eq.s32.totalorder %s27, 0
    %p205 = por %p203, %p204
    %p206 = scmp.ne.s32.totalorder %s194, %s195
    %p207 = scmp.eq.s32.totalorder %s28, 1
    %p208 = por %p206, %p207
    %p210 = scmp.ne.s32.totalorder %s195, %s209
    %p211 = scmp.eq.s32.totalorder %s28, 0
    %p212 = por %p210, %p211
    %s214 = sadd.s32 %s213, 1
    %p217 = scmp.eq.s32.totalorder %s22, 1
    %p218 = scmp.ne.s32.totalorder %s213, %s215
    %p219 = scmp.eq.s32.totalorder %s22, 0
    %p220 = por %p218, %p219
    %p221 = scmp.ne.s32.totalorder %s213, %s215
    %p222 = scmp.eq.s32.totalorder %s27, 1
    %p223 = por %p221, %p222
    %p224 = scmp.ne.s32.totalorder %s215, %s216
    %p225 = scmp.eq.s32.totalorder %s27, 0
    %p226 = por %p224, %p225
    %p227 = scmp.ne.s32.totalorder %s215, %s216
    %p228 = scmp.eq.s32.totalorder %s28, 1
    %p229 = por %p227, %p228
    %p231 = scmp.ne.s32.totalorder %s216, %s230
    %p232 = scmp.eq.s32.totalorder %s28, 0
    %p233 = por %p231, %p232
    %s235 = sadd.s32 %s234, 1
    %p238 = scmp.eq.s32.totalorder %s22, 1
    %p239 = scmp.ne.s32.totalorder %s234, %s236
    %p240 = scmp.eq.s32.totalorder %s22, 0
    %p241 = por %p239, %p240
    %p242 = scmp.ne.s32.totalorder %s234, %s236
    %p243 = scmp.eq.s32.totalorder %s27, 1
    %p244 = por %p242, %p243
    %p245 = scmp.ne.s32.totalorder %s236, %s237
    %p246 = scmp.eq.s32.totalorder %s27, 0
    %p247 = por %p245, %p246
    %p248 = scmp.ne.s32.totalorder %s236, %s237
    %p249 = scmp.eq.s32.totalorder %s28, 1
    %p250 = por %p248, %p249
    %p252 = scmp.ne.s32.totalorder %s237, %s251
    %p253 = scmp.eq.s32.totalorder %s28, 0
    %p254 = por %p252, %p253
    %s256 = sadd.s32 %s255, 1
    %p259 = scmp.eq.s32.totalorder %s22, 1
    %p260 = scmp.ne.s32.totalorder %s255, %s257
    %p261 = scmp.eq.s32.totalorder %s22, 0
    %p262 = por %p260, %p261
    %p263 = scmp.ne.s32.totalorder %s255, %s257
    %p264 = scmp.eq.s32.totalorder %s27, 1
    %p265 = por %p263, %p264
    %p266 = scmp.ne.s32.totalorder %s257, %s258
    %p267 = scmp.eq.s32.totalorder %s27, 0
    %p268 = por %p266, %p267
    %p269 = scmp.ne.s32.totalorder %s257, %s258
    %p270 = scmp.eq.s32.totalorder %s28, 1
    %p271 = por %p269, %p270
    %p273 = scmp.ne.s32.totalorder %s258, %s272
    %p274 = scmp.eq.s32.totalorder %s28, 0
    %p275 = por %p273, %p274
    %s277 = sadd.s32 %s276, 1
    %p280 = scmp.eq.s32.totalorder %s22, 1
    %p281 = scmp.ne.s32.totalorder %s276, %s278
    %p282 = scmp.eq.s32.totalorder %s22, 0
    %p283 = por %p281, %p282
    %p284 = scmp.ne.s32.totalorder %s276, %s278
    %p285 = scmp.eq.s32.totalorder %s27, 1
    %p286 = por %p284, %p285
    %p287 = scmp.ne.s32.totalorder %s278, %s279
    %p288 = scmp.eq.s32.totalorder %s27, 0
    %p289 = por %p287, %p288
    %p290 = scmp.ne.s32.totalorder %s278, %s279
    %p291 = scmp.eq.s32.totalorder %s28, 1
    %p292 = por %p290, %p291
    %p294 = scmp.ne.s32.totalorder %s279, %s293
    %p295 = scmp.eq.s32.totalorder %s28, 0
    %p296 = por %p294, %p295
    %s298 = sadd.s32 %s297, 1
    %p301 = scmp.eq.s32.totalorder %s22, 1
    %p302 = scmp.ne.s32.totalorder %s297, %s299
    %p303 = scmp.eq.s32.totalorder %s22, 0
    %p304 = por %p302, %p303
    %p305 = scmp.ne.s32.totalorder %s297, %s299
    %p306 = scmp.eq.s32.totalorder %s27, 1
    %p307 = por %p305, %p306
    %p308 = scmp.ne.s32.totalorder %s299, %s300
    %p309 = scmp.eq.s32.totalorder %s27, 0
    %p310 = por %p308, %p309
    %p311 = scmp.ne.s32.totalorder %s299, %s300
    %p312 = scmp.eq.s32.totalorder %s28, 1
    %p313 = por %p311, %p312
    %p315 = scmp.ne.s32.totalorder %s300, %s314
    %p316 = scmp.eq.s32.totalorder %s28, 0
    %p317 = por %p315, %p316
    %s319 = sadd.s32 %s318, 1
    %p322 = scmp.eq.s32.totalorder %s22, 1
    %p323 = scmp.ne.s32.totalorder %s318, %s320
    %p324 = scmp.eq.s32.totalorder %s22, 0
    %p325 = por %p323, %p324
    %p326 = scmp.ne.s32.totalorder %s318, %s320
    %p327 = scmp.eq.s32.totalorder %s27, 1
    %p328 = por %p326, %p327
    %p329 = scmp.ne.s32.totalorder %s320, %s321
    %p330 = scmp.eq.s32.totalorder %s27, 0
    %p331 = por %p329, %p330
    %p332 = scmp.ne.s32.totalorder %s320, %s321
    %p333 = scmp.eq.s32.totalorder %s28, 1
    %p334 = por %p332, %p333
    %p336 = scmp.ne.s32.totalorder %s321, %s335
    %p337 = scmp.eq.s32.totalorder %s28, 0
    %p338 = por %p336, %p337
    %s339 = ssub.s32 %s22, %s29
    %p340 = scmp.eq.s32.totalorder %s339, 0
    %s342 = sadd.s32 %s341, 1
    %s343 = scalar_select %p340, %s341, %s342
    %p346 = pneg %p340
    %p347 = scmp.eq.s32.totalorder %s22, 1
    %p348 = por %p346, %p347
    %p349 = scmp.ne.s32.totalorder %s341, %s344
    %p350 = scmp.eq.s32.totalorder %s22, 0
    %p351 = por %p349, %p350
    %p352 = scmp.ne.s32.totalorder %s341, %s344
    %p353 = scmp.eq.s32.totalorder %s27, 1
    %p354 = por %p352, %p353
    %p355 = scmp.ne.s32.totalorder %s344, %s345
    %p356 = scmp.eq.s32.totalorder %s27, 0
    %p357 = por %p355, %p356
    %p358 = scmp.ne.s32.totalorder %s344, %s345
    %p359 = scmp.eq.s32.totalorder %s28, 1
    %p360 = por %p358, %p359
    %p362 = scmp.ne.s32.totalorder %s345, %s361
    %p363 = scmp.eq.s32.totalorder %s28, 0
    %p364 = por %p362, %p363
    %p365 = scmp.le.s32.totalorder 1, %s22
    %p366 = scmp.lt.s32.totalorder %s22, 3
    %p367 = pnand %p365, %p366
    %p368 = pneg %p367
    // Predicated region
    $region9: #{divco_plgan_forward.5} parent=5 // pred_check
      _
    $region10: #{divco_plgan_forward.5} parent=5 // pred_check_branch
      %370 = sbr.rel (%p367) target = $region12
    $region11: #{divco_plgan_forward.5} parent=5 // pred_region
      %s371 = ssub.s32 %s22, 1
      // Predicated region
      $region13: #{divco_plgan_forward.5} parent=11 // pred_check
        %p372 = pneg %p121
      $region14: #{divco_plgan_forward.5} parent=11 // pred_check_branch
        %374 = sbr.rel (%p372) target = $region16
      $region15: #{divco_plgan_forward.5} parent=11 // pred_region
        _
      $region16: #{divco_plgan_forward.5} parent=11 // pred_fallthru
        _
      // Predicated region
      $region17: #{divco_plgan_forward.5} parent=11 // pred_check
        %p375 = pneg %p142
      $region18: #{divco_plgan_forward.5} parent=11 // pred_check_branch
        %377 = sbr.rel (%p375) target = $region20
      $region19: #{divco_plgan_forward.5} parent=11 // pred_region
        _
      $region20: #{divco_plgan_forward.5} parent=11 // pred_fallthru
        _
      // Predicated region
      $region21: #{divco_plgan_forward.5} parent=11 // pred_check
        %p378 = pneg %p163
      $region22: #{divco_plgan_forward.5} parent=11 // pred_check_branch
        %380 = sbr.rel (%p378) target = $region24
      $region23: #{divco_plgan_forward.5} parent=11 // pred_region
        _
      $region24: #{divco_plgan_forward.5} parent=11 // pred_fallthru
        _
      // Predicated region
      $region25: #{divco_plgan_forward.5} parent=11 // pred_check
        %p381 = pneg %p184
      $region26: #{divco_plgan_forward.5} parent=11 // pred_check_branch
        %383 = sbr.rel (%p381) target = $region28
      $region27: #{divco_plgan_forward.5} parent=11 // pred_region
        _
      $region28: #{divco_plgan_forward.5} parent=11 // pred_fallthru
        _
      // Predicated region
      $region29: #{divco_plgan_forward.5} parent=11 // pred_check
        %p384 = pneg %p205
      $region30: #{divco_plgan_forward.5} parent=11 // pred_check_branch
        %386 = sbr.rel (%p384) target = $region32
      $region31: #{divco_plgan_forward.5} parent=11 // pred_region
        _
      $region32: #{divco_plgan_forward.5} parent=11 // pred_fallthru
        _
      // Predicated region
      $region33: #{divco_plgan_forward.5} parent=11 // pred_check
        %p387 = pneg %p226
      $region34: #{divco_plgan_forward.5} parent=11 // pred_check_branch
        %389 = sbr.rel (%p387) target = $region36
      $region35: #{divco_plgan_forward.5} parent=11 // pred_region
        _
      $region36: #{divco_plgan_forward.5} parent=11 // pred_fallthru
        _
      // Predicated region
      $region37: #{divco_plgan_forward.5} parent=11 // pred_check
        %p390 = pneg %p247
      $region38: #{divco_plgan_forward.5} parent=11 // pred_check_branch
        %392 = sbr.rel (%p390) target = $region40
      $region39: #{divco_plgan_forward.5} parent=11 // pred_region
        _
      $region40: #{divco_plgan_forward.5} parent=11 // pred_fallthru
        _
      // Predicated region
      $region41: #{divco_plgan_forward.5} parent=11 // pred_check
        %p393 = pneg %p268
      $region42: #{divco_plgan_forward.5} parent=11 // pred_check_branch
        %395 = sbr.rel (%p393) target = $region44
      $region43: #{divco_plgan_forward.5} parent=11 // pred_region
        _
      $region44: #{divco_plgan_forward.5} parent=11 // pred_fallthru
        _
      // Predicated region
      $region45: #{divco_plgan_forward.5} parent=11 // pred_check
        %p396 = pneg %p289
      $region46: #{divco_plgan_forward.5} parent=11 // pred_check_branch
        %398 = sbr.rel (%p396) target = $region48
      $region47: #{divco_plgan_forward.5} parent=11 // pred_region
        _
      $region48: #{divco_plgan_forward.5} parent=11 // pred_fallthru
        _
      // Predicated region
      $region49: #{divco_plgan_forward.5} parent=11 // pred_check
        %p399 = pneg %p310
      $region50: #{divco_plgan_forward.5} parent=11 // pred_check_branch
        %401 = sbr.rel (%p399) target = $region52
      $region51: #{divco_plgan_forward.5} parent=11 // pred_region
        _
      $region52: #{divco_plgan_forward.5} parent=11 // pred_fallthru
        _
      // Predicated region
      $region53: #{divco_plgan_forward.5} parent=11 // pred_check
        %p402 = pneg %p331
      $region54: #{divco_plgan_forward.5} parent=11 // pred_check_branch
        %404 = sbr.rel (%p402) target = $region56
      $region55: #{divco_plgan_forward.5} parent=11 // pred_region
        _
      $region56: #{divco_plgan_forward.5} parent=11 // pred_fallthru
        _
    $region12: #{divco_plgan_forward.5} parent=5 // pred_fallthru
      _
    %p405 = scmp.lt.s32.totalorder %s22, 2
    // Predicated region
    $region57: #{divco_plgan_forward.5} parent=5 // pred_check
      %p406 = pneg %p405
    $region58: #{divco_plgan_forward.5} parent=5 // pred_check_branch
      %408 = sbr.rel (%p406) target = $region60
    $region59: #{divco_plgan_forward.5} parent=5 // pred_region
      // Predicated region
      $region61: #{divco_plgan_forward.5} parent=59 // pred_check
        %p409 = pneg %p42
      $region62: #{divco_plgan_forward.5} parent=59 // pred_check_branch
        %411 = sbr.rel (%p409) target = $region64
      $region63: #{divco_plgan_forward.5} parent=59 // pred_region
        %p412 = scmp.lt.s32.totalorder %s22, 1
        %s413 = scalar_select %p412, %s22, 1
        %s414 = smul.addr %s413, 4
        %s415 = smul.addr %s414, 4
        %s416 = scalar_lea.vmem %s0, %s415
      $region64: #{divco_plgan_forward.5} parent=59 // pred_fallthru
        _
      // Predicated region
      $region65: #{divco_plgan_forward.5} parent=59 // pred_check
        %p417 = pneg %p68
      $region66: #{divco_plgan_forward.5} parent=59 // pred_check_branch
        %419 = sbr.rel (%p417) target = $region68
      $region67: #{divco_plgan_forward.5} parent=59 // pred_region
        %p420 = scmp.lt.s32.totalorder %s22, 1
        %s421 = scalar_select %p420, %s22, 1
        %s422 = smul.addr %s421, 2
        %s423 = smul.addr %s422, 4
        %s424 = scalar_lea.vmem %s1, %s423
      $region68: #{divco_plgan_forward.5} parent=59 // pred_fallthru
        _
      // Predicated region
      $region69: #{divco_plgan_forward.5} parent=59 // pred_check
        %p425 = pneg %p94
      $region70: #{divco_plgan_forward.5} parent=59 // pred_check_branch
        %427 = sbr.rel (%p425) target = $region72
      $region71: #{divco_plgan_forward.5} parent=59 // pred_region
        %p428 = scmp.lt.s32.totalorder %s22, 1
        %s429 = scalar_select %p428, %s22, 1
        %s430 = smul.addr %s429, 4
        %s431 = smul.addr %s430, 4
        %s432 = scalar_lea.vmem %s2, %s431
      $region72: #{divco_plgan_forward.5} parent=59 // pred_fallthru
        _
    $region60: #{divco_plgan_forward.5} parent=5 // pred_fallthru
      _
    %p433 = scmp.le.s32.totalorder 1, %s22
    %p434 = scmp.lt.s32.totalorder %s22, 3
    %p435 = pnand %p433, %p434
    %p436 = pneg %p435
    // Predicated region
    $region73: #{divco_plgan_forward.5} parent=5 // pred_check
      _
    $region74: #{divco_plgan_forward.5} parent=5 // pred_check_branch
      %438 = sbr.rel (%p435) target = $region76
    $region75: #{divco_plgan_forward.5} parent=5 // pred_region
      %s439 = ssub.s32 %s22, 1
      %p440 = scmp.lt.s32.totalorder %s27, 1
      %s441 = scalar_select %p440, %s27, 1
      %s442 = smul.addr %s441, 4
      %s443 = smul.addr %s442, 4
      %s444 = scalar_lea.vmem %s0, %s443
      %p445 = pneg %p48
      %p446 = pneg %p45
      %p447 = scmp.lt.s32.totalorder %s27, 1
      %s448 = scalar_select %p447, %s27, 1
      %s449 = smul.addr %s448, 2
      %s450 = smul.addr %s449, 4
      %s451 = scalar_lea.vmem %s1, %s450
      %p452 = pneg %p74
      %p453 = pneg %p71
      %p454 = scmp.lt.s32.totalorder %s27, 1
      %s455 = scalar_select %p454, %s27, 1
      %s456 = smul.addr %s455, 4
      %s457 = smul.addr %s456, 4
      %s458 = scalar_lea.vmem %s2, %s457
      %p459 = pneg %p100
      %p460 = pneg %p97
      %p461 = pneg %p121
      %p462 = pneg %p118
      %p463 = pneg %p142
      %p464 = pneg %p139
      %p465 = pneg %p163
      %p466 = pneg %p160
      %p467 = pneg %p184
      %p468 = pneg %p181
      %p469 = pneg %p205
      %p470 = pneg %p202
      %p471 = pneg %p226
      %p472 = pneg %p223
      %p473 = pneg %p247
      %p474 = pneg %p244
      %p475 = pneg %p268
      %p476 = pneg %p265
      %p477 = pneg %p289
      %p478 = pneg %p286
      %p479 = pneg %p310
      %p480 = pneg %p307
      %p481 = pneg %p331
      %p482 = pneg %p328
      %p483 = pneg %p357
      %p484 = pneg %p354
      %p485 = scmp.lt.s32.totalorder %s27, 1
      %s486 = scalar_select %p485, %s27, 1
      %s487 = smul.addr %s486, 2
      %s488 = smul.addr %s487, 4
      %s489 = scalar_lea.vmem %s14, %s488
      %p490 = scmp.lt.s32.totalorder %s27, 1
      %s491 = scalar_select %p490, %s27, 1
      %s492 = smul.addr %s491, 4
      %s493 = smul.addr %s492, 4
      %s494 = scalar_lea.vmem %s0, %s493
      %p495 = scmp.lt.s32.totalorder %s27, 1
      %s496 = scalar_select %p495, %s27, 1
      %s497 = smul.addr %s496, 2
      %s498 = smul.addr %s497, 4
      %s499 = scalar_lea.vmem %s1, %s498
      %p500 = scmp.lt.s32.totalorder %s27, 1
      %s501 = scalar_select %p500, %s27, 1
      %s502 = smul.addr %s501, 4
      %s503 = smul.addr %s502, 4
      %s504 = scalar_lea.vmem %s2, %s503
      %p505 = scmp.lt.s32.totalorder %s27, 1
      %s506 = scalar_select %p505, %s27, 1
      %s507 = smul.addr %s506, 2
      %s508 = smul.addr %s507, 4
      %s509 = scalar_lea.vmem %s14, %s508
      %v511 = vld [vmem:[%s494] sm:$0xf]
      %v512 = vld [vmem:[%s494 + $0x4] sm:$0xf]
      %v513 = vld [vmem:[%s494 + $0x8] sm:$0xf]
      %v514 = vld [vmem:[%s494 + $0xc] sm:$0xf]
      %v515 = vld [vmem:[%s499] sm:$0xf]
      %v516 = vld [vmem:[%s499 + $0x4] sm:$0xf]
      %v517 = vld [vmem:[%s504] sm:$0xf]
      %v518 = vld [vmem:[%s504 + $0x4] sm:$0xf]
      %v519 = vld [vmem:[%s504 + $0x8] sm:$0xf]
      %v520 = vld [vmem:[%s504 + $0xc] sm:$0xf]
      %v521 = vld [vmem:[%s9] sm:$0xf]
      %v522 = vld [vmem:[%s9 + $0x4] sm:$0xf]
      %v523 = vld [vmem:[%s9 + $0x8] sm:$0xf]
      %v524 = vld [vmem:[%s9 + $0xc] sm:$0xf]
      %v525 = vld [vmem:[%s9 + $0x10] sm:$0xf]
      %v526 = vld [vmem:[%s9 + $0x14] sm:$0xf]
      %v527 = vld [vmem:[%s9 + $0x18] sm:$0xf]
      %v528 = vld [vmem:[%s9 + $0x1c] sm:$0xf]
      %v533 = vunpack.c.l.b16 %v511
      %v534 = vunpack.c.l.b16 %v512
      %v535 = vunpack.c.l.b16 %v513
      %v536 = vunpack.c.l.b16 %v514
      %v537 = vpack.c.b16 %v534, %v533
      %v538 = vpack.c.b16 %v536, %v535
      %v547 = vunpack.c.l.b16 %v521
      %v548 = vunpack.c.l.b16 %v522
      %v549 = vunpack.c.l.b16 %v523
      %v550 = vunpack.c.l.b16 %v524
      %v551 = vunpack.c.l.b16 %v525
      %v552 = vunpack.c.l.b16 %v526
      %v553 = vunpack.c.l.b16 %v527
      %v554 = vunpack.c.l.b16 %v528
      %v555 = vpack.c.b16 %v548, %v547
      %v556 = vpack.c.b16 %v550, %v549
      %v557 = vpack.c.b16 %v552, %v551
      %v558 = vpack.c.b16 %v554, %v553
      %vm563 = vcmask 523264
      %v565 = vsel %vm563, %v537, 0
      %v568 = vsel %vm563, %v538, 0
      %570 = vmatpush.bf16.msra.mxu0 0
      %571 = vmatpush.bf16.msra.mxu0 0
      %572 = vmatpush.bf16.msra.mxu0 0
      %573 = vmatpush.bf16.msra.mxu0 0
      %574 = vmatpush.bf16.msra.mxu0 %v558
      %575 = vmatpush.bf16.msra.mxu0 %v557
      %576 = vmatpush.bf16.msra.mxu0 %v556
      %577 = vmatpush.bf16.msra.mxu0 %v555
      %578 = vmatmul.bf16.gmra.mxu0 %v565
      %v579 = vpop.f32.mrf.mxu0
      %v580 = vadd.f32 0.0, %v579
      %v581 = vpop.f32.mrf.mxu0
      %v582 = vadd.f32 0.0, %v581
      %583 = vmatmul.bf16.gmra.mxu0 %v568
      %v584 = vpop.f32.mrf.mxu0
      %v585 = vadd.f32 0.0, %v584
      %v586 = vpop.f32.mrf.mxu0
      %v587 = vadd.f32 0.0, %v586
      %588 = vdwg.mxu0
      %s589 = scalar_lea.vmem %s9, 32
      %v590 = vld [vmem:[%s589] sm:$0xf]
      %v591 = vld [vmem:[%s589 + $0x4] sm:$0xf]
      %v592 = vld [vmem:[%s589 + $0x8] sm:$0xf]
      %v593 = vld [vmem:[%s589 + $0xc] sm:$0xf]
      %v594 = vld [vmem:[%s589 + $0x10] sm:$0xf]
      %v595 = vld [vmem:[%s589 + $0x14] sm:$0xf]
      %v596 = vld [vmem:[%s589 + $0x18] sm:$0xf]
      %v597 = vld [vmem:[%s589 + $0x1c] sm:$0xf]
      %v606 = vunpack.c.l.b16 %v590
      %v607 = vunpack.c.l.b16 %v591
      %v608 = vunpack.c.l.b16 %v592
      %v609 = vunpack.c.l.b16 %v593
      %v610 = vunpack.c.l.b16 %v594
      %v611 = vunpack.c.l.b16 %v595
      %v612 = vunpack.c.l.b16 %v596
      %v613 = vunpack.c.l.b16 %v597
      %v614 = vpack.c.b16 %v607, %v606
      %v615 = vpack.c.b16 %v609, %v608
      %v616 = vpack.c.b16 %v611, %v610
      %v617 = vpack.c.b16 %v613, %v612
      %622 = vmatpush.bf16.msra.mxu0 0
      %623 = vmatpush.bf16.msra.mxu0 0
      %624 = vmatpush.bf16.msra.mxu0 0
      %625 = vmatpush.bf16.msra.mxu0 0
      %626 = vmatpush.bf16.msra.mxu0 %v617
      %627 = vmatpush.bf16.msra.mxu0 %v616
      %628 = vmatpush.bf16.msra.mxu0 %v615
      %629 = vmatpush.bf16.msra.mxu0 %v614
      %630 = vmatmul.bf16.gmra.mxu0 %v565
      %v631 = vpop.f32.mrf.mxu0
      %v632 = vadd.f32 0.0, %v631
      %v633 = vpop.f32.mrf.mxu0
      %v634 = vadd.f32 0.0, %v633
      %635 = vmatmul.bf16.gmra.mxu0 %v568
      %v636 = vpop.f32.mrf.mxu0
      %v637 = vadd.f32 0.0, %v636
      %v638 = vpop.f32.mrf.mxu0
      %v639 = vadd.f32 0.0, %v638
      %640 = vdwg.mxu0
      %s641 = scalar_lea.vmem %s9, 64
      %v642 = vld [vmem:[%s641] sm:$0xf]
      %v643 = vld [vmem:[%s641 + $0x4] sm:$0xf]
      %v644 = vld [vmem:[%s641 + $0x8] sm:$0xf]
      %v645 = vld [vmem:[%s641 + $0xc] sm:$0xf]
      %v646 = vld [vmem:[%s641 + $0x10] sm:$0xf]
      %v647 = vld [vmem:[%s641 + $0x14] sm:$0xf]
      %v648 = vld [vmem:[%s641 + $0x18] sm:$0xf]
      %v649 = vld [vmem:[%s641 + $0x1c] sm:$0xf]
      %v658 = vunpack.c.l.b16 %v642
      %v659 = vunpack.c.l.b16 %v643
      %v660 = vunpack.c.l.b16 %v644
      %v661 = vunpack.c.l.b16 %v645
      %v662 = vunpack.c.l.b16 %v646
      %v663 = vunpack.c.l.b16 %v647
      %v664 = vunpack.c.l.b16 %v648
      %v665 = vunpack.c.l.b16 %v649
      %v666 = vpack.c.b16 %v659, %v658
      %v667 = vpack.c.b16 %v661, %v660
      %v668 = vpack.c.b16 %v663, %v662
      %v669 = vpack.c.b16 %v665, %v664
      %674 = vmatpush.bf16.msra.mxu0 0
      %675 = vmatpush.bf16.msra.mxu0 0
      %676 = vmatpush.bf16.msra.mxu0 0
      %677 = vmatpush.bf16.msra.mxu0 0
      %678 = vmatpush.bf16.msra.mxu0 %v669
      %679 = vmatpush.bf16.msra.mxu0 %v668
      %680 = vmatpush.bf16.msra.mxu0 %v667
      %681 = vmatpush.bf16.msra.mxu0 %v666
      %682 = vmatmul.bf16.gmra.mxu0 %v565
      %v683 = vpop.f32.mrf.mxu0
      %v684 = vadd.f32 0.0, %v683
      %v685 = vpop.f32.mrf.mxu0
      %v686 = vadd.f32 0.0, %v685
      %687 = vmatmul.bf16.gmra.mxu0 %v568
      %v688 = vpop.f32.mrf.mxu0
      %v689 = vadd.f32 0.0, %v688
      %v690 = vpop.f32.mrf.mxu0
      %v691 = vadd.f32 0.0, %v690
      %692 = vdwg.mxu0
      %s693 = scalar_lea.vmem %s9, 96
      %v694 = vld [vmem:[%s693] sm:$0xf]
      %v695 = vld [vmem:[%s693 + $0x4] sm:$0xf]
      %v696 = vld [vmem:[%s693 + $0x8] sm:$0xf]
      %v697 = vld [vmem:[%s693 + $0xc] sm:$0xf]
      %v698 = vld [vmem:[%s693 + $0x10] sm:$0xf]
      %v699 = vld [vmem:[%s693 + $0x14] sm:$0xf]
      %v700 = vld [vmem:[%s693 + $0x18] sm:$0xf]
      %v701 = vld [vmem:[%s693 + $0x1c] sm:$0xf]
      %v710 = vunpack.c.l.b16 %v694
      %v711 = vunpack.c.l.b16 %v695
      %v712 = vunpack.c.l.b16 %v696
      %v713 = vunpack.c.l.b16 %v697
      %v714 = vunpack.c.l.b16 %v698
      %v715 = vunpack.c.l.b16 %v699
      %v716 = vunpack.c.l.b16 %v700
      %v717 = vunpack.c.l.b16 %v701
      %v718 = vpack.c.b16 %v711, %v710
      %v719 = vpack.c.b16 %v713, %v712
      %v720 = vpack.c.b16 %v715, %v714
      %v721 = vpack.c.b16 %v717, %v716
      %726 = vmatpush.bf16.msra.mxu0 0
      %727 = vmatpush.bf16.msra.mxu0 0
      %728 = vmatpush.bf16.msra.mxu0 0
      %729 = vmatpush.bf16.msra.mxu0 0
      %730 = vmatpush.bf16.msra.mxu0 %v721
      %731 = vmatpush.bf16.msra.mxu0 %v720
      %732 = vmatpush.bf16.msra.mxu0 %v719
      %733 = vmatpush.bf16.msra.mxu0 %v718
      %734 = vmatmul.bf16.gmra.mxu0 %v565
      %v735 = vpop.f32.mrf.mxu0
      %v736 = vadd.f32 0.0, %v735
      %v737 = vpop.f32.mrf.mxu0
      %v738 = vadd.f32 0.0, %v737
      %739 = vmatmul.bf16.gmra.mxu0 %v568
      %v740 = vpop.f32.mrf.mxu0
      %v741 = vadd.f32 0.0, %v740
      %v742 = vpop.f32.mrf.mxu0
      %v743 = vadd.f32 0.0, %v742
      %744 = vdwg.mxu0
      %s745 = scalar_lea.vmem %s9, 128
      %v746 = vld [vmem:[%s745] sm:$0xf]
      %v747 = vld [vmem:[%s745 + $0x4] sm:$0xf]
      %v748 = vld [vmem:[%s745 + $0x8] sm:$0xf]
      %v749 = vld [vmem:[%s745 + $0xc] sm:$0xf]
      %v750 = vld [vmem:[%s745 + $0x10] sm:$0xf]
      %v751 = vld [vmem:[%s745 + $0x14] sm:$0xf]
      %v752 = vld [vmem:[%s745 + $0x18] sm:$0xf]
      %v753 = vld [vmem:[%s745 + $0x1c] sm:$0xf]
      %v762 = vunpack.c.l.b16 %v746
      %v763 = vunpack.c.l.b16 %v747
      %v764 = vunpack.c.l.b16 %v748
      %v765 = vunpack.c.l.b16 %v749
      %v766 = vunpack.c.l.b16 %v750
      %v767 = vunpack.c.l.b16 %v751
      %v768 = vunpack.c.l.b16 %v752
      %v769 = vunpack.c.l.b16 %v753
      %v770 = vpack.c.b16 %v763, %v762
      %v771 = vpack.c.b16 %v765, %v764
      %v772 = vpack.c.b16 %v767, %v766
      %v773 = vpack.c.b16 %v769, %v768
      %778 = vmatpush.bf16.msra.mxu0 0
      %779 = vmatpush.bf16.msra.mxu0 0
      %780 = vmatpush.bf16.msra.mxu0 0
      %781 = vmatpush.bf16.msra.mxu0 0
      %782 = vmatpush.bf16.msra.mxu0 %v773
      %783 = vmatpush.bf16.msra.mxu0 %v772
      %784 = vmatpush.bf16.msra.mxu0 %v771
      %785 = vmatpush.bf16.msra.mxu0 %v770
      %786 = vmatmul.bf16.gmra.mxu0 %v565
      %v787 = vpop.f32.mrf.mxu0
      %v788 = vadd.f32 0.0, %v787
      %v789 = vpop.f32.mrf.mxu0
      %v790 = vadd.f32 0.0, %v789
      %791 = vmatmul.bf16.gmra.mxu0 %v568
      %v792 = vpop.f32.mrf.mxu0
      %v793 = vadd.f32 0.0, %v792
      %v794 = vpop.f32.mrf.mxu0
      %v795 = vadd.f32 0.0, %v794
      %796 = vdwg.mxu0
      %s797 = scalar_lea.vmem %s9, 160
      %v798 = vld [vmem:[%s797] sm:$0xf]
      %v799 = vld [vmem:[%s797 + $0x4] sm:$0xf]
      %v800 = vld [vmem:[%s797 + $0x8] sm:$0xf]
      %v801 = vld [vmem:[%s797 + $0xc] sm:$0xf]
      %v802 = vld [vmem:[%s797 + $0x10] sm:$0xf]
      %v803 = vld [vmem:[%s797 + $0x14] sm:$0xf]
      %v804 = vld [vmem:[%s797 + $0x18] sm:$0xf]
      %v805 = vld [vmem:[%s797 + $0x1c] sm:$0xf]
      %v814 = vunpack.c.l.b16 %v798
      %v815 = vunpack.c.l.b16 %v799
      %v816 = vunpack.c.l.b16 %v800
      %v817 = vunpack.c.l.b16 %v801
      %v818 = vunpack.c.l.b16 %v802
      %v819 = vunpack.c.l.b16 %v803
      %v820 = vunpack.c.l.b16 %v804
      %v821 = vunpack.c.l.b16 %v805
      %v822 = vpack.c.b16 %v815, %v814
      %v823 = vpack.c.b16 %v817, %v816
      %v824 = vpack.c.b16 %v819, %v818
      %v825 = vpack.c.b16 %v821, %v820
      %830 = vmatpush.bf16.msra.mxu0 0
      %831 = vmatpush.bf16.msra.mxu0 0
      %832 = vmatpush.bf16.msra.mxu0 0
      %833 = vmatpush.bf16.msra.mxu0 0
      %834 = vmatpush.bf16.msra.mxu0 %v825
      %835 = vmatpush.bf16.msra.mxu0 %v824
      %836 = vmatpush.bf16.msra.mxu0 %v823
      %837 = vmatpush.bf16.msra.mxu0 %v822
      %838 = vmatmul.bf16.gmra.mxu0 %v565
      %v839 = vpop.f32.mrf.mxu0
      %v840 = vadd.f32 0.0, %v839
      %v841 = vpop.f32.mrf.mxu0
      %v842 = vadd.f32 0.0, %v841
      %843 = vmatmul.bf16.gmra.mxu0 %v568
      %v844 = vpop.f32.mrf.mxu0
      %v845 = vadd.f32 0.0, %v844
      %v846 = vpop.f32.mrf.mxu0
      %v847 = vadd.f32 0.0, %v846
      %848 = vdwg.mxu0
      %s849 = scalar_lea.vmem %s9, 192
      %v850 = vld [vmem:[%s849] sm:$0xf]
      %v851 = vld [vmem:[%s849 + $0x4] sm:$0xf]
      %v852 = vld [vmem:[%s849 + $0x8] sm:$0xf]
      %v853 = vld [vmem:[%s849 + $0xc] sm:$0xf]
      %v854 = vld [vmem:[%s849 + $0x10] sm:$0xf]
      %v855 = vld [vmem:[%s849 + $0x14] sm:$0xf]
      %v856 = vld [vmem:[%s849 + $0x18] sm:$0xf]
      %v857 = vld [vmem:[%s849 + $0x1c] sm:$0xf]
      %v866 = vunpack.c.l.b16 %v850
      %v867 = vunpack.c.l.b16 %v851
      %v868 = vunpack.c.l.b16 %v852
      %v869 = vunpack.c.l.b16 %v853
      %v870 = vunpack.c.l.b16 %v854
      %v871 = vunpack.c.l.b16 %v855
      %v872 = vunpack.c.l.b16 %v856
      %v873 = vunpack.c.l.b16 %v857
      %v874 = vpack.c.b16 %v867, %v866
      %v875 = vpack.c.b16 %v869, %v868
      %v876 = vpack.c.b16 %v871, %v870
      %v877 = vpack.c.b16 %v873, %v872
      %882 = vmatpush.bf16.msra.mxu0 0
      %883 = vmatpush.bf16.msra.mxu0 0
      %884 = vmatpush.bf16.msra.mxu0 0
      %885 = vmatpush.bf16.msra.mxu0 0
      %886 = vmatpush.bf16.msra.mxu0 %v877
      %887 = vmatpush.bf16.msra.mxu0 %v876
      %888 = vmatpush.bf16.msra.mxu0 %v875
      %889 = vmatpush.bf16.msra.mxu0 %v874
      %890 = vmatmul.bf16.gmra.mxu0 %v565
      %v891 = vpop.f32.mrf.mxu0
      %v892 = vadd.f32 0.0, %v891
      %v893 = vpop.f32.mrf.mxu0
      %v894 = vadd.f32 0.0, %v893
      %895 = vmatmul.bf16.gmra.mxu0 %v568
      %v896 = vpop.f32.mrf.mxu0
      %v897 = vadd.f32 0.0, %v896
      %v898 = vpop.f32.mrf.mxu0
      %v899 = vadd.f32 0.0, %v898
      %900 = vdwg.mxu0
      %s901 = scalar_lea.vmem %s9, 224
      %v902 = vld [vmem:[%s901] sm:$0xf]
      %v903 = vld [vmem:[%s901 + $0x4] sm:$0xf]
      %v904 = vld [vmem:[%s901 + $0x8] sm:$0xf]
      %v905 = vld [vmem:[%s901 + $0xc] sm:$0xf]
      %v906 = vld [vmem:[%s901 + $0x10] sm:$0xf]
      %v907 = vld [vmem:[%s901 + $0x14] sm:$0xf]
      %v908 = vld [vmem:[%s901 + $0x18] sm:$0xf]
      %v909 = vld [vmem:[%s901 + $0x1c] sm:$0xf]
      %v918 = vunpack.c.l.b16 %v902
      %v919 = vunpack.c.l.b16 %v903
      %v920 = vunpack.c.l.b16 %v904
      %v921 = vunpack.c.l.b16 %v905
      %v922 = vunpack.c.l.b16 %v906
      %v923 = vunpack.c.l.b16 %v907
      %v924 = vunpack.c.l.b16 %v908
      %v925 = vunpack.c.l.b16 %v909
      %v926 = vpack.c.b16 %v919, %v918
      %v927 = vpack.c.b16 %v921, %v920
      %v928 = vpack.c.b16 %v923, %v922
      %v929 = vpack.c.b16 %v925, %v924
      %934 = vmatpush.bf16.msra.mxu0 0
      %935 = vmatpush.bf16.msra.mxu0 0
      %936 = vmatpush.bf16.msra.mxu0 0
      %937 = vmatpush.bf16.msra.mxu0 0
      %938 = vmatpush.bf16.msra.mxu0 %v929
      %939 = vmatpush.bf16.msra.mxu0 %v928
      %940 = vmatpush.bf16.msra.mxu0 %v927
      %941 = vmatpush.bf16.msra.mxu0 %v926
      %942 = vmatmul.bf16.gmra.mxu0 %v565
      %v943 = vpop.f32.mrf.mxu0
      %v944 = vadd.f32 0.0, %v943
      %v945 = vpop.f32.mrf.mxu0
      %v946 = vadd.f32 0.0, %v945
      %947 = vmatmul.bf16.gmra.mxu0 %v568
      %v948 = vpop.f32.mrf.mxu0
      %v949 = vadd.f32 0.0, %v948
      %v950 = vpop.f32.mrf.mxu0
      %v951 = vadd.f32 0.0, %v950
      %952 = vdwg.mxu0
      %s953 = scalar_lea.vmem %s9, 256
      %v954 = vld [vmem:[%s953] sm:$0xf]
      %v955 = vld [vmem:[%s953 + $0x4] sm:$0xf]
      %v956 = vld [vmem:[%s953 + $0x8] sm:$0xf]
      %v957 = vld [vmem:[%s953 + $0xc] sm:$0xf]
      %v958 = vld [vmem:[%s953 + $0x10] sm:$0xf]
      %v959 = vld [vmem:[%s953 + $0x14] sm:$0xf]
      %v960 = vld [vmem:[%s953 + $0x18] sm:$0xf]
      %v961 = vld [vmem:[%s953 + $0x1c] sm:$0xf]
      %v970 = vunpack.c.l.b16 %v954
      %v971 = vunpack.c.l.b16 %v955
      %v972 = vunpack.c.l.b16 %v956
      %v973 = vunpack.c.l.b16 %v957
      %v974 = vunpack.c.l.b16 %v958
      %v975 = vunpack.c.l.b16 %v959
      %v976 = vunpack.c.l.b16 %v960
      %v977 = vunpack.c.l.b16 %v961
      %v978 = vpack.c.b16 %v971, %v970
      %v979 = vpack.c.b16 %v973, %v972
      %v980 = vpack.c.b16 %v975, %v974
      %v981 = vpack.c.b16 %v977, %v976
      %986 = vmatpush.bf16.msra.mxu0 0
      %987 = vmatpush.bf16.msra.mxu0 0
      %988 = vmatpush.bf16.msra.mxu0 0
      %989 = vmatpush.bf16.msra.mxu0 0
      %990 = vmatpush.bf16.msra.mxu0 %v981
      %991 = vmatpush.bf16.msra.mxu0 %v980
      %992 = vmatpush.bf16.msra.mxu0 %v979
      %993 = vmatpush.bf16.msra.mxu0 %v978
      %994 = vmatmul.bf16.gmra.mxu0 %v565
      %v995 = vpop.f32.mrf.mxu0
      %v996 = vadd.f32 0.0, %v995
      %v997 = vpop.f32.mrf.mxu0
      %v998 = vadd.f32 0.0, %v997
      %999 = vmatmul.bf16.gmra.mxu0 %v568
      %v1000 = vpop.f32.mrf.mxu0
      %v1001 = vadd.f32 0.0, %v1000
      %v1002 = vpop.f32.mrf.mxu0
      %v1003 = vadd.f32 0.0, %v1002
      %1004 = vdwg.mxu0
      %v1005 = vld [vmem:[%s10] sm:$0xf]
      %v1006 = vld [vmem:[%s10 + $0x4] sm:$0xf]
      %v1011 = vunpack.c.l.b16 %v517
      %v1012 = vunpack.c.l.b16 %v518
      %v1013 = vunpack.c.l.b16 %v519
      %v1014 = vunpack.c.l.b16 %v520
      %v1015 = vpack.c.b16 %v1012, %v1011
      %v1016 = vpack.c.b16 %v1014, %v1013
      %v1019 = vunpack.c.l.b16 %v1005
      %v1020 = vunpack.c.l.b16 %v1006
      %v1021 = vpack.c.b16 %v1020, %v1019
      %vm1023 = vcmask 130048
      %v1025 = vsel %vm1023, %v1015, 0
      %v1028 = vsel %vm1023, %v1016, 0
      %1030 = vmatpush.bf16.msra.mxu0 0
      %1031 = vmatpush.bf16.msra.mxu0 0
      %1032 = vmatpush.bf16.msra.mxu0 0
      %1033 = vmatpush.bf16.msra.mxu0 0
      %1034 = vmatpush.bf16.msra.mxu0 0
      %1035 = vmatpush.bf16.msra.mxu0 0
      %1036 = vmatpush.bf16.msra.mxu0 0
      %1037 = vmatpush.bf16.msra.mxu0 %v1021
      %1038 = vmatmul.bf16.gmra.mxu0 %v1025
      %v1039 = vpop.f32.mrf.mxu0
      %v1040 = vadd.f32 0.0, %v1039
      %v1041 = vpop.f32.mrf.mxu0
      %v1042 = vadd.f32 0.0, %v1041
      %1043 = vmatmul.bf16.gmra.mxu0 %v1028
      %v1044 = vpop.f32.mrf.mxu0
      %v1045 = vadd.f32 0.0, %v1044
      %v1046 = vpop.f32.mrf.mxu0
      %v1047 = vadd.f32 0.0, %v1046
      %1048 = vdwg.mxu0
      %s1049 = scalar_lea.vmem %s10, 8
      %v1050 = vld [vmem:[%s1049] sm:$0xf]
      %v1051 = vld [vmem:[%s1049 + $0x4] sm:$0xf]
      %v1054 = vunpack.c.l.b16 %v1050
      %v1055 = vunpack.c.l.b16 %v1051
      %v1056 = vpack.c.b16 %v1055, %v1054
      %1058 = vmatpush.bf16.msra.mxu0 0
      %1059 = vmatpush.bf16.msra.mxu0 0
      %1060 = vmatpush.bf16.msra.mxu0 0
      %1061 = vmatpush.bf16.msra.mxu0 0
      %1062 = vmatpush.bf16.msra.mxu0 0
      %1063 = vmatpush.bf16.msra.mxu0 0
      %1064 = vmatpush.bf16.msra.mxu0 0
      %1065 = vmatpush.bf16.msra.mxu0 %v1056
      %1066 = vmatmul.bf16.gmra.mxu0 %v1025
      %v1067 = vpop.f32.mrf.mxu0
      %v1068 = vadd.f32 0.0, %v1067
      %v1069 = vpop.f32.mrf.mxu0
      %v1070 = vadd.f32 0.0, %v1069
      %1071 = vmatmul.bf16.gmra.mxu0 %v1028
      %v1072 = vpop.f32.mrf.mxu0
      %v1073 = vadd.f32 0.0, %v1072
      %v1074 = vpop.f32.mrf.mxu0
      %v1075 = vadd.f32 0.0, %v1074
      %1076 = vdwg.mxu0
      %s1077 = scalar_lea.vmem %s10, 16
      %v1078 = vld [vmem:[%s1077] sm:$0xf]
      %v1079 = vld [vmem:[%s1077 + $0x4] sm:$0xf]
      %v1082 = vunpack.c.l.b16 %v1078
      %v1083 = vunpack.c.l.b16 %v1079
      %v1084 = vpack.c.b16 %v1083, %v1082
      %1086 = vmatpush.bf16.msra.mxu0 0
      %1087 = vmatpush.bf16.msra.mxu0 0
      %1088 = vmatpush.bf16.msra.mxu0 0
      %1089 = vmatpush.bf16.msra.mxu0 0
      %1090 = vmatpush.bf16.msra.mxu0 0
      %1091 = vmatpush.bf16.msra.mxu0 0
      %1092 = vmatpush.bf16.msra.mxu0 0
      %1093 = vmatpush.bf16.msra.mxu0 %v1084
      %1094 = vmatmul.bf16.gmra.mxu0 %v1025
      %v1095 = vpop.f32.mrf.mxu0
      %v1096 = vadd.f32 0.0, %v1095
      %v1097 = vpop.f32.mrf.mxu0
      %v1098 = vadd.f32 0.0, %v1097
      %1099 = vmatmul.bf16.gmra.mxu0 %v1028
      %v1100 = vpop.f32.mrf.mxu0
      %v1101 = vadd.f32 0.0, %v1100
      %v1102 = vpop.f32.mrf.mxu0
      %v1103 = vadd.f32 0.0, %v1102
      %1104 = vdwg.mxu0
      %s1105 = scalar_lea.vmem %s10, 24
      %v1106 = vld [vmem:[%s1105] sm:$0xf]
      %v1107 = vld [vmem:[%s1105 + $0x4] sm:$0xf]
      %v1110 = vunpack.c.l.b16 %v1106
      %v1111 = vunpack.c.l.b16 %v1107
      %v1112 = vpack.c.b16 %v1111, %v1110
      %1114 = vmatpush.bf16.msra.mxu0 0
      %1115 = vmatpush.bf16.msra.mxu0 0
      %1116 = vmatpush.bf16.msra.mxu0 0
      %1117 = vmatpush.bf16.msra.mxu0 0
      %1118 = vmatpush.bf16.msra.mxu0 0
      %1119 = vmatpush.bf16.msra.mxu0 0
      %1120 = vmatpush.bf16.msra.mxu0 0
      %1121 = vmatpush.bf16.msra.mxu0 %v1112
      %1122 = vmatmul.bf16.gmra.mxu0 %v1025
      %v1123 = vpop.f32.mrf.mxu0
      %v1124 = vadd.f32 0.0, %v1123
      %v1125 = vpop.f32.mrf.mxu0
      %v1126 = vadd.f32 0.0, %v1125
      %1127 = vmatmul.bf16.gmra.mxu0 %v1028
      %v1128 = vpop.f32.mrf.mxu0
      %v1129 = vadd.f32 0.0, %v1128
      %v1130 = vpop.f32.mrf.mxu0
      %v1131 = vadd.f32 0.0, %v1130
      %1132 = vdwg.mxu0
      %s1133 = scalar_lea.vmem %s10, 32
      %v1134 = vld [vmem:[%s1133] sm:$0xf]
      %v1135 = vld [vmem:[%s1133 + $0x4] sm:$0xf]
      %v1138 = vunpack.c.l.b16 %v1134
      %v1139 = vunpack.c.l.b16 %v1135
      %v1140 = vpack.c.b16 %v1139, %v1138
      %1142 = vmatpush.bf16.msra.mxu0 0
      %1143 = vmatpush.bf16.msra.mxu0 0
      %1144 = vmatpush.bf16.msra.mxu0 0
      %1145 = vmatpush.bf16.msra.mxu0 0
      %1146 = vmatpush.bf16.msra.mxu0 0
      %1147 = vmatpush.bf16.msra.mxu0 0
      %1148 = vmatpush.bf16.msra.mxu0 0
      %1149 = vmatpush.bf16.msra.mxu0 %v1140
      %1150 = vmatmul.bf16.gmra.mxu0 %v1025
      %v1151 = vpop.f32.mrf.mxu0
      %v1152 = vadd.f32 0.0, %v1151
      %v1153 = vpop.f32.mrf.mxu0
      %v1154 = vadd.f32 0.0, %v1153
      %1155 = vmatmul.bf16.gmra.mxu0 %v1028
      %v1156 = vpop.f32.mrf.mxu0
      %v1157 = vadd.f32 0.0, %v1156
      %v1158 = vpop.f32.mrf.mxu0
      %v1159 = vadd.f32 0.0, %v1158
      %1160 = vdwg.mxu0
      %s1161 = scalar_lea.vmem %s10, 40
      %v1162 = vld [vmem:[%s1161] sm:$0xf]
      %v1163 = vld [vmem:[%s1161 + $0x4] sm:$0xf]
      %v1166 = vunpack.c.l.b16 %v1162
      %v1167 = vunpack.c.l.b16 %v1163
      %v1168 = vpack.c.b16 %v1167, %v1166
      %1170 = vmatpush.bf16.msra.mxu0 0
      %1171 = vmatpush.bf16.msra.mxu0 0
      %1172 = vmatpush.bf16.msra.mxu0 0
      %1173 = vmatpush.bf16.msra.mxu0 0
      %1174 = vmatpush.bf16.msra.mxu0 0
      %1175 = vmatpush.bf16.msra.mxu0 0
      %1176 = vmatpush.bf16.msra.mxu0 0
      %1177 = vmatpush.bf16.msra.mxu0 %v1168
      %1178 = vmatmul.bf16.gmra.mxu0 %v1025
      %v1179 = vpop.f32.mrf.mxu0
      %v1180 = vadd.f32 0.0, %v1179
      %v1181 = vpop.f32.mrf.mxu0
      %v1182 = vadd.f32 0.0, %v1181
      %1183 = vmatmul.bf16.gmra.mxu0 %v1028
      %v1184 = vpop.f32.mrf.mxu0
      %v1185 = vadd.f32 0.0, %v1184
      %v1186 = vpop.f32.mrf.mxu0
      %v1187 = vadd.f32 0.0, %v1186
      %1188 = vdwg.mxu0
      %s1189 = scalar_lea.vmem %s10, 48
      %v1190 = vld [vmem:[%s1189] sm:$0xf]
      %v1191 = vld [vmem:[%s1189 + $0x4] sm:$0xf]
      %v1194 = vunpack.c.l.b16 %v1190
      %v1195 = vunpack.c.l.b16 %v1191
      %v1196 = vpack.c.b16 %v1195, %v1194
      %1198 = vmatpush.bf16.msra.mxu0 0
      %1199 = vmatpush.bf16.msra.mxu0 0
      %1200 = vmatpush.bf16.msra.mxu0 0
      %1201 = vmatpush.bf16.msra.mxu0 0
      %1202 = vmatpush.bf16.msra.mxu0 0
      %1203 = vmatpush.bf16.msra.mxu0 0
      %1204 = vmatpush.bf16.msra.mxu0 0
      %1205 = vmatpush.bf16.msra.mxu0 %v1196
      %1206 = vmatmul.bf16.gmra.mxu0 %v1025
      %v1207 = vpop.f32.mrf.mxu0
      %v1208 = vadd.f32 0.0, %v1207
      %v1209 = vpop.f32.mrf.mxu0
      %v1210 = vadd.f32 0.0, %v1209
      %1211 = vmatmul.bf16.gmra.mxu0 %v1028
      %v1212 = vpop.f32.mrf.mxu0
      %v1213 = vadd.f32 0.0, %v1212
      %v1214 = vpop.f32.mrf.mxu0
      %v1215 = vadd.f32 0.0, %v1214
      %1216 = vdwg.mxu0
      %s1217 = scalar_lea.vmem %s10, 56
      %v1218 = vld [vmem:[%s1217] sm:$0xf]
      %v1219 = vld [vmem:[%s1217 + $0x4] sm:$0xf]
      %v1222 = vunpack.c.l.b16 %v1218
      %v1223 = vunpack.c.l.b16 %v1219
      %v1224 = vpack.c.b16 %v1223, %v1222
      %1226 = vmatpush.bf16.msra.mxu0 0
      %1227 = vmatpush.bf16.msra.mxu0 0
      %1228 = vmatpush.bf16.msra.mxu0 0
      %1229 = vmatpush.bf16.msra.mxu0 0
      %1230 = vmatpush.bf16.msra.mxu0 0
      %1231 = vmatpush.bf16.msra.mxu0 0
      %1232 = vmatpush.bf16.msra.mxu0 0
      %1233 = vmatpush.bf16.msra.mxu0 %v1224
      %1234 = vmatmul.bf16.gmra.mxu0 %v1025
      %v1235 = vpop.f32.mrf.mxu0
      %v1236 = vadd.f32 0.0, %v1235
      %v1237 = vpop.f32.mrf.mxu0
      %v1238 = vadd.f32 0.0, %v1237
      %1239 = vmatmul.bf16.gmra.mxu0 %v1028
      %v1240 = vpop.f32.mrf.mxu0
      %v1241 = vadd.f32 0.0, %v1240
      %v1242 = vpop.f32.mrf.mxu0
      %v1243 = vadd.f32 0.0, %v1242
      %1244 = vdwg.mxu0
      %s1245 = scalar_lea.vmem %s10, 64
      %v1246 = vld [vmem:[%s1245] sm:$0xf]
      %v1247 = vld [vmem:[%s1245 + $0x4] sm:$0xf]
      %v1250 = vunpack.c.l.b16 %v1246
      %v1251 = vunpack.c.l.b16 %v1247
      %v1252 = vpack.c.b16 %v1251, %v1250
      %1254 = vmatpush.bf16.msra.mxu0 0
      %1255 = vmatpush.bf16.msra.mxu0 0
      %1256 = vmatpush.bf16.msra.mxu0 0
      %1257 = vmatpush.bf16.msra.mxu0 0
      %1258 = vmatpush.bf16.msra.mxu0 0
      %1259 = vmatpush.bf16.msra.mxu0 0
      %1260 = vmatpush.bf16.msra.mxu0 0
      %1261 = vmatpush.bf16.msra.mxu0 %v1252
      %1262 = vmatmul.bf16.gmra.mxu0 %v1025
      %v1263 = vpop.f32.mrf.mxu0
      %v1264 = vadd.f32 0.0, %v1263
      %v1265 = vpop.f32.mrf.mxu0
      %v1266 = vadd.f32 0.0, %v1265
      %1267 = vmatmul.bf16.gmra.mxu0 %v1028
      %v1268 = vpop.f32.mrf.mxu0
      %v1269 = vadd.f32 0.0, %v1268
      %v1270 = vpop.f32.mrf.mxu0
      %v1271 = vadd.f32 0.0, %v1270
      %1272 = vdwg.mxu0
      %v1273 = vld [vmem:[%s3] sm:$0xff]
      %v1274 = vld [vmem:[%s3 + $0x8] sm:$0xff]
      %v1275 = vld [vmem:[%s3 + $0x10] sm:$0xf]
      %v1276 = vld [vmem:[%s3 + $0x14] sm:$0xff]
      %v1277 = vld [vmem:[%s3 + $0x1c] sm:$0xff]
      %v1278 = vld [vmem:[%s3 + $0x24] sm:$0xf]
      %v1279 = vld [vmem:[%s3 + $0x28] sm:$0xff]
      %v1280 = vld [vmem:[%s3 + $0x30] sm:$0xff]
      %v1281 = vld [vmem:[%s3 + $0x38] sm:$0xf]
      %v1282 = vld [vmem:[%s3 + $0x3c] sm:$0xff]
      %v1283 = vld [vmem:[%s3 + $0x44] sm:$0xff]
      %v1284 = vld [vmem:[%s3 + $0x4c] sm:$0xf]
      %v1285 = vpack.c.bf16 %v582, %v580
      %v1286 = vpack.c.bf16 %v587, %v585
      %v1287 = vpack.c.bf16 %v634, %v632
      %v1288 = vpack.c.bf16 %v639, %v637
      %v1289 = vpack.c.bf16 %v686, %v684
      %v1290 = vpack.c.bf16 %v691, %v689
      %v1291 = vpack.c.bf16 %v738, %v736
      %v1292 = vpack.c.bf16 %v743, %v741
      %v1293 = vpack.c.bf16 %v790, %v788
      %v1294 = vpack.c.bf16 %v795, %v793
      %v1295 = vpack.c.bf16 %v842, %v840
      %v1296 = vpack.c.bf16 %v847, %v845
      %v1297 = vpack.c.bf16 %v894, %v892
      %v1298 = vpack.c.bf16 %v899, %v897
      %v1299 = vpack.c.bf16 %v946, %v944
      %v1300 = vpack.c.bf16 %v951, %v949
      %v1301 = vpack.c.bf16 %v998, %v996
      %v1302 = vpack.c.bf16 %v1003, %v1001
      %v1303 = vpack.c.bf16 %v1042, %v1040
      %v1304 = vpack.c.bf16 %v1047, %v1045
      %v1305 = vpack.c.bf16 %v1070, %v1068
      %v1306 = vpack.c.bf16 %v1075, %v1073
      %v1307 = vpack.c.bf16 %v1098, %v1096
      %v1308 = vpack.c.bf16 %v1103, %v1101
      %v1309 = vpack.c.bf16 %v1126, %v1124
      %v1310 = vpack.c.bf16 %v1131, %v1129
      %v1311 = vpack.c.bf16 %v1154, %v1152
      %v1312 = vpack.c.bf16 %v1159, %v1157
      %v1313 = vpack.c.bf16 %v1182, %v1180
      %v1314 = vpack.c.bf16 %v1187, %v1185
      %v1315 = vpack.c.bf16 %v1210, %v1208
      %v1316 = vpack.c.bf16 %v1215, %v1213
      %v1317 = vpack.c.bf16 %v1238, %v1236
      %v1318 = vpack.c.bf16 %v1243, %v1241
      %v1319 = vpack.c.bf16 %v1266, %v1264
      %v1320 = vpack.c.bf16 %v1271, %v1269
      %v1321 = vld [vmem:[%s4] sm:$0xff]
      %v1322 = vld [vmem:[%s4 + $0x8] sm:$0xff]
      %v1323 = vld [vmem:[%s4 + $0x10] sm:$0xff]
      %v1324 = vld [vmem:[%s4 + $0x18] sm:$0xff]
      %1326 = vset.pattern.permute.xlu0 0
      %1327 = vperm.xlu0 %1326, %v1321
      %v1328 = vpop.permute.xlu0 %1327
      %1331 = vset.pattern.permute.xlu0 0
      %1332 = vperm.xlu0 %1331, %v1322
      %v1333 = vpop.permute.xlu0 %1332
      %1336 = vset.pattern.permute.xlu0 0
      %1337 = vperm.xlu0 %1336, %v1323
      %v1338 = vpop.permute.xlu0 %1337
      %1341 = vset.pattern.permute.xlu0 0
      %1342 = vperm.xlu0 %1341, %v1324
      %v1343 = vpop.permute.xlu0 %1342
      %v1357 = vunpack.c.l.b16 %v1273
      %v1358 = vunpack.c.h.b16 %v1273
      %v1359 = vunpack.c.l.b16 %v1274
      %v1360 = vunpack.c.h.b16 %v1274
      %v1361 = vunpack.c.l.b16 %v1275
      %v1362 = vunpack.c.l.b16 %v1276
      %v1363 = vunpack.c.h.b16 %v1276
      %v1364 = vunpack.c.l.b16 %v1277
      %v1365 = vunpack.c.h.b16 %v1277
      %v1366 = vunpack.c.l.b16 %v1278
      %v1367 = vunpack.c.l.b16 %v1279
      %v1368 = vunpack.c.h.b16 %v1279
      %v1369 = vunpack.c.l.b16 %v1280
      %v1370 = vunpack.c.h.b16 %v1280
      %v1371 = vunpack.c.l.b16 %v1281
      %v1372 = vunpack.c.l.b16 %v1282
      %v1373 = vunpack.c.h.b16 %v1282
      %v1374 = vunpack.c.l.b16 %v1283
      %v1375 = vunpack.c.h.b16 %v1283
      %v1376 = vunpack.c.l.b16 %v1284
      %v1377 = vpack.c.b16 %v1362, %v1357
      %v1378 = vpack.c.b16 %v1363, %v1358
      %v1379 = vpack.c.b16 %v1364, %v1359
      %v1380 = vpack.c.b16 %v1365, %v1360
      %v1381 = vpack.c.b16 %v1366, %v1361
      %v1382 = vpack.c.b16 %v1372, %v1367
      %v1383 = vpack.c.b16 %v1373, %v1368
      %v1384 = vpack.c.b16 %v1374, %v1369
      %v1385 = vpack.c.b16 %v1375, %v1370
      %v1386 = vpack.c.b16 %v1376, %v1371
      %v1396 = vsel %vm563, %v1381, 0
      %v1399 = vsel %vm563, %v1386, 0
      %1401 = vmatpush.bf16.msra.mxu0 %v1292
      %1402 = vmatpush.bf16.msra.mxu0 %v1291
      %1403 = vmatpush.bf16.msra.mxu0 %v1290
      %1404 = vmatpush.bf16.msra.mxu0 %v1289
      %1405 = vmatpush.bf16.msra.mxu0 %v1288
      %1406 = vmatpush.bf16.msra.mxu0 %v1287
      %1407 = vmatpush.bf16.msra.mxu0 %v1286
      %1408 = vmatpush.bf16.msra.mxu0 %v1285
      %1409 = vmatmul.bf16.gmra.mxu0 %v1377
      %v1410 = vpop.f32.mrf.mxu0
      %v1411 = vadd.f32 %v1328, %v1410
      %v1412 = vpop.f32.mrf.mxu0
      %v1413 = vadd.f32 %v1333, %v1412
      %1414 = vmatmul.bf16.gmra.mxu0 %v1382
      %v1415 = vpop.f32.mrf.mxu0
      %v1416 = vadd.f32 %v1338, %v1415
      %v1417 = vpop.f32.mrf.mxu0
      %v1418 = vadd.f32 %v1343, %v1417
      %1419 = vdwg.mxu0
      %1420 = vmatpush.bf16.msra.mxu0 %v1300
      %1421 = vmatpush.bf16.msra.mxu0 %v1299
      %1422 = vmatpush.bf16.msra.mxu0 %v1298
      %1423 = vmatpush.bf16.msra.mxu0 %v1297
      %1424 = vmatpush.bf16.msra.mxu0 %v1296
      %1425 = vmatpush.bf16.msra.mxu0 %v1295
      %1426 = vmatpush.bf16.msra.mxu0 %v1294
      %1427 = vmatpush.bf16.msra.mxu0 %v1293
      %1428 = vmatmul.bf16.gmra.mxu0 %v1378
      %v1429 = vpop.f32.mrf.mxu0
      %v1430 = vadd.f32 %v1411, %v1429
      %v1431 = vpop.f32.mrf.mxu0
      %v1432 = vadd.f32 %v1413, %v1431
      %1433 = vmatmul.bf16.gmra.mxu0 %v1383
      %v1434 = vpop.f32.mrf.mxu0
      %v1435 = vadd.f32 %v1416, %v1434
      %v1436 = vpop.f32.mrf.mxu0
      %v1437 = vadd.f32 %v1418, %v1436
      %1438 = vdwg.mxu0
      %1439 = vmatpush.bf16.msra.mxu0 %v1308
      %1440 = vmatpush.bf16.msra.mxu0 %v1307
      %1441 = vmatpush.bf16.msra.mxu0 %v1306
      %1442 = vmatpush.bf16.msra.mxu0 %v1305
      %1443 = vmatpush.bf16.msra.mxu0 %v1304
      %1444 = vmatpush.bf16.msra.mxu0 %v1303
      %1445 = vmatpush.bf16.msra.mxu0 %v1302
      %1446 = vmatpush.bf16.msra.mxu0 %v1301
      %1447 = vmatmul.bf16.gmra.mxu0 %v1379
      %v1448 = vpop.f32.mrf.mxu0
      %v1449 = vadd.f32 %v1430, %v1448
      %v1450 = vpop.f32.mrf.mxu0
      %v1451 = vadd.f32 %v1432, %v1450
      %1452 = vmatmul.bf16.gmra.mxu0 %v1384
      %v1453 = vpop.f32.mrf.mxu0
      %v1454 = vadd.f32 %v1435, %v1453
      %v1455 = vpop.f32.mrf.mxu0
      %v1456 = vadd.f32 %v1437, %v1455
      %1457 = vdwg.mxu0
      %1458 = vmatpush.bf16.msra.mxu0 %v1316
      %1459 = vmatpush.bf16.msra.mxu0 %v1315
      %1460 = vmatpush.bf16.msra.mxu0 %v1314
      %1461 = vmatpush.bf16.msra.mxu0 %v1313
      %1462 = vmatpush.bf16.msra.mxu0 %v1312
      %1463 = vmatpush.bf16.msra.mxu0 %v1311
      %1464 = vmatpush.bf16.msra.mxu0 %v1310
      %1465 = vmatpush.bf16.msra.mxu0 %v1309
      %1466 = vmatmul.bf16.gmra.mxu0 %v1380
      %v1467 = vpop.f32.mrf.mxu0
      %v1468 = vadd.f32 %v1449, %v1467
      %v1469 = vpop.f32.mrf.mxu0
      %v1470 = vadd.f32 %v1451, %v1469
      %1471 = vmatmul.bf16.gmra.mxu0 %v1385
      %v1472 = vpop.f32.mrf.mxu0
      %v1473 = vadd.f32 %v1454, %v1472
      %v1474 = vpop.f32.mrf.mxu0
      %v1475 = vadd.f32 %v1456, %v1474
      %1476 = vdwg.mxu0
      %1477 = vmatpush.bf16.msra.mxu0 0
      %1478 = vmatpush.bf16.msra.mxu0 0
      %1479 = vmatpush.bf16.msra.mxu0 0
      %1480 = vmatpush.bf16.msra.mxu0 0
      %1481 = vmatpush.bf16.msra.mxu0 %v1320
      %1482 = vmatpush.bf16.msra.mxu0 %v1319
      %1483 = vmatpush.bf16.msra.mxu0 %v1318
      %1484 = vmatpush.bf16.msra.mxu0 %v1317
      %1485 = vmatmul.bf16.gmra.mxu0 %v1396
      %v1486 = vpop.f32.mrf.mxu0
      %v1487 = vadd.f32 %v1468, %v1486
      %v1488 = vpop.f32.mrf.mxu0
      %v1489 = vadd.f32 %v1470, %v1488
      %1490 = vmatmul.bf16.gmra.mxu0 %v1399
      %v1491 = vpop.f32.mrf.mxu0
      %v1492 = vadd.f32 %v1473, %v1491
      %v1493 = vpop.f32.mrf.mxu0
      %v1494 = vadd.f32 %v1475, %v1493
      %1495 = vdwg.mxu0
      %v1496 = vmax.f32 %v1487, 0.0
      %v1497 = vmax.f32 %v1489, 0.0
      %v1498 = vmax.f32 %v1492, 0.0
      %v1499 = vmax.f32 %v1494, 0.0
      %v1500 = vpack.c.bf16 %v1497, %v1496
      %v1501 = vpack.c.bf16 %v1499, %v1498
      %v1502 = vld [vmem:[%s11] sm:$0xff]
      %v1503 = vld [vmem:[%s11 + $0x8] sm:$0xff]
      %v1504 = vld [vmem:[%s11 + $0x10] sm:$0xff]
      %v1505 = vld [vmem:[%s11 + $0x18] sm:$0xff]
      %v1506 = vld [vmem:[%s11 + $0x20] sm:$0xff]
      %v1507 = vld [vmem:[%s11 + $0x28] sm:$0xff]
      %v1508 = vld [vmem:[%s11 + $0x30] sm:$0xff]
      %v1509 = vld [vmem:[%s11 + $0x38] sm:$0xff]
      %v1518 = vunpack.c.l.b16 %v1502
      %v1519 = vunpack.c.h.b16 %v1502
      %v1520 = vunpack.c.l.b16 %v1503
      %v1521 = vunpack.c.h.b16 %v1503
      %v1522 = vunpack.c.l.b16 %v1504
      %v1523 = vunpack.c.h.b16 %v1504
      %v1524 = vunpack.c.l.b16 %v1505
      %v1525 = vunpack.c.h.b16 %v1505
      %v1526 = vunpack.c.l.b16 %v1506
      %v1527 = vunpack.c.h.b16 %v1506
      %v1528 = vunpack.c.l.b16 %v1507
      %v1529 = vunpack.c.h.b16 %v1507
      %v1530 = vunpack.c.l.b16 %v1508
      %v1531 = vunpack.c.h.b16 %v1508
      %v1532 = vunpack.c.l.b16 %v1509
      %v1533 = vunpack.c.h.b16 %v1509
      %v1534 = vpack.c.b16 %v1520, %v1518
      %v1535 = vpack.c.b16 %v1521, %v1519
      %v1536 = vpack.c.b16 %v1524, %v1522
      %v1537 = vpack.c.b16 %v1525, %v1523
      %v1538 = vpack.c.b16 %v1528, %v1526
      %v1539 = vpack.c.b16 %v1529, %v1527
      %v1540 = vpack.c.b16 %v1532, %v1530
      %v1541 = vpack.c.b16 %v1533, %v1531
      %v1551 = vsel %vm563, %v1500, 0
      %v1554 = vsel %vm563, %v1501, 0
      %1556 = vmatpush.bf16.msra.mxu0 0
      %1557 = vmatpush.bf16.msra.mxu0 0
      %1558 = vmatpush.bf16.msra.mxu0 0
      %1559 = vmatpush.bf16.msra.mxu0 0
      %1560 = vmatpush.bf16.msra.mxu0 %v1540
      %1561 = vmatpush.bf16.msra.mxu0 %v1538
      %1562 = vmatpush.bf16.msra.mxu0 %v1536
      %1563 = vmatpush.bf16.msra.mxu0 %v1534
      %1564 = vmatmul.bf16.gmra.mxu0 %v1551
      %v1565 = vpop.f32.mrf.mxu0
      %v1566 = vadd.f32 0.0, %v1565
      %v1567 = vpop.f32.mrf.mxu0
      %v1568 = vadd.f32 0.0, %v1567
      %1569 = vmatmul.bf16.gmra.mxu0 %v1554
      %v1570 = vpop.f32.mrf.mxu0
      %v1571 = vadd.f32 0.0, %v1570
      %v1572 = vpop.f32.mrf.mxu0
      %v1573 = vadd.f32 0.0, %v1572
      %1574 = vdwg.mxu0
      %1575 = vmatpush.bf16.msra.mxu0 0
      %1576 = vmatpush.bf16.msra.mxu0 0
      %1577 = vmatpush.bf16.msra.mxu0 0
      %1578 = vmatpush.bf16.msra.mxu0 0
      %1579 = vmatpush.bf16.msra.mxu0 %v1541
      %1580 = vmatpush.bf16.msra.mxu0 %v1539
      %1581 = vmatpush.bf16.msra.mxu0 %v1537
      %1582 = vmatpush.bf16.msra.mxu0 %v1535
      %1583 = vmatmul.bf16.gmra.mxu0 %v1551
      %v1584 = vpop.f32.mrf.mxu0
      %v1585 = vadd.f32 0.0, %v1584
      %v1586 = vpop.f32.mrf.mxu0
      %v1587 = vadd.f32 0.0, %v1586
      %1588 = vmatmul.bf16.gmra.mxu0 %v1554
      %v1589 = vpop.f32.mrf.mxu0
      %v1590 = vadd.f32 0.0, %v1589
      %v1591 = vpop.f32.mrf.mxu0
      %v1592 = vadd.f32 0.0, %v1591
      %1593 = vdwg.mxu0
      %s1594 = scalar_lea.vmem %s11, 64
      %v1595 = vld [vmem:[%s1594] sm:$0xff]
      %v1596 = vld [vmem:[%s1594 + $0x8] sm:$0xff]
      %v1597 = vld [vmem:[%s1594 + $0x10] sm:$0xff]
      %v1598 = vld [vmem:[%s1594 + $0x18] sm:$0xff]
      %v1599 = vld [vmem:[%s1594 + $0x20] sm:$0xff]
      %v1600 = vld [vmem:[%s1594 + $0x28] sm:$0xff]
      %v1601 = vld [vmem:[%s1594 + $0x30] sm:$0xff]
      %v1602 = vld [vmem:[%s1594 + $0x38] sm:$0xff]
      %v1611 = vunpack.c.l.b16 %v1595
      %v1612 = vunpack.c.h.b16 %v1595
      %v1613 = vunpack.c.l.b16 %v1596
      %v1614 = vunpack.c.h.b16 %v1596
      %v1615 = vunpack.c.l.b16 %v1597
      %v1616 = vunpack.c.h.b16 %v1597
      %v1617 = vunpack.c.l.b16 %v1598
      %v1618 = vunpack.c.h.b16 %v1598
      %v1619 = vunpack.c.l.b16 %v1599
      %v1620 = vunpack.c.h.b16 %v1599
      %v1621 = vunpack.c.l.b16 %v1600
      %v1622 = vunpack.c.h.b16 %v1600
      %v1623 = vunpack.c.l.b16 %v1601
      %v1624 = vunpack.c.h.b16 %v1601
      %v1625 = vunpack.c.l.b16 %v1602
      %v1626 = vunpack.c.h.b16 %v1602
      %v1627 = vpack.c.b16 %v1613, %v1611
      %v1628 = vpack.c.b16 %v1614, %v1612
      %v1629 = vpack.c.b16 %v1617, %v1615
      %v1630 = vpack.c.b16 %v1618, %v1616
      %v1631 = vpack.c.b16 %v1621, %v1619
      %v1632 = vpack.c.b16 %v1622, %v1620
      %v1633 = vpack.c.b16 %v1625, %v1623
      %v1634 = vpack.c.b16 %v1626, %v1624
      %1643 = vmatpush.bf16.msra.mxu0 0
      %1644 = vmatpush.bf16.msra.mxu0 0
      %1645 = vmatpush.bf16.msra.mxu0 0
      %1646 = vmatpush.bf16.msra.mxu0 0
      %1647 = vmatpush.bf16.msra.mxu0 %v1633
      %1648 = vmatpush.bf16.msra.mxu0 %v1631
      %1649 = vmatpush.bf16.msra.mxu0 %v1629
      %1650 = vmatpush.bf16.msra.mxu0 %v1627
      %1651 = vmatmul.bf16.gmra.mxu0 %v1551
      %v1652 = vpop.f32.mrf.mxu0
      %v1653 = vadd.f32 0.0, %v1652
      %v1654 = vpop.f32.mrf.mxu0
      %v1655 = vadd.f32 0.0, %v1654
      %1656 = vmatmul.bf16.gmra.mxu0 %v1554
      %v1657 = vpop.f32.mrf.mxu0
      %v1658 = vadd.f32 0.0, %v1657
      %v1659 = vpop.f32.mrf.mxu0
      %v1660 = vadd.f32 0.0, %v1659
      %1661 = vdwg.mxu0
      %1662 = vmatpush.bf16.msra.mxu0 0
      %1663 = vmatpush.bf16.msra.mxu0 0
      %1664 = vmatpush.bf16.msra.mxu0 0
      %1665 = vmatpush.bf16.msra.mxu0 0
      %1666 = vmatpush.bf16.msra.mxu0 %v1634
      %1667 = vmatpush.bf16.msra.mxu0 %v1632
      %1668 = vmatpush.bf16.msra.mxu0 %v1630
      %1669 = vmatpush.bf16.msra.mxu0 %v1628
      %1670 = vmatmul.bf16.gmra.mxu0 %v1551
      %v1671 = vpop.f32.mrf.mxu0
      %v1672 = vadd.f32 0.0, %v1671
      %v1673 = vpop.f32.mrf.mxu0
      %v1674 = vadd.f32 0.0, %v1673
      %1675 = vmatmul.bf16.gmra.mxu0 %v1554
      %v1676 = vpop.f32.mrf.mxu0
      %v1677 = vadd.f32 0.0, %v1676
      %v1678 = vpop.f32.mrf.mxu0
      %v1679 = vadd.f32 0.0, %v1678
      %1680 = vdwg.mxu0
      %s1681 = scalar_lea.vmem %s11, 128
      %v1682 = vld [vmem:[%s1681] sm:$0xff]
      %v1683 = vld [vmem:[%s1681 + $0x8] sm:$0xff]
      %v1684 = vld [vmem:[%s1681 + $0x10] sm:$0xff]
      %v1685 = vld [vmem:[%s1681 + $0x18] sm:$0xff]
      %v1686 = vld [vmem:[%s1681 + $0x20] sm:$0xff]
      %v1687 = vld [vmem:[%s1681 + $0x28] sm:$0xff]
      %v1688 = vld [vmem:[%s1681 + $0x30] sm:$0xff]
      %v1689 = vld [vmem:[%s1681 + $0x38] sm:$0xff]
      %v1698 = vunpack.c.l.b16 %v1682
      %v1699 = vunpack.c.h.b16 %v1682
      %v1700 = vunpack.c.l.b16 %v1683
      %v1701 = vunpack.c.h.b16 %v1683
      %v1702 = vunpack.c.l.b16 %v1684
      %v1703 = vunpack.c.h.b16 %v1684
      %v1704 = vunpack.c.l.b16 %v1685
      %v1705 = vunpack.c.h.b16 %v1685
      %v1706 = vunpack.c.l.b16 %v1686
      %v1707 = vunpack.c.h.b16 %v1686
      %v1708 = vunpack.c.l.b16 %v1687
      %v1709 = vunpack.c.h.b16 %v1687
      %v1710 = vunpack.c.l.b16 %v1688
      %v1711 = vunpack.c.h.b16 %v1688
      %v1712 = vunpack.c.l.b16 %v1689
      %v1713 = vunpack.c.h.b16 %v1689
      %v1714 = vpack.c.b16 %v1700, %v1698
      %v1715 = vpack.c.b16 %v1701, %v1699
      %v1716 = vpack.c.b16 %v1704, %v1702
      %v1717 = vpack.c.b16 %v1705, %v1703
      %v1718 = vpack.c.b16 %v1708, %v1706
      %v1719 = vpack.c.b16 %v1709, %v1707
      %v1720 = vpack.c.b16 %v1712, %v1710
      %v1721 = vpack.c.b16 %v1713, %v1711
      %1730 = vmatpush.bf16.msra.mxu0 0
      %1731 = vmatpush.bf16.msra.mxu0 0
      %1732 = vmatpush.bf16.msra.mxu0 0
      %1733 = vmatpush.bf16.msra.mxu0 0
      %1734 = vmatpush.bf16.msra.mxu0 %v1720
      %1735 = vmatpush.bf16.msra.mxu0 %v1718
      %1736 = vmatpush.bf16.msra.mxu0 %v1716
      %1737 = vmatpush.bf16.msra.mxu0 %v1714
      %1738 = vmatmul.bf16.gmra.mxu0 %v1551
      %v1739 = vpop.f32.mrf.mxu0
      %v1740 = vadd.f32 0.0, %v1739
      %v1741 = vpop.f32.mrf.mxu0
      %v1742 = vadd.f32 0.0, %v1741
      %1743 = vmatmul.bf16.gmra.mxu0 %v1554
      %v1744 = vpop.f32.mrf.mxu0
      %v1745 = vadd.f32 0.0, %v1744
      %v1746 = vpop.f32.mrf.mxu0
      %v1747 = vadd.f32 0.0, %v1746
      %1748 = vdwg.mxu0
      %1749 = vmatpush.bf16.msra.mxu0 0
      %1750 = vmatpush.bf16.msra.mxu0 0
      %1751 = vmatpush.bf16.msra.mxu0 0
      %1752 = vmatpush.bf16.msra.mxu0 0
      %1753 = vmatpush.bf16.msra.mxu0 %v1721
      %1754 = vmatpush.bf16.msra.mxu0 %v1719
      %1755 = vmatpush.bf16.msra.mxu0 %v1717
      %1756 = vmatpush.bf16.msra.mxu0 %v1715
      %1757 = vmatmul.bf16.gmra.mxu0 %v1551
      %v1758 = vpop.f32.mrf.mxu0
      %v1759 = vadd.f32 0.0, %v1758
      %v1760 = vpop.f32.mrf.mxu0
      %v1761 = vadd.f32 0.0, %v1760
      %1762 = vmatmul.bf16.gmra.mxu0 %v1554
      %v1763 = vpop.f32.mrf.mxu0
      %v1764 = vadd.f32 0.0, %v1763
      %v1765 = vpop.f32.mrf.mxu0
      %v1766 = vadd.f32 0.0, %v1765
      %1767 = vdwg.mxu0
      %s1768 = scalar_lea.vmem %s11, 192
      %v1769 = vld [vmem:[%s1768] sm:$0xff]
      %v1770 = vld [vmem:[%s1768 + $0x8] sm:$0xff]
      %v1771 = vld [vmem:[%s1768 + $0x10] sm:$0xff]
      %v1772 = vld [vmem:[%s1768 + $0x18] sm:$0xff]
      %v1773 = vld [vmem:[%s1768 + $0x20] sm:$0xff]
      %v1774 = vld [vmem:[%s1768 + $0x28] sm:$0xff]
      %v1775 = vld [vmem:[%s1768 + $0x30] sm:$0xff]
      %v1776 = vld [vmem:[%s1768 + $0x38] sm:$0xff]
      %v1785 = vunpack.c.l.b16 %v1769
      %v1786 = vunpack.c.h.b16 %v1769
      %v1787 = vunpack.c.l.b16 %v1770
      %v1788 = vunpack.c.h.b16 %v1770
      %v1789 = vunpack.c.l.b16 %v1771
      %v1790 = vunpack.c.h.b16 %v1771
      %v1791 = vunpack.c.l.b16 %v1772
      %v1792 = vunpack.c.h.b16 %v1772
      %v1793 = vunpack.c.l.b16 %v1773
      %v1794 = vunpack.c.h.b16 %v1773
      %v1795 = vunpack.c.l.b16 %v1774
      %v1796 = vunpack.c.h.b16 %v1774
      %v1797 = vunpack.c.l.b16 %v1775
      %v1798 = vunpack.c.h.b16 %v1775
      %v1799 = vunpack.c.l.b16 %v1776
      %v1800 = vunpack.c.h.b16 %v1776
      %v1801 = vpack.c.b16 %v1787, %v1785
      %v1802 = vpack.c.b16 %v1788, %v1786
      %v1803 = vpack.c.b16 %v1791, %v1789
      %v1804 = vpack.c.b16 %v1792, %v1790
      %v1805 = vpack.c.b16 %v1795, %v1793
      %v1806 = vpack.c.b16 %v1796, %v1794
      %v1807 = vpack.c.b16 %v1799, %v1797
      %v1808 = vpack.c.b16 %v1800, %v1798
      %1817 = vmatpush.bf16.msra.mxu0 0
      %1818 = vmatpush.bf16.msra.mxu0 0
      %1819 = vmatpush.bf16.msra.mxu0 0
      %1820 = vmatpush.bf16.msra.mxu0 0
      %1821 = vmatpush.bf16.msra.mxu0 %v1807
      %1822 = vmatpush.bf16.msra.mxu0 %v1805
      %1823 = vmatpush.bf16.msra.mxu0 %v1803
      %1824 = vmatpush.bf16.msra.mxu0 %v1801
      %1825 = vmatmul.bf16.gmra.mxu0 %v1551
      %v1826 = vpop.f32.mrf.mxu0
      %v1827 = vadd.f32 0.0, %v1826
      %v1828 = vpop.f32.mrf.mxu0
      %v1829 = vadd.f32 0.0, %v1828
      %1830 = vmatmul.bf16.gmra.mxu0 %v1554
      %v1831 = vpop.f32.mrf.mxu0
      %v1832 = vadd.f32 0.0, %v1831
      %v1833 = vpop.f32.mrf.mxu0
      %v1834 = vadd.f32 0.0, %v1833
      %1835 = vdwg.mxu0
      %1836 = vmatpush.bf16.msra.mxu0 0
      %1837 = vmatpush.bf16.msra.mxu0 0
      %1838 = vmatpush.bf16.msra.mxu0 0
      %1839 = vmatpush.bf16.msra.mxu0 0
      %1840 = vmatpush.bf16.msra.mxu0 %v1808
      %1841 = vmatpush.bf16.msra.mxu0 %v1806
      %1842 = vmatpush.bf16.msra.mxu0 %v1804
      %1843 = vmatpush.bf16.msra.mxu0 %v1802
      %1844 = vmatmul.bf16.gmra.mxu0 %v1551
      %v1845 = vpop.f32.mrf.mxu0
      %v1846 = vadd.f32 0.0, %v1845
      %v1847 = vpop.f32.mrf.mxu0
      %v1848 = vadd.f32 0.0, %v1847
      %1849 = vmatmul.bf16.gmra.mxu0 %v1554
      %v1850 = vpop.f32.mrf.mxu0
      %v1851 = vadd.f32 0.0, %v1850
      %v1852 = vpop.f32.mrf.mxu0
      %v1853 = vadd.f32 0.0, %v1852
      %1854 = vdwg.mxu0
      %s1855 = scalar_lea.vmem %s11, 256
      %v1856 = vld [vmem:[%s1855] sm:$0xff]
      %v1857 = vld [vmem:[%s1855 + $0x8] sm:$0xff]
      %v1858 = vld [vmem:[%s1855 + $0x10] sm:$0xff]
      %v1859 = vld [vmem:[%s1855 + $0x18] sm:$0xff]
      %v1860 = vld [vmem:[%s1855 + $0x20] sm:$0xff]
      %v1861 = vld [vmem:[%s1855 + $0x28] sm:$0xff]
      %v1862 = vld [vmem:[%s1855 + $0x30] sm:$0xff]
      %v1863 = vld [vmem:[%s1855 + $0x38] sm:$0xff]
      %v1872 = vunpack.c.l.b16 %v1856
      %v1873 = vunpack.c.h.b16 %v1856
      %v1874 = vunpack.c.l.b16 %v1857
      %v1875 = vunpack.c.h.b16 %v1857
      %v1876 = vunpack.c.l.b16 %v1858
      %v1877 = vunpack.c.h.b16 %v1858
      %v1878 = vunpack.c.l.b16 %v1859
      %v1879 = vunpack.c.h.b16 %v1859
      %v1880 = vunpack.c.l.b16 %v1860
      %v1881 = vunpack.c.h.b16 %v1860
      %v1882 = vunpack.c.l.b16 %v1861
      %v1883 = vunpack.c.h.b16 %v1861
      %v1884 = vunpack.c.l.b16 %v1862
      %v1885 = vunpack.c.h.b16 %v1862
      %v1886 = vunpack.c.l.b16 %v1863
      %v1887 = vunpack.c.h.b16 %v1863
      %v1888 = vpack.c.b16 %v1874, %v1872
      %v1889 = vpack.c.b16 %v1875, %v1873
      %v1890 = vpack.c.b16 %v1878, %v1876
      %v1891 = vpack.c.b16 %v1879, %v1877
      %v1892 = vpack.c.b16 %v1882, %v1880
      %v1893 = vpack.c.b16 %v1883, %v1881
      %v1894 = vpack.c.b16 %v1886, %v1884
      %v1895 = vpack.c.b16 %v1887, %v1885
      %1904 = vmatpush.bf16.msra.mxu0 0
      %1905 = vmatpush.bf16.msra.mxu0 0
      %1906 = vmatpush.bf16.msra.mxu0 0
      %1907 = vmatpush.bf16.msra.mxu0 0
      %1908 = vmatpush.bf16.msra.mxu0 %v1894
      %1909 = vmatpush.bf16.msra.mxu0 %v1892
      %1910 = vmatpush.bf16.msra.mxu0 %v1890
      %1911 = vmatpush.bf16.msra.mxu0 %v1888
      %1912 = vmatmul.bf16.gmra.mxu0 %v1551
      %v1913 = vpop.f32.mrf.mxu0
      %v1914 = vadd.f32 0.0, %v1913
      %v1915 = vpop.f32.mrf.mxu0
      %v1916 = vadd.f32 0.0, %v1915
      %1917 = vmatmul.bf16.gmra.mxu0 %v1554
      %v1918 = vpop.f32.mrf.mxu0
      %v1919 = vadd.f32 0.0, %v1918
      %v1920 = vpop.f32.mrf.mxu0
      %v1921 = vadd.f32 0.0, %v1920
      %1922 = vdwg.mxu0
      %1923 = vmatpush.bf16.msra.mxu0 0
      %1924 = vmatpush.bf16.msra.mxu0 0
      %1925 = vmatpush.bf16.msra.mxu0 0
      %1926 = vmatpush.bf16.msra.mxu0 0
      %1927 = vmatpush.bf16.msra.mxu0 %v1895
      %1928 = vmatpush.bf16.msra.mxu0 %v1893
      %1929 = vmatpush.bf16.msra.mxu0 %v1891
      %1930 = vmatpush.bf16.msra.mxu0 %v1889
      %1931 = vmatmul.bf16.gmra.mxu0 %v1551
      %v1932 = vpop.f32.mrf.mxu0
      %v1933 = vadd.f32 0.0, %v1932
      %v1934 = vpop.f32.mrf.mxu0
      %v1935 = vadd.f32 0.0, %v1934
      %1936 = vmatmul.bf16.gmra.mxu0 %v1554
      %v1937 = vpop.f32.mrf.mxu0
      %v1938 = vadd.f32 0.0, %v1937
      %v1939 = vpop.f32.mrf.mxu0
      %v1940 = vadd.f32 0.0, %v1939
      %1941 = vdwg.mxu0
      %s1942 = scalar_lea.vmem %s11, 320
      %v1943 = vld [vmem:[%s1942] sm:$0xff]
      %v1944 = vld [vmem:[%s1942 + $0x8] sm:$0xff]
      %v1945 = vld [vmem:[%s1942 + $0x10] sm:$0xff]
      %v1946 = vld [vmem:[%s1942 + $0x18] sm:$0xff]
      %v1947 = vld [vmem:[%s1942 + $0x20] sm:$0xff]
      %v1948 = vld [vmem:[%s1942 + $0x28] sm:$0xff]
      %v1949 = vld [vmem:[%s1942 + $0x30] sm:$0xff]
      %v1950 = vld [vmem:[%s1942 + $0x38] sm:$0xff]
      %v1959 = vunpack.c.l.b16 %v1943
      %v1960 = vunpack.c.h.b16 %v1943
      %v1961 = vunpack.c.l.b16 %v1944
      %v1962 = vunpack.c.h.b16 %v1944
      %v1963 = vunpack.c.l.b16 %v1945
      %v1964 = vunpack.c.h.b16 %v1945
      %v1965 = vunpack.c.l.b16 %v1946
      %v1966 = vunpack.c.h.b16 %v1946
      %v1967 = vunpack.c.l.b16 %v1947
      %v1968 = vunpack.c.h.b16 %v1947
      %v1969 = vunpack.c.l.b16 %v1948
      %v1970 = vunpack.c.h.b16 %v1948
      %v1971 = vunpack.c.l.b16 %v1949
      %v1972 = vunpack.c.h.b16 %v1949
      %v1973 = vunpack.c.l.b16 %v1950
      %v1974 = vunpack.c.h.b16 %v1950
      %v1975 = vpack.c.b16 %v1961, %v1959
      %v1976 = vpack.c.b16 %v1962, %v1960
      %v1977 = vpack.c.b16 %v1965, %v1963
      %v1978 = vpack.c.b16 %v1966, %v1964
      %v1979 = vpack.c.b16 %v1969, %v1967
      %v1980 = vpack.c.b16 %v1970, %v1968
      %v1981 = vpack.c.b16 %v1973, %v1971
      %v1982 = vpack.c.b16 %v1974, %v1972
      %1991 = vmatpush.bf16.msra.mxu0 0
      %1992 = vmatpush.bf16.msra.mxu0 0
      %1993 = vmatpush.bf16.msra.mxu0 0
      %1994 = vmatpush.bf16.msra.mxu0 0
      %1995 = vmatpush.bf16.msra.mxu0 %v1981
      %1996 = vmatpush.bf16.msra.mxu0 %v1979
      %1997 = vmatpush.bf16.msra.mxu0 %v1977
      %1998 = vmatpush.bf16.msra.mxu0 %v1975
      %1999 = vmatmul.bf16.gmra.mxu0 %v1551
      %v2000 = vpop.f32.mrf.mxu0
      %v2001 = vadd.f32 0.0, %v2000
      %v2002 = vpop.f32.mrf.mxu0
      %v2003 = vadd.f32 0.0, %v2002
      %2004 = vmatmul.bf16.gmra.mxu0 %v1554
      %v2005 = vpop.f32.mrf.mxu0
      %v2006 = vadd.f32 0.0, %v2005
      %v2007 = vpop.f32.mrf.mxu0
      %v2008 = vadd.f32 0.0, %v2007
      %2009 = vdwg.mxu0
      %2010 = vmatpush.bf16.msra.mxu0 0
      %2011 = vmatpush.bf16.msra.mxu0 0
      %2012 = vmatpush.bf16.msra.mxu0 0
      %2013 = vmatpush.bf16.msra.mxu0 0
      %2014 = vmatpush.bf16.msra.mxu0 %v1982
      %2015 = vmatpush.bf16.msra.mxu0 %v1980
      %2016 = vmatpush.bf16.msra.mxu0 %v1978
      %2017 = vmatpush.bf16.msra.mxu0 %v1976
      %2018 = vmatmul.bf16.gmra.mxu0 %v1551
      %v2019 = vpop.f32.mrf.mxu0
      %v2020 = vadd.f32 0.0, %v2019
      %v2021 = vpop.f32.mrf.mxu0
      %v2022 = vadd.f32 0.0, %v2021
      %2023 = vmatmul.bf16.gmra.mxu0 %v1554
      %v2024 = vpop.f32.mrf.mxu0
      %v2025 = vadd.f32 0.0, %v2024
      %v2026 = vpop.f32.mrf.mxu0
      %v2027 = vadd.f32 0.0, %v2026
      %2028 = vdwg.mxu0
      %s2029 = scalar_lea.vmem %s11, 384
      %v2030 = vld [vmem:[%s2029] sm:$0xff]
      %v2031 = vld [vmem:[%s2029 + $0x8] sm:$0xff]
      %v2032 = vld [vmem:[%s2029 + $0x10] sm:$0xff]
      %v2033 = vld [vmem:[%s2029 + $0x18] sm:$0xff]
      %v2034 = vld [vmem:[%s2029 + $0x20] sm:$0xff]
      %v2035 = vld [vmem:[%s2029 + $0x28] sm:$0xff]
      %v2036 = vld [vmem:[%s2029 + $0x30] sm:$0xff]
      %v2037 = vld [vmem:[%s2029 + $0x38] sm:$0xff]
      %v2046 = vunpack.c.l.b16 %v2030
      %v2047 = vunpack.c.h.b16 %v2030
      %v2048 = vunpack.c.l.b16 %v2031
      %v2049 = vunpack.c.h.b16 %v2031
      %v2050 = vunpack.c.l.b16 %v2032
      %v2051 = vunpack.c.h.b16 %v2032
      %v2052 = vunpack.c.l.b16 %v2033
      %v2053 = vunpack.c.h.b16 %v2033
      %v2054 = vunpack.c.l.b16 %v2034
      %v2055 = vunpack.c.h.b16 %v2034
      %v2056 = vunpack.c.l.b16 %v2035
      %v2057 = vunpack.c.h.b16 %v2035
      %v2058 = vunpack.c.l.b16 %v2036
      %v2059 = vunpack.c.h.b16 %v2036
      %v2060 = vunpack.c.l.b16 %v2037
      %v2061 = vunpack.c.h.b16 %v2037
      %v2062 = vpack.c.b16 %v2048, %v2046
      %v2063 = vpack.c.b16 %v2049, %v2047
      %v2064 = vpack.c.b16 %v2052, %v2050
      %v2065 = vpack.c.b16 %v2053, %v2051
      %v2066 = vpack.c.b16 %v2056, %v2054
      %v2067 = vpack.c.b16 %v2057, %v2055
      %v2068 = vpack.c.b16 %v2060, %v2058
      %v2069 = vpack.c.b16 %v2061, %v2059
      %2078 = vmatpush.bf16.msra.mxu0 0
      %2079 = vmatpush.bf16.msra.mxu0 0
      %2080 = vmatpush.bf16.msra.mxu0 0
      %2081 = vmatpush.bf16.msra.mxu0 0
      %2082 = vmatpush.bf16.msra.mxu0 %v2068
      %2083 = vmatpush.bf16.msra.mxu0 %v2066
      %2084 = vmatpush.bf16.msra.mxu0 %v2064
      %2085 = vmatpush.bf16.msra.mxu0 %v2062
      %2086 = vmatmul.bf16.gmra.mxu0 %v1551
      %v2087 = vpop.f32.mrf.mxu0
      %v2088 = vadd.f32 0.0, %v2087
      %v2089 = vpop.f32.mrf.mxu0
      %v2090 = vadd.f32 0.0, %v2089
      %2091 = vmatmul.bf16.gmra.mxu0 %v1554
      %v2092 = vpop.f32.mrf.mxu0
      %v2093 = vadd.f32 0.0, %v2092
      %v2094 = vpop.f32.mrf.mxu0
      %v2095 = vadd.f32 0.0, %v2094
      %2096 = vdwg.mxu0
      %2097 = vmatpush.bf16.msra.mxu0 0
      %2098 = vmatpush.bf16.msra.mxu0 0
      %2099 = vmatpush.bf16.msra.mxu0 0
      %2100 = vmatpush.bf16.msra.mxu0 0
      %2101 = vmatpush.bf16.msra.mxu0 %v2069
      %2102 = vmatpush.bf16.msra.mxu0 %v2067
      %2103 = vmatpush.bf16.msra.mxu0 %v2065
      %2104 = vmatpush.bf16.msra.mxu0 %v2063
      %2105 = vmatmul.bf16.gmra.mxu0 %v1551
      %v2106 = vpop.f32.mrf.mxu0
      %v2107 = vadd.f32 0.0, %v2106
      %v2108 = vpop.f32.mrf.mxu0
      %v2109 = vadd.f32 0.0, %v2108
      %2110 = vmatmul.bf16.gmra.mxu0 %v1554
      %v2111 = vpop.f32.mrf.mxu0
      %v2112 = vadd.f32 0.0, %v2111
      %v2113 = vpop.f32.mrf.mxu0
      %v2114 = vadd.f32 0.0, %v2113
      %2115 = vdwg.mxu0
      %s2116 = scalar_lea.vmem %s11, 448
      %v2117 = vld [vmem:[%s2116] sm:$0xff]
      %v2118 = vld [vmem:[%s2116 + $0x8] sm:$0xff]
      %v2119 = vld [vmem:[%s2116 + $0x10] sm:$0xff]
      %v2120 = vld [vmem:[%s2116 + $0x18] sm:$0xff]
      %v2121 = vld [vmem:[%s2116 + $0x20] sm:$0xff]
      %v2122 = vld [vmem:[%s2116 + $0x28] sm:$0xff]
      %v2123 = vld [vmem:[%s2116 + $0x30] sm:$0xff]
      %v2124 = vld [vmem:[%s2116 + $0x38] sm:$0xff]
      %v2133 = vunpack.c.l.b16 %v2117
      %v2134 = vunpack.c.h.b16 %v2117
      %v2135 = vunpack.c.l.b16 %v2118
      %v2136 = vunpack.c.h.b16 %v2118
      %v2137 = vunpack.c.l.b16 %v2119
      %v2138 = vunpack.c.h.b16 %v2119
      %v2139 = vunpack.c.l.b16 %v2120
      %v2140 = vunpack.c.h.b16 %v2120
      %v2141 = vunpack.c.l.b16 %v2121
      %v2142 = vunpack.c.h.b16 %v2121
      %v2143 = vunpack.c.l.b16 %v2122
      %v2144 = vunpack.c.h.b16 %v2122
      %v2145 = vunpack.c.l.b16 %v2123
      %v2146 = vunpack.c.h.b16 %v2123
      %v2147 = vunpack.c.l.b16 %v2124
      %v2148 = vunpack.c.h.b16 %v2124
      %v2149 = vpack.c.b16 %v2135, %v2133
      %v2150 = vpack.c.b16 %v2136, %v2134
      %v2151 = vpack.c.b16 %v2139, %v2137
      %v2152 = vpack.c.b16 %v2140, %v2138
      %v2153 = vpack.c.b16 %v2143, %v2141
      %v2154 = vpack.c.b16 %v2144, %v2142
      %v2155 = vpack.c.b16 %v2147, %v2145
      %v2156 = vpack.c.b16 %v2148, %v2146
      %2165 = vmatpush.bf16.msra.mxu0 0
      %2166 = vmatpush.bf16.msra.mxu0 0
      %2167 = vmatpush.bf16.msra.mxu0 0
      %2168 = vmatpush.bf16.msra.mxu0 0
      %2169 = vmatpush.bf16.msra.mxu0 %v2155
      %2170 = vmatpush.bf16.msra.mxu0 %v2153
      %2171 = vmatpush.bf16.msra.mxu0 %v2151
      %2172 = vmatpush.bf16.msra.mxu0 %v2149
      %2173 = vmatmul.bf16.gmra.mxu0 %v1551
      %v2174 = vpop.f32.mrf.mxu0
      %v2175 = vadd.f32 0.0, %v2174
      %v2176 = vpop.f32.mrf.mxu0
      %v2177 = vadd.f32 0.0, %v2176
      %2178 = vmatmul.bf16.gmra.mxu0 %v1554
      %v2179 = vpop.f32.mrf.mxu0
      %v2180 = vadd.f32 0.0, %v2179
      %v2181 = vpop.f32.mrf.mxu0
      %v2182 = vadd.f32 0.0, %v2181
      %2183 = vdwg.mxu0
      %2184 = vmatpush.bf16.msra.mxu0 0
      %2185 = vmatpush.bf16.msra.mxu0 0
      %2186 = vmatpush.bf16.msra.mxu0 0
      %2187 = vmatpush.bf16.msra.mxu0 0
      %2188 = vmatpush.bf16.msra.mxu0 %v2156
      %2189 = vmatpush.bf16.msra.mxu0 %v2154
      %2190 = vmatpush.bf16.msra.mxu0 %v2152
      %2191 = vmatpush.bf16.msra.mxu0 %v2150
      %2192 = vmatmul.bf16.gmra.mxu0 %v1551
      %v2193 = vpop.f32.mrf.mxu0
      %v2194 = vadd.f32 0.0, %v2193
      %v2195 = vpop.f32.mrf.mxu0
      %v2196 = vadd.f32 0.0, %v2195
      %2197 = vmatmul.bf16.gmra.mxu0 %v1554
      %v2198 = vpop.f32.mrf.mxu0
      %v2199 = vadd.f32 0.0, %v2198
      %v2200 = vpop.f32.mrf.mxu0
      %v2201 = vadd.f32 0.0, %v2200
      %2202 = vdwg.mxu0
      %s2203 = scalar_lea.vmem %s11, 512
      %v2204 = vld [vmem:[%s2203] sm:$0xff]
      %v2205 = vld [vmem:[%s2203 + $0x8] sm:$0xff]
      %v2206 = vld [vmem:[%s2203 + $0x10] sm:$0xff]
      %v2207 = vld [vmem:[%s2203 + $0x18] sm:$0xff]
      %v2208 = vld [vmem:[%s2203 + $0x20] sm:$0xff]
      %v2209 = vld [vmem:[%s2203 + $0x28] sm:$0xff]
      %v2210 = vld [vmem:[%s2203 + $0x30] sm:$0xff]
      %v2211 = vld [vmem:[%s2203 + $0x38] sm:$0xff]
      %v2220 = vunpack.c.l.b16 %v2204
      %v2221 = vunpack.c.h.b16 %v2204
      %v2222 = vunpack.c.l.b16 %v2205
      %v2223 = vunpack.c.h.b16 %v2205
      %v2224 = vunpack.c.l.b16 %v2206
      %v2225 = vunpack.c.h.b16 %v2206
      %v2226 = vunpack.c.l.b16 %v2207
      %v2227 = vunpack.c.h.b16 %v2207
      %v2228 = vunpack.c.l.b16 %v2208
      %v2229 = vunpack.c.h.b16 %v2208
      %v2230 = vunpack.c.l.b16 %v2209
      %v2231 = vunpack.c.h.b16 %v2209
      %v2232 = vunpack.c.l.b16 %v2210
      %v2233 = vunpack.c.h.b16 %v2210
      %v2234 = vunpack.c.l.b16 %v2211
      %v2235 = vunpack.c.h.b16 %v2211
      %v2236 = vpack.c.b16 %v2222, %v2220
      %v2237 = vpack.c.b16 %v2223, %v2221
      %v2238 = vpack.c.b16 %v2226, %v2224
      %v2239 = vpack.c.b16 %v2227, %v2225
      %v2240 = vpack.c.b16 %v2230, %v2228
      %v2241 = vpack.c.b16 %v2231, %v2229
      %v2242 = vpack.c.b16 %v2234, %v2232
      %v2243 = vpack.c.b16 %v2235, %v2233
      %2252 = vmatpush.bf16.msra.mxu0 0
      %2253 = vmatpush.bf16.msra.mxu0 0
      %2254 = vmatpush.bf16.msra.mxu0 0
      %2255 = vmatpush.bf16.msra.mxu0 0
      %2256 = vmatpush.bf16.msra.mxu0 %v2242
      %2257 = vmatpush.bf16.msra.mxu0 %v2240
      %2258 = vmatpush.bf16.msra.mxu0 %v2238
      %2259 = vmatpush.bf16.msra.mxu0 %v2236
      %2260 = vmatmul.bf16.gmra.mxu0 %v1551
      %v2261 = vpop.f32.mrf.mxu0
      %v2262 = vadd.f32 0.0, %v2261
      %v2263 = vpop.f32.mrf.mxu0
      %v2264 = vadd.f32 0.0, %v2263
      %2265 = vmatmul.bf16.gmra.mxu0 %v1554
      %v2266 = vpop.f32.mrf.mxu0
      %v2267 = vadd.f32 0.0, %v2266
      %v2268 = vpop.f32.mrf.mxu0
      %v2269 = vadd.f32 0.0, %v2268
      %2270 = vdwg.mxu0
      %2271 = vmatpush.bf16.msra.mxu0 0
      %2272 = vmatpush.bf16.msra.mxu0 0
      %2273 = vmatpush.bf16.msra.mxu0 0
      %2274 = vmatpush.bf16.msra.mxu0 0
      %2275 = vmatpush.bf16.msra.mxu0 %v2243
      %2276 = vmatpush.bf16.msra.mxu0 %v2241
      %2277 = vmatpush.bf16.msra.mxu0 %v2239
      %2278 = vmatpush.bf16.msra.mxu0 %v2237
      %2279 = vmatmul.bf16.gmra.mxu0 %v1551
      %v2280 = vpop.f32.mrf.mxu0
      %v2281 = vadd.f32 0.0, %v2280
      %v2282 = vpop.f32.mrf.mxu0
      %v2283 = vadd.f32 0.0, %v2282
      %2284 = vmatmul.bf16.gmra.mxu0 %v1554
      %v2285 = vpop.f32.mrf.mxu0
      %v2286 = vadd.f32 0.0, %v2285
      %v2287 = vpop.f32.mrf.mxu0
      %v2288 = vadd.f32 0.0, %v2287
      %2289 = vdwg.mxu0
      %v2290 = vld [vmem:[%s12] sm:$0xff]
      %v2291 = vld [vmem:[%s12 + $0x8] sm:$0xff]
      %v2292 = vld [vmem:[%s12 + $0x10] sm:$0xff]
      %v2293 = vld [vmem:[%s12 + $0x18] sm:$0xff]
      %v2294 = vld [vmem:[%s12 + $0x20] sm:$0xff]
      %v2295 = vld [vmem:[%s12 + $0x28] sm:$0xff]
      %v2296 = vld [vmem:[%s12 + $0x30] sm:$0xff]
      %v2297 = vld [vmem:[%s12 + $0x38] sm:$0xff]
      %v2300 = vunpack.c.l.b16 %v515
      %v2301 = vunpack.c.l.b16 %v516
      %v2302 = vpack.c.b16 %v2301, %v2300
      %v2311 = vunpack.c.l.b16 %v2290
      %v2312 = vunpack.c.h.b16 %v2290
      %v2313 = vunpack.c.l.b16 %v2291
      %v2314 = vunpack.c.h.b16 %v2291
      %v2315 = vunpack.c.l.b16 %v2292
      %v2316 = vunpack.c.h.b16 %v2292
      %v2317 = vunpack.c.l.b16 %v2293
      %v2318 = vunpack.c.h.b16 %v2293
      %v2319 = vunpack.c.l.b16 %v2294
      %v2320 = vunpack.c.h.b16 %v2294
      %v2321 = vunpack.c.l.b16 %v2295
      %v2322 = vunpack.c.h.b16 %v2295
      %v2323 = vunpack.c.l.b16 %v2296
      %v2324 = vunpack.c.h.b16 %v2296
      %v2325 = vunpack.c.l.b16 %v2297
      %v2326 = vunpack.c.h.b16 %v2297
      %v2327 = vpack.c.b16 %v2313, %v2311
      %v2328 = vpack.c.b16 %v2314, %v2312
      %v2329 = vpack.c.b16 %v2317, %v2315
      %v2330 = vpack.c.b16 %v2318, %v2316
      %v2331 = vpack.c.b16 %v2321, %v2319
      %v2332 = vpack.c.b16 %v2322, %v2320
      %v2333 = vpack.c.b16 %v2325, %v2323
      %v2334 = vpack.c.b16 %v2326, %v2324
      %v2344 = vsel %vm563, %v2302, 0
      %2346 = vmatpush.bf16.msra.mxu0 0
      %2347 = vmatpush.bf16.msra.mxu0 0
      %2348 = vmatpush.bf16.msra.mxu0 0
      %2349 = vmatpush.bf16.msra.mxu0 0
      %2350 = vmatpush.bf16.msra.mxu0 %v2333
      %2351 = vmatpush.bf16.msra.mxu0 %v2331
      %2352 = vmatpush.bf16.msra.mxu0 %v2329
      %2353 = vmatpush.bf16.msra.mxu0 %v2327
      %2354 = vmatmul.bf16.gmra.mxu0 %v2344
      %v2355 = vpop.f32.mrf.mxu0
      %v2356 = vadd.f32 0.0, %v2355
      %v2357 = vpop.f32.mrf.mxu0
      %v2358 = vadd.f32 0.0, %v2357
      %2359 = vdwg.mxu0
      %2360 = vmatpush.bf16.msra.mxu0 0
      %2361 = vmatpush.bf16.msra.mxu0 0
      %2362 = vmatpush.bf16.msra.mxu0 0
      %2363 = vmatpush.bf16.msra.mxu0 0
      %2364 = vmatpush.bf16.msra.mxu0 %v2334
      %2365 = vmatpush.bf16.msra.mxu0 %v2332
      %2366 = vmatpush.bf16.msra.mxu0 %v2330
      %2367 = vmatpush.bf16.msra.mxu0 %v2328
      %2368 = vmatmul.bf16.gmra.mxu0 %v2344
      %v2369 = vpop.f32.mrf.mxu0
      %v2370 = vadd.f32 0.0, %v2369
      %v2371 = vpop.f32.mrf.mxu0
      %v2372 = vadd.f32 0.0, %v2371
      %2373 = vdwg.mxu0
      %s2374 = scalar_lea.vmem %s12, 64
      %v2375 = vld [vmem:[%s2374] sm:$0xff]
      %v2376 = vld [vmem:[%s2374 + $0x8] sm:$0xff]
      %v2377 = vld [vmem:[%s2374 + $0x10] sm:$0xff]
      %v2378 = vld [vmem:[%s2374 + $0x18] sm:$0xff]
      %v2379 = vld [vmem:[%s2374 + $0x20] sm:$0xff]
      %v2380 = vld [vmem:[%s2374 + $0x28] sm:$0xff]
      %v2381 = vld [vmem:[%s2374 + $0x30] sm:$0xff]
      %v2382 = vld [vmem:[%s2374 + $0x38] sm:$0xff]
      %v2391 = vunpack.c.l.b16 %v2375
      %v2392 = vunpack.c.h.b16 %v2375
      %v2393 = vunpack.c.l.b16 %v2376
      %v2394 = vunpack.c.h.b16 %v2376
      %v2395 = vunpack.c.l.b16 %v2377
      %v2396 = vunpack.c.h.b16 %v2377
      %v2397 = vunpack.c.l.b16 %v2378
      %v2398 = vunpack.c.h.b16 %v2378
      %v2399 = vunpack.c.l.b16 %v2379
      %v2400 = vunpack.c.h.b16 %v2379
      %v2401 = vunpack.c.l.b16 %v2380
      %v2402 = vunpack.c.h.b16 %v2380
      %v2403 = vunpack.c.l.b16 %v2381
      %v2404 = vunpack.c.h.b16 %v2381
      %v2405 = vunpack.c.l.b16 %v2382
      %v2406 = vunpack.c.h.b16 %v2382
      %v2407 = vpack.c.b16 %v2393, %v2391
      %v2408 = vpack.c.b16 %v2394, %v2392
      %v2409 = vpack.c.b16 %v2397, %v2395
      %v2410 = vpack.c.b16 %v2398, %v2396
      %v2411 = vpack.c.b16 %v2401, %v2399
      %v2412 = vpack.c.b16 %v2402, %v2400
      %v2413 = vpack.c.b16 %v2405, %v2403
      %v2414 = vpack.c.b16 %v2406, %v2404
      %2423 = vmatpush.bf16.msra.mxu0 0
      %2424 = vmatpush.bf16.msra.mxu0 0
      %2425 = vmatpush.bf16.msra.mxu0 0
      %2426 = vmatpush.bf16.msra.mxu0 0
      %2427 = vmatpush.bf16.msra.mxu0 %v2413
      %2428 = vmatpush.bf16.msra.mxu0 %v2411
      %2429 = vmatpush.bf16.msra.mxu0 %v2409
      %2430 = vmatpush.bf16.msra.mxu0 %v2407
      %2431 = vmatmul.bf16.gmra.mxu0 %v2344
      %v2432 = vpop.f32.mrf.mxu0
      %v2433 = vadd.f32 0.0, %v2432
      %v2434 = vpop.f32.mrf.mxu0
      %v2435 = vadd.f32 0.0, %v2434
      %2436 = vdwg.mxu0
      %2437 = vmatpush.bf16.msra.mxu0 0
      %2438 = vmatpush.bf16.msra.mxu0 0
      %2439 = vmatpush.bf16.msra.mxu0 0
      %2440 = vmatpush.bf16.msra.mxu0 0
      %2441 = vmatpush.bf16.msra.mxu0 %v2414
      %2442 = vmatpush.bf16.msra.mxu0 %v2412
      %2443 = vmatpush.bf16.msra.mxu0 %v2410
      %2444 = vmatpush.bf16.msra.mxu0 %v2408
      %2445 = vmatmul.bf16.gmra.mxu0 %v2344
      %v2446 = vpop.f32.mrf.mxu0
      %v2447 = vadd.f32 0.0, %v2446
      %v2448 = vpop.f32.mrf.mxu0
      %v2449 = vadd.f32 0.0, %v2448
      %2450 = vdwg.mxu0
      %s2451 = scalar_lea.vmem %s12, 128
      %v2452 = vld [vmem:[%s2451] sm:$0xff]
      %v2453 = vld [vmem:[%s2451 + $0x8] sm:$0xff]
      %v2454 = vld [vmem:[%s2451 + $0x10] sm:$0xff]
      %v2455 = vld [vmem:[%s2451 + $0x18] sm:$0xff]
      %v2456 = vld [vmem:[%s2451 + $0x20] sm:$0xff]
      %v2457 = vld [vmem:[%s2451 + $0x28] sm:$0xff]
      %v2458 = vld [vmem:[%s2451 + $0x30] sm:$0xff]
      %v2459 = vld [vmem:[%s2451 + $0x38] sm:$0xff]
      %v2468 = vunpack.c.l.b16 %v2452
      %v2469 = vunpack.c.h.b16 %v2452
      %v2470 = vunpack.c.l.b16 %v2453
      %v2471 = vunpack.c.h.b16 %v2453
      %v2472 = vunpack.c.l.b16 %v2454
      %v2473 = vunpack.c.h.b16 %v2454
      %v2474 = vunpack.c.l.b16 %v2455
      %v2475 = vunpack.c.h.b16 %v2455
      %v2476 = vunpack.c.l.b16 %v2456
      %v2477 = vunpack.c.h.b16 %v2456
      %v2478 = vunpack.c.l.b16 %v2457
      %v2479 = vunpack.c.h.b16 %v2457
      %v2480 = vunpack.c.l.b16 %v2458
      %v2481 = vunpack.c.h.b16 %v2458
      %v2482 = vunpack.c.l.b16 %v2459
      %v2483 = vunpack.c.h.b16 %v2459
      %v2484 = vpack.c.b16 %v2470, %v2468
      %v2485 = vpack.c.b16 %v2471, %v2469
      %v2486 = vpack.c.b16 %v2474, %v2472
      %v2487 = vpack.c.b16 %v2475, %v2473
      %v2488 = vpack.c.b16 %v2478, %v2476
      %v2489 = vpack.c.b16 %v2479, %v2477
      %v2490 = vpack.c.b16 %v2482, %v2480
      %v2491 = vpack.c.b16 %v2483, %v2481
      %2500 = vmatpush.bf16.msra.mxu0 0
      %2501 = vmatpush.bf16.msra.mxu0 0
      %2502 = vmatpush.bf16.msra.mxu0 0
      %2503 = vmatpush.bf16.msra.mxu0 0
      %2504 = vmatpush.bf16.msra.mxu0 %v2490
      %2505 = vmatpush.bf16.msra.mxu0 %v2488
      %2506 = vmatpush.bf16.msra.mxu0 %v2486
      %2507 = vmatpush.bf16.msra.mxu0 %v2484
      %2508 = vmatmul.bf16.gmra.mxu0 %v2344
      %v2509 = vpop.f32.mrf.mxu0
      %v2510 = vadd.f32 0.0, %v2509
      %v2511 = vpop.f32.mrf.mxu0
      %v2512 = vadd.f32 0.0, %v2511
      %2513 = vdwg.mxu0
      %2514 = vmatpush.bf16.msra.mxu0 0
      %2515 = vmatpush.bf16.msra.mxu0 0
      %2516 = vmatpush.bf16.msra.mxu0 0
      %2517 = vmatpush.bf16.msra.mxu0 0
      %2518 = vmatpush.bf16.msra.mxu0 %v2491
      %2519 = vmatpush.bf16.msra.mxu0 %v2489
      %2520 = vmatpush.bf16.msra.mxu0 %v2487
      %2521 = vmatpush.bf16.msra.mxu0 %v2485
      %2522 = vmatmul.bf16.gmra.mxu0 %v2344
      %v2523 = vpop.f32.mrf.mxu0
      %v2524 = vadd.f32 0.0, %v2523
      %v2525 = vpop.f32.mrf.mxu0
      %v2526 = vadd.f32 0.0, %v2525
      %2527 = vdwg.mxu0
      %s2528 = scalar_lea.vmem %s12, 192
      %v2529 = vld [vmem:[%s2528] sm:$0xff]
      %v2530 = vld [vmem:[%s2528 + $0x8] sm:$0xff]
      %v2531 = vld [vmem:[%s2528 + $0x10] sm:$0xff]
      %v2532 = vld [vmem:[%s2528 + $0x18] sm:$0xff]
      %v2533 = vld [vmem:[%s2528 + $0x20] sm:$0xff]
      %v2534 = vld [vmem:[%s2528 + $0x28] sm:$0xff]
      %v2535 = vld [vmem:[%s2528 + $0x30] sm:$0xff]
      %v2536 = vld [vmem:[%s2528 + $0x38] sm:$0xff]
      %v2545 = vunpack.c.l.b16 %v2529
      %v2546 = vunpack.c.h.b16 %v2529
      %v2547 = vunpack.c.l.b16 %v2530
      %v2548 = vunpack.c.h.b16 %v2530
      %v2549 = vunpack.c.l.b16 %v2531
      %v2550 = vunpack.c.h.b16 %v2531
      %v2551 = vunpack.c.l.b16 %v2532
      %v2552 = vunpack.c.h.b16 %v2532
      %v2553 = vunpack.c.l.b16 %v2533
      %v2554 = vunpack.c.h.b16 %v2533
      %v2555 = vunpack.c.l.b16 %v2534
      %v2556 = vunpack.c.h.b16 %v2534
      %v2557 = vunpack.c.l.b16 %v2535
      %v2558 = vunpack.c.h.b16 %v2535
      %v2559 = vunpack.c.l.b16 %v2536
      %v2560 = vunpack.c.h.b16 %v2536
      %v2561 = vpack.c.b16 %v2547, %v2545
      %v2562 = vpack.c.b16 %v2548, %v2546
      %v2563 = vpack.c.b16 %v2551, %v2549
      %v2564 = vpack.c.b16 %v2552, %v2550
      %v2565 = vpack.c.b16 %v2555, %v2553
      %v2566 = vpack.c.b16 %v2556, %v2554
      %v2567 = vpack.c.b16 %v2559, %v2557
      %v2568 = vpack.c.b16 %v2560, %v2558
      %2577 = vmatpush.bf16.msra.mxu0 0
      %2578 = vmatpush.bf16.msra.mxu0 0
      %2579 = vmatpush.bf16.msra.mxu0 0
      %2580 = vmatpush.bf16.msra.mxu0 0
      %2581 = vmatpush.bf16.msra.mxu0 %v2567
      %2582 = vmatpush.bf16.msra.mxu0 %v2565
      %2583 = vmatpush.bf16.msra.mxu0 %v2563
      %2584 = vmatpush.bf16.msra.mxu0 %v2561
      %2585 = vmatmul.bf16.gmra.mxu0 %v2344
      %v2586 = vpop.f32.mrf.mxu0
      %v2587 = vadd.f32 0.0, %v2586
      %v2588 = vpop.f32.mrf.mxu0
      %v2589 = vadd.f32 0.0, %v2588
      %2590 = vdwg.mxu0
      %2591 = vmatpush.bf16.msra.mxu0 0
      %2592 = vmatpush.bf16.msra.mxu0 0
      %2593 = vmatpush.bf16.msra.mxu0 0
      %2594 = vmatpush.bf16.msra.mxu0 0
      %2595 = vmatpush.bf16.msra.mxu0 %v2568
      %2596 = vmatpush.bf16.msra.mxu0 %v2566
      %2597 = vmatpush.bf16.msra.mxu0 %v2564
      %2598 = vmatpush.bf16.msra.mxu0 %v2562
      %2599 = vmatmul.bf16.gmra.mxu0 %v2344
      %v2600 = vpop.f32.mrf.mxu0
      %v2601 = vadd.f32 0.0, %v2600
      %v2602 = vpop.f32.mrf.mxu0
      %v2603 = vadd.f32 0.0, %v2602
      %2604 = vdwg.mxu0
      %s2605 = scalar_lea.vmem %s12, 256
      %v2606 = vld [vmem:[%s2605] sm:$0xff]
      %v2607 = vld [vmem:[%s2605 + $0x8] sm:$0xff]
      %v2608 = vld [vmem:[%s2605 + $0x10] sm:$0xff]
      %v2609 = vld [vmem:[%s2605 + $0x18] sm:$0xff]
      %v2610 = vld [vmem:[%s2605 + $0x20] sm:$0xff]
      %v2611 = vld [vmem:[%s2605 + $0x28] sm:$0xff]
      %v2612 = vld [vmem:[%s2605 + $0x30] sm:$0xff]
      %v2613 = vld [vmem:[%s2605 + $0x38] sm:$0xff]
      %v2622 = vunpack.c.l.b16 %v2606
      %v2623 = vunpack.c.h.b16 %v2606
      %v2624 = vunpack.c.l.b16 %v2607
      %v2625 = vunpack.c.h.b16 %v2607
      %v2626 = vunpack.c.l.b16 %v2608
      %v2627 = vunpack.c.h.b16 %v2608
      %v2628 = vunpack.c.l.b16 %v2609
      %v2629 = vunpack.c.h.b16 %v2609
      %v2630 = vunpack.c.l.b16 %v2610
      %v2631 = vunpack.c.h.b16 %v2610
      %v2632 = vunpack.c.l.b16 %v2611
      %v2633 = vunpack.c.h.b16 %v2611
      %v2634 = vunpack.c.l.b16 %v2612
      %v2635 = vunpack.c.h.b16 %v2612
      %v2636 = vunpack.c.l.b16 %v2613
      %v2637 = vunpack.c.h.b16 %v2613
      %v2638 = vpack.c.b16 %v2624, %v2622
      %v2639 = vpack.c.b16 %v2625, %v2623
      %v2640 = vpack.c.b16 %v2628, %v2626
      %v2641 = vpack.c.b16 %v2629, %v2627
      %v2642 = vpack.c.b16 %v2632, %v2630
      %v2643 = vpack.c.b16 %v2633, %v2631
      %v2644 = vpack.c.b16 %v2636, %v2634
      %v2645 = vpack.c.b16 %v2637, %v2635
      %2654 = vmatpush.bf16.msra.mxu0 0
      %2655 = vmatpush.bf16.msra.mxu0 0
      %2656 = vmatpush.bf16.msra.mxu0 0
      %2657 = vmatpush.bf16.msra.mxu0 0
      %2658 = vmatpush.bf16.msra.mxu0 %v2644
      %2659 = vmatpush.bf16.msra.mxu0 %v2642
      %2660 = vmatpush.bf16.msra.mxu0 %v2640
      %2661 = vmatpush.bf16.msra.mxu0 %v2638
      %2662 = vmatmul.bf16.gmra.mxu0 %v2344
      %v2663 = vpop.f32.mrf.mxu0
      %v2664 = vadd.f32 0.0, %v2663
      %v2665 = vpop.f32.mrf.mxu0
      %v2666 = vadd.f32 0.0, %v2665
      %2667 = vdwg.mxu0
      %2668 = vmatpush.bf16.msra.mxu0 0
      %2669 = vmatpush.bf16.msra.mxu0 0
      %2670 = vmatpush.bf16.msra.mxu0 0
      %2671 = vmatpush.bf16.msra.mxu0 0
      %2672 = vmatpush.bf16.msra.mxu0 %v2645
      %2673 = vmatpush.bf16.msra.mxu0 %v2643
      %2674 = vmatpush.bf16.msra.mxu0 %v2641
      %2675 = vmatpush.bf16.msra.mxu0 %v2639
      %2676 = vmatmul.bf16.gmra.mxu0 %v2344
      %v2677 = vpop.f32.mrf.mxu0
      %v2678 = vadd.f32 0.0, %v2677
      %v2679 = vpop.f32.mrf.mxu0
      %v2680 = vadd.f32 0.0, %v2679
      %2681 = vdwg.mxu0
      %s2682 = scalar_lea.vmem %s12, 320
      %v2683 = vld [vmem:[%s2682] sm:$0xff]
      %v2684 = vld [vmem:[%s2682 + $0x8] sm:$0xff]
      %v2685 = vld [vmem:[%s2682 + $0x10] sm:$0xff]
      %v2686 = vld [vmem:[%s2682 + $0x18] sm:$0xff]
      %v2687 = vld [vmem:[%s2682 + $0x20] sm:$0xff]
      %v2688 = vld [vmem:[%s2682 + $0x28] sm:$0xff]
      %v2689 = vld [vmem:[%s2682 + $0x30] sm:$0xff]
      %v2690 = vld [vmem:[%s2682 + $0x38] sm:$0xff]
      %v2699 = vunpack.c.l.b16 %v2683
      %v2700 = vunpack.c.h.b16 %v2683
      %v2701 = vunpack.c.l.b16 %v2684
      %v2702 = vunpack.c.h.b16 %v2684
      %v2703 = vunpack.c.l.b16 %v2685
      %v2704 = vunpack.c.h.b16 %v2685
      %v2705 = vunpack.c.l.b16 %v2686
      %v2706 = vunpack.c.h.b16 %v2686
      %v2707 = vunpack.c.l.b16 %v2687
      %v2708 = vunpack.c.h.b16 %v2687
      %v2709 = vunpack.c.l.b16 %v2688
      %v2710 = vunpack.c.h.b16 %v2688
      %v2711 = vunpack.c.l.b16 %v2689
      %v2712 = vunpack.c.h.b16 %v2689
      %v2713 = vunpack.c.l.b16 %v2690
      %v2714 = vunpack.c.h.b16 %v2690
      %v2715 = vpack.c.b16 %v2701, %v2699
      %v2716 = vpack.c.b16 %v2702, %v2700
      %v2717 = vpack.c.b16 %v2705, %v2703
      %v2718 = vpack.c.b16 %v2706, %v2704
      %v2719 = vpack.c.b16 %v2709, %v2707
      %v2720 = vpack.c.b16 %v2710, %v2708
      %v2721 = vpack.c.b16 %v2713, %v2711
      %v2722 = vpack.c.b16 %v2714, %v2712
      %2731 = vmatpush.bf16.msra.mxu0 0
      %2732 = vmatpush.bf16.msra.mxu0 0
      %2733 = vmatpush.bf16.msra.mxu0 0
      %2734 = vmatpush.bf16.msra.mxu0 0
      %2735 = vmatpush.bf16.msra.mxu0 %v2721
      %2736 = vmatpush.bf16.msra.mxu0 %v2719
      %2737 = vmatpush.bf16.msra.mxu0 %v2717
      %2738 = vmatpush.bf16.msra.mxu0 %v2715
      %2739 = vmatmul.bf16.gmra.mxu0 %v2344
      %v2740 = vpop.f32.mrf.mxu0
      %v2741 = vadd.f32 0.0, %v2740
      %v2742 = vpop.f32.mrf.mxu0
      %v2743 = vadd.f32 0.0, %v2742
      %2744 = vdwg.mxu0
      %2745 = vmatpush.bf16.msra.mxu0 0
      %2746 = vmatpush.bf16.msra.mxu0 0
      %2747 = vmatpush.bf16.msra.mxu0 0
      %2748 = vmatpush.bf16.msra.mxu0 0
      %2749 = vmatpush.bf16.msra.mxu0 %v2722
      %2750 = vmatpush.bf16.msra.mxu0 %v2720
      %2751 = vmatpush.bf16.msra.mxu0 %v2718
      %2752 = vmatpush.bf16.msra.mxu0 %v2716
      %2753 = vmatmul.bf16.gmra.mxu0 %v2344
      %v2754 = vpop.f32.mrf.mxu0
      %v2755 = vadd.f32 0.0, %v2754
      %v2756 = vpop.f32.mrf.mxu0
      %v2757 = vadd.f32 0.0, %v2756
      %2758 = vdwg.mxu0
      %s2759 = scalar_lea.vmem %s12, 384
      %v2760 = vld [vmem:[%s2759] sm:$0xff]
      %v2761 = vld [vmem:[%s2759 + $0x8] sm:$0xff]
      %v2762 = vld [vmem:[%s2759 + $0x10] sm:$0xff]
      %v2763 = vld [vmem:[%s2759 + $0x18] sm:$0xff]
      %v2764 = vld [vmem:[%s2759 + $0x20] sm:$0xff]
      %v2765 = vld [vmem:[%s2759 + $0x28] sm:$0xff]
      %v2766 = vld [vmem:[%s2759 + $0x30] sm:$0xff]
      %v2767 = vld [vmem:[%s2759 + $0x38] sm:$0xff]
      %v2776 = vunpack.c.l.b16 %v2760
      %v2777 = vunpack.c.h.b16 %v2760
      %v2778 = vunpack.c.l.b16 %v2761
      %v2779 = vunpack.c.h.b16 %v2761
      %v2780 = vunpack.c.l.b16 %v2762
      %v2781 = vunpack.c.h.b16 %v2762
      %v2782 = vunpack.c.l.b16 %v2763
      %v2783 = vunpack.c.h.b16 %v2763
      %v2784 = vunpack.c.l.b16 %v2764
      %v2785 = vunpack.c.h.b16 %v2764
      %v2786 = vunpack.c.l.b16 %v2765
      %v2787 = vunpack.c.h.b16 %v2765
      %v2788 = vunpack.c.l.b16 %v2766
      %v2789 = vunpack.c.h.b16 %v2766
      %v2790 = vunpack.c.l.b16 %v2767
      %v2791 = vunpack.c.h.b16 %v2767
      %v2792 = vpack.c.b16 %v2778, %v2776
      %v2793 = vpack.c.b16 %v2779, %v2777
      %v2794 = vpack.c.b16 %v2782, %v2780
      %v2795 = vpack.c.b16 %v2783, %v2781
      %v2796 = vpack.c.b16 %v2786, %v2784
      %v2797 = vpack.c.b16 %v2787, %v2785
      %v2798 = vpack.c.b16 %v2790, %v2788
      %v2799 = vpack.c.b16 %v2791, %v2789
      %2808 = vmatpush.bf16.msra.mxu0 0
      %2809 = vmatpush.bf16.msra.mxu0 0
      %2810 = vmatpush.bf16.msra.mxu0 0
      %2811 = vmatpush.bf16.msra.mxu0 0
      %2812 = vmatpush.bf16.msra.mxu0 %v2798
      %2813 = vmatpush.bf16.msra.mxu0 %v2796
      %2814 = vmatpush.bf16.msra.mxu0 %v2794
      %2815 = vmatpush.bf16.msra.mxu0 %v2792
      %2816 = vmatmul.bf16.gmra.mxu0 %v2344
      %v2817 = vpop.f32.mrf.mxu0
      %v2818 = vadd.f32 0.0, %v2817
      %v2819 = vpop.f32.mrf.mxu0
      %v2820 = vadd.f32 0.0, %v2819
      %2821 = vdwg.mxu0
      %2822 = vmatpush.bf16.msra.mxu0 0
      %2823 = vmatpush.bf16.msra.mxu0 0
      %2824 = vmatpush.bf16.msra.mxu0 0
      %2825 = vmatpush.bf16.msra.mxu0 0
      %2826 = vmatpush.bf16.msra.mxu0 %v2799
      %2827 = vmatpush.bf16.msra.mxu0 %v2797
      %2828 = vmatpush.bf16.msra.mxu0 %v2795
      %2829 = vmatpush.bf16.msra.mxu0 %v2793
      %2830 = vmatmul.bf16.gmra.mxu0 %v2344
      %v2831 = vpop.f32.mrf.mxu0
      %v2832 = vadd.f32 0.0, %v2831
      %v2833 = vpop.f32.mrf.mxu0
      %v2834 = vadd.f32 0.0, %v2833
      %2835 = vdwg.mxu0
      %s2836 = scalar_lea.vmem %s12, 448
      %v2837 = vld [vmem:[%s2836] sm:$0xff]
      %v2838 = vld [vmem:[%s2836 + $0x8] sm:$0xff]
      %v2839 = vld [vmem:[%s2836 + $0x10] sm:$0xff]
      %v2840 = vld [vmem:[%s2836 + $0x18] sm:$0xff]
      %v2841 = vld [vmem:[%s2836 + $0x20] sm:$0xff]
      %v2842 = vld [vmem:[%s2836 + $0x28] sm:$0xff]
      %v2843 = vld [vmem:[%s2836 + $0x30] sm:$0xff]
      %v2844 = vld [vmem:[%s2836 + $0x38] sm:$0xff]
      %v2853 = vunpack.c.l.b16 %v2837
      %v2854 = vunpack.c.h.b16 %v2837
      %v2855 = vunpack.c.l.b16 %v2838
      %v2856 = vunpack.c.h.b16 %v2838
      %v2857 = vunpack.c.l.b16 %v2839
      %v2858 = vunpack.c.h.b16 %v2839
      %v2859 = vunpack.c.l.b16 %v2840
      %v2860 = vunpack.c.h.b16 %v2840
      %v2861 = vunpack.c.l.b16 %v2841
      %v2862 = vunpack.c.h.b16 %v2841
      %v2863 = vunpack.c.l.b16 %v2842
      %v2864 = vunpack.c.h.b16 %v2842
      %v2865 = vunpack.c.l.b16 %v2843
      %v2866 = vunpack.c.h.b16 %v2843
      %v2867 = vunpack.c.l.b16 %v2844
      %v2868 = vunpack.c.h.b16 %v2844
      %v2869 = vpack.c.b16 %v2855, %v2853
      %v2870 = vpack.c.b16 %v2856, %v2854
      %v2871 = vpack.c.b16 %v2859, %v2857
      %v2872 = vpack.c.b16 %v2860, %v2858
      %v2873 = vpack.c.b16 %v2863, %v2861
      %v2874 = vpack.c.b16 %v2864, %v2862
      %v2875 = vpack.c.b16 %v2867, %v2865
      %v2876 = vpack.c.b16 %v2868, %v2866
      %2885 = vmatpush.bf16.msra.mxu0 0
      %2886 = vmatpush.bf16.msra.mxu0 0
      %2887 = vmatpush.bf16.msra.mxu0 0
      %2888 = vmatpush.bf16.msra.mxu0 0
      %2889 = vmatpush.bf16.msra.mxu0 %v2875
      %2890 = vmatpush.bf16.msra.mxu0 %v2873
      %2891 = vmatpush.bf16.msra.mxu0 %v2871
      %2892 = vmatpush.bf16.msra.mxu0 %v2869
      %2893 = vmatmul.bf16.gmra.mxu0 %v2344
      %v2894 = vpop.f32.mrf.mxu0
      %v2895 = vadd.f32 0.0, %v2894
      %v2896 = vpop.f32.mrf.mxu0
      %v2897 = vadd.f32 0.0, %v2896
      %2898 = vdwg.mxu0
      %2899 = vmatpush.bf16.msra.mxu0 0
      %2900 = vmatpush.bf16.msra.mxu0 0
      %2901 = vmatpush.bf16.msra.mxu0 0
      %2902 = vmatpush.bf16.msra.mxu0 0
      %2903 = vmatpush.bf16.msra.mxu0 %v2876
      %2904 = vmatpush.bf16.msra.mxu0 %v2874
      %2905 = vmatpush.bf16.msra.mxu0 %v2872
      %2906 = vmatpush.bf16.msra.mxu0 %v2870
      %2907 = vmatmul.bf16.gmra.mxu0 %v2344
      %v2908 = vpop.f32.mrf.mxu0
      %v2909 = vadd.f32 0.0, %v2908
      %v2910 = vpop.f32.mrf.mxu0
      %v2911 = vadd.f32 0.0, %v2910
      %2912 = vdwg.mxu0
      %s2913 = scalar_lea.vmem %s12, 512
      %v2914 = vld [vmem:[%s2913] sm:$0xff]
      %v2915 = vld [vmem:[%s2913 + $0x8] sm:$0xff]
      %v2916 = vld [vmem:[%s2913 + $0x10] sm:$0xff]
      %v2917 = vld [vmem:[%s2913 + $0x18] sm:$0xff]
      %v2918 = vld [vmem:[%s2913 + $0x20] sm:$0xff]
      %v2919 = vld [vmem:[%s2913 + $0x28] sm:$0xff]
      %v2920 = vld [vmem:[%s2913 + $0x30] sm:$0xff]
      %v2921 = vld [vmem:[%s2913 + $0x38] sm:$0xff]
      %v2930 = vunpack.c.l.b16 %v2914
      %v2931 = vunpack.c.h.b16 %v2914
      %v2932 = vunpack.c.l.b16 %v2915
      %v2933 = vunpack.c.h.b16 %v2915
      %v2934 = vunpack.c.l.b16 %v2916
      %v2935 = vunpack.c.h.b16 %v2916
      %v2936 = vunpack.c.l.b16 %v2917
      %v2937 = vunpack.c.h.b16 %v2917
      %v2938 = vunpack.c.l.b16 %v2918
      %v2939 = vunpack.c.h.b16 %v2918
      %v2940 = vunpack.c.l.b16 %v2919
      %v2941 = vunpack.c.h.b16 %v2919
      %v2942 = vunpack.c.l.b16 %v2920
      %v2943 = vunpack.c.h.b16 %v2920
      %v2944 = vunpack.c.l.b16 %v2921
      %v2945 = vunpack.c.h.b16 %v2921
      %v2946 = vpack.c.b16 %v2932, %v2930
      %v2947 = vpack.c.b16 %v2933, %v2931
      %v2948 = vpack.c.b16 %v2936, %v2934
      %v2949 = vpack.c.b16 %v2937, %v2935
      %v2950 = vpack.c.b16 %v2940, %v2938
      %v2951 = vpack.c.b16 %v2941, %v2939
      %v2952 = vpack.c.b16 %v2944, %v2942
      %v2953 = vpack.c.b16 %v2945, %v2943
      %2962 = vmatpush.bf16.msra.mxu0 0
      %2963 = vmatpush.bf16.msra.mxu0 0
      %2964 = vmatpush.bf16.msra.mxu0 0
      %2965 = vmatpush.bf16.msra.mxu0 0
      %2966 = vmatpush.bf16.msra.mxu0 %v2952
      %2967 = vmatpush.bf16.msra.mxu0 %v2950
      %2968 = vmatpush.bf16.msra.mxu0 %v2948
      %2969 = vmatpush.bf16.msra.mxu0 %v2946
      %2970 = vmatmul.bf16.gmra.mxu0 %v2344
      %v2971 = vpop.f32.mrf.mxu0
      %v2972 = vadd.f32 0.0, %v2971
      %v2973 = vpop.f32.mrf.mxu0
      %v2974 = vadd.f32 0.0, %v2973
      %2975 = vdwg.mxu0
      %2976 = vmatpush.bf16.msra.mxu0 0
      %2977 = vmatpush.bf16.msra.mxu0 0
      %2978 = vmatpush.bf16.msra.mxu0 0
      %2979 = vmatpush.bf16.msra.mxu0 0
      %2980 = vmatpush.bf16.msra.mxu0 %v2953
      %2981 = vmatpush.bf16.msra.mxu0 %v2951
      %2982 = vmatpush.bf16.msra.mxu0 %v2949
      %2983 = vmatpush.bf16.msra.mxu0 %v2947
      %2984 = vmatmul.bf16.gmra.mxu0 %v2344
      %v2985 = vpop.f32.mrf.mxu0
      %v2986 = vadd.f32 0.0, %v2985
      %v2987 = vpop.f32.mrf.mxu0
      %v2988 = vadd.f32 0.0, %v2987
      %2989 = vdwg.mxu0
      %v2990 = vld [vmem:[%s5] sm:$0xff]
      %v2991 = vld [vmem:[%s5 + $0x8] sm:$0xff]
      %v2992 = vld [vmem:[%s5 + $0x10] sm:$0xff]
      %v2993 = vld [vmem:[%s5 + $0x18] sm:$0xff]
      %v2994 = vpack.c.bf16 %v1568, %v1566
      %v2995 = vpack.c.bf16 %v1587, %v1585
      %v2996 = vpack.c.bf16 %v1573, %v1571
      %v2997 = vpack.c.bf16 %v1592, %v1590
      %v2998 = vpack.c.bf16 %v1655, %v1653
      %v2999 = vpack.c.bf16 %v1674, %v1672
      %v3000 = vpack.c.bf16 %v1660, %v1658
      %v3001 = vpack.c.bf16 %v1679, %v1677
      %v3002 = vpack.c.bf16 %v1742, %v1740
      %v3003 = vpack.c.bf16 %v1761, %v1759
      %v3004 = vpack.c.bf16 %v1747, %v1745
      %v3005 = vpack.c.bf16 %v1766, %v1764
      %v3006 = vpack.c.bf16 %v1829, %v1827
      %v3007 = vpack.c.bf16 %v1848, %v1846
      %v3008 = vpack.c.bf16 %v1834, %v1832
      %v3009 = vpack.c.bf16 %v1853, %v1851
      %v3010 = vpack.c.bf16 %v1916, %v1914
      %v3011 = vpack.c.bf16 %v1935, %v1933
      %v3012 = vpack.c.bf16 %v1921, %v1919
      %v3013 = vpack.c.bf16 %v1940, %v1938
      %v3014 = vpack.c.bf16 %v2003, %v2001
      %v3015 = vpack.c.bf16 %v2022, %v2020
      %v3016 = vpack.c.bf16 %v2008, %v2006
      %v3017 = vpack.c.bf16 %v2027, %v2025
      %v3018 = vpack.c.bf16 %v2090, %v2088
      %v3019 = vpack.c.bf16 %v2109, %v2107
      %v3020 = vpack.c.bf16 %v2095, %v2093
      %v3021 = vpack.c.bf16 %v2114, %v2112
      %v3022 = vpack.c.bf16 %v2177, %v2175
      %v3023 = vpack.c.bf16 %v2196, %v2194
      %v3024 = vpack.c.bf16 %v2182, %v2180
      %v3025 = vpack.c.bf16 %v2201, %v2199
      %v3026 = vpack.c.bf16 %v2264, %v2262
      %v3027 = vpack.c.bf16 %v2283, %v2281
      %v3028 = vpack.c.bf16 %v2269, %v2267
      %v3029 = vpack.c.bf16 %v2288, %v2286
      %v3030 = vpack.c.bf16 %v2358, %v2356
      %v3031 = vpack.c.bf16 %v2372, %v2370
      %v3032 = vpack.c.bf16 %v2435, %v2433
      %v3033 = vpack.c.bf16 %v2449, %v2447
      %v3034 = vpack.c.bf16 %v2512, %v2510
      %v3035 = vpack.c.bf16 %v2526, %v2524
      %v3036 = vpack.c.bf16 %v2589, %v2587
      %v3037 = vpack.c.bf16 %v2603, %v2601
      %v3038 = vpack.c.bf16 %v2666, %v2664
      %v3039 = vpack.c.bf16 %v2680, %v2678
      %v3040 = vpack.c.bf16 %v2743, %v2741
      %v3041 = vpack.c.bf16 %v2757, %v2755
      %v3042 = vpack.c.bf16 %v2820, %v2818
      %v3043 = vpack.c.bf16 %v2834, %v2832
      %v3044 = vpack.c.bf16 %v2897, %v2895
      %v3045 = vpack.c.bf16 %v2911, %v2909
      %v3046 = vpack.c.bf16 %v2974, %v2972
      %v3047 = vpack.c.bf16 %v2988, %v2986
      %v3048 = vld [vmem:[%s6] sm:$0xff]
      %v3049 = vld [vmem:[%s6 + $0x8] sm:$0xff]
      %3051 = vset.pattern.permute.xlu0 0
      %3052 = vperm.xlu0 %3051, %v3048
      %v3053 = vpop.permute.xlu0 %3052
      %3056 = vset.pattern.permute.xlu0 0
      %3057 = vperm.xlu0 %3056, %v3049
      %v3058 = vpop.permute.xlu0 %3057
      %v3064 = vunpack.c.l.b16 %v2990
      %v3065 = vunpack.c.h.b16 %v2990
      %v3066 = vunpack.c.l.b16 %v2991
      %v3067 = vunpack.c.h.b16 %v2991
      %v3068 = vunpack.c.l.b16 %v2992
      %v3069 = vunpack.c.h.b16 %v2992
      %v3070 = vunpack.c.l.b16 %v2993
      %v3071 = vunpack.c.h.b16 %v2993
      %v3072 = vpack.c.b16 %v3068, %v3064
      %v3073 = vpack.c.b16 %v3069, %v3065
      %v3074 = vpack.c.b16 %v3070, %v3066
      %v3075 = vpack.c.b16 %v3071, %v3067
      %vm3079 = vcmask 392192
      %v3081 = vsel %vm3079, %v3075, 0
      %3083 = vmatpush.bf16.msra.mxu0 %v3008
      %3084 = vmatpush.bf16.msra.mxu0 %v3006
      %3085 = vmatpush.bf16.msra.mxu0 %v3004
      %3086 = vmatpush.bf16.msra.mxu0 %v3002
      %3087 = vmatpush.bf16.msra.mxu0 %v3000
      %3088 = vmatpush.bf16.msra.mxu0 %v2998
      %3089 = vmatpush.bf16.msra.mxu0 %v2996
      %3090 = vmatpush.bf16.msra.mxu0 %v2994
      %3091 = vmatmul.bf16.gmra.mxu0 %v3072
      %v3092 = vpop.f32.mrf.mxu0
      %v3093 = vadd.f32 %v3053, %v3092
      %v3094 = vpop.f32.mrf.mxu0
      %v3095 = vadd.f32 %v3058, %v3094
      %3096 = vdwg.mxu0
      %3097 = vmatpush.bf16.msra.mxu0 %v3024
      %3098 = vmatpush.bf16.msra.mxu0 %v3022
      %3099 = vmatpush.bf16.msra.mxu0 %v3020
      %3100 = vmatpush.bf16.msra.mxu0 %v3018
      %3101 = vmatpush.bf16.msra.mxu0 %v3016
      %3102 = vmatpush.bf16.msra.mxu0 %v3014
      %3103 = vmatpush.bf16.msra.mxu0 %v3012
      %3104 = vmatpush.bf16.msra.mxu0 %v3010
      %3105 = vmatmul.bf16.gmra.mxu0 %v3073
      %v3106 = vpop.f32.mrf.mxu0
      %v3107 = vadd.f32 %v3093, %v3106
      %v3108 = vpop.f32.mrf.mxu0
      %v3109 = vadd.f32 %v3095, %v3108
      %3110 = vdwg.mxu0
      %3111 = vmatpush.bf16.msra.mxu0 %v3040
      %3112 = vmatpush.bf16.msra.mxu0 %v3038
      %3113 = vmatpush.bf16.msra.mxu0 %v3036
      %3114 = vmatpush.bf16.msra.mxu0 %v3034
      %3115 = vmatpush.bf16.msra.mxu0 %v3032
      %3116 = vmatpush.bf16.msra.mxu0 %v3030
      %3117 = vmatpush.bf16.msra.mxu0 %v3028
      %3118 = vmatpush.bf16.msra.mxu0 %v3026
      %3119 = vmatmul.bf16.gmra.mxu0 %v3074
      %v3120 = vpop.f32.mrf.mxu0
      %v3121 = vadd.f32 %v3107, %v3120
      %v3122 = vpop.f32.mrf.mxu0
      %v3123 = vadd.f32 %v3109, %v3122
      %3124 = vdwg.mxu0
      %3125 = vmatpush.bf16.msra.mxu0 0
      %3126 = vmatpush.bf16.msra.mxu0 0
      %3127 = vmatpush.bf16.msra.mxu0 0
      %3128 = vmatpush.bf16.msra.mxu0 0
      %3129 = vmatpush.bf16.msra.mxu0 0
      %3130 = vmatpush.bf16.msra.mxu0 %v3046
      %3131 = vmatpush.bf16.msra.mxu0 %v3044
      %3132 = vmatpush.bf16.msra.mxu0 %v3042
      %3133 = vmatmul.bf16.gmra.mxu0 %v3081
      %v3134 = vpop.f32.mrf.mxu0
      %v3135 = vadd.f32 %v3121, %v3134
      %v3136 = vpop.f32.mrf.mxu0
      %v3137 = vadd.f32 %v3123, %v3136
      %3138 = vdwg.mxu0
      %3139 = vmatpush.bf16.msra.mxu0 %v3009
      %3140 = vmatpush.bf16.msra.mxu0 %v3007
      %3141 = vmatpush.bf16.msra.mxu0 %v3005
      %3142 = vmatpush.bf16.msra.mxu0 %v3003
      %3143 = vmatpush.bf16.msra.mxu0 %v3001
      %3144 = vmatpush.bf16.msra.mxu0 %v2999
      %3145 = vmatpush.bf16.msra.mxu0 %v2997
      %3146 = vmatpush.bf16.msra.mxu0 %v2995
      %3147 = vmatmul.bf16.gmra.mxu0 %v3072
      %v3148 = vpop.f32.mrf.mxu0
      %v3149 = vadd.f32 %v3053, %v3148
      %v3150 = vpop.f32.mrf.mxu0
      %v3151 = vadd.f32 %v3058, %v3150
      %3152 = vdwg.mxu0
      %3153 = vmatpush.bf16.msra.mxu0 %v3025
      %3154 = vmatpush.bf16.msra.mxu0 %v3023
      %3155 = vmatpush.bf16.msra.mxu0 %v3021
      %3156 = vmatpush.bf16.msra.mxu0 %v3019
      %3157 = vmatpush.bf16.msra.mxu0 %v3017
      %3158 = vmatpush.bf16.msra.mxu0 %v3015
      %3159 = vmatpush.bf16.msra.mxu0 %v3013
      %3160 = vmatpush.bf16.msra.mxu0 %v3011
      %3161 = vmatmul.bf16.gmra.mxu0 %v3073
      %v3162 = vpop.f32.mrf.mxu0
      %v3163 = vadd.f32 %v3149, %v3162
      %v3164 = vpop.f32.mrf.mxu0
      %v3165 = vadd.f32 %v3151, %v3164
      %3166 = vdwg.mxu0
      %3167 = vmatpush.bf16.msra.mxu0 %v3041
      %3168 = vmatpush.bf16.msra.mxu0 %v3039
      %3169 = vmatpush.bf16.msra.mxu0 %v3037
      %3170 = vmatpush.bf16.msra.mxu0 %v3035
      %3171 = vmatpush.bf16.msra.mxu0 %v3033
      %3172 = vmatpush.bf16.msra.mxu0 %v3031
      %3173 = vmatpush.bf16.msra.mxu0 %v3029
      %3174 = vmatpush.bf16.msra.mxu0 %v3027
      %3175 = vmatmul.bf16.gmra.mxu0 %v3074
      %v3176 = vpop.f32.mrf.mxu0
      %v3177 = vadd.f32 %v3163, %v3176
      %v3178 = vpop.f32.mrf.mxu0
      %v3179 = vadd.f32 %v3165, %v3178
      %3180 = vdwg.mxu0
      %3181 = vmatpush.bf16.msra.mxu0 0
      %3182 = vmatpush.bf16.msra.mxu0 0
      %3183 = vmatpush.bf16.msra.mxu0 0
      %3184 = vmatpush.bf16.msra.mxu0 0
      %3185 = vmatpush.bf16.msra.mxu0 0
      %3186 = vmatpush.bf16.msra.mxu0 %v3047
      %3187 = vmatpush.bf16.msra.mxu0 %v3045
      %3188 = vmatpush.bf16.msra.mxu0 %v3043
      %3189 = vmatmul.bf16.gmra.mxu0 %v3081
      %v3190 = vpop.f32.mrf.mxu0
      %v3191 = vadd.f32 %v3177, %v3190
      %v3192 = vpop.f32.mrf.mxu0
      %v3193 = vadd.f32 %v3179, %v3192
      %3194 = vdwg.mxu0
      %v3195 = vmax.f32 %v3135, 0.0
      %v3196 = vmax.f32 %v3191, 0.0
      %v3197 = vmax.f32 %v3137, 0.0
      %v3198 = vmax.f32 %v3193, 0.0
      %v3199 = vpack.c.bf16 %v3196, %v3195
      %v3200 = vpack.c.bf16 %v3198, %v3197
      %v3203 = vunpack.c.l.b16 %v3199
      %v3204 = vunpack.c.l.b16 %v3200
      %v3205 = vpack.c.b16 %v3204, %v3203
      %3206 = vrot.lane.b32.xlu0 %v3205, 64
      %v3207 = vpop.permute.xlu0 %3206
      %v3208 = vunpack.c.h.b16 %v3199
      %v3209 = vunpack.c.h.b16 %v3200
      %v3210 = vpack.c.b16 %v3209, %v3208
      %3211 = vrot.lane.b32.xlu0 %v3210, 64
      %v3212 = vpop.permute.xlu0 %3211
      %v3213 = vld [vmem:[%s13] sm:$0xff]
      %v3214 = vld [vmem:[%s13 + $0x8] sm:$0xff]
      %v3215 = vld [vmem:[%s13 + $0x10] sm:$0xff]
      %v3216 = vld [vmem:[%s13 + $0x18] sm:$0xff]
      %v3217 = vld [vmem:[%s13 + $0x20] sm:$0xff]
      %v3218 = vld [vmem:[%s13 + $0x28] sm:$0xff]
      %v3219 = vld [vmem:[%s13 + $0x30] sm:$0xff]
      %v3220 = vld [vmem:[%s13 + $0x38] sm:$0xff]
      %v3229 = vunpack.c.l.b16 %v3213
      %v3230 = vunpack.c.h.b16 %v3213
      %v3231 = vunpack.c.l.b16 %v3214
      %v3232 = vunpack.c.h.b16 %v3214
      %v3233 = vunpack.c.l.b16 %v3215
      %v3234 = vunpack.c.h.b16 %v3215
      %v3235 = vunpack.c.l.b16 %v3216
      %v3236 = vunpack.c.h.b16 %v3216
      %v3237 = vunpack.c.l.b16 %v3217
      %v3238 = vunpack.c.h.b16 %v3217
      %v3239 = vunpack.c.l.b16 %v3218
      %v3240 = vunpack.c.h.b16 %v3218
      %v3241 = vunpack.c.l.b16 %v3219
      %v3242 = vunpack.c.h.b16 %v3219
      %v3243 = vunpack.c.l.b16 %v3220
      %v3244 = vunpack.c.h.b16 %v3220
      %v3245 = vpack.c.b16 %v3231, %v3229
      %v3246 = vpack.c.b16 %v3232, %v3230
      %v3247 = vpack.c.b16 %v3235, %v3233
      %v3248 = vpack.c.b16 %v3236, %v3234
      %v3249 = vpack.c.b16 %v3239, %v3237
      %v3250 = vpack.c.b16 %v3240, %v3238
      %v3251 = vpack.c.b16 %v3243, %v3241
      %v3252 = vpack.c.b16 %v3244, %v3242
      %v3262 = vsel %vm563, %v3205, 0
      %v3265 = vsel %vm563, %v3207, 0
      %v3268 = vsel %vm563, %v3210, 0
      %v3271 = vsel %vm563, %v3212, 0
      %3273 = vmatpush.bf16.msra.mxu0 0
      %3274 = vmatpush.bf16.msra.mxu0 0
      %3275 = vmatpush.bf16.msra.mxu0 0
      %3276 = vmatpush.bf16.msra.mxu0 0
      %3277 = vmatpush.bf16.msra.mxu0 %v3251
      %3278 = vmatpush.bf16.msra.mxu0 %v3249
      %3279 = vmatpush.bf16.msra.mxu0 %v3247
      %3280 = vmatpush.bf16.msra.mxu0 %v3245
      %3281 = vmatmul.bf16.gmra.mxu0 %v3262
      %v3282 = vpop.f32.mrf.mxu0
      %v3283 = vadd.f32 0.0, %v3282
      %v3284 = vpop.f32.mrf.mxu0
      %v3285 = vadd.f32 0.0, %v3284
      %3286 = vmatmul.bf16.gmra.mxu0 %v3265
      %v3287 = vpop.f32.mrf.mxu0
      %v3288 = vadd.f32 0.0, %v3287
      %v3289 = vpop.f32.mrf.mxu0
      %v3290 = vadd.f32 0.0, %v3289
      %3291 = vmatmul.bf16.gmra.mxu0 %v3268
      %v3292 = vpop.f32.mrf.mxu0
      %v3293 = vadd.f32 0.0, %v3292
      %v3294 = vpop.f32.mrf.mxu0
      %v3295 = vadd.f32 0.0, %v3294
      %3296 = vmatmul.bf16.gmra.mxu0 %v3271
      %v3297 = vpop.f32.mrf.mxu0
      %v3298 = vadd.f32 0.0, %v3297
      %v3299 = vpop.f32.mrf.mxu0
      %v3300 = vadd.f32 0.0, %v3299
      %3301 = vdwg.mxu0
      %3302 = vmatpush.bf16.msra.mxu0 0
      %3303 = vmatpush.bf16.msra.mxu0 0
      %3304 = vmatpush.bf16.msra.mxu0 0
      %3305 = vmatpush.bf16.msra.mxu0 0
      %3306 = vmatpush.bf16.msra.mxu0 %v3252
      %3307 = vmatpush.bf16.msra.mxu0 %v3250
      %3308 = vmatpush.bf16.msra.mxu0 %v3248
      %3309 = vmatpush.bf16.msra.mxu0 %v3246
      %3310 = vmatmul.bf16.gmra.mxu0 %v3262
      %v3311 = vpop.f32.mrf.mxu0
      %v3312 = vadd.f32 0.0, %v3311
      %v3313 = vpop.f32.mrf.mxu0
      %v3314 = vadd.f32 0.0, %v3313
      %3315 = vmatmul.bf16.gmra.mxu0 %v3265
      %v3316 = vpop.f32.mrf.mxu0
      %v3317 = vadd.f32 0.0, %v3316
      %v3318 = vpop.f32.mrf.mxu0
      %v3319 = vadd.f32 0.0, %v3318
      %3320 = vmatmul.bf16.gmra.mxu0 %v3268
      %v3321 = vpop.f32.mrf.mxu0
      %v3322 = vadd.f32 0.0, %v3321
      %v3323 = vpop.f32.mrf.mxu0
      %v3324 = vadd.f32 0.0, %v3323
      %3325 = vmatmul.bf16.gmra.mxu0 %v3271
      %v3326 = vpop.f32.mrf.mxu0
      %v3327 = vadd.f32 0.0, %v3326
      %v3328 = vpop.f32.mrf.mxu0
      %v3329 = vadd.f32 0.0, %v3328
      %3330 = vdwg.mxu0
      %s3331 = scalar_lea.vmem %s13, 64
      %v3332 = vld [vmem:[%s3331] sm:$0xff]
      %v3333 = vld [vmem:[%s3331 + $0x8] sm:$0xff]
      %v3334 = vld [vmem:[%s3331 + $0x10] sm:$0xff]
      %v3335 = vld [vmem:[%s3331 + $0x18] sm:$0xff]
      %v3336 = vld [vmem:[%s3331 + $0x20] sm:$0xff]
      %v3337 = vld [vmem:[%s3331 + $0x28] sm:$0xff]
      %v3338 = vld [vmem:[%s3331 + $0x30] sm:$0xff]
      %v3339 = vld [vmem:[%s3331 + $0x38] sm:$0xff]
      %v3348 = vunpack.c.l.b16 %v3332
      %v3349 = vunpack.c.h.b16 %v3332
      %v3350 = vunpack.c.l.b16 %v3333
      %v3351 = vunpack.c.h.b16 %v3333
      %v3352 = vunpack.c.l.b16 %v3334
      %v3353 = vunpack.c.h.b16 %v3334
      %v3354 = vunpack.c.l.b16 %v3335
      %v3355 = vunpack.c.h.b16 %v3335
      %v3356 = vunpack.c.l.b16 %v3336
      %v3357 = vunpack.c.h.b16 %v3336
      %v3358 = vunpack.c.l.b16 %v3337
      %v3359 = vunpack.c.h.b16 %v3337
      %v3360 = vunpack.c.l.b16 %v3338
      %v3361 = vunpack.c.h.b16 %v3338
      %v3362 = vunpack.c.l.b16 %v3339
      %v3363 = vunpack.c.h.b16 %v3339
      %v3364 = vpack.c.b16 %v3350, %v3348
      %v3365 = vpack.c.b16 %v3351, %v3349
      %v3366 = vpack.c.b16 %v3354, %v3352
      %v3367 = vpack.c.b16 %v3355, %v3353
      %v3368 = vpack.c.b16 %v3358, %v3356
      %v3369 = vpack.c.b16 %v3359, %v3357
      %v3370 = vpack.c.b16 %v3362, %v3360
      %v3371 = vpack.c.b16 %v3363, %v3361
      %3380 = vmatpush.bf16.msra.mxu0 0
      %3381 = vmatpush.bf16.msra.mxu0 0
      %3382 = vmatpush.bf16.msra.mxu0 0
      %3383 = vmatpush.bf16.msra.mxu0 0
      %3384 = vmatpush.bf16.msra.mxu0 %v3370
      %3385 = vmatpush.bf16.msra.mxu0 %v3368
      %3386 = vmatpush.bf16.msra.mxu0 %v3366
      %3387 = vmatpush.bf16.msra.mxu0 %v3364
      %3388 = vmatmul.bf16.gmra.mxu0 %v3262
      %v3389 = vpop.f32.mrf.mxu0
      %v3390 = vadd.f32 0.0, %v3389
      %v3391 = vpop.f32.mrf.mxu0
      %v3392 = vadd.f32 0.0, %v3391
      %3393 = vmatmul.bf16.gmra.mxu0 %v3265
      %v3394 = vpop.f32.mrf.mxu0
      %v3395 = vadd.f32 0.0, %v3394
      %v3396 = vpop.f32.mrf.mxu0
      %v3397 = vadd.f32 0.0, %v3396
      %3398 = vmatmul.bf16.gmra.mxu0 %v3268
      %v3399 = vpop.f32.mrf.mxu0
      %v3400 = vadd.f32 0.0, %v3399
      %v3401 = vpop.f32.mrf.mxu0
      %v3402 = vadd.f32 0.0, %v3401
      %3403 = vmatmul.bf16.gmra.mxu0 %v3271
      %v3404 = vpop.f32.mrf.mxu0
      %v3405 = vadd.f32 0.0, %v3404
      %v3406 = vpop.f32.mrf.mxu0
      %v3407 = vadd.f32 0.0, %v3406
      %3408 = vdwg.mxu0
      %3409 = vmatpush.bf16.msra.mxu0 0
      %3410 = vmatpush.bf16.msra.mxu0 0
      %3411 = vmatpush.bf16.msra.mxu0 0
      %3412 = vmatpush.bf16.msra.mxu0 0
      %3413 = vmatpush.bf16.msra.mxu0 %v3371
      %3414 = vmatpush.bf16.msra.mxu0 %v3369
      %3415 = vmatpush.bf16.msra.mxu0 %v3367
      %3416 = vmatpush.bf16.msra.mxu0 %v3365
      %3417 = vmatmul.bf16.gmra.mxu0 %v3262
      %v3418 = vpop.f32.mrf.mxu0
      %v3419 = vadd.f32 0.0, %v3418
      %v3420 = vpop.f32.mrf.mxu0
      %v3421 = vadd.f32 0.0, %v3420
      %3422 = vmatmul.bf16.gmra.mxu0 %v3265
      %v3423 = vpop.f32.mrf.mxu0
      %v3424 = vadd.f32 0.0, %v3423
      %v3425 = vpop.f32.mrf.mxu0
      %v3426 = vadd.f32 0.0, %v3425
      %3427 = vmatmul.bf16.gmra.mxu0 %v3268
      %v3428 = vpop.f32.mrf.mxu0
      %v3429 = vadd.f32 0.0, %v3428
      %v3430 = vpop.f32.mrf.mxu0
      %v3431 = vadd.f32 0.0, %v3430
      %3432 = vmatmul.bf16.gmra.mxu0 %v3271
      %v3433 = vpop.f32.mrf.mxu0
      %v3434 = vadd.f32 0.0, %v3433
      %v3435 = vpop.f32.mrf.mxu0
      %v3436 = vadd.f32 0.0, %v3435
      %3437 = vdwg.mxu0
      %s3438 = scalar_lea.vmem %s13, 128
      %v3439 = vld [vmem:[%s3438] sm:$0xff]
      %v3440 = vld [vmem:[%s3438 + $0x8] sm:$0xff]
      %v3441 = vld [vmem:[%s3438 + $0x10] sm:$0xff]
      %v3442 = vld [vmem:[%s3438 + $0x18] sm:$0xff]
      %v3443 = vld [vmem:[%s3438 + $0x20] sm:$0xff]
      %v3444 = vld [vmem:[%s3438 + $0x28] sm:$0xff]
      %v3445 = vld [vmem:[%s3438 + $0x30] sm:$0xff]
      %v3446 = vld [vmem:[%s3438 + $0x38] sm:$0xff]
      %v3455 = vunpack.c.l.b16 %v3439
      %v3456 = vunpack.c.h.b16 %v3439
      %v3457 = vunpack.c.l.b16 %v3440
      %v3458 = vunpack.c.h.b16 %v3440
      %v3459 = vunpack.c.l.b16 %v3441
      %v3460 = vunpack.c.h.b16 %v3441
      %v3461 = vunpack.c.l.b16 %v3442
      %v3462 = vunpack.c.h.b16 %v3442
      %v3463 = vunpack.c.l.b16 %v3443
      %v3464 = vunpack.c.h.b16 %v3443
      %v3465 = vunpack.c.l.b16 %v3444
      %v3466 = vunpack.c.h.b16 %v3444
      %v3467 = vunpack.c.l.b16 %v3445
      %v3468 = vunpack.c.h.b16 %v3445
      %v3469 = vunpack.c.l.b16 %v3446
      %v3470 = vunpack.c.h.b16 %v3446
      %v3471 = vpack.c.b16 %v3457, %v3455
      %v3472 = vpack.c.b16 %v3458, %v3456
      %v3473 = vpack.c.b16 %v3461, %v3459
      %v3474 = vpack.c.b16 %v3462, %v3460
      %v3475 = vpack.c.b16 %v3465, %v3463
      %v3476 = vpack.c.b16 %v3466, %v3464
      %v3477 = vpack.c.b16 %v3469, %v3467
      %v3478 = vpack.c.b16 %v3470, %v3468
      %3487 = vmatpush.bf16.msra.mxu0 0
      %3488 = vmatpush.bf16.msra.mxu0 0
      %3489 = vmatpush.bf16.msra.mxu0 0
      %3490 = vmatpush.bf16.msra.mxu0 0
      %3491 = vmatpush.bf16.msra.mxu0 %v3477
      %3492 = vmatpush.bf16.msra.mxu0 %v3475
      %3493 = vmatpush.bf16.msra.mxu0 %v3473
      %3494 = vmatpush.bf16.msra.mxu0 %v3471
      %3495 = vmatmul.bf16.gmra.mxu0 %v3262
      %v3496 = vpop.f32.mrf.mxu0
      %v3497 = vadd.f32 0.0, %v3496
      %v3498 = vpop.f32.mrf.mxu0
      %v3499 = vadd.f32 0.0, %v3498
      %3500 = vmatmul.bf16.gmra.mxu0 %v3265
      %v3501 = vpop.f32.mrf.mxu0
      %v3502 = vadd.f32 0.0, %v3501
      %v3503 = vpop.f32.mrf.mxu0
      %v3504 = vadd.f32 0.0, %v3503
      %3505 = vmatmul.bf16.gmra.mxu0 %v3268
      %v3506 = vpop.f32.mrf.mxu0
      %v3507 = vadd.f32 0.0, %v3506
      %v3508 = vpop.f32.mrf.mxu0
      %v3509 = vadd.f32 0.0, %v3508
      %3510 = vmatmul.bf16.gmra.mxu0 %v3271
      %v3511 = vpop.f32.mrf.mxu0
      %v3512 = vadd.f32 0.0, %v3511
      %v3513 = vpop.f32.mrf.mxu0
      %v3514 = vadd.f32 0.0, %v3513
      %3515 = vdwg.mxu0
      %3516 = vmatpush.bf16.msra.mxu0 0
      %3517 = vmatpush.bf16.msra.mxu0 0
      %3518 = vmatpush.bf16.msra.mxu0 0
      %3519 = vmatpush.bf16.msra.mxu0 0
      %3520 = vmatpush.bf16.msra.mxu0 %v3478
      %3521 = vmatpush.bf16.msra.mxu0 %v3476
      %3522 = vmatpush.bf16.msra.mxu0 %v3474
      %3523 = vmatpush.bf16.msra.mxu0 %v3472
      %3524 = vmatmul.bf16.gmra.mxu0 %v3262
      %v3525 = vpop.f32.mrf.mxu0
      %v3526 = vadd.f32 0.0, %v3525
      %v3527 = vpop.f32.mrf.mxu0
      %v3528 = vadd.f32 0.0, %v3527
      %3529 = vmatmul.bf16.gmra.mxu0 %v3265
      %v3530 = vpop.f32.mrf.mxu0
      %v3531 = vadd.f32 0.0, %v3530
      %v3532 = vpop.f32.mrf.mxu0
      %v3533 = vadd.f32 0.0, %v3532
      %3534 = vmatmul.bf16.gmra.mxu0 %v3268
      %v3535 = vpop.f32.mrf.mxu0
      %v3536 = vadd.f32 0.0, %v3535
      %v3537 = vpop.f32.mrf.mxu0
      %v3538 = vadd.f32 0.0, %v3537
      %3539 = vmatmul.bf16.gmra.mxu0 %v3271
      %v3540 = vpop.f32.mrf.mxu0
      %v3541 = vadd.f32 0.0, %v3540
      %v3542 = vpop.f32.mrf.mxu0
      %v3543 = vadd.f32 0.0, %v3542
      %3544 = vdwg.mxu0
      %s3545 = scalar_lea.vmem %s13, 192
      %v3546 = vld [vmem:[%s3545] sm:$0xff]
      %v3547 = vld [vmem:[%s3545 + $0x8] sm:$0xff]
      %v3548 = vld [vmem:[%s3545 + $0x10] sm:$0xff]
      %v3549 = vld [vmem:[%s3545 + $0x18] sm:$0xff]
      %v3550 = vld [vmem:[%s3545 + $0x20] sm:$0xff]
      %v3551 = vld [vmem:[%s3545 + $0x28] sm:$0xff]
      %v3552 = vld [vmem:[%s3545 + $0x30] sm:$0xff]
      %v3553 = vld [vmem:[%s3545 + $0x38] sm:$0xff]
      %v3562 = vunpack.c.l.b16 %v3546
      %v3563 = vunpack.c.h.b16 %v3546
      %v3564 = vunpack.c.l.b16 %v3547
      %v3565 = vunpack.c.h.b16 %v3547
      %v3566 = vunpack.c.l.b16 %v3548
      %v3567 = vunpack.c.h.b16 %v3548
      %v3568 = vunpack.c.l.b16 %v3549
      %v3569 = vunpack.c.h.b16 %v3549
      %v3570 = vunpack.c.l.b16 %v3550
      %v3571 = vunpack.c.h.b16 %v3550
      %v3572 = vunpack.c.l.b16 %v3551
      %v3573 = vunpack.c.h.b16 %v3551
      %v3574 = vunpack.c.l.b16 %v3552
      %v3575 = vunpack.c.h.b16 %v3552
      %v3576 = vunpack.c.l.b16 %v3553
      %v3577 = vunpack.c.h.b16 %v3553
      %v3578 = vpack.c.b16 %v3564, %v3562
      %v3579 = vpack.c.b16 %v3565, %v3563
      %v3580 = vpack.c.b16 %v3568, %v3566
      %v3581 = vpack.c.b16 %v3569, %v3567
      %v3582 = vpack.c.b16 %v3572, %v3570
      %v3583 = vpack.c.b16 %v3573, %v3571
      %v3584 = vpack.c.b16 %v3576, %v3574
      %v3585 = vpack.c.b16 %v3577, %v3575
      %3594 = vmatpush.bf16.msra.mxu0 0
      %3595 = vmatpush.bf16.msra.mxu0 0
      %3596 = vmatpush.bf16.msra.mxu0 0
      %3597 = vmatpush.bf16.msra.mxu0 0
      %3598 = vmatpush.bf16.msra.mxu0 %v3584
      %3599 = vmatpush.bf16.msra.mxu0 %v3582
      %3600 = vmatpush.bf16.msra.mxu0 %v3580
      %3601 = vmatpush.bf16.msra.mxu0 %v3578
      %3602 = vmatmul.bf16.gmra.mxu0 %v3262
      %v3603 = vpop.f32.mrf.mxu0
      %v3604 = vadd.f32 0.0, %v3603
      %v3605 = vpop.f32.mrf.mxu0
      %v3606 = vadd.f32 0.0, %v3605
      %3607 = vmatmul.bf16.gmra.mxu0 %v3265
      %v3608 = vpop.f32.mrf.mxu0
      %v3609 = vadd.f32 0.0, %v3608
      %v3610 = vpop.f32.mrf.mxu0
      %v3611 = vadd.f32 0.0, %v3610
      %3612 = vmatmul.bf16.gmra.mxu0 %v3268
      %v3613 = vpop.f32.mrf.mxu0
      %v3614 = vadd.f32 0.0, %v3613
      %v3615 = vpop.f32.mrf.mxu0
      %v3616 = vadd.f32 0.0, %v3615
      %3617 = vmatmul.bf16.gmra.mxu0 %v3271
      %v3618 = vpop.f32.mrf.mxu0
      %v3619 = vadd.f32 0.0, %v3618
      %v3620 = vpop.f32.mrf.mxu0
      %v3621 = vadd.f32 0.0, %v3620
      %3622 = vdwg.mxu0
      %3623 = vmatpush.bf16.msra.mxu0 0
      %3624 = vmatpush.bf16.msra.mxu0 0
      %3625 = vmatpush.bf16.msra.mxu0 0
      %3626 = vmatpush.bf16.msra.mxu0 0
      %3627 = vmatpush.bf16.msra.mxu0 %v3585
      %3628 = vmatpush.bf16.msra.mxu0 %v3583
      %3629 = vmatpush.bf16.msra.mxu0 %v3581
      %3630 = vmatpush.bf16.msra.mxu0 %v3579
      %3631 = vmatmul.bf16.gmra.mxu0 %v3262
      %v3632 = vpop.f32.mrf.mxu0
      %v3633 = vadd.f32 0.0, %v3632
      %v3634 = vpop.f32.mrf.mxu0
      %v3635 = vadd.f32 0.0, %v3634
      %3636 = vmatmul.bf16.gmra.mxu0 %v3265
      %v3637 = vpop.f32.mrf.mxu0
      %v3638 = vadd.f32 0.0, %v3637
      %v3639 = vpop.f32.mrf.mxu0
      %v3640 = vadd.f32 0.0, %v3639
      %3641 = vmatmul.bf16.gmra.mxu0 %v3268
      %v3642 = vpop.f32.mrf.mxu0
      %v3643 = vadd.f32 0.0, %v3642
      %v3644 = vpop.f32.mrf.mxu0
      %v3645 = vadd.f32 0.0, %v3644
      %3646 = vmatmul.bf16.gmra.mxu0 %v3271
      %v3647 = vpop.f32.mrf.mxu0
      %v3648 = vadd.f32 0.0, %v3647
      %v3649 = vpop.f32.mrf.mxu0
      %v3650 = vadd.f32 0.0, %v3649
      %3651 = vdwg.mxu0
      %s3652 = scalar_lea.vmem %s13, 256
      %v3653 = vld [vmem:[%s3652] sm:$0xff]
      %v3654 = vld [vmem:[%s3652 + $0x8] sm:$0xff]
      %v3655 = vld [vmem:[%s3652 + $0x10] sm:$0xff]
      %v3656 = vld [vmem:[%s3652 + $0x18] sm:$0xff]
      %v3657 = vld [vmem:[%s3652 + $0x20] sm:$0xff]
      %v3658 = vld [vmem:[%s3652 + $0x28] sm:$0xff]
      %v3659 = vld [vmem:[%s3652 + $0x30] sm:$0xff]
      %v3660 = vld [vmem:[%s3652 + $0x38] sm:$0xff]
      %v3669 = vunpack.c.l.b16 %v3653
      %v3670 = vunpack.c.h.b16 %v3653
      %v3671 = vunpack.c.l.b16 %v3654
      %v3672 = vunpack.c.h.b16 %v3654
      %v3673 = vunpack.c.l.b16 %v3655
      %v3674 = vunpack.c.h.b16 %v3655
      %v3675 = vunpack.c.l.b16 %v3656
      %v3676 = vunpack.c.h.b16 %v3656
      %v3677 = vunpack.c.l.b16 %v3657
      %v3678 = vunpack.c.h.b16 %v3657
      %v3679 = vunpack.c.l.b16 %v3658
      %v3680 = vunpack.c.h.b16 %v3658
      %v3681 = vunpack.c.l.b16 %v3659
      %v3682 = vunpack.c.h.b16 %v3659
      %v3683 = vunpack.c.l.b16 %v3660
      %v3684 = vunpack.c.h.b16 %v3660
      %v3685 = vpack.c.b16 %v3671, %v3669
      %v3686 = vpack.c.b16 %v3672, %v3670
      %v3687 = vpack.c.b16 %v3675, %v3673
      %v3688 = vpack.c.b16 %v3676, %v3674
      %v3689 = vpack.c.b16 %v3679, %v3677
      %v3690 = vpack.c.b16 %v3680, %v3678
      %v3691 = vpack.c.b16 %v3683, %v3681
      %v3692 = vpack.c.b16 %v3684, %v3682
      %3701 = vmatpush.bf16.msra.mxu0 0
      %3702 = vmatpush.bf16.msra.mxu0 0
      %3703 = vmatpush.bf16.msra.mxu0 0
      %3704 = vmatpush.bf16.msra.mxu0 0
      %3705 = vmatpush.bf16.msra.mxu0 %v3691
      %3706 = vmatpush.bf16.msra.mxu0 %v3689
      %3707 = vmatpush.bf16.msra.mxu0 %v3687
      %3708 = vmatpush.bf16.msra.mxu0 %v3685
      %3709 = vmatmul.bf16.gmra.mxu0 %v3262
      %v3710 = vpop.f32.mrf.mxu0
      %v3711 = vadd.f32 0.0, %v3710
      %v3712 = vpop.f32.mrf.mxu0
      %v3713 = vadd.f32 0.0, %v3712
      %3714 = vmatmul.bf16.gmra.mxu0 %v3265
      %v3715 = vpop.f32.mrf.mxu0
      %v3716 = vadd.f32 0.0, %v3715
      %v3717 = vpop.f32.mrf.mxu0
      %v3718 = vadd.f32 0.0, %v3717
      %3719 = vmatmul.bf16.gmra.mxu0 %v3268
      %v3720 = vpop.f32.mrf.mxu0
      %v3721 = vadd.f32 0.0, %v3720
      %v3722 = vpop.f32.mrf.mxu0
      %v3723 = vadd.f32 0.0, %v3722
      %3724 = vmatmul.bf16.gmra.mxu0 %v3271
      %v3725 = vpop.f32.mrf.mxu0
      %v3726 = vadd.f32 0.0, %v3725
      %v3727 = vpop.f32.mrf.mxu0
      %v3728 = vadd.f32 0.0, %v3727
      %3729 = vdwg.mxu0
      %3730 = vmatpush.bf16.msra.mxu0 0
      %3731 = vmatpush.bf16.msra.mxu0 0
      %3732 = vmatpush.bf16.msra.mxu0 0
      %3733 = vmatpush.bf16.msra.mxu0 0
      %3734 = vmatpush.bf16.msra.mxu0 %v3692
      %3735 = vmatpush.bf16.msra.mxu0 %v3690
      %3736 = vmatpush.bf16.msra.mxu0 %v3688
      %3737 = vmatpush.bf16.msra.mxu0 %v3686
      %3738 = vmatmul.bf16.gmra.mxu0 %v3262
      %v3739 = vpop.f32.mrf.mxu0
      %v3740 = vadd.f32 0.0, %v3739
      %v3741 = vpop.f32.mrf.mxu0
      %v3742 = vadd.f32 0.0, %v3741
      %3743 = vmatmul.bf16.gmra.mxu0 %v3265
      %v3744 = vpop.f32.mrf.mxu0
      %v3745 = vadd.f32 0.0, %v3744
      %v3746 = vpop.f32.mrf.mxu0
      %v3747 = vadd.f32 0.0, %v3746
      %3748 = vmatmul.bf16.gmra.mxu0 %v3268
      %v3749 = vpop.f32.mrf.mxu0
      %v3750 = vadd.f32 0.0, %v3749
      %v3751 = vpop.f32.mrf.mxu0
      %v3752 = vadd.f32 0.0, %v3751
      %3753 = vmatmul.bf16.gmra.mxu0 %v3271
      %v3754 = vpop.f32.mrf.mxu0
      %v3755 = vadd.f32 0.0, %v3754
      %v3756 = vpop.f32.mrf.mxu0
      %v3757 = vadd.f32 0.0, %v3756
      %3758 = vdwg.mxu0
      %s3759 = scalar_lea.vmem %s13, 320
      %v3760 = vld [vmem:[%s3759] sm:$0xff]
      %v3761 = vld [vmem:[%s3759 + $0x8] sm:$0xff]
      %v3762 = vld [vmem:[%s3759 + $0x10] sm:$0xff]
      %v3763 = vld [vmem:[%s3759 + $0x18] sm:$0xff]
      %v3764 = vld [vmem:[%s3759 + $0x20] sm:$0xff]
      %v3765 = vld [vmem:[%s3759 + $0x28] sm:$0xff]
      %v3766 = vld [vmem:[%s3759 + $0x30] sm:$0xff]
      %v3767 = vld [vmem:[%s3759 + $0x38] sm:$0xff]
      %v3776 = vunpack.c.l.b16 %v3760
      %v3777 = vunpack.c.h.b16 %v3760
      %v3778 = vunpack.c.l.b16 %v3761
      %v3779 = vunpack.c.h.b16 %v3761
      %v3780 = vunpack.c.l.b16 %v3762
      %v3781 = vunpack.c.h.b16 %v3762
      %v3782 = vunpack.c.l.b16 %v3763
      %v3783 = vunpack.c.h.b16 %v3763
      %v3784 = vunpack.c.l.b16 %v3764
      %v3785 = vunpack.c.h.b16 %v3764
      %v3786 = vunpack.c.l.b16 %v3765
      %v3787 = vunpack.c.h.b16 %v3765
      %v3788 = vunpack.c.l.b16 %v3766
      %v3789 = vunpack.c.h.b16 %v3766
      %v3790 = vunpack.c.l.b16 %v3767
      %v3791 = vunpack.c.h.b16 %v3767
      %v3792 = vpack.c.b16 %v3778, %v3776
      %v3793 = vpack.c.b16 %v3779, %v3777
      %v3794 = vpack.c.b16 %v3782, %v3780
      %v3795 = vpack.c.b16 %v3783, %v3781
      %v3796 = vpack.c.b16 %v3786, %v3784
      %v3797 = vpack.c.b16 %v3787, %v3785
      %v3798 = vpack.c.b16 %v3790, %v3788
      %v3799 = vpack.c.b16 %v3791, %v3789
      %3808 = vmatpush.bf16.msra.mxu0 0
      %3809 = vmatpush.bf16.msra.mxu0 0
      %3810 = vmatpush.bf16.msra.mxu0 0
      %3811 = vmatpush.bf16.msra.mxu0 0
      %3812 = vmatpush.bf16.msra.mxu0 %v3798
      %3813 = vmatpush.bf16.msra.mxu0 %v3796
      %3814 = vmatpush.bf16.msra.mxu0 %v3794
      %3815 = vmatpush.bf16.msra.mxu0 %v3792
      %3816 = vmatmul.bf16.gmra.mxu0 %v3262
      %v3817 = vpop.f32.mrf.mxu0
      %v3818 = vadd.f32 0.0, %v3817
      %v3819 = vpop.f32.mrf.mxu0
      %v3820 = vadd.f32 0.0, %v3819
      %3821 = vmatmul.bf16.gmra.mxu0 %v3265
      %v3822 = vpop.f32.mrf.mxu0
      %v3823 = vadd.f32 0.0, %v3822
      %v3824 = vpop.f32.mrf.mxu0
      %v3825 = vadd.f32 0.0, %v3824
      %3826 = vmatmul.bf16.gmra.mxu0 %v3268
      %v3827 = vpop.f32.mrf.mxu0
      %v3828 = vadd.f32 0.0, %v3827
      %v3829 = vpop.f32.mrf.mxu0
      %v3830 = vadd.f32 0.0, %v3829
      %3831 = vmatmul.bf16.gmra.mxu0 %v3271
      %v3832 = vpop.f32.mrf.mxu0
      %v3833 = vadd.f32 0.0, %v3832
      %v3834 = vpop.f32.mrf.mxu0
      %v3835 = vadd.f32 0.0, %v3834
      %3836 = vdwg.mxu0
      %3837 = vmatpush.bf16.msra.mxu0 0
      %3838 = vmatpush.bf16.msra.mxu0 0
      %3839 = vmatpush.bf16.msra.mxu0 0
      %3840 = vmatpush.bf16.msra.mxu0 0
      %3841 = vmatpush.bf16.msra.mxu0 %v3799
      %3842 = vmatpush.bf16.msra.mxu0 %v3797
      %3843 = vmatpush.bf16.msra.mxu0 %v3795
      %3844 = vmatpush.bf16.msra.mxu0 %v3793
      %3845 = vmatmul.bf16.gmra.mxu0 %v3262
      %v3846 = vpop.f32.mrf.mxu0
      %v3847 = vadd.f32 0.0, %v3846
      %v3848 = vpop.f32.mrf.mxu0
      %v3849 = vadd.f32 0.0, %v3848
      %3850 = vmatmul.bf16.gmra.mxu0 %v3265
      %v3851 = vpop.f32.mrf.mxu0
      %v3852 = vadd.f32 0.0, %v3851
      %v3853 = vpop.f32.mrf.mxu0
      %v3854 = vadd.f32 0.0, %v3853
      %3855 = vmatmul.bf16.gmra.mxu0 %v3268
      %v3856 = vpop.f32.mrf.mxu0
      %v3857 = vadd.f32 0.0, %v3856
      %v3858 = vpop.f32.mrf.mxu0
      %v3859 = vadd.f32 0.0, %v3858
      %3860 = vmatmul.bf16.gmra.mxu0 %v3271
      %v3861 = vpop.f32.mrf.mxu0
      %v3862 = vadd.f32 0.0, %v3861
      %v3863 = vpop.f32.mrf.mxu0
      %v3864 = vadd.f32 0.0, %v3863
      %3865 = vdwg.mxu0
      %s3866 = scalar_lea.vmem %s13, 384
      %v3867 = vld [vmem:[%s3866] sm:$0xff]
      %v3868 = vld [vmem:[%s3866 + $0x8] sm:$0xff]
      %v3869 = vld [vmem:[%s3866 + $0x10] sm:$0xff]
      %v3870 = vld [vmem:[%s3866 + $0x18] sm:$0xff]
      %v3871 = vld [vmem:[%s3866 + $0x20] sm:$0xff]
      %v3872 = vld [vmem:[%s3866 + $0x28] sm:$0xff]
      %v3873 = vld [vmem:[%s3866 + $0x30] sm:$0xff]
      %v3874 = vld [vmem:[%s3866 + $0x38] sm:$0xff]
      %v3883 = vunpack.c.l.b16 %v3867
      %v3884 = vunpack.c.h.b16 %v3867
      %v3885 = vunpack.c.l.b16 %v3868
      %v3886 = vunpack.c.h.b16 %v3868
      %v3887 = vunpack.c.l.b16 %v3869
      %v3888 = vunpack.c.h.b16 %v3869
      %v3889 = vunpack.c.l.b16 %v3870
      %v3890 = vunpack.c.h.b16 %v3870
      %v3891 = vunpack.c.l.b16 %v3871
      %v3892 = vunpack.c.h.b16 %v3871
      %v3893 = vunpack.c.l.b16 %v3872
      %v3894 = vunpack.c.h.b16 %v3872
      %v3895 = vunpack.c.l.b16 %v3873
      %v3896 = vunpack.c.h.b16 %v3873
      %v3897 = vunpack.c.l.b16 %v3874
      %v3898 = vunpack.c.h.b16 %v3874
      %v3899 = vpack.c.b16 %v3885, %v3883
      %v3900 = vpack.c.b16 %v3886, %v3884
      %v3901 = vpack.c.b16 %v3889, %v3887
      %v3902 = vpack.c.b16 %v3890, %v3888
      %v3903 = vpack.c.b16 %v3893, %v3891
      %v3904 = vpack.c.b16 %v3894, %v3892
      %v3905 = vpack.c.b16 %v3897, %v3895
      %v3906 = vpack.c.b16 %v3898, %v3896
      %3915 = vmatpush.bf16.msra.mxu0 0
      %3916 = vmatpush.bf16.msra.mxu0 0
      %3917 = vmatpush.bf16.msra.mxu0 0
      %3918 = vmatpush.bf16.msra.mxu0 0
      %3919 = vmatpush.bf16.msra.mxu0 %v3905
      %3920 = vmatpush.bf16.msra.mxu0 %v3903
      %3921 = vmatpush.bf16.msra.mxu0 %v3901
      %3922 = vmatpush.bf16.msra.mxu0 %v3899
      %3923 = vmatmul.bf16.gmra.mxu0 %v3262
      %v3924 = vpop.f32.mrf.mxu0
      %v3925 = vadd.f32 0.0, %v3924
      %v3926 = vpop.f32.mrf.mxu0
      %v3927 = vadd.f32 0.0, %v3926
      %3928 = vmatmul.bf16.gmra.mxu0 %v3265
      %v3929 = vpop.f32.mrf.mxu0
      %v3930 = vadd.f32 0.0, %v3929
      %v3931 = vpop.f32.mrf.mxu0
      %v3932 = vadd.f32 0.0, %v3931
      %3933 = vmatmul.bf16.gmra.mxu0 %v3268
      %v3934 = vpop.f32.mrf.mxu0
      %v3935 = vadd.f32 0.0, %v3934
      %v3936 = vpop.f32.mrf.mxu0
      %v3937 = vadd.f32 0.0, %v3936
      %3938 = vmatmul.bf16.gmra.mxu0 %v3271
      %v3939 = vpop.f32.mrf.mxu0
      %v3940 = vadd.f32 0.0, %v3939
      %v3941 = vpop.f32.mrf.mxu0
      %v3942 = vadd.f32 0.0, %v3941
      %3943 = vdwg.mxu0
      %3944 = vmatpush.bf16.msra.mxu0 0
      %3945 = vmatpush.bf16.msra.mxu0 0
      %3946 = vmatpush.bf16.msra.mxu0 0
      %3947 = vmatpush.bf16.msra.mxu0 0
      %3948 = vmatpush.bf16.msra.mxu0 %v3906
      %3949 = vmatpush.bf16.msra.mxu0 %v3904
      %3950 = vmatpush.bf16.msra.mxu0 %v3902
      %3951 = vmatpush.bf16.msra.mxu0 %v3900
      %3952 = vmatmul.bf16.gmra.mxu0 %v3262
      %v3953 = vpop.f32.mrf.mxu0
      %v3954 = vadd.f32 0.0, %v3953
      %v3955 = vpop.f32.mrf.mxu0
      %v3956 = vadd.f32 0.0, %v3955
      %3957 = vmatmul.bf16.gmra.mxu0 %v3265
      %v3958 = vpop.f32.mrf.mxu0
      %v3959 = vadd.f32 0.0, %v3958
      %v3960 = vpop.f32.mrf.mxu0
      %v3961 = vadd.f32 0.0, %v3960
      %3962 = vmatmul.bf16.gmra.mxu0 %v3268
      %v3963 = vpop.f32.mrf.mxu0
      %v3964 = vadd.f32 0.0, %v3963
      %v3965 = vpop.f32.mrf.mxu0
      %v3966 = vadd.f32 0.0, %v3965
      %3967 = vmatmul.bf16.gmra.mxu0 %v3271
      %v3968 = vpop.f32.mrf.mxu0
      %v3969 = vadd.f32 0.0, %v3968
      %v3970 = vpop.f32.mrf.mxu0
      %v3971 = vadd.f32 0.0, %v3970
      %3972 = vdwg.mxu0
      %s3973 = scalar_lea.vmem %s13, 448
      %v3974 = vld [vmem:[%s3973] sm:$0xff]
      %v3975 = vld [vmem:[%s3973 + $0x8] sm:$0xff]
      %v3976 = vld [vmem:[%s3973 + $0x10] sm:$0xff]
      %v3977 = vld [vmem:[%s3973 + $0x18] sm:$0xff]
      %v3978 = vld [vmem:[%s3973 + $0x20] sm:$0xff]
      %v3979 = vld [vmem:[%s3973 + $0x28] sm:$0xff]
      %v3980 = vld [vmem:[%s3973 + $0x30] sm:$0xff]
      %v3981 = vld [vmem:[%s3973 + $0x38] sm:$0xff]
      %v3990 = vunpack.c.l.b16 %v3974
      %v3991 = vunpack.c.h.b16 %v3974
      %v3992 = vunpack.c.l.b16 %v3975
      %v3993 = vunpack.c.h.b16 %v3975
      %v3994 = vunpack.c.l.b16 %v3976
      %v3995 = vunpack.c.h.b16 %v3976
      %v3996 = vunpack.c.l.b16 %v3977
      %v3997 = vunpack.c.h.b16 %v3977
      %v3998 = vunpack.c.l.b16 %v3978
      %v3999 = vunpack.c.h.b16 %v3978
      %v4000 = vunpack.c.l.b16 %v3979
      %v4001 = vunpack.c.h.b16 %v3979
      %v4002 = vunpack.c.l.b16 %v3980
      %v4003 = vunpack.c.h.b16 %v3980
      %v4004 = vunpack.c.l.b16 %v3981
      %v4005 = vunpack.c.h.b16 %v3981
      %v4006 = vpack.c.b16 %v3992, %v3990
      %v4007 = vpack.c.b16 %v3993, %v3991
      %v4008 = vpack.c.b16 %v3996, %v3994
      %v4009 = vpack.c.b16 %v3997, %v3995
      %v4010 = vpack.c.b16 %v4000, %v3998
      %v4011 = vpack.c.b16 %v4001, %v3999
      %v4012 = vpack.c.b16 %v4004, %v4002
      %v4013 = vpack.c.b16 %v4005, %v4003
      %4022 = vmatpush.bf16.msra.mxu0 0
      %4023 = vmatpush.bf16.msra.mxu0 0
      %4024 = vmatpush.bf16.msra.mxu0 0
      %4025 = vmatpush.bf16.msra.mxu0 0
      %4026 = vmatpush.bf16.msra.mxu0 %v4012
      %4027 = vmatpush.bf16.msra.mxu0 %v4010
      %4028 = vmatpush.bf16.msra.mxu0 %v4008
      %4029 = vmatpush.bf16.msra.mxu0 %v4006
      %4030 = vmatmul.bf16.gmra.mxu0 %v3262
      %v4031 = vpop.f32.mrf.mxu0
      %v4032 = vadd.f32 0.0, %v4031
      %v4033 = vpop.f32.mrf.mxu0
      %v4034 = vadd.f32 0.0, %v4033
      %4035 = vmatmul.bf16.gmra.mxu0 %v3265
      %v4036 = vpop.f32.mrf.mxu0
      %v4037 = vadd.f32 0.0, %v4036
      %v4038 = vpop.f32.mrf.mxu0
      %v4039 = vadd.f32 0.0, %v4038
      %4040 = vmatmul.bf16.gmra.mxu0 %v3268
      %v4041 = vpop.f32.mrf.mxu0
      %v4042 = vadd.f32 0.0, %v4041
      %v4043 = vpop.f32.mrf.mxu0
      %v4044 = vadd.f32 0.0, %v4043
      %4045 = vmatmul.bf16.gmra.mxu0 %v3271
      %v4046 = vpop.f32.mrf.mxu0
      %v4047 = vadd.f32 0.0, %v4046
      %v4048 = vpop.f32.mrf.mxu0
      %v4049 = vadd.f32 0.0, %v4048
      %4050 = vdwg.mxu0
      %4051 = vmatpush.bf16.msra.mxu0 0
      %4052 = vmatpush.bf16.msra.mxu0 0
      %4053 = vmatpush.bf16.msra.mxu0 0
      %4054 = vmatpush.bf16.msra.mxu0 0
      %4055 = vmatpush.bf16.msra.mxu0 %v4013
      %4056 = vmatpush.bf16.msra.mxu0 %v4011
      %4057 = vmatpush.bf16.msra.mxu0 %v4009
      %4058 = vmatpush.bf16.msra.mxu0 %v4007
      %4059 = vmatmul.bf16.gmra.mxu0 %v3262
      %v4060 = vpop.f32.mrf.mxu0
      %v4061 = vadd.f32 0.0, %v4060
      %v4062 = vpop.f32.mrf.mxu0
      %v4063 = vadd.f32 0.0, %v4062
      %4064 = vmatmul.bf16.gmra.mxu0 %v3265
      %v4065 = vpop.f32.mrf.mxu0
      %v4066 = vadd.f32 0.0, %v4065
      %v4067 = vpop.f32.mrf.mxu0
      %v4068 = vadd.f32 0.0, %v4067
      %4069 = vmatmul.bf16.gmra.mxu0 %v3268
      %v4070 = vpop.f32.mrf.mxu0
      %v4071 = vadd.f32 0.0, %v4070
      %v4072 = vpop.f32.mrf.mxu0
      %v4073 = vadd.f32 0.0, %v4072
      %4074 = vmatmul.bf16.gmra.mxu0 %v3271
      %v4075 = vpop.f32.mrf.mxu0
      %v4076 = vadd.f32 0.0, %v4075
      %v4077 = vpop.f32.mrf.mxu0
      %v4078 = vadd.f32 0.0, %v4077
      %4079 = vdwg.mxu0
      %s4080 = scalar_lea.vmem %s13, 512
      %v4081 = vld [vmem:[%s4080] sm:$0xff]
      %v4082 = vld [vmem:[%s4080 + $0x8] sm:$0xff]
      %v4083 = vld [vmem:[%s4080 + $0x10] sm:$0xff]
      %v4084 = vld [vmem:[%s4080 + $0x18] sm:$0xff]
      %v4085 = vld [vmem:[%s4080 + $0x20] sm:$0xff]
      %v4086 = vld [vmem:[%s4080 + $0x28] sm:$0xff]
      %v4087 = vld [vmem:[%s4080 + $0x30] sm:$0xff]
      %v4088 = vld [vmem:[%s4080 + $0x38] sm:$0xff]
      %v4097 = vunpack.c.l.b16 %v4081
      %v4098 = vunpack.c.h.b16 %v4081
      %v4099 = vunpack.c.l.b16 %v4082
      %v4100 = vunpack.c.h.b16 %v4082
      %v4101 = vunpack.c.l.b16 %v4083
      %v4102 = vunpack.c.h.b16 %v4083
      %v4103 = vunpack.c.l.b16 %v4084
      %v4104 = vunpack.c.h.b16 %v4084
      %v4105 = vunpack.c.l.b16 %v4085
      %v4106 = vunpack.c.h.b16 %v4085
      %v4107 = vunpack.c.l.b16 %v4086
      %v4108 = vunpack.c.h.b16 %v4086
      %v4109 = vunpack.c.l.b16 %v4087
      %v4110 = vunpack.c.h.b16 %v4087
      %v4111 = vunpack.c.l.b16 %v4088
      %v4112 = vunpack.c.h.b16 %v4088
      %v4113 = vpack.c.b16 %v4099, %v4097
      %v4114 = vpack.c.b16 %v4100, %v4098
      %v4115 = vpack.c.b16 %v4103, %v4101
      %v4116 = vpack.c.b16 %v4104, %v4102
      %v4117 = vpack.c.b16 %v4107, %v4105
      %v4118 = vpack.c.b16 %v4108, %v4106
      %v4119 = vpack.c.b16 %v4111, %v4109
      %v4120 = vpack.c.b16 %v4112, %v4110
      %4129 = vmatpush.bf16.msra.mxu0 0
      %4130 = vmatpush.bf16.msra.mxu0 0
      %4131 = vmatpush.bf16.msra.mxu0 0
      %4132 = vmatpush.bf16.msra.mxu0 0
      %4133 = vmatpush.bf16.msra.mxu0 %v4119
      %4134 = vmatpush.bf16.msra.mxu0 %v4117
      %4135 = vmatpush.bf16.msra.mxu0 %v4115
      %4136 = vmatpush.bf16.msra.mxu0 %v4113
      %4137 = vmatmul.bf16.gmra.mxu0 %v3262
      %v4138 = vpop.f32.mrf.mxu0
      %v4139 = vadd.f32 0.0, %v4138
      %v4140 = vpop.f32.mrf.mxu0
      %v4141 = vadd.f32 0.0, %v4140
      %4142 = vmatmul.bf16.gmra.mxu0 %v3265
      %v4143 = vpop.f32.mrf.mxu0
      %v4144 = vadd.f32 0.0, %v4143
      %v4145 = vpop.f32.mrf.mxu0
      %v4146 = vadd.f32 0.0, %v4145
      %4147 = vmatmul.bf16.gmra.mxu0 %v3268
      %v4148 = vpop.f32.mrf.mxu0
      %v4149 = vadd.f32 0.0, %v4148
      %v4150 = vpop.f32.mrf.mxu0
      %v4151 = vadd.f32 0.0, %v4150
      %4152 = vmatmul.bf16.gmra.mxu0 %v3271
      %v4153 = vpop.f32.mrf.mxu0
      %v4154 = vadd.f32 0.0, %v4153
      %v4155 = vpop.f32.mrf.mxu0
      %v4156 = vadd.f32 0.0, %v4155
      %4157 = vdwg.mxu0
      %4158 = vmatpush.bf16.msra.mxu0 0
      %4159 = vmatpush.bf16.msra.mxu0 0
      %4160 = vmatpush.bf16.msra.mxu0 0
      %4161 = vmatpush.bf16.msra.mxu0 0
      %4162 = vmatpush.bf16.msra.mxu0 %v4120
      %4163 = vmatpush.bf16.msra.mxu0 %v4118
      %4164 = vmatpush.bf16.msra.mxu0 %v4116
      %4165 = vmatpush.bf16.msra.mxu0 %v4114
      %4166 = vmatmul.bf16.gmra.mxu0 %v3262
      %v4167 = vpop.f32.mrf.mxu0
      %v4168 = vadd.f32 0.0, %v4167
      %v4169 = vpop.f32.mrf.mxu0
      %v4170 = vadd.f32 0.0, %v4169
      %4171 = vmatmul.bf16.gmra.mxu0 %v3265
      %v4172 = vpop.f32.mrf.mxu0
      %v4173 = vadd.f32 0.0, %v4172
      %v4174 = vpop.f32.mrf.mxu0
      %v4175 = vadd.f32 0.0, %v4174
      %4176 = vmatmul.bf16.gmra.mxu0 %v3268
      %v4177 = vpop.f32.mrf.mxu0
      %v4178 = vadd.f32 0.0, %v4177
      %v4179 = vpop.f32.mrf.mxu0
      %v4180 = vadd.f32 0.0, %v4179
      %4181 = vmatmul.bf16.gmra.mxu0 %v3271
      %v4182 = vpop.f32.mrf.mxu0
      %v4183 = vadd.f32 0.0, %v4182
      %v4184 = vpop.f32.mrf.mxu0
      %v4185 = vadd.f32 0.0, %v4184
      %4186 = vdwg.mxu0
      %v4187 = vld [vmem:[%s7] sm:$0xff]
      %v4188 = vld [vmem:[%s7 + $0x8] sm:$0x3]
      %v4189 = vpack.c.bf16 %v3285, %v3283
      %v4190 = vpack.c.bf16 %v3314, %v3312
      %v4191 = vpack.c.bf16 %v3290, %v3288
      %v4192 = vpack.c.bf16 %v3319, %v3317
      %v4193 = vpack.c.bf16 %v3295, %v3293
      %v4194 = vpack.c.bf16 %v3324, %v3322
      %v4195 = vpack.c.bf16 %v3300, %v3298
      %v4196 = vpack.c.bf16 %v3329, %v3327
      %v4197 = vpack.c.bf16 %v3392, %v3390
      %v4198 = vpack.c.bf16 %v3421, %v3419
      %v4199 = vpack.c.bf16 %v3397, %v3395
      %v4200 = vpack.c.bf16 %v3426, %v3424
      %v4201 = vpack.c.bf16 %v3402, %v3400
      %v4202 = vpack.c.bf16 %v3431, %v3429
      %v4203 = vpack.c.bf16 %v3407, %v3405
      %v4204 = vpack.c.bf16 %v3436, %v3434
      %v4205 = vpack.c.bf16 %v3499, %v3497
      %v4206 = vpack.c.bf16 %v3528, %v3526
      %v4207 = vpack.c.bf16 %v3504, %v3502
      %v4208 = vpack.c.bf16 %v3533, %v3531
      %v4209 = vpack.c.bf16 %v3509, %v3507
      %v4210 = vpack.c.bf16 %v3538, %v3536
      %v4211 = vpack.c.bf16 %v3514, %v3512
      %v4212 = vpack.c.bf16 %v3543, %v3541
      %v4213 = vpack.c.bf16 %v3606, %v3604
      %v4214 = vpack.c.bf16 %v3635, %v3633
      %v4215 = vpack.c.bf16 %v3611, %v3609
      %v4216 = vpack.c.bf16 %v3640, %v3638
      %v4217 = vpack.c.bf16 %v3616, %v3614
      %v4218 = vpack.c.bf16 %v3645, %v3643
      %v4219 = vpack.c.bf16 %v3621, %v3619
      %v4220 = vpack.c.bf16 %v3650, %v3648
      %v4221 = vpack.c.bf16 %v3713, %v3711
      %v4222 = vpack.c.bf16 %v3742, %v3740
      %v4223 = vpack.c.bf16 %v3718, %v3716
      %v4224 = vpack.c.bf16 %v3747, %v3745
      %v4225 = vpack.c.bf16 %v3723, %v3721
      %v4226 = vpack.c.bf16 %v3752, %v3750
      %v4227 = vpack.c.bf16 %v3728, %v3726
      %v4228 = vpack.c.bf16 %v3757, %v3755
      %v4229 = vpack.c.bf16 %v3820, %v3818
      %v4230 = vpack.c.bf16 %v3849, %v3847
      %v4231 = vpack.c.bf16 %v3825, %v3823
      %v4232 = vpack.c.bf16 %v3854, %v3852
      %v4233 = vpack.c.bf16 %v3830, %v3828
      %v4234 = vpack.c.bf16 %v3859, %v3857
      %v4235 = vpack.c.bf16 %v3835, %v3833
      %v4236 = vpack.c.bf16 %v3864, %v3862
      %v4237 = vpack.c.bf16 %v3927, %v3925
      %v4238 = vpack.c.bf16 %v3956, %v3954
      %v4239 = vpack.c.bf16 %v3932, %v3930
      %v4240 = vpack.c.bf16 %v3961, %v3959
      %v4241 = vpack.c.bf16 %v3937, %v3935
      %v4242 = vpack.c.bf16 %v3966, %v3964
      %v4243 = vpack.c.bf16 %v3942, %v3940
      %v4244 = vpack.c.bf16 %v3971, %v3969
      %v4245 = vpack.c.bf16 %v4034, %v4032
      %v4246 = vpack.c.bf16 %v4063, %v4061
      %v4247 = vpack.c.bf16 %v4039, %v4037
      %v4248 = vpack.c.bf16 %v4068, %v4066
      %v4249 = vpack.c.bf16 %v4044, %v4042
      %v4250 = vpack.c.bf16 %v4073, %v4071
      %v4251 = vpack.c.bf16 %v4049, %v4047
      %v4252 = vpack.c.bf16 %v4078, %v4076
      %v4253 = vpack.c.bf16 %v4141, %v4139
      %v4254 = vpack.c.bf16 %v4170, %v4168
      %v4255 = vpack.c.bf16 %v4146, %v4144
      %v4256 = vpack.c.bf16 %v4175, %v4173
      %v4257 = vpack.c.bf16 %v4151, %v4149
      %v4258 = vpack.c.bf16 %v4180, %v4178
      %v4259 = vpack.c.bf16 %v4156, %v4154
      %v4260 = vpack.c.bf16 %v4185, %v4183
      %v4261 = vld [vmem:[#allocation2] sm:$0x1]
      %v4263 = vperm.slane %v4261, 0
      %4264 = vset.pattern.permute.xlu0 0
      %4265 = vperm.xlu0 %4264, %v4263
      %v4266 = vpop.permute.xlu0 %4265
      %4269 = vst [vmem:[#allocation1] ss:$4 sm:$0xff] %v4187
      %s4271 = scalar_lea.vmem [#allocation1], 32
      %4272 = vst [vmem:[%s4271] ss:$4 sm:$0xff] %v4188
      %v4273 = vld.sshfl [vmem:[#allocation1] sm:$0xff pattern:$0x73625140]
      %v4274 = vld.sshfl [vmem:[#allocation1 + $0x8] sm:$0xff pattern:$0x73625140]
      %v4275 = vld.sshfl [vmem:[#allocation1 + $0x10] sm:$0xff pattern:$0x73625140]
      %v4276 = vld.sshfl [vmem:[#allocation1 + $0x18] sm:$0xff pattern:$0x73625140]
      %v4277 = vld.sshfl [vmem:[#allocation1 + $0x20] sm:$0xff pattern:$0x73625140]
      %v4282 = vsel %vm563, %v4277, 0
      %4284 = vmatpush.bf16.msra.mxu0 %v4203
      %4285 = vmatpush.bf16.msra.mxu0 %v4201
      %4286 = vmatpush.bf16.msra.mxu0 %v4199
      %4287 = vmatpush.bf16.msra.mxu0 %v4197
      %4288 = vmatpush.bf16.msra.mxu0 %v4195
      %4289 = vmatpush.bf16.msra.mxu0 %v4193
      %4290 = vmatpush.bf16.msra.mxu0 %v4191
      %4291 = vmatpush.bf16.msra.mxu0 %v4189
      %4292 = vmatmul.bf16.gmra.mxu0 %v4273
      %v4293 = vpop.f32.mrf.mxu0
      %v4294 = vadd.f32 %v4266, %v4293
      %v4295 = vpop.f32.mrf.mxu0
      %4296 = vdwg.mxu0
      %4297 = vmatpush.bf16.msra.mxu0 %v4219
      %4298 = vmatpush.bf16.msra.mxu0 %v4217
      %4299 = vmatpush.bf16.msra.mxu0 %v4215
      %4300 = vmatpush.bf16.msra.mxu0 %v4213
      %4301 = vmatpush.bf16.msra.mxu0 %v4211
      %4302 = vmatpush.bf16.msra.mxu0 %v4209
      %4303 = vmatpush.bf16.msra.mxu0 %v4207
      %4304 = vmatpush.bf16.msra.mxu0 %v4205
      %4305 = vmatmul.bf16.gmra.mxu0 %v4274
      %v4306 = vpop.f32.mrf.mxu0
      %v4307 = vadd.f32 %v4294, %v4306
      %v4308 = vpop.f32.mrf.mxu0
      %4309 = vdwg.mxu0
      %4310 = vmatpush.bf16.msra.mxu0 %v4235
      %4311 = vmatpush.bf16.msra.mxu0 %v4233
      %4312 = vmatpush.bf16.msra.mxu0 %v4231
      %4313 = vmatpush.bf16.msra.mxu0 %v4229
      %4314 = vmatpush.bf16.msra.mxu0 %v4227
      %4315 = vmatpush.bf16.msra.mxu0 %v4225
      %4316 = vmatpush.bf16.msra.mxu0 %v4223
      %4317 = vmatpush.bf16.msra.mxu0 %v4221
      %4318 = vmatmul.bf16.gmra.mxu0 %v4275
      %v4319 = vpop.f32.mrf.mxu0
      %v4320 = vadd.f32 %v4307, %v4319
      %v4321 = vpop.f32.mrf.mxu0
      %4322 = vdwg.mxu0
      %4323 = vmatpush.bf16.msra.mxu0 %v4251
      %4324 = vmatpush.bf16.msra.mxu0 %v4249
      %4325 = vmatpush.bf16.msra.mxu0 %v4247
      %4326 = vmatpush.bf16.msra.mxu0 %v4245
      %4327 = vmatpush.bf16.msra.mxu0 %v4243
      %4328 = vmatpush.bf16.msra.mxu0 %v4241
      %4329 = vmatpush.bf16.msra.mxu0 %v4239
      %4330 = vmatpush.bf16.msra.mxu0 %v4237
      %4331 = vmatmul.bf16.gmra.mxu0 %v4276
      %v4332 = vpop.f32.mrf.mxu0
      %v4333 = vadd.f32 %v4320, %v4332
      %v4334 = vpop.f32.mrf.mxu0
      %4335 = vdwg.mxu0
      %4336 = vmatpush.bf16.msra.mxu0 0
      %4337 = vmatpush.bf16.msra.mxu0 0
      %4338 = vmatpush.bf16.msra.mxu0 0
      %4339 = vmatpush.bf16.msra.mxu0 0
      %4340 = vmatpush.bf16.msra.mxu0 %v4259
      %4341 = vmatpush.bf16.msra.mxu0 %v4257
      %4342 = vmatpush.bf16.msra.mxu0 %v4255
      %4343 = vmatpush.bf16.msra.mxu0 %v4253
      %4344 = vmatmul.bf16.gmra.mxu0 %v4282
      %v4345 = vpop.f32.mrf.mxu0
      %v4346 = vadd.f32 %v4333, %v4345
      %v4347 = vpop.f32.mrf.mxu0
      %4348 = vdwg.mxu0
      %4349 = vmatpush.bf16.msra.mxu0 %v4204
      %4350 = vmatpush.bf16.msra.mxu0 %v4202
      %4351 = vmatpush.bf16.msra.mxu0 %v4200
      %4352 = vmatpush.bf16.msra.mxu0 %v4198
      %4353 = vmatpush.bf16.msra.mxu0 %v4196
      %4354 = vmatpush.bf16.msra.mxu0 %v4194
      %4355 = vmatpush.bf16.msra.mxu0 %v4192
      %4356 = vmatpush.bf16.msra.mxu0 %v4190
      %4357 = vmatmul.bf16.gmra.mxu0 %v4273
      %v4358 = vpop.f32.mrf.mxu0
      %v4359 = vadd.f32 %v4266, %v4358
      %v4360 = vpop.f32.mrf.mxu0
      %4361 = vdwg.mxu0
      %4362 = vmatpush.bf16.msra.mxu0 %v4220
      %4363 = vmatpush.bf16.msra.mxu0 %v4218
      %4364 = vmatpush.bf16.msra.mxu0 %v4216
      %4365 = vmatpush.bf16.msra.mxu0 %v4214
      %4366 = vmatpush.bf16.msra.mxu0 %v4212
      %4367 = vmatpush.bf16.msra.mxu0 %v4210
      %4368 = vmatpush.bf16.msra.mxu0 %v4208
      %4369 = vmatpush.bf16.msra.mxu0 %v4206
      %4370 = vmatmul.bf16.gmra.mxu0 %v4274
      %v4371 = vpop.f32.mrf.mxu0
      %v4372 = vadd.f32 %v4359, %v4371
      %v4373 = vpop.f32.mrf.mxu0
      %4374 = vdwg.mxu0
      %4375 = vmatpush.bf16.msra.mxu0 %v4236
      %4376 = vmatpush.bf16.msra.mxu0 %v4234
      %4377 = vmatpush.bf16.msra.mxu0 %v4232
      %4378 = vmatpush.bf16.msra.mxu0 %v4230
      %4379 = vmatpush.bf16.msra.mxu0 %v4228
      %4380 = vmatpush.bf16.msra.mxu0 %v4226
      %4381 = vmatpush.bf16.msra.mxu0 %v4224
      %4382 = vmatpush.bf16.msra.mxu0 %v4222
      %4383 = vmatmul.bf16.gmra.mxu0 %v4275
      %v4384 = vpop.f32.mrf.mxu0
      %v4385 = vadd.f32 %v4372, %v4384
      %v4386 = vpop.f32.mrf.mxu0
      %4387 = vdwg.mxu0
      %4388 = vmatpush.bf16.msra.mxu0 %v4252
      %4389 = vmatpush.bf16.msra.mxu0 %v4250
      %4390 = vmatpush.bf16.msra.mxu0 %v4248
      %4391 = vmatpush.bf16.msra.mxu0 %v4246
      %4392 = vmatpush.bf16.msra.mxu0 %v4244
      %4393 = vmatpush.bf16.msra.mxu0 %v4242
      %4394 = vmatpush.bf16.msra.mxu0 %v4240
      %4395 = vmatpush.bf16.msra.mxu0 %v4238
      %4396 = vmatmul.bf16.gmra.mxu0 %v4276
      %v4397 = vpop.f32.mrf.mxu0
      %v4398 = vadd.f32 %v4385, %v4397
      %v4399 = vpop.f32.mrf.mxu0
      %4400 = vdwg.mxu0
      %4401 = vmatpush.bf16.msra.mxu0 0
      %4402 = vmatpush.bf16.msra.mxu0 0
      %4403 = vmatpush.bf16.msra.mxu0 0
      %4404 = vmatpush.bf16.msra.mxu0 0
      %4405 = vmatpush.bf16.msra.mxu0 %v4260
      %4406 = vmatpush.bf16.msra.mxu0 %v4258
      %4407 = vmatpush.bf16.msra.mxu0 %v4256
      %4408 = vmatpush.bf16.msra.mxu0 %v4254
      %4409 = vmatmul.bf16.gmra.mxu0 %v4282
      %v4410 = vpop.f32.mrf.mxu0
      %v4411 = vadd.f32 %v4398, %v4410
      %v4412 = vpop.f32.mrf.mxu0
      %4413 = vdwg.mxu0
      %v4414 = vtanh.pop %v4346
      %v4415 = vtanh.pop %v4411
      %v4418 = vrot.slane %v4415, 4
      %vm4419 = vcmask 1043456
      %v4420 = vsel %vm4419, %v4414, %v4418
      %4422 = vst [vmem:[%s509] sm:$0xff] %v4420
      %p4423 = scmp.lt.s32.totalorder %s27, 1
      %s4424 = scalar_select %p4423, %s27, 1
      %s4425 = smul.addr %s4424, 2
      %s4426 = smul.addr %s4425, 4
      %s4427 = scalar_lea.vmem %s14, %s4426
      // Predicated region
      $region77: #{divco_plgan_forward.5} parent=75 // pred_check
        %p4428 = pneg %p354
      $region78: #{divco_plgan_forward.5} parent=75 // pred_check_branch
        %4430 = sbr.rel (%p4428) target = $region80
      $region79: #{divco_plgan_forward.5} parent=75 // pred_region
        _
      $region80: #{divco_plgan_forward.5} parent=75 // pred_fallthru
        _
    $region76: #{divco_plgan_forward.5} parent=5 // pred_fallthru
      _
    %p4431 = scmp.le.s32.totalorder 2, %s22
    // Predicated region
    $region81: #{divco_plgan_forward.5} parent=5 // pred_check
      %p4432 = pneg %p4431
    $region82: #{divco_plgan_forward.5} parent=5 // pred_check_branch
      %4434 = sbr.rel (%p4432) target = $region84
    $region83: #{divco_plgan_forward.5} parent=5 // pred_region
      %s4435 = ssub.s32 %s22, 2
      // Predicated region
      $region85: #{divco_plgan_forward.5} parent=83 // pred_check
        %p4436 = pneg %p360
      $region86: #{divco_plgan_forward.5} parent=83 // pred_check_branch
        %4438 = sbr.rel (%p4436) target = $region88
      $region87: #{divco_plgan_forward.5} parent=83 // pred_region
        %p4439 = scmp.lt.s32.totalorder %s28, 1
        %s4440 = scalar_select %p4439, %s28, 1
        %s4441 = smul.addr %s4440, 2
        %s4442 = smul.addr %s4441, 4
        %s4443 = scalar_lea.vmem %s14, %s4442
      $region88: #{divco_plgan_forward.5} parent=83 // pred_fallthru
        _
    $region84: #{divco_plgan_forward.5} parent=5 // pred_fallthru
      _
  $region6: #{divco_plgan_forward.5} parent=0 // loop_footer
    %s26 = sadd.s32 1, %s22
  $region7: #{divco_plgan_forward.5} parent=0 // loop_footer_branch
    %21 = sbr.rel target = $region3
  $region8: #{divco_plgan_forward.5} parent=0 // loop_exit
    _

</llo_original>
